<compile_context>
chip_gen: v5e
topology: v5e:2x2
jax: 0.10.0
libtpu: 0.0.40
codegen_flags: <defaults>
</compile_context>

<pallas_src>
import numpy as np
import jax
import jax.numpy as jnp
from jax.experimental import pallas as pl
from jax.experimental.pallas import tpu as pltpu

# ----------------------------------------------------------------------------
# Static configuration (mirrors the cfg.* fields used in SegTaskNet.__init__)
# ----------------------------------------------------------------------------
CFG = dict(
    num_classes=5,
    in_chans=4,
    num_stages=2,
    img_size=16,
    patch_size=[7, 3],
    stride=[4, 2],
    depths=[1, 1],
    embed_dims=[16, 32],
    num_heads=[1, 2],
    mlp_ratios=[2, 2],
    sr_ratios=[2, 1],
    decoder_embed_dim=32,
)

STAGE_CFGS = []
for _s in range(CFG["num_stages"]):
    STAGE_CFGS.append(dict(
        k=CFG["patch_size"][_s],
        stride=CFG["stride"][_s],
        pad=CFG["patch_size"][_s] // 2,
        in_chans=CFG["in_chans"] if _s == 0 else CFG["embed_dims"][_s - 1],
        dim=CFG["embed_dims"][_s],
        heads=CFG["num_heads"][_s],
        mlp=CFG["mlp_ratios"][_s],
        sr=CFG["sr_ratios"][_s],
        depth=CFG["depths"][_s],
    ))

PRED_PAD = 128     # lane-dense width of the final logits slab (sliced to num_classes outside)
LN_EPS = 1e-6      # TODO(synk): confirm vs reference (nn.LayerNorm default 1e-5; SegFormer uses 1e-6).
NEG_INF = -1e30


def _conv_out(n, k, s, p):
    return (n + 2 * p - k) // s + 1


# ----------------------------------------------------------------------------
# Compile-time constant operators (numpy, built once outside jit)
# ----------------------------------------------------------------------------
def _np_conv_select(B, H, W, k, stride, pad):
    """0/1 selection matrices G[p] (B*No, B*N): gather-as-matmul for a kxk/stride conv.
    Zero padding is handled by all-zero rows."""
    Ho, Wo = _conv_out(H, k, stride, pad), _conv_out(W, k, stride, pad)
    N, No = H * W, Ho * Wo
    g = np.zeros((k * k, B * No, B * N), np.float32)
    for b in range(B):
        for ho in range(Ho):
            for wo in range(Wo):
                r = b * No + ho * Wo + wo
                for di in range(k):
                    for dj in range(k):
                        hi, wi = ho * stride + di - pad, wo * stride + dj - pad
                        if 0 <= hi < H and 0 <= wi < W:
                            g[di * k + dj, r, b * N + hi * W + wi] = 1.0
    return g


def _np_bilinear_axis(o_sz, i_sz):
    m = np.zeros((o_sz, i_sz), np.float32)
    if i_sz == 1:
        m[:, 0] = 1.0
        return m
    scale = i_sz / o_sz
    for o in range(o_sz):
        src = min(max((o + 0.5) * scale - 0.5, 0.0), i_sz - 1.0)
        i0 = int(np.floor(src))
        i1 = min(i0 + 1, i_sz - 1)
        w1 = src - i0
        m[o, i0] += 1.0 - w1
        m[o, i1] += w1
    return m


def _np_bilinear_matrix(out_hw, in_hw):
    """(Ho*Wo, Hi*Wi) half-pixel bilinear interpolation operator (align_corners=False)."""
    return np.kron(_np_bilinear_axis(out_hw[0], in_hw[0]),
                   _np_bilinear_axis(out_hw[1], in_hw[1]))


def _np_batch_mask(B, N, Nk):
    """Block-diagonal batch mask (B*N, B*Nk): 0 within a batch element, -inf across."""
    m = np.full((B * N, B * Nk), NEG_INF, np.float32)
    for b in range(B):
        m[b * N:(b + 1) * N, b * Nk:(b + 1) * Nk] = 0.0
    return m


def build_constants(B):
    s0c, s1c = STAGE_CFGS
    H0 = _conv_out(CFG["img_size"], s0c["k"], s0c["stride"], s0c["pad"])   # 4
    H1 = _conv_out(H0, s1c["k"], s1c["stride"], s1c["pad"])                # 2
    Hk0 = H0 // s0c["sr"]
    return dict(
        # sr conv (kernel=stride=sr) selection matrices: (sr*sr, B*Nk0, B*N0)
        gsel0=jnp.asarray(_np_conv_select(B, H0, H0, s0c["sr"], s0c["sr"], 0), jnp.bfloat16),
        # stage-1 3x3/stride-2 patch-embed selection matrices: (9, B*N1, B*N0)
        gpe1=jnp.asarray(_np_conv_select(B, H0, H0, s1c["k"], s1c["stride"], s1c["pad"]),
                         jnp.bfloat16),
        # block-diag (over batch) bilinear upsample operator: (B*N0, B*N1)
        up1m=jnp.asarray(np.kron(np.eye(B, dtype=np.float32),
                                 _np_bilinear_matrix((H0, H0), (H1, H1))), jnp.bfloat16),
        mask0=jnp.asarray(_np_batch_mask(B, H0 * H0, Hk0 * Hk0), jnp.float32),
        mask1=jnp.asarray(_np_batch_mask(B, H1 * H1, H1 * H1), jnp.float32),
    )


# ----------------------------------------------------------------------------
# In-kernel math helpers (traced inside the Pallas kernel)
# ----------------------------------------------------------------------------
def _mm(a, w):
    """bf16 MXU matmul with f32 accumulation (astype is a no-op if already bf16)."""
    return jnp.dot(a.astype(jnp.bfloat16), w.astype(jnp.bfloat16),
                   preferred_element_type=jnp.float32)


def _qkT(q, k):
    """q @ k^T (contract last dims), bf16 in / f32 acc."""
    return jax.lax.dot_general(q.astype(jnp.bfloat16), k.astype(jnp.bfloat16),
                               (((1,), (1,)), ((), ())),
                               preferred_element_type=jnp.float32)


def _ln(x, gb, eps=LN_EPS):
    """Single-pass LayerNorm over last dim; gb (2, C): row0=gamma, row1=beta. f32 math."""
    mu = jnp.mean(x, axis=-1, keepdims=True)
    ms = jnp.mean(x * x, axis=-1, keepdims=True)
    var = jnp.maximum(ms - mu * mu, 0.0)
    return (x - mu) * jax.lax.rsqrt(var + eps) * gb[0:1, :] + gb[1:2, :]


def _softmax_rows(s):
    s = s - jnp.max(s, axis=-1, keepdims=True)
    p = jnp.exp(s)
    return p * pl.reciprocal(jnp.sum(p, axis=-1, keepdims=True), approx=True)


def _attn_mlp_block(tok, *, heads, mask, n1, n2, wq, bq, wkv, bkv, wo, bo,
                    fc1_w, fc1_b, fc2_w, fc2_b, sr):
    """One pre-LN transformer block (SRA attention + Mix-FFN MLP), drop_path=identity."""
    bf16 = jnp.bfloat16
    C = tok.shape[-1]
    dh = C // heads
    scale = float(dh) ** -0.5

    h = _ln(tok, n1)
    h_bf = h.astype(bf16)                        # cast once; reused by Q / sr-conv / QKV matmuls

    if sr is not None:
        gsel_r, sr_w, sr_b, sr_ln = sr
        q = _mm(h_bf, wq) + bq                   # (B*N, C)
        acc = None
        for p in range(gsel_r.shape[0]):         # sr*sr conv as selection-matrix matmuls
            hp = _mm(gsel_r[p], h_bf)            # (B*Nk, C) gathered rows
            t = _mm(hp, sr_w[p * C:(p + 1) * C, :])
            acc = t if acc is None else acc + t
        kv_src = _ln(acc + sr_b, sr_ln).astype(bf16)
        kv = _mm(kv_src, wkv) + bkv              # (B*Nk, 2C)
        kmat, vmat = kv[:, :C], kv[:, C:]
    else:
        qkv = _mm(h_bf, wkv) + bkv               # fused (C, 3C) QKV projection
        q, kmat, vmat = qkv[:, :C], qkv[:, C:2 * C], qkv[:, 2 * C:]

    # Full-batch masked attention; heads accumulate straight through out-proj row slices.
    attn = None
    for hh in range(heads):
        sl = slice(hh * dh, (hh + 1) * dh)
        s = _qkT(q[:, sl], kmat[:, sl]) * scale + mask       # (B*N, B*Nk), f32
        p_att = _softmax_rows(s)
        contrib = _mm(_mm(p_att, vmat[:, sl]), wo[sl, :])    # (B*N, C)
        attn = contrib if attn is None else attn + contrib
    tok = tok + attn + bo                         # residual (dropout / drop_path = identity)

    hm = _ln(tok, n2)
    # TODO(synk): PyTorch default GELU is exact erf; tanh approximation used here.
    hm = jax.nn.gelu(_mm(hm, fc1_w) + fc1_b, approximate=True)
    # TODO(synk): Mix-FFN depthwise 3x3 conv between fc1 and fc2 omitted (submodule source unavailable).
    return tok + (_mm(hm, fc2_w) + fc2_b)


# ----------------------------------------------------------------------------
# The single fused kernel: both modality encoders (2 stages) + decoder head
# ----------------------------------------------------------------------------
def _fused_kernel(*refs):
    (cols0, mask0_r, mask1_r, gsel0_r, gpe1_r, up1_r,
     s0_pe_w, s0_pe_b, s0_pe_ln, s0_n1, s0_wq, s0_bq, s0_wkv, s0_bkv,
     s0_sr_w, s0_sr_b, s0_sr_ln, s0_wo, s0_bo, s0_n2,
     s0_fc1_w, s0_fc1_b, s0_fc2_w, s0_fc2_b, s0_norm,
     s1_pe_w, s1_pe_b, s1_pe_ln, s1_n1, s1_wqkv, s1_bqkv,
     s1_wo, s1_bo, s1_n2, s1_fc1_w, s1_fc1_b, s1_fc2_w, s1_fc2_b, s1_norm,
     f0_w, f0_b, f1_w, f1_b, l0_w, l0_b, l1_w, l1_b,
     dfw, dfb, pred_w, pred_b,
     out_ref) = refs

    bf16 = jnp.bfloat16
    s0c, s1c = STAGE_CFGS
    C0 = s0c["dim"]

    mask0 = mask0_r[...]
    mask1 = mask1_r[...]

    toks0, toks1 = [], []
    for m in range(2):                       # static unroll over modalities (separate weights)
        # ---- stage 0: overlap patch embed (host-extracted columns) + block(s) ----
        tok = _mm(cols0[m], s0_pe_w[m]) + s0_pe_b[m]           # (B*N0, C0)
        tok = _ln(tok, s0_pe_ln[m])
        # TODO(synk): cross-modal FRM rectification inside encoder.forward not reproducible (source unavailable).
        for blk in range(s0c["depth"]):
            tok = _attn_mlp_block(
                tok, heads=s0c["heads"], mask=mask0,
                n1=s0_n1[m, blk], n2=s0_n2[m, blk],
                wq=s0_wq[m, blk], bq=s0_bq[m, blk],
                wkv=s0_wkv[m, blk], bkv=s0_bkv[m, blk],
                wo=s0_wo[m, blk], bo=s0_bo[m, blk],
                fc1_w=s0_fc1_w[m, blk], fc1_b=s0_fc1_b[m, blk],
                fc2_w=s0_fc2_w[m, blk], fc2_b=s0_fc2_b[m, blk],
                sr=(gsel0_r, s0_sr_w[m, blk], s0_sr_b[m, blk], s0_sr_ln[m, blk]))
        tok0 = _ln(tok, s0_norm[m])
        toks0.append(tok0)

        # ---- stage 1: patch embed straight from the VMEM-resident stage-0 tokens ----
        t0_bf = tok0.astype(bf16)
        pe1_w = s1_pe_w[m]                                      # (k*k*C0, C1)
        acc = None
        for p in range(s1c["k"] * s1c["k"]):                    # 3x3/stride-2 conv as gather-matmuls
            hp = _mm(gpe1_r[p], t0_bf)                          # (B*N1, C0)
            t = _mm(hp, pe1_w[p * C0:(p + 1) * C0, :])
            acc = t if acc is None else acc + t
        tok = _ln(acc + s1_pe_b[m], s1_pe_ln[m])
        for blk in range(s1c["depth"]):
            tok = _attn_mlp_block(
                tok, heads=s1c["heads"], mask=mask1,
                n1=s1_n1[m, blk], n2=s1_n2[m, blk],
                wq=None, bq=None,
                wkv=s1_wqkv[m, blk], bkv=s1_bqkv[m, blk],
                wo=s1_wo[m, blk], bo=s1_bo[m, blk],
                fc1_w=s1_fc1_w[m, blk], fc1_b=s1_fc1_b[m, blk],
                fc2_w=s1_fc2_w[m, blk], fc2_b=s1_fc2_b[m, blk],
                sr=None)
        toks1.append(_ln(tok, s1_norm[m]))

    # ---- decoder: per-stage modality fusion + SegFormer MLP head, all VMEM-resident ----
    # TODO(synk): exact FeatureFusionModule unknown; approximated by split-weight 1x1 conv over the modality pair.
    fused0 = _mm(toks0[0], f0_w[0]) + _mm(toks0[1], f0_w[1]) + f0_b[...]   # (B*N0, C0)
    fused1 = _mm(toks1[0], f1_w[0]) + _mm(toks1[1], f1_w[1]) + f1_b[...]   # (B*N1, C1)
    proj0 = _mm(fused0, l0_w[...]) + l0_b[...]                             # (B*N0, De)
    proj1 = _mm(fused1, l1_w[...]) + l1_b[...]                             # (B*N1, De)
    up1 = _mm(up1_r[...], proj1)                      # bilinear upsample: one block-diag matmul
    hid = jnp.maximum(_mm(up1, dfw[0]) + _mm(proj0, dfw[1]) + dfb[...], 0.0)  # fuse conv (BN folded) + ReLU
    out_ref[...] = _mm(hid, pred_w[...]) + pred_b[...]                     # lane-dense padded logits slab


# ----------------------------------------------------------------------------
# Host wrapper for the single pallas_call
# ----------------------------------------------------------------------------
def _full_spec(shape):
    rank = len(shape)
    return pl.BlockSpec(tuple(shape), lambda *_g, _r=rank: (0,) * _r)


def run_fused_net(cols0, params, consts):
    s0, s1, dec = params["stage0"], params["stage1"], params["decoder"]
    BN0 = cols0.shape[1]

    inputs = [
        cols0, consts["mask0"], consts["mask1"],
        consts["gsel0"], consts["gpe1"], consts["up1m"],
        s0["pe_w"], s0["pe_b"], s0["pe_ln"], s0["n1"], s0["wq"], s0["bq"],
        s0["wkv"], s0["bkv"], s0["sr_w"], s0["sr_b"], s0["sr_ln"],
        s0["wo"], s0["bo"], s0["n2"], s0["fc1_w"], s0["fc1_b"],
        s0["fc2_w"], s0["fc2_b"], s0["norm"],
        s1["pe_w"], s1["pe_b"], s1["pe_ln"], s1["n1"], s1["wqkv"], s1["bqkv"],
        s1["wo"], s1["bo"], s1["n2"], s1["fc1_w"], s1["fc1_b"],
        s1["fc2_w"], s1["fc2_b"], s1["norm"],
        dec["f0_w"], dec["f0_b"], dec["f1_w"], dec["f1_b"],
        dec["l0_w"], dec["l0_b"], dec["l1_w"], dec["l1_b"],
        dec["dfw"], dec["dfb"], dec["pred_w"], dec["pred_b"],
    ]
    return pl.pallas_call(
        _fused_kernel,
        grid=(1,),
        in_specs=[_full_spec(x.shape) for x in inputs],
        out_specs=pl.BlockSpec((BN0, PRED_PAD), lambda i: (0, 0)),
        out_shape=jax.ShapeDtypeStruct((BN0, PRED_PAD), jnp.float32),
        compiler_params=pltpu.CompilerParams(dimension_semantics=("arbitrary",)),
    )(*inputs)


# ----------------------------------------------------------------------------
# Forward
# ----------------------------------------------------------------------------
def segtasknet_forward(params, consts, modal_x, modal_y):
    """modal_x, modal_y: (B, in_chans, H, W) NCHW.  Returns out1 logits NCHW (B, nc, H/4, W/4)."""
    B = modal_x.shape[0]
    s0c = STAGE_CFGS[0]
    H0 = _conv_out(CFG["img_size"], s0c["k"], s0c["stride"], s0c["pad"])

    xy = jnp.concatenate([modal_x, modal_y], axis=0)               # (2B, Cin, H, W) modality-major
    xy = jnp.transpose(xy, (0, 2, 3, 1)).astype(jnp.float32)       # NHWC
    # Stage-0 overlap-patch im2col as a single XLA op (replaces the 49-slice Python loop).
    cols = jax.lax.conv_general_dilated_patches(
        xy, filter_shape=(s0c["k"], s0c["k"]),
        window_strides=(s0c["stride"], s0c["stride"]),
        padding=((s0c["pad"], s0c["pad"]),) * 2,
        dimension_numbers=("NHWC", "HWIO", "NHWC"))                # (2B, H0, W0, k*k*Cin)
    # TODO(synk): if real PyTorch conv weights are loaded, match patch-feature ordering to (Cout,Cin,kh,kw).
    cols = cols.reshape(2, B * H0 * H0, s0c["k"] * s0c["k"] * s0c["in_chans"])

    logits = run_fused_net(cols, params, consts)                   # (B*N0, PRED_PAD)
    nc = CFG["num_classes"]
    out1 = logits[:, :nc].reshape(B, H0, H0, nc).transpose(0, 3, 1, 2)
    return out1                                                    # out2 is None in the reference


# ----------------------------------------------------------------------------
# Deterministic parameter construction (modality-stacked, kernel-ready)
# ----------------------------------------------------------------------------
class KeyGen:
    def __init__(self, key):
        self.key = key

    def __call__(self):
        self.key, sub = jax.random.split(self.key)
        return sub


def build_params(seed=0):
    kg = KeyGen(jax.random.PRNGKey(seed))
    bf16 = jnp.bfloat16

    def w(shape):                 # matmul weights -> bf16 (MXU operands)
        return (0.02 * jax.random.normal(kg(), shape)).astype(bf16)

    def zeros(shape):
        return jnp.zeros(shape, jnp.float32)

    def ln_stack(lead, C):        # row0 = gamma(=1), row1 = beta(=0)
        base = jnp.stack([jnp.ones((C,), jnp.float32), jnp.zeros((C,), jnp.float32)])
        return jnp.broadcast_to(base, tuple(lead) + (2, C))

    s0c, s1c = STAGE_CFGS
    C0, C1, d0, d1 = s0c["dim"], s1c["dim"], s0c["depth"], s1c["depth"]

    stage0 = dict(  # sr > 1: separate Q / KV projections + spatial-reduction conv
        pe_w=w((2, s0c["k"] ** 2 * s0c["in_chans"], C0)), pe_b=zeros((2, 1, C0)),
        pe_ln=ln_stack((2,), C0),
        n1=ln_stack((2, d0), C0),
        wq=w((2, d0, C0, C0)), bq=zeros((2, d0, 1, C0)),
        wkv=w((2, d0, C0, 2 * C0)), bkv=zeros((2, d0, 1, 2 * C0)),
        sr_w=w((2, d0, s0c["sr"] ** 2 * C0, C0)), sr_b=zeros((2, d0, 1, C0)),
        sr_ln=ln_stack((2, d0), C0),
        wo=w((2, d0, C0, C0)), bo=zeros((2, d0, 1, C0)),
        n2=ln_stack((2, d0), C0),
        fc1_w=w((2, d0, C0, s0c["mlp"] * C0)), fc1_b=zeros((2, d0, 1, s0c["mlp"] * C0)),
        fc2_w=w((2, d0, s0c["mlp"] * C0, C0)), fc2_b=zeros((2, d0, 1, C0)),
        norm=ln_stack((2,), C0),
    )
    stage1 = dict(  # sr == 1: fused (C, 3C) QKV projection
        pe_w=w((2, s1c["k"] ** 2 * s1c["in_chans"], C1)), pe_b=zeros((2, 1, C1)),
        pe_ln=ln_stack((2,), C1),
        n1=ln_stack((2, d1), C1),
        wqkv=w((2, d1, C1, 3 * C1)), bqkv=zeros((2, d1, 1, 3 * C1)),
        wo=w((2, d1, C1, C1)), bo=zeros((2, d1, 1, C1)),
        n2=ln_stack((2, d1), C1),
        fc1_w=w((2, d1, C1, s1c["mlp"] * C1)), fc1_b=zeros((2, d1, 1, s1c["mlp"] * C1)),
        fc2_w=w((2, d1, s1c["mlp"] * C1, C1)), fc2_b=zeros((2, d1, 1, C1)),
        norm=ln_stack((2,), C1),
    )

    De, nc = CFG["decoder_embed_dim"], CFG["num_classes"]

    # Inference-mode BatchNorm of the decoder fuse conv folded into its weights (outside jit).
    bn_g, bn_b = jnp.ones((De,), jnp.float32), jnp.zeros((De,), jnp.float32)
    bn_mean, bn_var = jnp.zeros((De,), jnp.float32), jnp.ones((De,), jnp.float32)
    bn_scale = bn_g * jax.lax.rsqrt(bn_var + 1e-5)
    bn_shift = bn_b - bn_mean * bn_scale
    raw_dfw = 0.02 * jax.random.normal(kg(), (CFG["num_stages"], De, De))
    dfw = (raw_dfw * bn_scale[None, None, :]).astype(bf16)   # [0] <- upsampled stage-1, [1] <- stage-0
    dfb = (jnp.zeros((De,), jnp.float32) * bn_scale + bn_shift).reshape(1, De)

    # linear_pred padded to a lane-dense 128-wide output slab (sliced back outside the kernel)
    raw_pred_w = 0.02 * jax.random.normal(kg(), (De, nc))
    pred_w = jnp.zeros((De, PRED_PAD), jnp.float32).at[:, :nc].set(raw_pred_w).astype(bf16)
    pred_b = jnp.zeros((1, PRED_PAD), jnp.float32)

    decoder = dict(
        f0_w=w((2, C0, C0)), f0_b=zeros((1, C0)),            # per-modality split FFM-approx weights
        f1_w=w((2, C1, C1)), f1_b=zeros((1, C1)),
        l0_w=w((C0, De)), l0_b=zeros((1, De)),
        l1_w=w((C1, De)), l1_b=zeros((1, De)),
        dfw=dfw, dfb=dfb, pred_w=pred_w, pred_b=pred_b,
    )
    return dict(stage0=stage0, stage1=stage1, decoder=decoder)


# ----------------------------------------------------------------------------
# Main
# ----------------------------------------------------------------------------
if __name__ == "__main__":
    B, Cin, S = 2, CFG["in_chans"], CFG["img_size"]
    params = build_params(seed=0)
    consts = build_constants(B)

    key = jax.random.PRNGKey(0)
    kx, ky = jax.random.split(key)
    modal_x = jax.random.normal(kx, (B, Cin, S, S), dtype=jnp.float32)
    modal_y = jax.random.normal(ky, (B, Cin, S, S), dtype=jnp.float32)

    fwd = jax.jit(segtasknet_forward)
    out1 = jax.block_until_ready(fwd(params, consts, modal_x, modal_y))

    expected = (B, CFG["num_classes"], S // CFG["stride"][0], S // CFG["stride"][0])
    assert out1.shape == expected, (out1.shape, expected)
    assert bool(jnp.all(jnp.isfinite(out1)))
    print("KERNEL_OK")
</pallas_src>

<mosaic_0001>
module attributes {stable_mosaic.version = 11 : i64} {
  func.func @_fused_kernel(%arg0: i32, %arg1: memref<2x32x196xf32, #tpu.memory_space<vmem>>, %arg2: memref<32x8xf32, #tpu.memory_space<vmem>>, %arg3: memref<8x8xf32, #tpu.memory_space<vmem>>, %arg4: memref<4x8x32xbf16, #tpu.memory_space<vmem>>, %arg5: memref<9x8x32xbf16, #tpu.memory_space<vmem>>, %arg6: memref<32x8xbf16, #tpu.memory_space<vmem>>, %arg7: memref<2x196x16xbf16, #tpu.memory_space<vmem>>, %arg8: memref<2x1x16xf32, #tpu.memory_space<vmem>>, %arg9: memref<2x2x16xf32, #tpu.memory_space<vmem>>, %arg10: memref<2x1x2x16xf32, #tpu.memory_space<vmem>>, %arg11: memref<2x1x16x16xbf16, #tpu.memory_space<vmem>>, %arg12: memref<2x1x1x16xf32, #tpu.memory_space<vmem>>, %arg13: memref<2x1x16x32xbf16, #tpu.memory_space<vmem>>, %arg14: memref<2x1x1x32xf32, #tpu.memory_space<vmem>>, %arg15: memref<2x1x64x16xbf16, #tpu.memory_space<vmem>>, %arg16: memref<2x1x1x16xf32, #tpu.memory_space<vmem>>, %arg17: memref<2x1x2x16xf32, #tpu.memory_space<vmem>>, %arg18: memref<2x1x16x16xbf16, #tpu.memory_space<vmem>>, %arg19: memref<2x1x1x16xf32, #tpu.memory_space<vmem>>, %arg20: memref<2x1x2x16xf32, #tpu.memory_space<vmem>>, %arg21: memref<2x1x16x32xbf16, #tpu.memory_space<vmem>>, %arg22: memref<2x1x1x32xf32, #tpu.memory_space<vmem>>, %arg23: memref<2x1x32x16xbf16, #tpu.memory_space<vmem>>, %arg24: memref<2x1x1x16xf32, #tpu.memory_space<vmem>>, %arg25: memref<2x2x16xf32, #tpu.memory_space<vmem>>, %arg26: memref<2x144x32xbf16, #tpu.memory_space<vmem>>, %arg27: memref<2x1x32xf32, #tpu.memory_space<vmem>>, %arg28: memref<2x2x32xf32, #tpu.memory_space<vmem>>, %arg29: memref<2x1x2x32xf32, #tpu.memory_space<vmem>>, %arg30: memref<2x1x32x96xbf16, #tpu.memory_space<vmem>>, %arg31: memref<2x1x1x96xf32, #tpu.memory_space<vmem>>, %arg32: memref<2x1x32x32xbf16, #tpu.memory_space<vmem>>, %arg33: memref<2x1x1x32xf32, #tpu.memory_space<vmem>>, %arg34: memref<2x1x2x32xf32, #tpu.memory_space<vmem>>, %arg35: memref<2x1x32x64xbf16, #tpu.memory_space<vmem>>, %arg36: memref<2x1x1x64xf32, #tpu.memory_space<vmem>>, %arg37: memref<2x1x64x32xbf16, #tpu.memory_space<vmem>>, %arg38: memref<2x1x1x32xf32, #tpu.memory_space<vmem>>, %arg39: memref<2x2x32xf32, #tpu.memory_space<vmem>>, %arg40: memref<2x16x16xbf16, #tpu.memory_space<vmem>>, %arg41: memref<1x16xf32, #tpu.memory_space<vmem>>, %arg42: memref<2x32x32xbf16, #tpu.memory_space<vmem>>, %arg43: memref<1x32xf32, #tpu.memory_space<vmem>>, %arg44: memref<16x32xbf16, #tpu.memory_space<vmem>>, %arg45: memref<1x32xf32, #tpu.memory_space<vmem>>, %arg46: memref<32x32xbf16, #tpu.memory_space<vmem>>, %arg47: memref<1x32xf32, #tpu.memory_space<vmem>>, %arg48: memref<2x32x32xbf16, #tpu.memory_space<vmem>>, %arg49: memref<1x32xf32, #tpu.memory_space<vmem>>, %arg50: memref<32x128xbf16, #tpu.memory_space<vmem>>, %arg51: memref<1x128xf32, #tpu.memory_space<vmem>>, %arg52: memref<32x128xf32, #tpu.memory_space<vmem>>) attributes {dimension_semantics = [#tpu.dimension_semantics<arbitrary>], iteration_bounds = array<i64: 1>, scalar_prefetch = 0 : i64, scratch_operands = 0 : i64, tpu.core_type = #tpu.core_type<tc>, window_params = [{pipeline_mode = #tpu.pipeline_mode<synchronous>, transform_indices = @transform_0, window_bounds = array<i64: 2, 32, 196>}, {pipeline_mode = #tpu.pipeline_mode<synchronous>, transform_indices = @transform_1, window_bounds = array<i64: 32, 8>}, {pipeline_mode = #tpu.pipeline_mode<synchronous>, transform_indices = @transform_2, window_bounds = array<i64: 8, 8>}, {pipeline_mode = #tpu.pipeline_mode<synchronous>, transform_indices = @transform_3, window_bounds = array<i64: 4, 8, 32>}, {pipeline_mode = #tpu.pipeline_mode<synchronous>, transform_indices = @transform_4, window_bounds = array<i64: 9, 8, 32>}, {pipeline_mode = #tpu.pipeline_mode<synchronous>, transform_indices = @transform_5, window_bounds = array<i64: 32, 8>}, {pipeline_mode = #tpu.pipeline_mode<synchronous>, transform_indices = @transform_6, window_bounds = array<i64: 2, 196, 16>}, {pipeline_mode = #tpu.pipeline_mode<synchronous>, transform_indices = @transform_7, window_bounds = array<i64: 2, 1, 16>}, {pipeline_mode = #tpu.pipeline_mode<synchronous>, transform_indices = @transform_8, window_bounds = array<i64: 2, 2, 16>}, {pipeline_mode = #tpu.pipeline_mode<synchronous>, transform_indices = @transform_9, window_bounds = array<i64: 2, 1, 2, 16>}, {pipeline_mode = #tpu.pipeline_mode<synchronous>, transform_indices = @transform_10, window_bounds = array<i64: 2, 1, 16, 16>}, {pipeline_mode = #tpu.pipeline_mode<synchronous>, transform_indices = @transform_11, window_bounds = array<i64: 2, 1, 1, 16>}, {pipeline_mode = #tpu.pipeline_mode<synchronous>, transform_indices = @transform_12, window_bounds = array<i64: 2, 1, 16, 32>}, {pipeline_mode = #tpu.pipeline_mode<synchronous>, transform_indices = @transform_13, window_bounds = array<i64: 2, 1, 1, 32>}, {pipeline_mode = #tpu.pipeline_mode<synchronous>, transform_indices = @transform_14, window_bounds = array<i64: 2, 1, 64, 16>}, {pipeline_mode = #tpu.pipeline_mode<synchronous>, transform_indices = @transform_15, window_bounds = array<i64: 2, 1, 1, 16>}, {pipeline_mode = #tpu.pipeline_mode<synchronous>, transform_indices = @transform_16, window_bounds = array<i64: 2, 1, 2, 16>}, {pipeline_mode = #tpu.pipeline_mode<synchronous>, transform_indices = @transform_17, window_bounds = array<i64: 2, 1, 16, 16>}, {pipeline_mode = #tpu.pipeline_mode<synchronous>, transform_indices = @transform_18, window_bounds = array<i64: 2, 1, 1, 16>}, {pipeline_mode = #tpu.pipeline_mode<synchronous>, transform_indices = @transform_19, window_bounds = array<i64: 2, 1, 2, 16>}, {pipeline_mode = #tpu.pipeline_mode<synchronous>, transform_indices = @transform_20, window_bounds = array<i64: 2, 1, 16, 32>}, {pipeline_mode = #tpu.pipeline_mode<synchronous>, transform_indices = @transform_21, window_bounds = array<i64: 2, 1, 1, 32>}, {pipeline_mode = #tpu.pipeline_mode<synchronous>, transform_indices = @transform_22, window_bounds = array<i64: 2, 1, 32, 16>}, {pipeline_mode = #tpu.pipeline_mode<synchronous>, transform_indices = @transform_23, window_bounds = array<i64: 2, 1, 1, 16>}, {pipeline_mode = #tpu.pipeline_mode<synchronous>, transform_indices = @transform_24, window_bounds = array<i64: 2, 2, 16>}, {pipeline_mode = #tpu.pipeline_mode<synchronous>, transform_indices = @transform_25, window_bounds = array<i64: 2, 144, 32>}, {pipeline_mode = #tpu.pipeline_mode<synchronous>, transform_indices = @transform_26, window_bounds = array<i64: 2, 1, 32>}, {pipeline_mode = #tpu.pipeline_mode<synchronous>, transform_indices = @transform_27, window_bounds = array<i64: 2, 2, 32>}, {pipeline_mode = #tpu.pipeline_mode<synchronous>, transform_indices = @transform_28, window_bounds = array<i64: 2, 1, 2, 32>}, {pipeline_mode = #tpu.pipeline_mode<synchronous>, transform_indices = @transform_29, window_bounds = array<i64: 2, 1, 32, 96>}, {pipeline_mode = #tpu.pipeline_mode<synchronous>, transform_indices = @transform_30, window_bounds = array<i64: 2, 1, 1, 96>}, {pipeline_mode = #tpu.pipeline_mode<synchronous>, transform_indices = @transform_31, window_bounds = array<i64: 2, 1, 32, 32>}, {pipeline_mode = #tpu.pipeline_mode<synchronous>, transform_indices = @transform_32, window_bounds = array<i64: 2, 1, 1, 32>}, {pipeline_mode = #tpu.pipeline_mode<synchronous>, transform_indices = @transform_33, window_bounds = array<i64: 2, 1, 2, 32>}, {pipeline_mode = #tpu.pipeline_mode<synchronous>, transform_indices = @transform_34, window_bounds = array<i64: 2, 1, 32, 64>}, {pipeline_mode = #tpu.pipeline_mode<synchronous>, transform_indices = @transform_35, window_bounds = array<i64: 2, 1, 1, 64>}, {pipeline_mode = #tpu.pipeline_mode<synchronous>, transform_indices = @transform_36, window_bounds = array<i64: 2, 1, 64, 32>}, {pipeline_mode = #tpu.pipeline_mode<synchronous>, transform_indices = @transform_37, window_bounds = array<i64: 2, 1, 1, 32>}, {pipeline_mode = #tpu.pipeline_mode<synchronous>, transform_indices = @transform_38, window_bounds = array<i64: 2, 2, 32>}, {pipeline_mode = #tpu.pipeline_mode<synchronous>, transform_indices = @transform_39, window_bounds = array<i64: 2, 16, 16>}, {pipeline_mode = #tpu.pipeline_mode<synchronous>, transform_indices = @transform_40, window_bounds = array<i64: 1, 16>}, {pipeline_mode = #tpu.pipeline_mode<synchronous>, transform_indices = @transform_41, window_bounds = array<i64: 2, 32, 32>}, {pipeline_mode = #tpu.pipeline_mode<synchronous>, transform_indices = @transform_42, window_bounds = array<i64: 1, 32>}, {pipeline_mode = #tpu.pipeline_mode<synchronous>, transform_indices = @transform_43, window_bounds = array<i64: 16, 32>}, {pipeline_mode = #tpu.pipeline_mode<synchronous>, transform_indices = @transform_44, window_bounds = array<i64: 1, 32>}, {pipeline_mode = #tpu.pipeline_mode<synchronous>, transform_indices = @transform_45, window_bounds = array<i64: 32, 32>}, {pipeline_mode = #tpu.pipeline_mode<synchronous>, transform_indices = @transform_46, window_bounds = array<i64: 1, 32>}, {pipeline_mode = #tpu.pipeline_mode<synchronous>, transform_indices = @transform_47, window_bounds = array<i64: 2, 32, 32>}, {pipeline_mode = #tpu.pipeline_mode<synchronous>, transform_indices = @transform_48, window_bounds = array<i64: 1, 32>}, {pipeline_mode = #tpu.pipeline_mode<synchronous>, transform_indices = @transform_49, window_bounds = array<i64: 32, 128>}, {pipeline_mode = #tpu.pipeline_mode<synchronous>, transform_indices = @transform_50, window_bounds = array<i64: 1, 128>}, {pipeline_mode = #tpu.pipeline_mode<synchronous>, transform_indices = @transform_51, window_bounds = array<i64: 32, 128>}]} {
    %c0 = arith.constant 0 : index
    %c0_0 = arith.constant 0 : index
    %0 = vector.load %arg2[%c0, %c0_0] : memref<32x8xf32, #tpu.memory_space<vmem>>, vector<32x8xf32>
    %c0_1 = arith.constant 0 : index
    %c0_2 = arith.constant 0 : index
    %1 = vector.load %arg3[%c0_1, %c0_2] : memref<8x8xf32, #tpu.memory_space<vmem>>, vector<8x8xf32>
    %c0_3 = arith.constant 0 : index
    %c0_4 = arith.constant 0 : index
    %c0_5 = arith.constant 0 : index
    %2 = vector.load %arg1[%c0_3, %c0_4, %c0_5] : memref<2x32x196xf32, #tpu.memory_space<vmem>>, vector<1x32x196xf32>
    %3 = vector.shape_cast %2 : vector<1x32x196xf32> to vector<32x196xf32>
    %c0_6 = arith.constant 0 : index
    %c0_7 = arith.constant 0 : index
    %c0_8 = arith.constant 0 : index
    %4 = vector.load %arg7[%c0_6, %c0_7, %c0_8] : memref<2x196x16xbf16, #tpu.memory_space<vmem>>, vector<1x196x16xbf16>
    %5 = vector.shape_cast %4 : vector<1x196x16xbf16> to vector<196x16xbf16>
    %6 = arith.truncf %3 : vector<32x196xf32> to vector<32x196xbf16>
    %cst = arith.constant dense<0.000000e+00> : vector<32x16xf32>
    %7 = tpu.matmul %6, %5, %cst {dimension_numbers = #tpu.dot_dimension_numbers<[1], [0], [0], [1], [0, 0, 1, 1], [], []>} : vector<32x196xbf16>, vector<196x16xbf16>, vector<32x16xf32> -> vector<32x16xf32>
    %c0_9 = arith.constant 0 : index
    %c0_10 = arith.constant 0 : index
    %c0_11 = arith.constant 0 : index
    %8 = vector.load %arg8[%c0_9, %c0_10, %c0_11] : memref<2x1x16xf32, #tpu.memory_space<vmem>>, vector<1x1x16xf32>
    %9 = vector.shape_cast %8 : vector<1x1x16xf32> to vector<1x16xf32>
    %10 = vector.broadcast %9 : vector<1x16xf32> to vector<32x16xf32>
    %11 = arith.addf %7, %10 : vector<32x16xf32>
    %c0_12 = arith.constant 0 : index
    %c0_13 = arith.constant 0 : index
    %c0_14 = arith.constant 0 : index
    %12 = vector.load %arg9[%c0_12, %c0_13, %c0_14] : memref<2x2x16xf32, #tpu.memory_space<vmem>>, vector<1x2x16xf32>
    %13 = vector.shape_cast %12 : vector<1x2x16xf32> to vector<2x16xf32>
    %cst_15 = arith.constant dense<0.000000e+00> : vector<32xf32>
    %14 = vector.multi_reduction <add>, %11, %cst_15 [1] : vector<32x16xf32> to vector<32xf32>
    %15 = vector.shape_cast %14 : vector<32xf32> to vector<32x1xf32>
    %cst_16 = arith.constant 1.600000e+01 : f32
    %16 = vector.broadcast %cst_16 : f32 to vector<32x1xf32>
    %17 = arith.divf %15, %16 : vector<32x1xf32>
    %18 = arith.mulf %11, %11 : vector<32x16xf32>
    %cst_17 = arith.constant dense<0.000000e+00> : vector<32xf32>
    %19 = vector.multi_reduction <add>, %18, %cst_17 [1] : vector<32x16xf32> to vector<32xf32>
    %20 = vector.shape_cast %19 : vector<32xf32> to vector<32x1xf32>
    %cst_18 = arith.constant 1.600000e+01 : f32
    %21 = vector.broadcast %cst_18 : f32 to vector<32x1xf32>
    %22 = arith.divf %20, %21 : vector<32x1xf32>
    %23 = arith.mulf %17, %17 : vector<32x1xf32>
    %24 = arith.subf %22, %23 : vector<32x1xf32>
    %cst_19 = arith.constant 0.000000e+00 : f32
    %25 = vector.broadcast %cst_19 : f32 to vector<32x1xf32>
    %26 = arith.maximumf %24, %25 : vector<32x1xf32>
    %27 = vector.broadcast %17 : vector<32x1xf32> to vector<32x16xf32>
    %28 = arith.subf %11, %27 : vector<32x16xf32>
    %cst_20 = arith.constant 9.99999997E-7 : f32
    %29 = vector.broadcast %cst_20 : f32 to vector<32x1xf32>
    %30 = arith.addf %26, %29 : vector<32x1xf32>
    %31 = math.rsqrt %30 : vector<32x1xf32>
    %32 = vector.broadcast %31 : vector<32x1xf32> to vector<32x16xf32>
    %33 = arith.mulf %28, %32 : vector<32x16xf32>
    %34 = vector.extract_strided_slice %13 {offsets = [0, 0], sizes = [1, 16], strides = [1, 1]} : vector<2x16xf32> to vector<1x16xf32>
    %35 = vector.broadcast %34 : vector<1x16xf32> to vector<32x16xf32>
    %36 = arith.mulf %33, %35 : vector<32x16xf32>
    %37 = vector.extract_strided_slice %13 {offsets = [1, 0], sizes = [1, 16], strides = [1, 1]} : vector<2x16xf32> to vector<1x16xf32>
    %38 = vector.broadcast %37 : vector<1x16xf32> to vector<32x16xf32>
    %39 = arith.addf %36, %38 : vector<32x16xf32>
    %c0_21 = arith.constant 0 : index
    %c0_22 = arith.constant 0 : index
    %c0_23 = arith.constant 0 : index
    %c0_24 = arith.constant 0 : index
    %40 = vector.load %arg10[%c0_21, %c0_22, %c0_23, %c0_24] : memref<2x1x2x16xf32, #tpu.memory_space<vmem>>, vector<1x1x2x16xf32>
    %41 = vector.shape_cast %40 : vector<1x1x2x16xf32> to vector<2x16xf32>
    %c0_25 = arith.constant 0 : index
    %c0_26 = arith.constant 0 : index
    %c0_27 = arith.constant 0 : index
    %c0_28 = arith.constant 0 : index
    %42 = vector.load %arg20[%c0_25, %c0_26, %c0_27, %c0_28] : memref<2x1x2x16xf32, #tpu.memory_space<vmem>>, vector<1x1x2x16xf32>
    %43 = vector.shape_cast %42 : vector<1x1x2x16xf32> to vector<2x16xf32>
    %c0_29 = arith.constant 0 : index
    %c0_30 = arith.constant 0 : index
    %c0_31 = arith.constant 0 : index
    %c0_32 = arith.constant 0 : index
    %44 = vector.load %arg11[%c0_29, %c0_30, %c0_31, %c0_32] : memref<2x1x16x16xbf16, #tpu.memory_space<vmem>>, vector<1x1x16x16xbf16>
    %45 = vector.shape_cast %44 : vector<1x1x16x16xbf16> to vector<16x16xbf16>
    %c0_33 = arith.constant 0 : index
    %c0_34 = arith.constant 0 : index
    %c0_35 = arith.constant 0 : index
    %c0_36 = arith.constant 0 : index
    %46 = vector.load %arg12[%c0_33, %c0_34, %c0_35, %c0_36] : memref<2x1x1x16xf32, #tpu.memory_space<vmem>>, vector<1x1x1x16xf32>
    %47 = vector.shape_cast %46 : vector<1x1x1x16xf32> to vector<1x16xf32>
    %c0_37 = arith.constant 0 : index
    %c0_38 = arith.constant 0 : index
    %c0_39 = arith.constant 0 : index
    %c0_40 = arith.constant 0 : index
    %48 = vector.load %arg13[%c0_37, %c0_38, %c0_39, %c0_40] : memref<2x1x16x32xbf16, #tpu.memory_space<vmem>>, vector<1x1x16x32xbf16>
    %49 = vector.shape_cast %48 : vector<1x1x16x32xbf16> to vector<16x32xbf16>
    %c0_41 = arith.constant 0 : index
    %c0_42 = arith.constant 0 : index
    %c0_43 = arith.constant 0 : index
    %c0_44 = arith.constant 0 : index
    %50 = vector.load %arg14[%c0_41, %c0_42, %c0_43, %c0_44] : memref<2x1x1x32xf32, #tpu.memory_space<vmem>>, vector<1x1x1x32xf32>
    %51 = vector.shape_cast %50 : vector<1x1x1x32xf32> to vector<1x32xf32>
    %c0_45 = arith.constant 0 : index
    %c0_46 = arith.constant 0 : index
    %c0_47 = arith.constant 0 : index
    %c0_48 = arith.constant 0 : index
    %52 = vector.load %arg18[%c0_45, %c0_46, %c0_47, %c0_48] : memref<2x1x16x16xbf16, #tpu.memory_space<vmem>>, vector<1x1x16x16xbf16>
    %53 = vector.shape_cast %52 : vector<1x1x16x16xbf16> to vector<16x16xbf16>
    %c0_49 = arith.constant 0 : index
    %c0_50 = arith.constant 0 : index
    %c0_51 = arith.constant 0 : index
    %c0_52 = arith.constant 0 : index
    %54 = vector.load %arg19[%c0_49, %c0_50, %c0_51, %c0_52] : memref<2x1x1x16xf32, #tpu.memory_space<vmem>>, vector<1x1x1x16xf32>
    %55 = vector.shape_cast %54 : vector<1x1x1x16xf32> to vector<1x16xf32>
    %c0_53 = arith.constant 0 : index
    %c0_54 = arith.constant 0 : index
    %c0_55 = arith.constant 0 : index
    %c0_56 = arith.constant 0 : index
    %56 = vector.load %arg21[%c0_53, %c0_54, %c0_55, %c0_56] : memref<2x1x16x32xbf16, #tpu.memory_space<vmem>>, vector<1x1x16x32xbf16>
    %57 = vector.shape_cast %56 : vector<1x1x16x32xbf16> to vector<16x32xbf16>
    %c0_57 = arith.constant 0 : index
    %c0_58 = arith.constant 0 : index
    %c0_59 = arith.constant 0 : index
    %c0_60 = arith.constant 0 : index
    %58 = vector.load %arg22[%c0_57, %c0_58, %c0_59, %c0_60] : memref<2x1x1x32xf32, #tpu.memory_space<vmem>>, vector<1x1x1x32xf32>
    %59 = vector.shape_cast %58 : vector<1x1x1x32xf32> to vector<1x32xf32>
    %c0_61 = arith.constant 0 : index
    %c0_62 = arith.constant 0 : index
    %c0_63 = arith.constant 0 : index
    %c0_64 = arith.constant 0 : index
    %60 = vector.load %arg23[%c0_61, %c0_62, %c0_63, %c0_64] : memref<2x1x32x16xbf16, #tpu.memory_space<vmem>>, vector<1x1x32x16xbf16>
    %61 = vector.shape_cast %60 : vector<1x1x32x16xbf16> to vector<32x16xbf16>
    %c0_65 = arith.constant 0 : index
    %c0_66 = arith.constant 0 : index
    %c0_67 = arith.constant 0 : index
    %c0_68 = arith.constant 0 : index
    %62 = vector.load %arg24[%c0_65, %c0_66, %c0_67, %c0_68] : memref<2x1x1x16xf32, #tpu.memory_space<vmem>>, vector<1x1x1x16xf32>
    %63 = vector.shape_cast %62 : vector<1x1x1x16xf32> to vector<1x16xf32>
    %c0_69 = arith.constant 0 : index
    %c0_70 = arith.constant 0 : index
    %c0_71 = arith.constant 0 : index
    %c0_72 = arith.constant 0 : index
    %64 = vector.load %arg15[%c0_69, %c0_70, %c0_71, %c0_72] : memref<2x1x64x16xbf16, #tpu.memory_space<vmem>>, vector<1x1x64x16xbf16>
    %65 = vector.shape_cast %64 : vector<1x1x64x16xbf16> to vector<64x16xbf16>
    %c0_73 = arith.constant 0 : index
    %c0_74 = arith.constant 0 : index
    %c0_75 = arith.constant 0 : index
    %c0_76 = arith.constant 0 : index
    %66 = vector.load %arg16[%c0_73, %c0_74, %c0_75, %c0_76] : memref<2x1x1x16xf32, #tpu.memory_space<vmem>>, vector<1x1x1x16xf32>
    %67 = vector.shape_cast %66 : vector<1x1x1x16xf32> to vector<1x16xf32>
    %c0_77 = arith.constant 0 : index
    %c0_78 = arith.constant 0 : index
    %c0_79 = arith.constant 0 : index
    %c0_80 = arith.constant 0 : index
    %68 = vector.load %arg17[%c0_77, %c0_78, %c0_79, %c0_80] : memref<2x1x2x16xf32, #tpu.memory_space<vmem>>, vector<1x1x2x16xf32>
    %69 = vector.shape_cast %68 : vector<1x1x2x16xf32> to vector<2x16xf32>
    %cst_81 = arith.constant dense<0.000000e+00> : vector<32xf32>
    %70 = vector.multi_reduction <add>, %39, %cst_81 [1] : vector<32x16xf32> to vector<32xf32>
    %71 = vector.shape_cast %70 : vector<32xf32> to vector<32x1xf32>
    %cst_82 = arith.constant 1.600000e+01 : f32
    %72 = vector.broadcast %cst_82 : f32 to vector<32x1xf32>
    %73 = arith.divf %71, %72 : vector<32x1xf32>
    %74 = arith.mulf %39, %39 : vector<32x16xf32>
    %cst_83 = arith.constant dense<0.000000e+00> : vector<32xf32>
    %75 = vector.multi_reduction <add>, %74, %cst_83 [1] : vector<32x16xf32> to vector<32xf32>
    %76 = vector.shape_cast %75 : vector<32xf32> to vector<32x1xf32>
    %cst_84 = arith.constant 1.600000e+01 : f32
    %77 = vector.broadcast %cst_84 : f32 to vector<32x1xf32>
    %78 = arith.divf %76, %77 : vector<32x1xf32>
    %79 = arith.mulf %73, %73 : vector<32x1xf32>
    %80 = arith.subf %78, %79 : vector<32x1xf32>
    %cst_85 = arith.constant 0.000000e+00 : f32
    %81 = vector.broadcast %cst_85 : f32 to vector<32x1xf32>
    %82 = arith.maximumf %80, %81 : vector<32x1xf32>
    %83 = vector.broadcast %73 : vector<32x1xf32> to vector<32x16xf32>
    %84 = arith.subf %39, %83 : vector<32x16xf32>
    %cst_86 = arith.constant 9.99999997E-7 : f32
    %85 = vector.broadcast %cst_86 : f32 to vector<32x1xf32>
    %86 = arith.addf %82, %85 : vector<32x1xf32>
    %87 = math.rsqrt %86 : vector<32x1xf32>
    %88 = vector.broadcast %87 : vector<32x1xf32> to vector<32x16xf32>
    %89 = arith.mulf %84, %88 : vector<32x16xf32>
    %90 = vector.extract_strided_slice %41 {offsets = [0, 0], sizes = [1, 16], strides = [1, 1]} : vector<2x16xf32> to vector<1x16xf32>
    %91 = vector.broadcast %90 : vector<1x16xf32> to vector<32x16xf32>
    %92 = arith.mulf %89, %91 : vector<32x16xf32>
    %93 = vector.extract_strided_slice %41 {offsets = [1, 0], sizes = [1, 16], strides = [1, 1]} : vector<2x16xf32> to vector<1x16xf32>
    %94 = vector.broadcast %93 : vector<1x16xf32> to vector<32x16xf32>
    %95 = arith.addf %92, %94 : vector<32x16xf32>
    %96 = arith.truncf %95 : vector<32x16xf32> to vector<32x16xbf16>
    %cst_87 = arith.constant dense<0.000000e+00> : vector<32x16xf32>
    %97 = tpu.matmul %96, %45, %cst_87 {dimension_numbers = #tpu.dot_dimension_numbers<[1], [0], [0], [1], [0, 0, 1, 1], [], []>} : vector<32x16xbf16>, vector<16x16xbf16>, vector<32x16xf32> -> vector<32x16xf32>
    %98 = vector.broadcast %47 : vector<1x16xf32> to vector<32x16xf32>
    %99 = arith.addf %97, %98 : vector<32x16xf32>
    %c0_88 = arith.constant 0 : index
    %c0_89 = arith.constant 0 : index
    %c0_90 = arith.constant 0 : index
    %100 = vector.load %arg4[%c0_88, %c0_89, %c0_90] : memref<4x8x32xbf16, #tpu.memory_space<vmem>>, vector<1x8x32xbf16>
    %101 = vector.shape_cast %100 : vector<1x8x32xbf16> to vector<8x32xbf16>
    %cst_91 = arith.constant dense<0.000000e+00> : vector<8x16xf32>
    %102 = tpu.matmul %101, %96, %cst_91 {dimension_numbers = #tpu.dot_dimension_numbers<[1], [0], [0], [1], [0, 0, 1, 1], [], []>} : vector<8x32xbf16>, vector<32x16xbf16>, vector<8x16xf32> -> vector<8x16xf32>
    %103 = vector.extract_strided_slice %65 {offsets = [0, 0], sizes = [16, 16], strides = [1, 1]} : vector<64x16xbf16> to vector<16x16xbf16>
    %104 = arith.truncf %102 : vector<8x16xf32> to vector<8x16xbf16>
    %cst_92 = arith.constant dense<0.000000e+00> : vector<8x16xf32>
    %105 = tpu.matmul %104, %103, %cst_92 {dimension_numbers = #tpu.dot_dimension_numbers<[1], [0], [0], [1], [0, 0, 1, 1], [], []>} : vector<8x16xbf16>, vector<16x16xbf16>, vector<8x16xf32> -> vector<8x16xf32>
    %c1 = arith.constant 1 : index
    %c0_93 = arith.constant 0 : index
    %c0_94 = arith.constant 0 : index
    %106 = vector.load %arg4[%c1, %c0_93, %c0_94] : memref<4x8x32xbf16, #tpu.memory_space<vmem>>, vector<1x8x32xbf16>
    %107 = vector.shape_cast %106 : vector<1x8x32xbf16> to vector<8x32xbf16>
    %cst_95 = arith.constant dense<0.000000e+00> : vector<8x16xf32>
    %108 = tpu.matmul %107, %96, %cst_95 {dimension_numbers = #tpu.dot_dimension_numbers<[1], [0], [0], [1], [0, 0, 1, 1], [], []>} : vector<8x32xbf16>, vector<32x16xbf16>, vector<8x16xf32> -> vector<8x16xf32>
    %109 = vector.extract_strided_slice %65 {offsets = [16, 0], sizes = [16, 16], strides = [1, 1]} : vector<64x16xbf16> to vector<16x16xbf16>
    %110 = arith.truncf %108 : vector<8x16xf32> to vector<8x16xbf16>
    %cst_96 = arith.constant dense<0.000000e+00> : vector<8x16xf32>
    %111 = tpu.matmul %110, %109, %cst_96 {dimension_numbers = #tpu.dot_dimension_numbers<[1], [0], [0], [1], [0, 0, 1, 1], [], []>} : vector<8x16xbf16>, vector<16x16xbf16>, vector<8x16xf32> -> vector<8x16xf32>
    %112 = arith.addf %105, %111 : vector<8x16xf32>
    %c2 = arith.constant 2 : index
    %c0_97 = arith.constant 0 : index
    %c0_98 = arith.constant 0 : index
    %113 = vector.load %arg4[%c2, %c0_97, %c0_98] : memref<4x8x32xbf16, #tpu.memory_space<vmem>>, vector<1x8x32xbf16>
    %114 = vector.shape_cast %113 : vector<1x8x32xbf16> to vector<8x32xbf16>
    %cst_99 = arith.constant dense<0.000000e+00> : vector<8x16xf32>
    %115 = tpu.matmul %114, %96, %cst_99 {dimension_numbers = #tpu.dot_dimension_numbers<[1], [0], [0], [1], [0, 0, 1, 1], [], []>} : vector<8x32xbf16>, vector<32x16xbf16>, vector<8x16xf32> -> vector<8x16xf32>
    %116 = vector.extract_strided_slice %65 {offsets = [32, 0], sizes = [16, 16], strides = [1, 1]} : vector<64x16xbf16> to vector<16x16xbf16>
    %117 = arith.truncf %115 : vector<8x16xf32> to vector<8x16xbf16>
    %cst_100 = arith.constant dense<0.000000e+00> : vector<8x16xf32>
    %118 = tpu.matmul %117, %116, %cst_100 {dimension_numbers = #tpu.dot_dimension_numbers<[1], [0], [0], [1], [0, 0, 1, 1], [], []>} : vector<8x16xbf16>, vector<16x16xbf16>, vector<8x16xf32> -> vector<8x16xf32>
    %119 = arith.addf %112, %118 : vector<8x16xf32>
    %c3 = arith.constant 3 : index
    %c0_101 = arith.constant 0 : index
    %c0_102 = arith.constant 0 : index
    %120 = vector.load %arg4[%c3, %c0_101, %c0_102] : memref<4x8x32xbf16, #tpu.memory_space<vmem>>, vector<1x8x32xbf16>
    %121 = vector.shape_cast %120 : vector<1x8x32xbf16> to vector<8x32xbf16>
    %cst_103 = arith.constant dense<0.000000e+00> : vector<8x16xf32>
    %122 = tpu.matmul %121, %96, %cst_103 {dimension_numbers = #tpu.dot_dimension_numbers<[1], [0], [0], [1], [0, 0, 1, 1], [], []>} : vector<8x32xbf16>, vector<32x16xbf16>, vector<8x16xf32> -> vector<8x16xf32>
    %123 = vector.extract_strided_slice %65 {offsets = [48, 0], sizes = [16, 16], strides = [1, 1]} : vector<64x16xbf16> to vector<16x16xbf16>
    %124 = arith.truncf %122 : vector<8x16xf32> to vector<8x16xbf16>
    %cst_104 = arith.constant dense<0.000000e+00> : vector<8x16xf32>
    %125 = tpu.matmul %124, %123, %cst_104 {dimension_numbers = #tpu.dot_dimension_numbers<[1], [0], [0], [1], [0, 0, 1, 1], [], []>} : vector<8x16xbf16>, vector<16x16xbf16>, vector<8x16xf32> -> vector<8x16xf32>
    %126 = arith.addf %119, %125 : vector<8x16xf32>
    %127 = vector.broadcast %67 : vector<1x16xf32> to vector<8x16xf32>
    %128 = arith.addf %126, %127 : vector<8x16xf32>
    %cst_105 = arith.constant dense<0.000000e+00> : vector<8xf32>
    %129 = vector.multi_reduction <add>, %128, %cst_105 [1] : vector<8x16xf32> to vector<8xf32>
    %130 = vector.shape_cast %129 : vector<8xf32> to vector<8x1xf32>
    %cst_106 = arith.constant 1.600000e+01 : f32
    %131 = vector.broadcast %cst_106 : f32 to vector<8x1xf32>
    %132 = arith.divf %130, %131 : vector<8x1xf32>
    %133 = arith.mulf %128, %128 : vector<8x16xf32>
    %cst_107 = arith.constant dense<0.000000e+00> : vector<8xf32>
    %134 = vector.multi_reduction <add>, %133, %cst_107 [1] : vector<8x16xf32> to vector<8xf32>
    %135 = vector.shape_cast %134 : vector<8xf32> to vector<8x1xf32>
    %cst_108 = arith.constant 1.600000e+01 : f32
    %136 = vector.broadcast %cst_108 : f32 to vector<8x1xf32>
    %137 = arith.divf %135, %136 : vector<8x1xf32>
    %138 = arith.mulf %132, %132 : vector<8x1xf32>
    %139 = arith.subf %137, %138 : vector<8x1xf32>
    %cst_109 = arith.constant 0.000000e+00 : f32
    %140 = vector.broadcast %cst_109 : f32 to vector<8x1xf32>
    %141 = arith.maximumf %139, %140 : vector<8x1xf32>
    %142 = vector.broadcast %132 : vector<8x1xf32> to vector<8x16xf32>
    %143 = arith.subf %128, %142 : vector<8x16xf32>
    %cst_110 = arith.constant 9.99999997E-7 : f32
    %144 = vector.broadcast %cst_110 : f32 to vector<8x1xf32>
    %145 = arith.addf %141, %144 : vector<8x1xf32>
    %146 = math.rsqrt %145 : vector<8x1xf32>
    %147 = vector.broadcast %146 : vector<8x1xf32> to vector<8x16xf32>
    %148 = arith.mulf %143, %147 : vector<8x16xf32>
    %149 = vector.extract_strided_slice %69 {offsets = [0, 0], sizes = [1, 16], strides = [1, 1]} : vector<2x16xf32> to vector<1x16xf32>
    %150 = vector.broadcast %149 : vector<1x16xf32> to vector<8x16xf32>
    %151 = arith.mulf %148, %150 : vector<8x16xf32>
    %152 = vector.extract_strided_slice %69 {offsets = [1, 0], sizes = [1, 16], strides = [1, 1]} : vector<2x16xf32> to vector<1x16xf32>
    %153 = vector.broadcast %152 : vector<1x16xf32> to vector<8x16xf32>
    %154 = arith.addf %151, %153 : vector<8x16xf32>
    %155 = arith.truncf %154 : vector<8x16xf32> to vector<8x16xbf16>
    %cst_111 = arith.constant dense<0.000000e+00> : vector<8x32xf32>
    %156 = tpu.matmul %155, %49, %cst_111 {dimension_numbers = #tpu.dot_dimension_numbers<[1], [0], [0], [1], [0, 0, 1, 1], [], []>} : vector<8x16xbf16>, vector<16x32xbf16>, vector<8x32xf32> -> vector<8x32xf32>
    %157 = vector.broadcast %51 : vector<1x32xf32> to vector<8x32xf32>
    %158 = arith.addf %156, %157 : vector<8x32xf32>
    %159 = vector.extract_strided_slice %158 {offsets = [0, 0], sizes = [8, 16], strides = [1, 1]} : vector<8x32xf32> to vector<8x16xf32>
    %160 = vector.extract_strided_slice %158 {offsets = [0, 16], sizes = [8, 16], strides = [1, 1]} : vector<8x32xf32> to vector<8x16xf32>
    %161 = arith.truncf %99 : vector<32x16xf32> to vector<32x16xbf16>
    %162 = arith.truncf %159 : vector<8x16xf32> to vector<8x16xbf16>
    %cst_112 = arith.constant dense<0.000000e+00> : vector<32x8xf32>
    %163 = tpu.matmul %161, %162, %cst_112 {dimension_numbers = #tpu.dot_dimension_numbers<[1], [1], [0], [0], [0, 0, 1, 0], [], []>} : vector<32x16xbf16>, vector<8x16xbf16>, vector<32x8xf32> -> vector<32x8xf32>
    %cst_113 = arith.constant 2.500000e-01 : f32
    %164 = vector.broadcast %cst_113 : f32 to vector<32x8xf32>
    %165 = arith.mulf %163, %164 : vector<32x8xf32>
    %166 = arith.addf %165, %0 : vector<32x8xf32>
    %cst_114 = arith.constant dense<0xFF800000> : vector<32xf32>
    %167 = vector.multi_reduction <maximumf>, %166, %cst_114 [1] : vector<32x8xf32> to vector<32xf32>
    %168 = vector.shape_cast %167 : vector<32xf32> to vector<32x1xf32>
    %169 = vector.broadcast %168 : vector<32x1xf32> to vector<32x8xf32>
    %170 = arith.subf %166, %169 : vector<32x8xf32>
    %171 = math.exp %170 : vector<32x8xf32>
    %cst_115 = arith.constant dense<0.000000e+00> : vector<32xf32>
    %172 = vector.multi_reduction <add>, %171, %cst_115 [1] : vector<32x8xf32> to vector<32xf32>
    %173 = vector.shape_cast %172 : vector<32xf32> to vector<32x1xf32>
    %174 = tpu.reciprocal %173 {approx = true} : vector<32x1xf32> -> vector<32x1xf32>
    %175 = vector.broadcast %174 : vector<32x1xf32> to vector<32x8xf32>
    %176 = arith.mulf %171, %175 : vector<32x8xf32>
    %177 = arith.truncf %176 : vector<32x8xf32> to vector<32x8xbf16>
    %178 = arith.truncf %160 : vector<8x16xf32> to vector<8x16xbf16>
    %cst_116 = arith.constant dense<0.000000e+00> : vector<32x16xf32>
    %179 = tpu.matmul %177, %178, %cst_116 {dimension_numbers = #tpu.dot_dimension_numbers<[1], [0], [0], [1], [0, 0, 1, 1], [], []>} : vector<32x8xbf16>, vector<8x16xbf16>, vector<32x16xf32> -> vector<32x16xf32>
    %180 = arith.truncf %179 : vector<32x16xf32> to vector<32x16xbf16>
    %cst_117 = arith.constant dense<0.000000e+00> : vector<32x16xf32>
    %181 = tpu.matmul %180, %53, %cst_117 {dimension_numbers = #tpu.dot_dimension_numbers<[1], [0], [0], [1], [0, 0, 1, 1], [], []>} : vector<32x16xbf16>, vector<16x16xbf16>, vector<32x16xf32> -> vector<32x16xf32>
    %182 = arith.addf %39, %181 : vector<32x16xf32>
    %183 = vector.broadcast %55 : vector<1x16xf32> to vector<32x16xf32>
    %184 = arith.addf %182, %183 : vector<32x16xf32>
    %cst_118 = arith.constant dense<0.000000e+00> : vector<32xf32>
    %185 = vector.multi_reduction <add>, %184, %cst_118 [1] : vector<32x16xf32> to vector<32xf32>
    %186 = vector.shape_cast %185 : vector<32xf32> to vector<32x1xf32>
    %cst_119 = arith.constant 1.600000e+01 : f32
    %187 = vector.broadcast %cst_119 : f32 to vector<32x1xf32>
    %188 = arith.divf %186, %187 : vector<32x1xf32>
    %189 = arith.mulf %184, %184 : vector<32x16xf32>
    %cst_120 = arith.constant dense<0.000000e+00> : vector<32xf32>
    %190 = vector.multi_reduction <add>, %189, %cst_120 [1] : vector<32x16xf32> to vector<32xf32>
    %191 = vector.shape_cast %190 : vector<32xf32> to vector<32x1xf32>
    %cst_121 = arith.constant 1.600000e+01 : f32
    %192 = vector.broadcast %cst_121 : f32 to vector<32x1xf32>
    %193 = arith.divf %191, %192 : vector<32x1xf32>
    %194 = arith.mulf %188, %188 : vector<32x1xf32>
    %195 = arith.subf %193, %194 : vector<32x1xf32>
    %cst_122 = arith.constant 0.000000e+00 : f32
    %196 = vector.broadcast %cst_122 : f32 to vector<32x1xf32>
    %197 = arith.maximumf %195, %196 : vector<32x1xf32>
    %198 = vector.broadcast %188 : vector<32x1xf32> to vector<32x16xf32>
    %199 = arith.subf %184, %198 : vector<32x16xf32>
    %cst_123 = arith.constant 9.99999997E-7 : f32
    %200 = vector.broadcast %cst_123 : f32 to vector<32x1xf32>
    %201 = arith.addf %197, %200 : vector<32x1xf32>
    %202 = math.rsqrt %201 : vector<32x1xf32>
    %203 = vector.broadcast %202 : vector<32x1xf32> to vector<32x16xf32>
    %204 = arith.mulf %199, %203 : vector<32x16xf32>
    %205 = vector.extract_strided_slice %43 {offsets = [0, 0], sizes = [1, 16], strides = [1, 1]} : vector<2x16xf32> to vector<1x16xf32>
    %206 = vector.broadcast %205 : vector<1x16xf32> to vector<32x16xf32>
    %207 = arith.mulf %204, %206 : vector<32x16xf32>
    %208 = vector.extract_strided_slice %43 {offsets = [1, 0], sizes = [1, 16], strides = [1, 1]} : vector<2x16xf32> to vector<1x16xf32>
    %209 = vector.broadcast %208 : vector<1x16xf32> to vector<32x16xf32>
    %210 = arith.addf %207, %209 : vector<32x16xf32>
    %211 = arith.truncf %210 : vector<32x16xf32> to vector<32x16xbf16>
    %cst_124 = arith.constant dense<0.000000e+00> : vector<32x32xf32>
    %212 = tpu.matmul %211, %57, %cst_124 {dimension_numbers = #tpu.dot_dimension_numbers<[1], [0], [0], [1], [0, 0, 1, 1], [], []>} : vector<32x16xbf16>, vector<16x32xbf16>, vector<32x32xf32> -> vector<32x32xf32>
    %213 = vector.broadcast %59 : vector<1x32xf32> to vector<32x32xf32>
    %214 = arith.addf %212, %213 : vector<32x32xf32>
    %215 = arith.mulf %214, %214 : vector<32x32xf32>
    %216 = arith.mulf %214, %215 : vector<32x32xf32>
    %cst_125 = arith.constant 4.471500e-02 : f32
    %217 = vector.broadcast %cst_125 : f32 to vector<32x32xf32>
    %218 = arith.mulf %217, %216 : vector<32x32xf32>
    %219 = arith.addf %214, %218 : vector<32x32xf32>
    %cst_126 = arith.constant 0.797884583 : f32
    %220 = vector.broadcast %cst_126 : f32 to vector<32x32xf32>
    %221 = arith.mulf %220, %219 : vector<32x32xf32>
    %222 = math.tanh %221 : vector<32x32xf32>
    %cst_127 = arith.constant 1.000000e+00 : f32
    %223 = vector.broadcast %cst_127 : f32 to vector<32x32xf32>
    %224 = arith.addf %223, %222 : vector<32x32xf32>
    %cst_128 = arith.constant 5.000000e-01 : f32
    %225 = vector.broadcast %cst_128 : f32 to vector<32x32xf32>
    %226 = arith.mulf %225, %224 : vector<32x32xf32>
    %227 = arith.mulf %214, %226 : vector<32x32xf32>
    %228 = arith.truncf %227 : vector<32x32xf32> to vector<32x32xbf16>
    %cst_129 = arith.constant dense<0.000000e+00> : vector<32x16xf32>
    %229 = tpu.matmul %228, %61, %cst_129 {dimension_numbers = #tpu.dot_dimension_numbers<[1], [0], [0], [1], [0, 0, 1, 1], [], []>} : vector<32x32xbf16>, vector<32x16xbf16>, vector<32x16xf32> -> vector<32x16xf32>
    %230 = vector.broadcast %63 : vector<1x16xf32> to vector<32x16xf32>
    %231 = arith.addf %229, %230 : vector<32x16xf32>
    %232 = arith.addf %184, %231 : vector<32x16xf32>
    %c0_130 = arith.constant 0 : index
    %c0_131 = arith.constant 0 : index
    %c0_132 = arith.constant 0 : index
    %233 = vector.load %arg25[%c0_130, %c0_131, %c0_132] : memref<2x2x16xf32, #tpu.memory_space<vmem>>, vector<1x2x16xf32>
    %234 = vector.shape_cast %233 : vector<1x2x16xf32> to vector<2x16xf32>
    %cst_133 = arith.constant dense<0.000000e+00> : vector<32xf32>
    %235 = vector.multi_reduction <add>, %232, %cst_133 [1] : vector<32x16xf32> to vector<32xf32>
    %236 = vector.shape_cast %235 : vector<32xf32> to vector<32x1xf32>
    %cst_134 = arith.constant 1.600000e+01 : f32
    %237 = vector.broadcast %cst_134 : f32 to vector<32x1xf32>
    %238 = arith.divf %236, %237 : vector<32x1xf32>
    %239 = arith.mulf %232, %232 : vector<32x16xf32>
    %cst_135 = arith.constant dense<0.000000e+00> : vector<32xf32>
    %240 = vector.multi_reduction <add>, %239, %cst_135 [1] : vector<32x16xf32> to vector<32xf32>
    %241 = vector.shape_cast %240 : vector<32xf32> to vector<32x1xf32>
    %cst_136 = arith.constant 1.600000e+01 : f32
    %242 = vector.broadcast %cst_136 : f32 to vector<32x1xf32>
    %243 = arith.divf %241, %242 : vector<32x1xf32>
    %244 = arith.mulf %238, %238 : vector<32x1xf32>
    %245 = arith.subf %243, %244 : vector<32x1xf32>
    %cst_137 = arith.constant 0.000000e+00 : f32
    %246 = vector.broadcast %cst_137 : f32 to vector<32x1xf32>
    %247 = arith.maximumf %245, %246 : vector<32x1xf32>
    %248 = vector.broadcast %238 : vector<32x1xf32> to vector<32x16xf32>
    %249 = arith.subf %232, %248 : vector<32x16xf32>
    %cst_138 = arith.constant 9.99999997E-7 : f32
    %250 = vector.broadcast %cst_138 : f32 to vector<32x1xf32>
    %251 = arith.addf %247, %250 : vector<32x1xf32>
    %252 = math.rsqrt %251 : vector<32x1xf32>
    %253 = vector.broadcast %252 : vector<32x1xf32> to vector<32x16xf32>
    %254 = arith.mulf %249, %253 : vector<32x16xf32>
    %255 = vector.extract_strided_slice %234 {offsets = [0, 0], sizes = [1, 16], strides = [1, 1]} : vector<2x16xf32> to vector<1x16xf32>
    %256 = vector.broadcast %255 : vector<1x16xf32> to vector<32x16xf32>
    %257 = arith.mulf %254, %256 : vector<32x16xf32>
    %258 = vector.extract_strided_slice %234 {offsets = [1, 0], sizes = [1, 16], strides = [1, 1]} : vector<2x16xf32> to vector<1x16xf32>
    %259 = vector.broadcast %258 : vector<1x16xf32> to vector<32x16xf32>
    %260 = arith.addf %257, %259 : vector<32x16xf32>
    %261 = arith.truncf %260 : vector<32x16xf32> to vector<32x16xbf16>
    %c0_139 = arith.constant 0 : index
    %c0_140 = arith.constant 0 : index
    %c0_141 = arith.constant 0 : index
    %262 = vector.load %arg26[%c0_139, %c0_140, %c0_141] : memref<2x144x32xbf16, #tpu.memory_space<vmem>>, vector<1x144x32xbf16>
    %263 = vector.shape_cast %262 : vector<1x144x32xbf16> to vector<144x32xbf16>
    %c0_142 = arith.constant 0 : index
    %c0_143 = arith.constant 0 : index
    %c0_144 = arith.constant 0 : index
    %264 = vector.load %arg5[%c0_142, %c0_143, %c0_144] : memref<9x8x32xbf16, #tpu.memory_space<vmem>>, vector<1x8x32xbf16>
    %265 = vector.shape_cast %264 : vector<1x8x32xbf16> to vector<8x32xbf16>
    %cst_145 = arith.constant dense<0.000000e+00> : vector<8x16xf32>
    %266 = tpu.matmul %265, %261, %cst_145 {dimension_numbers = #tpu.dot_dimension_numbers<[1], [0], [0], [1], [0, 0, 1, 1], [], []>} : vector<8x32xbf16>, vector<32x16xbf16>, vector<8x16xf32> -> vector<8x16xf32>
    %267 = vector.extract_strided_slice %263 {offsets = [0, 0], sizes = [16, 32], strides = [1, 1]} : vector<144x32xbf16> to vector<16x32xbf16>
    %268 = arith.truncf %266 : vector<8x16xf32> to vector<8x16xbf16>
    %cst_146 = arith.constant dense<0.000000e+00> : vector<8x32xf32>
    %269 = tpu.matmul %268, %267, %cst_146 {dimension_numbers = #tpu.dot_dimension_numbers<[1], [0], [0], [1], [0, 0, 1, 1], [], []>} : vector<8x16xbf16>, vector<16x32xbf16>, vector<8x32xf32> -> vector<8x32xf32>
    %c1_147 = arith.constant 1 : index
    %c0_148 = arith.constant 0 : index
    %c0_149 = arith.constant 0 : index
    %270 = vector.load %arg5[%c1_147, %c0_148, %c0_149] : memref<9x8x32xbf16, #tpu.memory_space<vmem>>, vector<1x8x32xbf16>
    %271 = vector.shape_cast %270 : vector<1x8x32xbf16> to vector<8x32xbf16>
    %cst_150 = arith.constant dense<0.000000e+00> : vector<8x16xf32>
    %272 = tpu.matmul %271, %261, %cst_150 {dimension_numbers = #tpu.dot_dimension_numbers<[1], [0], [0], [1], [0, 0, 1, 1], [], []>} : vector<8x32xbf16>, vector<32x16xbf16>, vector<8x16xf32> -> vector<8x16xf32>
    %273 = vector.extract_strided_slice %263 {offsets = [16, 0], sizes = [16, 32], strides = [1, 1]} : vector<144x32xbf16> to vector<16x32xbf16>
    %274 = arith.truncf %272 : vector<8x16xf32> to vector<8x16xbf16>
    %cst_151 = arith.constant dense<0.000000e+00> : vector<8x32xf32>
    %275 = tpu.matmul %274, %273, %cst_151 {dimension_numbers = #tpu.dot_dimension_numbers<[1], [0], [0], [1], [0, 0, 1, 1], [], []>} : vector<8x16xbf16>, vector<16x32xbf16>, vector<8x32xf32> -> vector<8x32xf32>
    %276 = arith.addf %269, %275 : vector<8x32xf32>
    %c2_152 = arith.constant 2 : index
    %c0_153 = arith.constant 0 : index
    %c0_154 = arith.constant 0 : index
    %277 = vector.load %arg5[%c2_152, %c0_153, %c0_154] : memref<9x8x32xbf16, #tpu.memory_space<vmem>>, vector<1x8x32xbf16>
    %278 = vector.shape_cast %277 : vector<1x8x32xbf16> to vector<8x32xbf16>
    %cst_155 = arith.constant dense<0.000000e+00> : vector<8x16xf32>
    %279 = tpu.matmul %278, %261, %cst_155 {dimension_numbers = #tpu.dot_dimension_numbers<[1], [0], [0], [1], [0, 0, 1, 1], [], []>} : vector<8x32xbf16>, vector<32x16xbf16>, vector<8x16xf32> -> vector<8x16xf32>
    %280 = vector.extract_strided_slice %263 {offsets = [32, 0], sizes = [16, 32], strides = [1, 1]} : vector<144x32xbf16> to vector<16x32xbf16>
    %281 = arith.truncf %279 : vector<8x16xf32> to vector<8x16xbf16>
    %cst_156 = arith.constant dense<0.000000e+00> : vector<8x32xf32>
    %282 = tpu.matmul %281, %280, %cst_156 {dimension_numbers = #tpu.dot_dimension_numbers<[1], [0], [0], [1], [0, 0, 1, 1], [], []>} : vector<8x16xbf16>, vector<16x32xbf16>, vector<8x32xf32> -> vector<8x32xf32>
    %283 = arith.addf %276, %282 : vector<8x32xf32>
    %c3_157 = arith.constant 3 : index
    %c0_158 = arith.constant 0 : index
    %c0_159 = arith.constant 0 : index
    %284 = vector.load %arg5[%c3_157, %c0_158, %c0_159] : memref<9x8x32xbf16, #tpu.memory_space<vmem>>, vector<1x8x32xbf16>
    %285 = vector.shape_cast %284 : vector<1x8x32xbf16> to vector<8x32xbf16>
    %cst_160 = arith.constant dense<0.000000e+00> : vector<8x16xf32>
    %286 = tpu.matmul %285, %261, %cst_160 {dimension_numbers = #tpu.dot_dimension_numbers<[1], [0], [0], [1], [0, 0, 1, 1], [], []>} : vector<8x32xbf16>, vector<32x16xbf16>, vector<8x16xf32> -> vector<8x16xf32>
    %287 = vector.extract_strided_slice %263 {offsets = [48, 0], sizes = [16, 32], strides = [1, 1]} : vector<144x32xbf16> to vector<16x32xbf16>
    %288 = arith.truncf %286 : vector<8x16xf32> to vector<8x16xbf16>
    %cst_161 = arith.constant dense<0.000000e+00> : vector<8x32xf32>
    %289 = tpu.matmul %288, %287, %cst_161 {dimension_numbers = #tpu.dot_dimension_numbers<[1], [0], [0], [1], [0, 0, 1, 1], [], []>} : vector<8x16xbf16>, vector<16x32xbf16>, vector<8x32xf32> -> vector<8x32xf32>
    %290 = arith.addf %283, %289 : vector<8x32xf32>
    %c4 = arith.constant 4 : index
    %c0_162 = arith.constant 0 : index
    %c0_163 = arith.constant 0 : index
    %291 = vector.load %arg5[%c4, %c0_162, %c0_163] : memref<9x8x32xbf16, #tpu.memory_space<vmem>>, vector<1x8x32xbf16>
    %292 = vector.shape_cast %291 : vector<1x8x32xbf16> to vector<8x32xbf16>
    %cst_164 = arith.constant dense<0.000000e+00> : vector<8x16xf32>
    %293 = tpu.matmul %292, %261, %cst_164 {dimension_numbers = #tpu.dot_dimension_numbers<[1], [0], [0], [1], [0, 0, 1, 1], [], []>} : vector<8x32xbf16>, vector<32x16xbf16>, vector<8x16xf32> -> vector<8x16xf32>
    %294 = vector.extract_strided_slice %263 {offsets = [64, 0], sizes = [16, 32], strides = [1, 1]} : vector<144x32xbf16> to vector<16x32xbf16>
    %295 = arith.truncf %293 : vector<8x16xf32> to vector<8x16xbf16>
    %cst_165 = arith.constant dense<0.000000e+00> : vector<8x32xf32>
    %296 = tpu.matmul %295, %294, %cst_165 {dimension_numbers = #tpu.dot_dimension_numbers<[1], [0], [0], [1], [0, 0, 1, 1], [], []>} : vector<8x16xbf16>, vector<16x32xbf16>, vector<8x32xf32> -> vector<8x32xf32>
    %297 = arith.addf %290, %296 : vector<8x32xf32>
    %c5 = arith.constant 5 : index
    %c0_166 = arith.constant 0 : index
    %c0_167 = arith.constant 0 : index
    %298 = vector.load %arg5[%c5, %c0_166, %c0_167] : memref<9x8x32xbf16, #tpu.memory_space<vmem>>, vector<1x8x32xbf16>
    %299 = vector.shape_cast %298 : vector<1x8x32xbf16> to vector<8x32xbf16>
    %cst_168 = arith.constant dense<0.000000e+00> : vector<8x16xf32>
    %300 = tpu.matmul %299, %261, %cst_168 {dimension_numbers = #tpu.dot_dimension_numbers<[1], [0], [0], [1], [0, 0, 1, 1], [], []>} : vector<8x32xbf16>, vector<32x16xbf16>, vector<8x16xf32> -> vector<8x16xf32>
    %301 = vector.extract_strided_slice %263 {offsets = [80, 0], sizes = [16, 32], strides = [1, 1]} : vector<144x32xbf16> to vector<16x32xbf16>
    %302 = arith.truncf %300 : vector<8x16xf32> to vector<8x16xbf16>
    %cst_169 = arith.constant dense<0.000000e+00> : vector<8x32xf32>
    %303 = tpu.matmul %302, %301, %cst_169 {dimension_numbers = #tpu.dot_dimension_numbers<[1], [0], [0], [1], [0, 0, 1, 1], [], []>} : vector<8x16xbf16>, vector<16x32xbf16>, vector<8x32xf32> -> vector<8x32xf32>
    %304 = arith.addf %297, %303 : vector<8x32xf32>
    %c6 = arith.constant 6 : index
    %c0_170 = arith.constant 0 : index
    %c0_171 = arith.constant 0 : index
    %305 = vector.load %arg5[%c6, %c0_170, %c0_171] : memref<9x8x32xbf16, #tpu.memory_space<vmem>>, vector<1x8x32xbf16>
    %306 = vector.shape_cast %305 : vector<1x8x32xbf16> to vector<8x32xbf16>
    %cst_172 = arith.constant dense<0.000000e+00> : vector<8x16xf32>
    %307 = tpu.matmul %306, %261, %cst_172 {dimension_numbers = #tpu.dot_dimension_numbers<[1], [0], [0], [1], [0, 0, 1, 1], [], []>} : vector<8x32xbf16>, vector<32x16xbf16>, vector<8x16xf32> -> vector<8x16xf32>
    %308 = vector.extract_strided_slice %263 {offsets = [96, 0], sizes = [16, 32], strides = [1, 1]} : vector<144x32xbf16> to vector<16x32xbf16>
    %309 = arith.truncf %307 : vector<8x16xf32> to vector<8x16xbf16>
    %cst_173 = arith.constant dense<0.000000e+00> : vector<8x32xf32>
    %310 = tpu.matmul %309, %308, %cst_173 {dimension_numbers = #tpu.dot_dimension_numbers<[1], [0], [0], [1], [0, 0, 1, 1], [], []>} : vector<8x16xbf16>, vector<16x32xbf16>, vector<8x32xf32> -> vector<8x32xf32>
    %311 = arith.addf %304, %310 : vector<8x32xf32>
    %c7 = arith.constant 7 : index
    %c0_174 = arith.constant 0 : index
    %c0_175 = arith.constant 0 : index
    %312 = vector.load %arg5[%c7, %c0_174, %c0_175] : memref<9x8x32xbf16, #tpu.memory_space<vmem>>, vector<1x8x32xbf16>
    %313 = vector.shape_cast %312 : vector<1x8x32xbf16> to vector<8x32xbf16>
    %cst_176 = arith.constant dense<0.000000e+00> : vector<8x16xf32>
    %314 = tpu.matmul %313, %261, %cst_176 {dimension_numbers = #tpu.dot_dimension_numbers<[1], [0], [0], [1], [0, 0, 1, 1], [], []>} : vector<8x32xbf16>, vector<32x16xbf16>, vector<8x16xf32> -> vector<8x16xf32>
    %315 = vector.extract_strided_slice %263 {offsets = [112, 0], sizes = [16, 32], strides = [1, 1]} : vector<144x32xbf16> to vector<16x32xbf16>
    %316 = arith.truncf %314 : vector<8x16xf32> to vector<8x16xbf16>
    %cst_177 = arith.constant dense<0.000000e+00> : vector<8x32xf32>
    %317 = tpu.matmul %316, %315, %cst_177 {dimension_numbers = #tpu.dot_dimension_numbers<[1], [0], [0], [1], [0, 0, 1, 1], [], []>} : vector<8x16xbf16>, vector<16x32xbf16>, vector<8x32xf32> -> vector<8x32xf32>
    %318 = arith.addf %311, %317 : vector<8x32xf32>
    %c8 = arith.constant 8 : index
    %c0_178 = arith.constant 0 : index
    %c0_179 = arith.constant 0 : index
    %319 = vector.load %arg5[%c8, %c0_178, %c0_179] : memref<9x8x32xbf16, #tpu.memory_space<vmem>>, vector<1x8x32xbf16>
    %320 = vector.shape_cast %319 : vector<1x8x32xbf16> to vector<8x32xbf16>
    %cst_180 = arith.constant dense<0.000000e+00> : vector<8x16xf32>
    %321 = tpu.matmul %320, %261, %cst_180 {dimension_numbers = #tpu.dot_dimension_numbers<[1], [0], [0], [1], [0, 0, 1, 1], [], []>} : vector<8x32xbf16>, vector<32x16xbf16>, vector<8x16xf32> -> vector<8x16xf32>
    %322 = vector.extract_strided_slice %263 {offsets = [128, 0], sizes = [16, 32], strides = [1, 1]} : vector<144x32xbf16> to vector<16x32xbf16>
    %323 = arith.truncf %321 : vector<8x16xf32> to vector<8x16xbf16>
    %cst_181 = arith.constant dense<0.000000e+00> : vector<8x32xf32>
    %324 = tpu.matmul %323, %322, %cst_181 {dimension_numbers = #tpu.dot_dimension_numbers<[1], [0], [0], [1], [0, 0, 1, 1], [], []>} : vector<8x16xbf16>, vector<16x32xbf16>, vector<8x32xf32> -> vector<8x32xf32>
    %325 = arith.addf %318, %324 : vector<8x32xf32>
    %c0_182 = arith.constant 0 : index
    %c0_183 = arith.constant 0 : index
    %c0_184 = arith.constant 0 : index
    %326 = vector.load %arg27[%c0_182, %c0_183, %c0_184] : memref<2x1x32xf32, #tpu.memory_space<vmem>>, vector<1x1x32xf32>
    %327 = vector.shape_cast %326 : vector<1x1x32xf32> to vector<1x32xf32>
    %328 = vector.broadcast %327 : vector<1x32xf32> to vector<8x32xf32>
    %329 = arith.addf %325, %328 : vector<8x32xf32>
    %c0_185 = arith.constant 0 : index
    %c0_186 = arith.constant 0 : index
    %c0_187 = arith.constant 0 : index
    %330 = vector.load %arg28[%c0_185, %c0_186, %c0_187] : memref<2x2x32xf32, #tpu.memory_space<vmem>>, vector<1x2x32xf32>
    %331 = vector.shape_cast %330 : vector<1x2x32xf32> to vector<2x32xf32>
    %cst_188 = arith.constant dense<0.000000e+00> : vector<8xf32>
    %332 = vector.multi_reduction <add>, %329, %cst_188 [1] : vector<8x32xf32> to vector<8xf32>
    %333 = vector.shape_cast %332 : vector<8xf32> to vector<8x1xf32>
    %cst_189 = arith.constant 3.200000e+01 : f32
    %334 = vector.broadcast %cst_189 : f32 to vector<8x1xf32>
    %335 = arith.divf %333, %334 : vector<8x1xf32>
    %336 = arith.mulf %329, %329 : vector<8x32xf32>
    %cst_190 = arith.constant dense<0.000000e+00> : vector<8xf32>
    %337 = vector.multi_reduction <add>, %336, %cst_190 [1] : vector<8x32xf32> to vector<8xf32>
    %338 = vector.shape_cast %337 : vector<8xf32> to vector<8x1xf32>
    %cst_191 = arith.constant 3.200000e+01 : f32
    %339 = vector.broadcast %cst_191 : f32 to vector<8x1xf32>
    %340 = arith.divf %338, %339 : vector<8x1xf32>
    %341 = arith.mulf %335, %335 : vector<8x1xf32>
    %342 = arith.subf %340, %341 : vector<8x1xf32>
    %cst_192 = arith.constant 0.000000e+00 : f32
    %343 = vector.broadcast %cst_192 : f32 to vector<8x1xf32>
    %344 = arith.maximumf %342, %343 : vector<8x1xf32>
    %345 = vector.broadcast %335 : vector<8x1xf32> to vector<8x32xf32>
    %346 = arith.subf %329, %345 : vector<8x32xf32>
    %cst_193 = arith.constant 9.99999997E-7 : f32
    %347 = vector.broadcast %cst_193 : f32 to vector<8x1xf32>
    %348 = arith.addf %344, %347 : vector<8x1xf32>
    %349 = math.rsqrt %348 : vector<8x1xf32>
    %350 = vector.broadcast %349 : vector<8x1xf32> to vector<8x32xf32>
    %351 = arith.mulf %346, %350 : vector<8x32xf32>
    %352 = vector.extract_strided_slice %331 {offsets = [0, 0], sizes = [1, 32], strides = [1, 1]} : vector<2x32xf32> to vector<1x32xf32>
    %353 = vector.broadcast %352 : vector<1x32xf32> to vector<8x32xf32>
    %354 = arith.mulf %351, %353 : vector<8x32xf32>
    %355 = vector.extract_strided_slice %331 {offsets = [1, 0], sizes = [1, 32], strides = [1, 1]} : vector<2x32xf32> to vector<1x32xf32>
    %356 = vector.broadcast %355 : vector<1x32xf32> to vector<8x32xf32>
    %357 = arith.addf %354, %356 : vector<8x32xf32>
    %c0_194 = arith.constant 0 : index
    %c0_195 = arith.constant 0 : index
    %c0_196 = arith.constant 0 : index
    %c0_197 = arith.constant 0 : index
    %358 = vector.load %arg29[%c0_194, %c0_195, %c0_196, %c0_197] : memref<2x1x2x32xf32, #tpu.memory_space<vmem>>, vector<1x1x2x32xf32>
    %359 = vector.shape_cast %358 : vector<1x1x2x32xf32> to vector<2x32xf32>
    %c0_198 = arith.constant 0 : index
    %c0_199 = arith.constant 0 : index
    %c0_200 = arith.constant 0 : index
    %c0_201 = arith.constant 0 : index
    %360 = vector.load %arg34[%c0_198, %c0_199, %c0_200, %c0_201] : memref<2x1x2x32xf32, #tpu.memory_space<vmem>>, vector<1x1x2x32xf32>
    %361 = vector.shape_cast %360 : vector<1x1x2x32xf32> to vector<2x32xf32>
    %c0_202 = arith.constant 0 : index
    %c0_203 = arith.constant 0 : index
    %c0_204 = arith.constant 0 : index
    %c0_205 = arith.constant 0 : index
    %362 = vector.load %arg30[%c0_202, %c0_203, %c0_204, %c0_205] : memref<2x1x32x96xbf16, #tpu.memory_space<vmem>>, vector<1x1x32x96xbf16>
    %363 = vector.shape_cast %362 : vector<1x1x32x96xbf16> to vector<32x96xbf16>
    %c0_206 = arith.constant 0 : index
    %c0_207 = arith.constant 0 : index
    %c0_208 = arith.constant 0 : index
    %c0_209 = arith.constant 0 : index
    %364 = vector.load %arg31[%c0_206, %c0_207, %c0_208, %c0_209] : memref<2x1x1x96xf32, #tpu.memory_space<vmem>>, vector<1x1x1x96xf32>
    %365 = vector.shape_cast %364 : vector<1x1x1x96xf32> to vector<1x96xf32>
    %c0_210 = arith.constant 0 : index
    %c0_211 = arith.constant 0 : index
    %c0_212 = arith.constant 0 : index
    %c0_213 = arith.constant 0 : index
    %366 = vector.load %arg32[%c0_210, %c0_211, %c0_212, %c0_213] : memref<2x1x32x32xbf16, #tpu.memory_space<vmem>>, vector<1x1x32x32xbf16>
    %367 = vector.shape_cast %366 : vector<1x1x32x32xbf16> to vector<32x32xbf16>
    %c0_214 = arith.constant 0 : index
    %c0_215 = arith.constant 0 : index
    %c0_216 = arith.constant 0 : index
    %c0_217 = arith.constant 0 : index
    %368 = vector.load %arg33[%c0_214, %c0_215, %c0_216, %c0_217] : memref<2x1x1x32xf32, #tpu.memory_space<vmem>>, vector<1x1x1x32xf32>
    %369 = vector.shape_cast %368 : vector<1x1x1x32xf32> to vector<1x32xf32>
    %c0_218 = arith.constant 0 : index
    %c0_219 = arith.constant 0 : index
    %c0_220 = arith.constant 0 : index
    %c0_221 = arith.constant 0 : index
    %370 = vector.load %arg35[%c0_218, %c0_219, %c0_220, %c0_221] : memref<2x1x32x64xbf16, #tpu.memory_space<vmem>>, vector<1x1x32x64xbf16>
    %371 = vector.shape_cast %370 : vector<1x1x32x64xbf16> to vector<32x64xbf16>
    %c0_222 = arith.constant 0 : index
    %c0_223 = arith.constant 0 : index
    %c0_224 = arith.constant 0 : index
    %c0_225 = arith.constant 0 : index
    %372 = vector.load %arg36[%c0_222, %c0_223, %c0_224, %c0_225] : memref<2x1x1x64xf32, #tpu.memory_space<vmem>>, vector<1x1x1x64xf32>
    %373 = vector.shape_cast %372 : vector<1x1x1x64xf32> to vector<1x64xf32>
    %c0_226 = arith.constant 0 : index
    %c0_227 = arith.constant 0 : index
    %c0_228 = arith.constant 0 : index
    %c0_229 = arith.constant 0 : index
    %374 = vector.load %arg37[%c0_226, %c0_227, %c0_228, %c0_229] : memref<2x1x64x32xbf16, #tpu.memory_space<vmem>>, vector<1x1x64x32xbf16>
    %375 = vector.shape_cast %374 : vector<1x1x64x32xbf16> to vector<64x32xbf16>
    %c0_230 = arith.constant 0 : index
    %c0_231 = arith.constant 0 : index
    %c0_232 = arith.constant 0 : index
    %c0_233 = arith.constant 0 : index
    %376 = vector.load %arg38[%c0_230, %c0_231, %c0_232, %c0_233] : memref<2x1x1x32xf32, #tpu.memory_space<vmem>>, vector<1x1x1x32xf32>
    %377 = vector.shape_cast %376 : vector<1x1x1x32xf32> to vector<1x32xf32>
    %cst_234 = arith.constant dense<0.000000e+00> : vector<8xf32>
    %378 = vector.multi_reduction <add>, %357, %cst_234 [1] : vector<8x32xf32> to vector<8xf32>
    %379 = vector.shape_cast %378 : vector<8xf32> to vector<8x1xf32>
    %cst_235 = arith.constant 3.200000e+01 : f32
    %380 = vector.broadcast %cst_235 : f32 to vector<8x1xf32>
    %381 = arith.divf %379, %380 : vector<8x1xf32>
    %382 = arith.mulf %357, %357 : vector<8x32xf32>
    %cst_236 = arith.constant dense<0.000000e+00> : vector<8xf32>
    %383 = vector.multi_reduction <add>, %382, %cst_236 [1] : vector<8x32xf32> to vector<8xf32>
    %384 = vector.shape_cast %383 : vector<8xf32> to vector<8x1xf32>
    %cst_237 = arith.constant 3.200000e+01 : f32
    %385 = vector.broadcast %cst_237 : f32 to vector<8x1xf32>
    %386 = arith.divf %384, %385 : vector<8x1xf32>
    %387 = arith.mulf %381, %381 : vector<8x1xf32>
    %388 = arith.subf %386, %387 : vector<8x1xf32>
    %cst_238 = arith.constant 0.000000e+00 : f32
    %389 = vector.broadcast %cst_238 : f32 to vector<8x1xf32>
    %390 = arith.maximumf %388, %389 : vector<8x1xf32>
    %391 = vector.broadcast %381 : vector<8x1xf32> to vector<8x32xf32>
    %392 = arith.subf %357, %391 : vector<8x32xf32>
    %cst_239 = arith.constant 9.99999997E-7 : f32
    %393 = vector.broadcast %cst_239 : f32 to vector<8x1xf32>
    %394 = arith.addf %390, %393 : vector<8x1xf32>
    %395 = math.rsqrt %394 : vector<8x1xf32>
    %396 = vector.broadcast %395 : vector<8x1xf32> to vector<8x32xf32>
    %397 = arith.mulf %392, %396 : vector<8x32xf32>
    %398 = vector.extract_strided_slice %359 {offsets = [0, 0], sizes = [1, 32], strides = [1, 1]} : vector<2x32xf32> to vector<1x32xf32>
    %399 = vector.broadcast %398 : vector<1x32xf32> to vector<8x32xf32>
    %400 = arith.mulf %397, %399 : vector<8x32xf32>
    %401 = vector.extract_strided_slice %359 {offsets = [1, 0], sizes = [1, 32], strides = [1, 1]} : vector<2x32xf32> to vector<1x32xf32>
    %402 = vector.broadcast %401 : vector<1x32xf32> to vector<8x32xf32>
    %403 = arith.addf %400, %402 : vector<8x32xf32>
    %404 = arith.truncf %403 : vector<8x32xf32> to vector<8x32xbf16>
    %cst_240 = arith.constant dense<0.000000e+00> : vector<8x96xf32>
    %405 = tpu.matmul %404, %363, %cst_240 {dimension_numbers = #tpu.dot_dimension_numbers<[1], [0], [0], [1], [0, 0, 1, 1], [], []>} : vector<8x32xbf16>, vector<32x96xbf16>, vector<8x96xf32> -> vector<8x96xf32>
    %406 = vector.broadcast %365 : vector<1x96xf32> to vector<8x96xf32>
    %407 = arith.addf %405, %406 : vector<8x96xf32>
    %408 = vector.extract_strided_slice %407 {offsets = [0, 0], sizes = [8, 32], strides = [1, 1]} : vector<8x96xf32> to vector<8x32xf32>
    %409 = vector.extract_strided_slice %407 {offsets = [0, 32], sizes = [8, 32], strides = [1, 1]} : vector<8x96xf32> to vector<8x32xf32>
    %410 = vector.extract_strided_slice %407 {offsets = [0, 64], sizes = [8, 32], strides = [1, 1]} : vector<8x96xf32> to vector<8x32xf32>
    %411 = vector.extract_strided_slice %408 {offsets = [0, 0], sizes = [8, 16], strides = [1, 1]} : vector<8x32xf32> to vector<8x16xf32>
    %412 = vector.extract_strided_slice %409 {offsets = [0, 0], sizes = [8, 16], strides = [1, 1]} : vector<8x32xf32> to vector<8x16xf32>
    %413 = arith.truncf %411 : vector<8x16xf32> to vector<8x16xbf16>
    %414 = arith.truncf %412 : vector<8x16xf32> to vector<8x16xbf16>
    %cst_241 = arith.constant dense<0.000000e+00> : vector<8x8xf32>
    %415 = tpu.matmul %413, %414, %cst_241 {dimension_numbers = #tpu.dot_dimension_numbers<[1], [1], [0], [0], [0, 0, 1, 0], [], []>} : vector<8x16xbf16>, vector<8x16xbf16>, vector<8x8xf32> -> vector<8x8xf32>
    %cst_242 = arith.constant 2.500000e-01 : f32
    %416 = vector.broadcast %cst_242 : f32 to vector<8x8xf32>
    %417 = arith.mulf %415, %416 : vector<8x8xf32>
    %418 = arith.addf %417, %1 : vector<8x8xf32>
    %cst_243 = arith.constant dense<0xFF800000> : vector<8xf32>
    %419 = vector.multi_reduction <maximumf>, %418, %cst_243 [1] : vector<8x8xf32> to vector<8xf32>
    %420 = vector.shape_cast %419 : vector<8xf32> to vector<8x1xf32>
    %421 = vector.broadcast %420 : vector<8x1xf32> to vector<8x8xf32>
    %422 = arith.subf %418, %421 : vector<8x8xf32>
    %423 = math.exp %422 : vector<8x8xf32>
    %cst_244 = arith.constant dense<0.000000e+00> : vector<8xf32>
    %424 = vector.multi_reduction <add>, %423, %cst_244 [1] : vector<8x8xf32> to vector<8xf32>
    %425 = vector.shape_cast %424 : vector<8xf32> to vector<8x1xf32>
    %426 = tpu.reciprocal %425 {approx = true} : vector<8x1xf32> -> vector<8x1xf32>
    %427 = vector.broadcast %426 : vector<8x1xf32> to vector<8x8xf32>
    %428 = arith.mulf %423, %427 : vector<8x8xf32>
    %429 = vector.extract_strided_slice %410 {offsets = [0, 0], sizes = [8, 16], strides = [1, 1]} : vector<8x32xf32> to vector<8x16xf32>
    %430 = arith.truncf %428 : vector<8x8xf32> to vector<8x8xbf16>
    %431 = arith.truncf %429 : vector<8x16xf32> to vector<8x16xbf16>
    %cst_245 = arith.constant dense<0.000000e+00> : vector<8x16xf32>
    %432 = tpu.matmul %430, %431, %cst_245 {dimension_numbers = #tpu.dot_dimension_numbers<[1], [0], [0], [1], [0, 0, 1, 1], [], []>} : vector<8x8xbf16>, vector<8x16xbf16>, vector<8x16xf32> -> vector<8x16xf32>
    %433 = vector.extract_strided_slice %367 {offsets = [0, 0], sizes = [16, 32], strides = [1, 1]} : vector<32x32xbf16> to vector<16x32xbf16>
    %434 = arith.truncf %432 : vector<8x16xf32> to vector<8x16xbf16>
    %cst_246 = arith.constant dense<0.000000e+00> : vector<8x32xf32>
    %435 = tpu.matmul %434, %433, %cst_246 {dimension_numbers = #tpu.dot_dimension_numbers<[1], [0], [0], [1], [0, 0, 1, 1], [], []>} : vector<8x16xbf16>, vector<16x32xbf16>, vector<8x32xf32> -> vector<8x32xf32>
    %436 = vector.extract_strided_slice %408 {offsets = [0, 16], sizes = [8, 16], strides = [1, 1]} : vector<8x32xf32> to vector<8x16xf32>
    %437 = vector.extract_strided_slice %409 {offsets = [0, 16], sizes = [8, 16], strides = [1, 1]} : vector<8x32xf32> to vector<8x16xf32>
    %438 = arith.truncf %436 : vector<8x16xf32> to vector<8x16xbf16>
    %439 = arith.truncf %437 : vector<8x16xf32> to vector<8x16xbf16>
    %cst_247 = arith.constant dense<0.000000e+00> : vector<8x8xf32>
    %440 = tpu.matmul %438, %439, %cst_247 {dimension_numbers = #tpu.dot_dimension_numbers<[1], [1], [0], [0], [0, 0, 1, 0], [], []>} : vector<8x16xbf16>, vector<8x16xbf16>, vector<8x8xf32> -> vector<8x8xf32>
    %cst_248 = arith.constant 2.500000e-01 : f32
    %441 = vector.broadcast %cst_248 : f32 to vector<8x8xf32>
    %442 = arith.mulf %440, %441 : vector<8x8xf32>
    %443 = arith.addf %442, %1 : vector<8x8xf32>
    %cst_249 = arith.constant dense<0xFF800000> : vector<8xf32>
    %444 = vector.multi_reduction <maximumf>, %443, %cst_249 [1] : vector<8x8xf32> to vector<8xf32>
    %445 = vector.shape_cast %444 : vector<8xf32> to vector<8x1xf32>
    %446 = vector.broadcast %445 : vector<8x1xf32> to vector<8x8xf32>
    %447 = arith.subf %443, %446 : vector<8x8xf32>
    %448 = math.exp %447 : vector<8x8xf32>
    %cst_250 = arith.constant dense<0.000000e+00> : vector<8xf32>
    %449 = vector.multi_reduction <add>, %448, %cst_250 [1] : vector<8x8xf32> to vector<8xf32>
    %450 = vector.shape_cast %449 : vector<8xf32> to vector<8x1xf32>
    %451 = tpu.reciprocal %450 {approx = true} : vector<8x1xf32> -> vector<8x1xf32>
    %452 = vector.broadcast %451 : vector<8x1xf32> to vector<8x8xf32>
    %453 = arith.mulf %448, %452 : vector<8x8xf32>
    %454 = vector.extract_strided_slice %410 {offsets = [0, 16], sizes = [8, 16], strides = [1, 1]} : vector<8x32xf32> to vector<8x16xf32>
    %455 = arith.truncf %453 : vector<8x8xf32> to vector<8x8xbf16>
    %456 = arith.truncf %454 : vector<8x16xf32> to vector<8x16xbf16>
    %cst_251 = arith.constant dense<0.000000e+00> : vector<8x16xf32>
    %457 = tpu.matmul %455, %456, %cst_251 {dimension_numbers = #tpu.dot_dimension_numbers<[1], [0], [0], [1], [0, 0, 1, 1], [], []>} : vector<8x8xbf16>, vector<8x16xbf16>, vector<8x16xf32> -> vector<8x16xf32>
    %458 = vector.extract_strided_slice %367 {offsets = [16, 0], sizes = [16, 32], strides = [1, 1]} : vector<32x32xbf16> to vector<16x32xbf16>
    %459 = arith.truncf %457 : vector<8x16xf32> to vector<8x16xbf16>
    %cst_252 = arith.constant dense<0.000000e+00> : vector<8x32xf32>
    %460 = tpu.matmul %459, %458, %cst_252 {dimension_numbers = #tpu.dot_dimension_numbers<[1], [0], [0], [1], [0, 0, 1, 1], [], []>} : vector<8x16xbf16>, vector<16x32xbf16>, vector<8x32xf32> -> vector<8x32xf32>
    %461 = arith.addf %435, %460 : vector<8x32xf32>
    %462 = arith.addf %357, %461 : vector<8x32xf32>
    %463 = vector.broadcast %369 : vector<1x32xf32> to vector<8x32xf32>
    %464 = arith.addf %462, %463 : vector<8x32xf32>
    %cst_253 = arith.constant dense<0.000000e+00> : vector<8xf32>
    %465 = vector.multi_reduction <add>, %464, %cst_253 [1] : vector<8x32xf32> to vector<8xf32>
    %466 = vector.shape_cast %465 : vector<8xf32> to vector<8x1xf32>
    %cst_254 = arith.constant 3.200000e+01 : f32
    %467 = vector.broadcast %cst_254 : f32 to vector<8x1xf32>
    %468 = arith.divf %466, %467 : vector<8x1xf32>
    %469 = arith.mulf %464, %464 : vector<8x32xf32>
    %cst_255 = arith.constant dense<0.000000e+00> : vector<8xf32>
    %470 = vector.multi_reduction <add>, %469, %cst_255 [1] : vector<8x32xf32> to vector<8xf32>
    %471 = vector.shape_cast %470 : vector<8xf32> to vector<8x1xf32>
    %cst_256 = arith.constant 3.200000e+01 : f32
    %472 = vector.broadcast %cst_256 : f32 to vector<8x1xf32>
    %473 = arith.divf %471, %472 : vector<8x1xf32>
    %474 = arith.mulf %468, %468 : vector<8x1xf32>
    %475 = arith.subf %473, %474 : vector<8x1xf32>
    %cst_257 = arith.constant 0.000000e+00 : f32
    %476 = vector.broadcast %cst_257 : f32 to vector<8x1xf32>
    %477 = arith.maximumf %475, %476 : vector<8x1xf32>
    %478 = vector.broadcast %468 : vector<8x1xf32> to vector<8x32xf32>
    %479 = arith.subf %464, %478 : vector<8x32xf32>
    %cst_258 = arith.constant 9.99999997E-7 : f32
    %480 = vector.broadcast %cst_258 : f32 to vector<8x1xf32>
    %481 = arith.addf %477, %480 : vector<8x1xf32>
    %482 = math.rsqrt %481 : vector<8x1xf32>
    %483 = vector.broadcast %482 : vector<8x1xf32> to vector<8x32xf32>
    %484 = arith.mulf %479, %483 : vector<8x32xf32>
    %485 = vector.extract_strided_slice %361 {offsets = [0, 0], sizes = [1, 32], strides = [1, 1]} : vector<2x32xf32> to vector<1x32xf32>
    %486 = vector.broadcast %485 : vector<1x32xf32> to vector<8x32xf32>
    %487 = arith.mulf %484, %486 : vector<8x32xf32>
    %488 = vector.extract_strided_slice %361 {offsets = [1, 0], sizes = [1, 32], strides = [1, 1]} : vector<2x32xf32> to vector<1x32xf32>
    %489 = vector.broadcast %488 : vector<1x32xf32> to vector<8x32xf32>
    %490 = arith.addf %487, %489 : vector<8x32xf32>
    %491 = arith.truncf %490 : vector<8x32xf32> to vector<8x32xbf16>
    %cst_259 = arith.constant dense<0.000000e+00> : vector<8x64xf32>
    %492 = tpu.matmul %491, %371, %cst_259 {dimension_numbers = #tpu.dot_dimension_numbers<[1], [0], [0], [1], [0, 0, 1, 1], [], []>} : vector<8x32xbf16>, vector<32x64xbf16>, vector<8x64xf32> -> vector<8x64xf32>
    %493 = vector.broadcast %373 : vector<1x64xf32> to vector<8x64xf32>
    %494 = arith.addf %492, %493 : vector<8x64xf32>
    %495 = arith.mulf %494, %494 : vector<8x64xf32>
    %496 = arith.mulf %494, %495 : vector<8x64xf32>
    %cst_260 = arith.constant 4.471500e-02 : f32
    %497 = vector.broadcast %cst_260 : f32 to vector<8x64xf32>
    %498 = arith.mulf %497, %496 : vector<8x64xf32>
    %499 = arith.addf %494, %498 : vector<8x64xf32>
    %cst_261 = arith.constant 0.797884583 : f32
    %500 = vector.broadcast %cst_261 : f32 to vector<8x64xf32>
    %501 = arith.mulf %500, %499 : vector<8x64xf32>
    %502 = math.tanh %501 : vector<8x64xf32>
    %cst_262 = arith.constant 1.000000e+00 : f32
    %503 = vector.broadcast %cst_262 : f32 to vector<8x64xf32>
    %504 = arith.addf %503, %502 : vector<8x64xf32>
    %cst_263 = arith.constant 5.000000e-01 : f32
    %505 = vector.broadcast %cst_263 : f32 to vector<8x64xf32>
    %506 = arith.mulf %505, %504 : vector<8x64xf32>
    %507 = arith.mulf %494, %506 : vector<8x64xf32>
    %508 = arith.truncf %507 : vector<8x64xf32> to vector<8x64xbf16>
    %cst_264 = arith.constant dense<0.000000e+00> : vector<8x32xf32>
    %509 = tpu.matmul %508, %375, %cst_264 {dimension_numbers = #tpu.dot_dimension_numbers<[1], [0], [0], [1], [0, 0, 1, 1], [], []>} : vector<8x64xbf16>, vector<64x32xbf16>, vector<8x32xf32> -> vector<8x32xf32>
    %510 = vector.broadcast %377 : vector<1x32xf32> to vector<8x32xf32>
    %511 = arith.addf %509, %510 : vector<8x32xf32>
    %512 = arith.addf %464, %511 : vector<8x32xf32>
    %c0_265 = arith.constant 0 : index
    %c0_266 = arith.constant 0 : index
    %c0_267 = arith.constant 0 : index
    %513 = vector.load %arg39[%c0_265, %c0_266, %c0_267] : memref<2x2x32xf32, #tpu.memory_space<vmem>>, vector<1x2x32xf32>
    %514 = vector.shape_cast %513 : vector<1x2x32xf32> to vector<2x32xf32>
    %cst_268 = arith.constant dense<0.000000e+00> : vector<8xf32>
    %515 = vector.multi_reduction <add>, %512, %cst_268 [1] : vector<8x32xf32> to vector<8xf32>
    %516 = vector.shape_cast %515 : vector<8xf32> to vector<8x1xf32>
    %cst_269 = arith.constant 3.200000e+01 : f32
    %517 = vector.broadcast %cst_269 : f32 to vector<8x1xf32>
    %518 = arith.divf %516, %517 : vector<8x1xf32>
    %519 = arith.mulf %512, %512 : vector<8x32xf32>
    %cst_270 = arith.constant dense<0.000000e+00> : vector<8xf32>
    %520 = vector.multi_reduction <add>, %519, %cst_270 [1] : vector<8x32xf32> to vector<8xf32>
    %521 = vector.shape_cast %520 : vector<8xf32> to vector<8x1xf32>
    %cst_271 = arith.constant 3.200000e+01 : f32
    %522 = vector.broadcast %cst_271 : f32 to vector<8x1xf32>
    %523 = arith.divf %521, %522 : vector<8x1xf32>
    %524 = arith.mulf %518, %518 : vector<8x1xf32>
    %525 = arith.subf %523, %524 : vector<8x1xf32>
    %cst_272 = arith.constant 0.000000e+00 : f32
    %526 = vector.broadcast %cst_272 : f32 to vector<8x1xf32>
    %527 = arith.maximumf %525, %526 : vector<8x1xf32>
    %528 = vector.broadcast %518 : vector<8x1xf32> to vector<8x32xf32>
    %529 = arith.subf %512, %528 : vector<8x32xf32>
    %cst_273 = arith.constant 9.99999997E-7 : f32
    %530 = vector.broadcast %cst_273 : f32 to vector<8x1xf32>
    %531 = arith.addf %527, %530 : vector<8x1xf32>
    %532 = math.rsqrt %531 : vector<8x1xf32>
    %533 = vector.broadcast %532 : vector<8x1xf32> to vector<8x32xf32>
    %534 = arith.mulf %529, %533 : vector<8x32xf32>
    %535 = vector.extract_strided_slice %514 {offsets = [0, 0], sizes = [1, 32], strides = [1, 1]} : vector<2x32xf32> to vector<1x32xf32>
    %536 = vector.broadcast %535 : vector<1x32xf32> to vector<8x32xf32>
    %537 = arith.mulf %534, %536 : vector<8x32xf32>
    %538 = vector.extract_strided_slice %514 {offsets = [1, 0], sizes = [1, 32], strides = [1, 1]} : vector<2x32xf32> to vector<1x32xf32>
    %539 = vector.broadcast %538 : vector<1x32xf32> to vector<8x32xf32>
    %540 = arith.addf %537, %539 : vector<8x32xf32>
    %c1_274 = arith.constant 1 : index
    %c0_275 = arith.constant 0 : index
    %c0_276 = arith.constant 0 : index
    %541 = vector.load %arg1[%c1_274, %c0_275, %c0_276] : memref<2x32x196xf32, #tpu.memory_space<vmem>>, vector<1x32x196xf32>
    %542 = vector.shape_cast %541 : vector<1x32x196xf32> to vector<32x196xf32>
    %c1_277 = arith.constant 1 : index
    %c0_278 = arith.constant 0 : index
    %c0_279 = arith.constant 0 : index
    %543 = vector.load %arg7[%c1_277, %c0_278, %c0_279] : memref<2x196x16xbf16, #tpu.memory_space<vmem>>, vector<1x196x16xbf16>
    %544 = vector.shape_cast %543 : vector<1x196x16xbf16> to vector<196x16xbf16>
    %545 = arith.truncf %542 : vector<32x196xf32> to vector<32x196xbf16>
    %cst_280 = arith.constant dense<0.000000e+00> : vector<32x16xf32>
    %546 = tpu.matmul %545, %544, %cst_280 {dimension_numbers = #tpu.dot_dimension_numbers<[1], [0], [0], [1], [0, 0, 1, 1], [], []>} : vector<32x196xbf16>, vector<196x16xbf16>, vector<32x16xf32> -> vector<32x16xf32>
    %c1_281 = arith.constant 1 : index
    %c0_282 = arith.constant 0 : index
    %c0_283 = arith.constant 0 : index
    %547 = vector.load %arg8[%c1_281, %c0_282, %c0_283] : memref<2x1x16xf32, #tpu.memory_space<vmem>>, vector<1x1x16xf32>
    %548 = vector.shape_cast %547 : vector<1x1x16xf32> to vector<1x16xf32>
    %549 = vector.broadcast %548 : vector<1x16xf32> to vector<32x16xf32>
    %550 = arith.addf %546, %549 : vector<32x16xf32>
    %c1_284 = arith.constant 1 : index
    %c0_285 = arith.constant 0 : index
    %c0_286 = arith.constant 0 : index
    %551 = vector.load %arg9[%c1_284, %c0_285, %c0_286] : memref<2x2x16xf32, #tpu.memory_space<vmem>>, vector<1x2x16xf32>
    %552 = vector.shape_cast %551 : vector<1x2x16xf32> to vector<2x16xf32>
    %cst_287 = arith.constant dense<0.000000e+00> : vector<32xf32>
    %553 = vector.multi_reduction <add>, %550, %cst_287 [1] : vector<32x16xf32> to vector<32xf32>
    %554 = vector.shape_cast %553 : vector<32xf32> to vector<32x1xf32>
    %cst_288 = arith.constant 1.600000e+01 : f32
    %555 = vector.broadcast %cst_288 : f32 to vector<32x1xf32>
    %556 = arith.divf %554, %555 : vector<32x1xf32>
    %557 = arith.mulf %550, %550 : vector<32x16xf32>
    %cst_289 = arith.constant dense<0.000000e+00> : vector<32xf32>
    %558 = vector.multi_reduction <add>, %557, %cst_289 [1] : vector<32x16xf32> to vector<32xf32>
    %559 = vector.shape_cast %558 : vector<32xf32> to vector<32x1xf32>
    %cst_290 = arith.constant 1.600000e+01 : f32
    %560 = vector.broadcast %cst_290 : f32 to vector<32x1xf32>
    %561 = arith.divf %559, %560 : vector<32x1xf32>
    %562 = arith.mulf %556, %556 : vector<32x1xf32>
    %563 = arith.subf %561, %562 : vector<32x1xf32>
    %cst_291 = arith.constant 0.000000e+00 : f32
    %564 = vector.broadcast %cst_291 : f32 to vector<32x1xf32>
    %565 = arith.maximumf %563, %564 : vector<32x1xf32>
    %566 = vector.broadcast %556 : vector<32x1xf32> to vector<32x16xf32>
    %567 = arith.subf %550, %566 : vector<32x16xf32>
    %cst_292 = arith.constant 9.99999997E-7 : f32
    %568 = vector.broadcast %cst_292 : f32 to vector<32x1xf32>
    %569 = arith.addf %565, %568 : vector<32x1xf32>
    %570 = math.rsqrt %569 : vector<32x1xf32>
    %571 = vector.broadcast %570 : vector<32x1xf32> to vector<32x16xf32>
    %572 = arith.mulf %567, %571 : vector<32x16xf32>
    %573 = vector.extract_strided_slice %552 {offsets = [0, 0], sizes = [1, 16], strides = [1, 1]} : vector<2x16xf32> to vector<1x16xf32>
    %574 = vector.broadcast %573 : vector<1x16xf32> to vector<32x16xf32>
    %575 = arith.mulf %572, %574 : vector<32x16xf32>
    %576 = vector.extract_strided_slice %552 {offsets = [1, 0], sizes = [1, 16], strides = [1, 1]} : vector<2x16xf32> to vector<1x16xf32>
    %577 = vector.broadcast %576 : vector<1x16xf32> to vector<32x16xf32>
    %578 = arith.addf %575, %577 : vector<32x16xf32>
    %c1_293 = arith.constant 1 : index
    %c0_294 = arith.constant 0 : index
    %c0_295 = arith.constant 0 : index
    %c0_296 = arith.constant 0 : index
    %579 = vector.load %arg10[%c1_293, %c0_294, %c0_295, %c0_296] : memref<2x1x2x16xf32, #tpu.memory_space<vmem>>, vector<1x1x2x16xf32>
    %580 = vector.shape_cast %579 : vector<1x1x2x16xf32> to vector<2x16xf32>
    %c1_297 = arith.constant 1 : index
    %c0_298 = arith.constant 0 : index
    %c0_299 = arith.constant 0 : index
    %c0_300 = arith.constant 0 : index
    %581 = vector.load %arg20[%c1_297, %c0_298, %c0_299, %c0_300] : memref<2x1x2x16xf32, #tpu.memory_space<vmem>>, vector<1x1x2x16xf32>
    %582 = vector.shape_cast %581 : vector<1x1x2x16xf32> to vector<2x16xf32>
    %c1_301 = arith.constant 1 : index
    %c0_302 = arith.constant 0 : index
    %c0_303 = arith.constant 0 : index
    %c0_304 = arith.constant 0 : index
    %583 = vector.load %arg11[%c1_301, %c0_302, %c0_303, %c0_304] : memref<2x1x16x16xbf16, #tpu.memory_space<vmem>>, vector<1x1x16x16xbf16>
    %584 = vector.shape_cast %583 : vector<1x1x16x16xbf16> to vector<16x16xbf16>
    %c1_305 = arith.constant 1 : index
    %c0_306 = arith.constant 0 : index
    %c0_307 = arith.constant 0 : index
    %c0_308 = arith.constant 0 : index
    %585 = vector.load %arg12[%c1_305, %c0_306, %c0_307, %c0_308] : memref<2x1x1x16xf32, #tpu.memory_space<vmem>>, vector<1x1x1x16xf32>
    %586 = vector.shape_cast %585 : vector<1x1x1x16xf32> to vector<1x16xf32>
    %c1_309 = arith.constant 1 : index
    %c0_310 = arith.constant 0 : index
    %c0_311 = arith.constant 0 : index
    %c0_312 = arith.constant 0 : index
    %587 = vector.load %arg13[%c1_309, %c0_310, %c0_311, %c0_312] : memref<2x1x16x32xbf16, #tpu.memory_space<vmem>>, vector<1x1x16x32xbf16>
    %588 = vector.shape_cast %587 : vector<1x1x16x32xbf16> to vector<16x32xbf16>
    %c1_313 = arith.constant 1 : index
    %c0_314 = arith.constant 0 : index
    %c0_315 = arith.constant 0 : index
    %c0_316 = arith.constant 0 : index
    %589 = vector.load %arg14[%c1_313, %c0_314, %c0_315, %c0_316] : memref<2x1x1x32xf32, #tpu.memory_space<vmem>>, vector<1x1x1x32xf32>
    %590 = vector.shape_cast %589 : vector<1x1x1x32xf32> to vector<1x32xf32>
    %c1_317 = arith.constant 1 : index
    %c0_318 = arith.constant 0 : index
    %c0_319 = arith.constant 0 : index
    %c0_320 = arith.constant 0 : index
    %591 = vector.load %arg18[%c1_317, %c0_318, %c0_319, %c0_320] : memref<2x1x16x16xbf16, #tpu.memory_space<vmem>>, vector<1x1x16x16xbf16>
    %592 = vector.shape_cast %591 : vector<1x1x16x16xbf16> to vector<16x16xbf16>
    %c1_321 = arith.constant 1 : index
    %c0_322 = arith.constant 0 : index
    %c0_323 = arith.constant 0 : index
    %c0_324 = arith.constant 0 : index
    %593 = vector.load %arg19[%c1_321, %c0_322, %c0_323, %c0_324] : memref<2x1x1x16xf32, #tpu.memory_space<vmem>>, vector<1x1x1x16xf32>
    %594 = vector.shape_cast %593 : vector<1x1x1x16xf32> to vector<1x16xf32>
    %c1_325 = arith.constant 1 : index
    %c0_326 = arith.constant 0 : index
    %c0_327 = arith.constant 0 : index
    %c0_328 = arith.constant 0 : index
    %595 = vector.load %arg21[%c1_325, %c0_326, %c0_327, %c0_328] : memref<2x1x16x32xbf16, #tpu.memory_space<vmem>>, vector<1x1x16x32xbf16>
    %596 = vector.shape_cast %595 : vector<1x1x16x32xbf16> to vector<16x32xbf16>
    %c1_329 = arith.constant 1 : index
    %c0_330 = arith.constant 0 : index
    %c0_331 = arith.constant 0 : index
    %c0_332 = arith.constant 0 : index
    %597 = vector.load %arg22[%c1_329, %c0_330, %c0_331, %c0_332] : memref<2x1x1x32xf32, #tpu.memory_space<vmem>>, vector<1x1x1x32xf32>
    %598 = vector.shape_cast %597 : vector<1x1x1x32xf32> to vector<1x32xf32>
    %c1_333 = arith.constant 1 : index
    %c0_334 = arith.constant 0 : index
    %c0_335 = arith.constant 0 : index
    %c0_336 = arith.constant 0 : index
    %599 = vector.load %arg23[%c1_333, %c0_334, %c0_335, %c0_336] : memref<2x1x32x16xbf16, #tpu.memory_space<vmem>>, vector<1x1x32x16xbf16>
    %600 = vector.shape_cast %599 : vector<1x1x32x16xbf16> to vector<32x16xbf16>
    %c1_337 = arith.constant 1 : index
    %c0_338 = arith.constant 0 : index
    %c0_339 = arith.constant 0 : index
    %c0_340 = arith.constant 0 : index
    %601 = vector.load %arg24[%c1_337, %c0_338, %c0_339, %c0_340] : memref<2x1x1x16xf32, #tpu.memory_space<vmem>>, vector<1x1x1x16xf32>
    %602 = vector.shape_cast %601 : vector<1x1x1x16xf32> to vector<1x16xf32>
    %c1_341 = arith.constant 1 : index
    %c0_342 = arith.constant 0 : index
    %c0_343 = arith.constant 0 : index
    %c0_344 = arith.constant 0 : index
    %603 = vector.load %arg15[%c1_341, %c0_342, %c0_343, %c0_344] : memref<2x1x64x16xbf16, #tpu.memory_space<vmem>>, vector<1x1x64x16xbf16>
    %604 = vector.shape_cast %603 : vector<1x1x64x16xbf16> to vector<64x16xbf16>
    %c1_345 = arith.constant 1 : index
    %c0_346 = arith.constant 0 : index
    %c0_347 = arith.constant 0 : index
    %c0_348 = arith.constant 0 : index
    %605 = vector.load %arg16[%c1_345, %c0_346, %c0_347, %c0_348] : memref<2x1x1x16xf32, #tpu.memory_space<vmem>>, vector<1x1x1x16xf32>
    %606 = vector.shape_cast %605 : vector<1x1x1x16xf32> to vector<1x16xf32>
    %c1_349 = arith.constant 1 : index
    %c0_350 = arith.constant 0 : index
    %c0_351 = arith.constant 0 : index
    %c0_352 = arith.constant 0 : index
    %607 = vector.load %arg17[%c1_349, %c0_350, %c0_351, %c0_352] : memref<2x1x2x16xf32, #tpu.memory_space<vmem>>, vector<1x1x2x16xf32>
    %608 = vector.shape_cast %607 : vector<1x1x2x16xf32> to vector<2x16xf32>
    %cst_353 = arith.constant dense<0.000000e+00> : vector<32xf32>
    %609 = vector.multi_reduction <add>, %578, %cst_353 [1] : vector<32x16xf32> to vector<32xf32>
    %610 = vector.shape_cast %609 : vector<32xf32> to vector<32x1xf32>
    %cst_354 = arith.constant 1.600000e+01 : f32
    %611 = vector.broadcast %cst_354 : f32 to vector<32x1xf32>
    %612 = arith.divf %610, %611 : vector<32x1xf32>
    %613 = arith.mulf %578, %578 : vector<32x16xf32>
    %cst_355 = arith.constant dense<0.000000e+00> : vector<32xf32>
    %614 = vector.multi_reduction <add>, %613, %cst_355 [1] : vector<32x16xf32> to vector<32xf32>
    %615 = vector.shape_cast %614 : vector<32xf32> to vector<32x1xf32>
    %cst_356 = arith.constant 1.600000e+01 : f32
    %616 = vector.broadcast %cst_356 : f32 to vector<32x1xf32>
    %617 = arith.divf %615, %616 : vector<32x1xf32>
    %618 = arith.mulf %612, %612 : vector<32x1xf32>
    %619 = arith.subf %617, %618 : vector<32x1xf32>
    %cst_357 = arith.constant 0.000000e+00 : f32
    %620 = vector.broadcast %cst_357 : f32 to vector<32x1xf32>
    %621 = arith.maximumf %619, %620 : vector<32x1xf32>
    %622 = vector.broadcast %612 : vector<32x1xf32> to vector<32x16xf32>
    %623 = arith.subf %578, %622 : vector<32x16xf32>
    %cst_358 = arith.constant 9.99999997E-7 : f32
    %624 = vector.broadcast %cst_358 : f32 to vector<32x1xf32>
    %625 = arith.addf %621, %624 : vector<32x1xf32>
    %626 = math.rsqrt %625 : vector<32x1xf32>
    %627 = vector.broadcast %626 : vector<32x1xf32> to vector<32x16xf32>
    %628 = arith.mulf %623, %627 : vector<32x16xf32>
    %629 = vector.extract_strided_slice %580 {offsets = [0, 0], sizes = [1, 16], strides = [1, 1]} : vector<2x16xf32> to vector<1x16xf32>
    %630 = vector.broadcast %629 : vector<1x16xf32> to vector<32x16xf32>
    %631 = arith.mulf %628, %630 : vector<32x16xf32>
    %632 = vector.extract_strided_slice %580 {offsets = [1, 0], sizes = [1, 16], strides = [1, 1]} : vector<2x16xf32> to vector<1x16xf32>
    %633 = vector.broadcast %632 : vector<1x16xf32> to vector<32x16xf32>
    %634 = arith.addf %631, %633 : vector<32x16xf32>
    %635 = arith.truncf %634 : vector<32x16xf32> to vector<32x16xbf16>
    %cst_359 = arith.constant dense<0.000000e+00> : vector<32x16xf32>
    %636 = tpu.matmul %635, %584, %cst_359 {dimension_numbers = #tpu.dot_dimension_numbers<[1], [0], [0], [1], [0, 0, 1, 1], [], []>} : vector<32x16xbf16>, vector<16x16xbf16>, vector<32x16xf32> -> vector<32x16xf32>
    %637 = vector.broadcast %586 : vector<1x16xf32> to vector<32x16xf32>
    %638 = arith.addf %636, %637 : vector<32x16xf32>
    %c0_360 = arith.constant 0 : index
    %c0_361 = arith.constant 0 : index
    %c0_362 = arith.constant 0 : index
    %639 = vector.load %arg4[%c0_360, %c0_361, %c0_362] : memref<4x8x32xbf16, #tpu.memory_space<vmem>>, vector<1x8x32xbf16>
    %640 = vector.shape_cast %639 : vector<1x8x32xbf16> to vector<8x32xbf16>
    %cst_363 = arith.constant dense<0.000000e+00> : vector<8x16xf32>
    %641 = tpu.matmul %640, %635, %cst_363 {dimension_numbers = #tpu.dot_dimension_numbers<[1], [0], [0], [1], [0, 0, 1, 1], [], []>} : vector<8x32xbf16>, vector<32x16xbf16>, vector<8x16xf32> -> vector<8x16xf32>
    %642 = vector.extract_strided_slice %604 {offsets = [0, 0], sizes = [16, 16], strides = [1, 1]} : vector<64x16xbf16> to vector<16x16xbf16>
    %643 = arith.truncf %641 : vector<8x16xf32> to vector<8x16xbf16>
    %cst_364 = arith.constant dense<0.000000e+00> : vector<8x16xf32>
    %644 = tpu.matmul %643, %642, %cst_364 {dimension_numbers = #tpu.dot_dimension_numbers<[1], [0], [0], [1], [0, 0, 1, 1], [], []>} : vector<8x16xbf16>, vector<16x16xbf16>, vector<8x16xf32> -> vector<8x16xf32>
    %c1_365 = arith.constant 1 : index
    %c0_366 = arith.constant 0 : index
    %c0_367 = arith.constant 0 : index
    %645 = vector.load %arg4[%c1_365, %c0_366, %c0_367] : memref<4x8x32xbf16, #tpu.memory_space<vmem>>, vector<1x8x32xbf16>
    %646 = vector.shape_cast %645 : vector<1x8x32xbf16> to vector<8x32xbf16>
    %cst_368 = arith.constant dense<0.000000e+00> : vector<8x16xf32>
    %647 = tpu.matmul %646, %635, %cst_368 {dimension_numbers = #tpu.dot_dimension_numbers<[1], [0], [0], [1], [0, 0, 1, 1], [], []>} : vector<8x32xbf16>, vector<32x16xbf16>, vector<8x16xf32> -> vector<8x16xf32>
    %648 = vector.extract_strided_slice %604 {offsets = [16, 0], sizes = [16, 16], strides = [1, 1]} : vector<64x16xbf16> to vector<16x16xbf16>
    %649 = arith.truncf %647 : vector<8x16xf32> to vector<8x16xbf16>
    %cst_369 = arith.constant dense<0.000000e+00> : vector<8x16xf32>
    %650 = tpu.matmul %649, %648, %cst_369 {dimension_numbers = #tpu.dot_dimension_numbers<[1], [0], [0], [1], [0, 0, 1, 1], [], []>} : vector<8x16xbf16>, vector<16x16xbf16>, vector<8x16xf32> -> vector<8x16xf32>
    %651 = arith.addf %644, %650 : vector<8x16xf32>
    %c2_370 = arith.constant 2 : index
    %c0_371 = arith.constant 0 : index
    %c0_372 = arith.constant 0 : index
    %652 = vector.load %arg4[%c2_370, %c0_371, %c0_372] : memref<4x8x32xbf16, #tpu.memory_space<vmem>>, vector<1x8x32xbf16>
    %653 = vector.shape_cast %652 : vector<1x8x32xbf16> to vector<8x32xbf16>
    %cst_373 = arith.constant dense<0.000000e+00> : vector<8x16xf32>
    %654 = tpu.matmul %653, %635, %cst_373 {dimension_numbers = #tpu.dot_dimension_numbers<[1], [0], [0], [1], [0, 0, 1, 1], [], []>} : vector<8x32xbf16>, vector<32x16xbf16>, vector<8x16xf32> -> vector<8x16xf32>
    %655 = vector.extract_strided_slice %604 {offsets = [32, 0], sizes = [16, 16], strides = [1, 1]} : vector<64x16xbf16> to vector<16x16xbf16>
    %656 = arith.truncf %654 : vector<8x16xf32> to vector<8x16xbf16>
    %cst_374 = arith.constant dense<0.000000e+00> : vector<8x16xf32>
    %657 = tpu.matmul %656, %655, %cst_374 {dimension_numbers = #tpu.dot_dimension_numbers<[1], [0], [0], [1], [0, 0, 1, 1], [], []>} : vector<8x16xbf16>, vector<16x16xbf16>, vector<8x16xf32> -> vector<8x16xf32>
    %658 = arith.addf %651, %657 : vector<8x16xf32>
    %c3_375 = arith.constant 3 : index
    %c0_376 = arith.constant 0 : index
    %c0_377 = arith.constant 0 : index
    %659 = vector.load %arg4[%c3_375, %c0_376, %c0_377] : memref<4x8x32xbf16, #tpu.memory_space<vmem>>, vector<1x8x32xbf16>
    %660 = vector.shape_cast %659 : vector<1x8x32xbf16> to vector<8x32xbf16>
    %cst_378 = arith.constant dense<0.000000e+00> : vector<8x16xf32>
    %661 = tpu.matmul %660, %635, %cst_378 {dimension_numbers = #tpu.dot_dimension_numbers<[1], [0], [0], [1], [0, 0, 1, 1], [], []>} : vector<8x32xbf16>, vector<32x16xbf16>, vector<8x16xf32> -> vector<8x16xf32>
    %662 = vector.extract_strided_slice %604 {offsets = [48, 0], sizes = [16, 16], strides = [1, 1]} : vector<64x16xbf16> to vector<16x16xbf16>
    %663 = arith.truncf %661 : vector<8x16xf32> to vector<8x16xbf16>
    %cst_379 = arith.constant dense<0.000000e+00> : vector<8x16xf32>
    %664 = tpu.matmul %663, %662, %cst_379 {dimension_numbers = #tpu.dot_dimension_numbers<[1], [0], [0], [1], [0, 0, 1, 1], [], []>} : vector<8x16xbf16>, vector<16x16xbf16>, vector<8x16xf32> -> vector<8x16xf32>
    %665 = arith.addf %658, %664 : vector<8x16xf32>
    %666 = vector.broadcast %606 : vector<1x16xf32> to vector<8x16xf32>
    %667 = arith.addf %665, %666 : vector<8x16xf32>
    %cst_380 = arith.constant dense<0.000000e+00> : vector<8xf32>
    %668 = vector.multi_reduction <add>, %667, %cst_380 [1] : vector<8x16xf32> to vector<8xf32>
    %669 = vector.shape_cast %668 : vector<8xf32> to vector<8x1xf32>
    %cst_381 = arith.constant 1.600000e+01 : f32
    %670 = vector.broadcast %cst_381 : f32 to vector<8x1xf32>
    %671 = arith.divf %669, %670 : vector<8x1xf32>
    %672 = arith.mulf %667, %667 : vector<8x16xf32>
    %cst_382 = arith.constant dense<0.000000e+00> : vector<8xf32>
    %673 = vector.multi_reduction <add>, %672, %cst_382 [1] : vector<8x16xf32> to vector<8xf32>
    %674 = vector.shape_cast %673 : vector<8xf32> to vector<8x1xf32>
    %cst_383 = arith.constant 1.600000e+01 : f32
    %675 = vector.broadcast %cst_383 : f32 to vector<8x1xf32>
    %676 = arith.divf %674, %675 : vector<8x1xf32>
    %677 = arith.mulf %671, %671 : vector<8x1xf32>
    %678 = arith.subf %676, %677 : vector<8x1xf32>
    %cst_384 = arith.constant 0.000000e+00 : f32
    %679 = vector.broadcast %cst_384 : f32 to vector<8x1xf32>
    %680 = arith.maximumf %678, %679 : vector<8x1xf32>
    %681 = vector.broadcast %671 : vector<8x1xf32> to vector<8x16xf32>
    %682 = arith.subf %667, %681 : vector<8x16xf32>
    %cst_385 = arith.constant 9.99999997E-7 : f32
    %683 = vector.broadcast %cst_385 : f32 to vector<8x1xf32>
    %684 = arith.addf %680, %683 : vector<8x1xf32>
    %685 = math.rsqrt %684 : vector<8x1xf32>
    %686 = vector.broadcast %685 : vector<8x1xf32> to vector<8x16xf32>
    %687 = arith.mulf %682, %686 : vector<8x16xf32>
    %688 = vector.extract_strided_slice %608 {offsets = [0, 0], sizes = [1, 16], strides = [1, 1]} : vector<2x16xf32> to vector<1x16xf32>
    %689 = vector.broadcast %688 : vector<1x16xf32> to vector<8x16xf32>
    %690 = arith.mulf %687, %689 : vector<8x16xf32>
    %691 = vector.extract_strided_slice %608 {offsets = [1, 0], sizes = [1, 16], strides = [1, 1]} : vector<2x16xf32> to vector<1x16xf32>
    %692 = vector.broadcast %691 : vector<1x16xf32> to vector<8x16xf32>
    %693 = arith.addf %690, %692 : vector<8x16xf32>
    %694 = arith.truncf %693 : vector<8x16xf32> to vector<8x16xbf16>
    %cst_386 = arith.constant dense<0.000000e+00> : vector<8x32xf32>
    %695 = tpu.matmul %694, %588, %cst_386 {dimension_numbers = #tpu.dot_dimension_numbers<[1], [0], [0], [1], [0, 0, 1, 1], [], []>} : vector<8x16xbf16>, vector<16x32xbf16>, vector<8x32xf32> -> vector<8x32xf32>
    %696 = vector.broadcast %590 : vector<1x32xf32> to vector<8x32xf32>
    %697 = arith.addf %695, %696 : vector<8x32xf32>
    %698 = vector.extract_strided_slice %697 {offsets = [0, 0], sizes = [8, 16], strides = [1, 1]} : vector<8x32xf32> to vector<8x16xf32>
    %699 = vector.extract_strided_slice %697 {offsets = [0, 16], sizes = [8, 16], strides = [1, 1]} : vector<8x32xf32> to vector<8x16xf32>
    %700 = arith.truncf %638 : vector<32x16xf32> to vector<32x16xbf16>
    %701 = arith.truncf %698 : vector<8x16xf32> to vector<8x16xbf16>
    %cst_387 = arith.constant dense<0.000000e+00> : vector<32x8xf32>
    %702 = tpu.matmul %700, %701, %cst_387 {dimension_numbers = #tpu.dot_dimension_numbers<[1], [1], [0], [0], [0, 0, 1, 0], [], []>} : vector<32x16xbf16>, vector<8x16xbf16>, vector<32x8xf32> -> vector<32x8xf32>
    %cst_388 = arith.constant 2.500000e-01 : f32
    %703 = vector.broadcast %cst_388 : f32 to vector<32x8xf32>
    %704 = arith.mulf %702, %703 : vector<32x8xf32>
    %705 = arith.addf %704, %0 : vector<32x8xf32>
    %cst_389 = arith.constant dense<0xFF800000> : vector<32xf32>
    %706 = vector.multi_reduction <maximumf>, %705, %cst_389 [1] : vector<32x8xf32> to vector<32xf32>
    %707 = vector.shape_cast %706 : vector<32xf32> to vector<32x1xf32>
    %708 = vector.broadcast %707 : vector<32x1xf32> to vector<32x8xf32>
    %709 = arith.subf %705, %708 : vector<32x8xf32>
    %710 = math.exp %709 : vector<32x8xf32>
    %cst_390 = arith.constant dense<0.000000e+00> : vector<32xf32>
    %711 = vector.multi_reduction <add>, %710, %cst_390 [1] : vector<32x8xf32> to vector<32xf32>
    %712 = vector.shape_cast %711 : vector<32xf32> to vector<32x1xf32>
    %713 = tpu.reciprocal %712 {approx = true} : vector<32x1xf32> -> vector<32x1xf32>
    %714 = vector.broadcast %713 : vector<32x1xf32> to vector<32x8xf32>
    %715 = arith.mulf %710, %714 : vector<32x8xf32>
    %716 = arith.truncf %715 : vector<32x8xf32> to vector<32x8xbf16>
    %717 = arith.truncf %699 : vector<8x16xf32> to vector<8x16xbf16>
    %cst_391 = arith.constant dense<0.000000e+00> : vector<32x16xf32>
    %718 = tpu.matmul %716, %717, %cst_391 {dimension_numbers = #tpu.dot_dimension_numbers<[1], [0], [0], [1], [0, 0, 1, 1], [], []>} : vector<32x8xbf16>, vector<8x16xbf16>, vector<32x16xf32> -> vector<32x16xf32>
    %719 = arith.truncf %718 : vector<32x16xf32> to vector<32x16xbf16>
    %cst_392 = arith.constant dense<0.000000e+00> : vector<32x16xf32>
    %720 = tpu.matmul %719, %592, %cst_392 {dimension_numbers = #tpu.dot_dimension_numbers<[1], [0], [0], [1], [0, 0, 1, 1], [], []>} : vector<32x16xbf16>, vector<16x16xbf16>, vector<32x16xf32> -> vector<32x16xf32>
    %721 = arith.addf %578, %720 : vector<32x16xf32>
    %722 = vector.broadcast %594 : vector<1x16xf32> to vector<32x16xf32>
    %723 = arith.addf %721, %722 : vector<32x16xf32>
    %cst_393 = arith.constant dense<0.000000e+00> : vector<32xf32>
    %724 = vector.multi_reduction <add>, %723, %cst_393 [1] : vector<32x16xf32> to vector<32xf32>
    %725 = vector.shape_cast %724 : vector<32xf32> to vector<32x1xf32>
    %cst_394 = arith.constant 1.600000e+01 : f32
    %726 = vector.broadcast %cst_394 : f32 to vector<32x1xf32>
    %727 = arith.divf %725, %726 : vector<32x1xf32>
    %728 = arith.mulf %723, %723 : vector<32x16xf32>
    %cst_395 = arith.constant dense<0.000000e+00> : vector<32xf32>
    %729 = vector.multi_reduction <add>, %728, %cst_395 [1] : vector<32x16xf32> to vector<32xf32>
    %730 = vector.shape_cast %729 : vector<32xf32> to vector<32x1xf32>
    %cst_396 = arith.constant 1.600000e+01 : f32
    %731 = vector.broadcast %cst_396 : f32 to vector<32x1xf32>
    %732 = arith.divf %730, %731 : vector<32x1xf32>
    %733 = arith.mulf %727, %727 : vector<32x1xf32>
    %734 = arith.subf %732, %733 : vector<32x1xf32>
    %cst_397 = arith.constant 0.000000e+00 : f32
    %735 = vector.broadcast %cst_397 : f32 to vector<32x1xf32>
    %736 = arith.maximumf %734, %735 : vector<32x1xf32>
    %737 = vector.broadcast %727 : vector<32x1xf32> to vector<32x16xf32>
    %738 = arith.subf %723, %737 : vector<32x16xf32>
    %cst_398 = arith.constant 9.99999997E-7 : f32
    %739 = vector.broadcast %cst_398 : f32 to vector<32x1xf32>
    %740 = arith.addf %736, %739 : vector<32x1xf32>
    %741 = math.rsqrt %740 : vector<32x1xf32>
    %742 = vector.broadcast %741 : vector<32x1xf32> to vector<32x16xf32>
    %743 = arith.mulf %738, %742 : vector<32x16xf32>
    %744 = vector.extract_strided_slice %582 {offsets = [0, 0], sizes = [1, 16], strides = [1, 1]} : vector<2x16xf32> to vector<1x16xf32>
    %745 = vector.broadcast %744 : vector<1x16xf32> to vector<32x16xf32>
    %746 = arith.mulf %743, %745 : vector<32x16xf32>
    %747 = vector.extract_strided_slice %582 {offsets = [1, 0], sizes = [1, 16], strides = [1, 1]} : vector<2x16xf32> to vector<1x16xf32>
    %748 = vector.broadcast %747 : vector<1x16xf32> to vector<32x16xf32>
    %749 = arith.addf %746, %748 : vector<32x16xf32>
    %750 = arith.truncf %749 : vector<32x16xf32> to vector<32x16xbf16>
    %cst_399 = arith.constant dense<0.000000e+00> : vector<32x32xf32>
    %751 = tpu.matmul %750, %596, %cst_399 {dimension_numbers = #tpu.dot_dimension_numbers<[1], [0], [0], [1], [0, 0, 1, 1], [], []>} : vector<32x16xbf16>, vector<16x32xbf16>, vector<32x32xf32> -> vector<32x32xf32>
    %752 = vector.broadcast %598 : vector<1x32xf32> to vector<32x32xf32>
    %753 = arith.addf %751, %752 : vector<32x32xf32>
    %754 = arith.mulf %753, %753 : vector<32x32xf32>
    %755 = arith.mulf %753, %754 : vector<32x32xf32>
    %cst_400 = arith.constant 4.471500e-02 : f32
    %756 = vector.broadcast %cst_400 : f32 to vector<32x32xf32>
    %757 = arith.mulf %756, %755 : vector<32x32xf32>
    %758 = arith.addf %753, %757 : vector<32x32xf32>
    %cst_401 = arith.constant 0.797884583 : f32
    %759 = vector.broadcast %cst_401 : f32 to vector<32x32xf32>
    %760 = arith.mulf %759, %758 : vector<32x32xf32>
    %761 = math.tanh %760 : vector<32x32xf32>
    %cst_402 = arith.constant 1.000000e+00 : f32
    %762 = vector.broadcast %cst_402 : f32 to vector<32x32xf32>
    %763 = arith.addf %762, %761 : vector<32x32xf32>
    %cst_403 = arith.constant 5.000000e-01 : f32
    %764 = vector.broadcast %cst_403 : f32 to vector<32x32xf32>
    %765 = arith.mulf %764, %763 : vector<32x32xf32>
    %766 = arith.mulf %753, %765 : vector<32x32xf32>
    %767 = arith.truncf %766 : vector<32x32xf32> to vector<32x32xbf16>
    %cst_404 = arith.constant dense<0.000000e+00> : vector<32x16xf32>
    %768 = tpu.matmul %767, %600, %cst_404 {dimension_numbers = #tpu.dot_dimension_numbers<[1], [0], [0], [1], [0, 0, 1, 1], [], []>} : vector<32x32xbf16>, vector<32x16xbf16>, vector<32x16xf32> -> vector<32x16xf32>
    %769 = vector.broadcast %602 : vector<1x16xf32> to vector<32x16xf32>
    %770 = arith.addf %768, %769 : vector<32x16xf32>
    %771 = arith.addf %723, %770 : vector<32x16xf32>
    %c1_405 = arith.constant 1 : index
    %c0_406 = arith.constant 0 : index
    %c0_407 = arith.constant 0 : index
    %772 = vector.load %arg25[%c1_405, %c0_406, %c0_407] : memref<2x2x16xf32, #tpu.memory_space<vmem>>, vector<1x2x16xf32>
    %773 = vector.shape_cast %772 : vector<1x2x16xf32> to vector<2x16xf32>
    %cst_408 = arith.constant dense<0.000000e+00> : vector<32xf32>
    %774 = vector.multi_reduction <add>, %771, %cst_408 [1] : vector<32x16xf32> to vector<32xf32>
    %775 = vector.shape_cast %774 : vector<32xf32> to vector<32x1xf32>
    %cst_409 = arith.constant 1.600000e+01 : f32
    %776 = vector.broadcast %cst_409 : f32 to vector<32x1xf32>
    %777 = arith.divf %775, %776 : vector<32x1xf32>
    %778 = arith.mulf %771, %771 : vector<32x16xf32>
    %cst_410 = arith.constant dense<0.000000e+00> : vector<32xf32>
    %779 = vector.multi_reduction <add>, %778, %cst_410 [1] : vector<32x16xf32> to vector<32xf32>
    %780 = vector.shape_cast %779 : vector<32xf32> to vector<32x1xf32>
    %cst_411 = arith.constant 1.600000e+01 : f32
    %781 = vector.broadcast %cst_411 : f32 to vector<32x1xf32>
    %782 = arith.divf %780, %781 : vector<32x1xf32>
    %783 = arith.mulf %777, %777 : vector<32x1xf32>
    %784 = arith.subf %782, %783 : vector<32x1xf32>
    %cst_412 = arith.constant 0.000000e+00 : f32
    %785 = vector.broadcast %cst_412 : f32 to vector<32x1xf32>
    %786 = arith.maximumf %784, %785 : vector<32x1xf32>
    %787 = vector.broadcast %777 : vector<32x1xf32> to vector<32x16xf32>
    %788 = arith.subf %771, %787 : vector<32x16xf32>
    %cst_413 = arith.constant 9.99999997E-7 : f32
    %789 = vector.broadcast %cst_413 : f32 to vector<32x1xf32>
    %790 = arith.addf %786, %789 : vector<32x1xf32>
    %791 = math.rsqrt %790 : vector<32x1xf32>
    %792 = vector.broadcast %791 : vector<32x1xf32> to vector<32x16xf32>
    %793 = arith.mulf %788, %792 : vector<32x16xf32>
    %794 = vector.extract_strided_slice %773 {offsets = [0, 0], sizes = [1, 16], strides = [1, 1]} : vector<2x16xf32> to vector<1x16xf32>
    %795 = vector.broadcast %794 : vector<1x16xf32> to vector<32x16xf32>
    %796 = arith.mulf %793, %795 : vector<32x16xf32>
    %797 = vector.extract_strided_slice %773 {offsets = [1, 0], sizes = [1, 16], strides = [1, 1]} : vector<2x16xf32> to vector<1x16xf32>
    %798 = vector.broadcast %797 : vector<1x16xf32> to vector<32x16xf32>
    %799 = arith.addf %796, %798 : vector<32x16xf32>
    %800 = arith.truncf %799 : vector<32x16xf32> to vector<32x16xbf16>
    %c1_414 = arith.constant 1 : index
    %c0_415 = arith.constant 0 : index
    %c0_416 = arith.constant 0 : index
    %801 = vector.load %arg26[%c1_414, %c0_415, %c0_416] : memref<2x144x32xbf16, #tpu.memory_space<vmem>>, vector<1x144x32xbf16>
    %802 = vector.shape_cast %801 : vector<1x144x32xbf16> to vector<144x32xbf16>
    %c0_417 = arith.constant 0 : index
    %c0_418 = arith.constant 0 : index
    %c0_419 = arith.constant 0 : index
    %803 = vector.load %arg5[%c0_417, %c0_418, %c0_419] : memref<9x8x32xbf16, #tpu.memory_space<vmem>>, vector<1x8x32xbf16>
    %804 = vector.shape_cast %803 : vector<1x8x32xbf16> to vector<8x32xbf16>
    %cst_420 = arith.constant dense<0.000000e+00> : vector<8x16xf32>
    %805 = tpu.matmul %804, %800, %cst_420 {dimension_numbers = #tpu.dot_dimension_numbers<[1], [0], [0], [1], [0, 0, 1, 1], [], []>} : vector<8x32xbf16>, vector<32x16xbf16>, vector<8x16xf32> -> vector<8x16xf32>
    %806 = vector.extract_strided_slice %802 {offsets = [0, 0], sizes = [16, 32], strides = [1, 1]} : vector<144x32xbf16> to vector<16x32xbf16>
    %807 = arith.truncf %805 : vector<8x16xf32> to vector<8x16xbf16>
    %cst_421 = arith.constant dense<0.000000e+00> : vector<8x32xf32>
    %808 = tpu.matmul %807, %806, %cst_421 {dimension_numbers = #tpu.dot_dimension_numbers<[1], [0], [0], [1], [0, 0, 1, 1], [], []>} : vector<8x16xbf16>, vector<16x32xbf16>, vector<8x32xf32> -> vector<8x32xf32>
    %c1_422 = arith.constant 1 : index
    %c0_423 = arith.constant 0 : index
    %c0_424 = arith.constant 0 : index
    %809 = vector.load %arg5[%c1_422, %c0_423, %c0_424] : memref<9x8x32xbf16, #tpu.memory_space<vmem>>, vector<1x8x32xbf16>
    %810 = vector.shape_cast %809 : vector<1x8x32xbf16> to vector<8x32xbf16>
    %cst_425 = arith.constant dense<0.000000e+00> : vector<8x16xf32>
    %811 = tpu.matmul %810, %800, %cst_425 {dimension_numbers = #tpu.dot_dimension_numbers<[1], [0], [0], [1], [0, 0, 1, 1], [], []>} : vector<8x32xbf16>, vector<32x16xbf16>, vector<8x16xf32> -> vector<8x16xf32>
    %812 = vector.extract_strided_slice %802 {offsets = [16, 0], sizes = [16, 32], strides = [1, 1]} : vector<144x32xbf16> to vector<16x32xbf16>
    %813 = arith.truncf %811 : vector<8x16xf32> to vector<8x16xbf16>
    %cst_426 = arith.constant dense<0.000000e+00> : vector<8x32xf32>
    %814 = tpu.matmul %813, %812, %cst_426 {dimension_numbers = #tpu.dot_dimension_numbers<[1], [0], [0], [1], [0, 0, 1, 1], [], []>} : vector<8x16xbf16>, vector<16x32xbf16>, vector<8x32xf32> -> vector<8x32xf32>
    %815 = arith.addf %808, %814 : vector<8x32xf32>
    %c2_427 = arith.constant 2 : index
    %c0_428 = arith.constant 0 : index
    %c0_429 = arith.constant 0 : index
    %816 = vector.load %arg5[%c2_427, %c0_428, %c0_429] : memref<9x8x32xbf16, #tpu.memory_space<vmem>>, vector<1x8x32xbf16>
    %817 = vector.shape_cast %816 : vector<1x8x32xbf16> to vector<8x32xbf16>
    %cst_430 = arith.constant dense<0.000000e+00> : vector<8x16xf32>
    %818 = tpu.matmul %817, %800, %cst_430 {dimension_numbers = #tpu.dot_dimension_numbers<[1], [0], [0], [1], [0, 0, 1, 1], [], []>} : vector<8x32xbf16>, vector<32x16xbf16>, vector<8x16xf32> -> vector<8x16xf32>
    %819 = vector.extract_strided_slice %802 {offsets = [32, 0], sizes = [16, 32], strides = [1, 1]} : vector<144x32xbf16> to vector<16x32xbf16>
    %820 = arith.truncf %818 : vector<8x16xf32> to vector<8x16xbf16>
    %cst_431 = arith.constant dense<0.000000e+00> : vector<8x32xf32>
    %821 = tpu.matmul %820, %819, %cst_431 {dimension_numbers = #tpu.dot_dimension_numbers<[1], [0], [0], [1], [0, 0, 1, 1], [], []>} : vector<8x16xbf16>, vector<16x32xbf16>, vector<8x32xf32> -> vector<8x32xf32>
    %822 = arith.addf %815, %821 : vector<8x32xf32>
    %c3_432 = arith.constant 3 : index
    %c0_433 = arith.constant 0 : index
    %c0_434 = arith.constant 0 : index
    %823 = vector.load %arg5[%c3_432, %c0_433, %c0_434] : memref<9x8x32xbf16, #tpu.memory_space<vmem>>, vector<1x8x32xbf16>
    %824 = vector.shape_cast %823 : vector<1x8x32xbf16> to vector<8x32xbf16>
    %cst_435 = arith.constant dense<0.000000e+00> : vector<8x16xf32>
    %825 = tpu.matmul %824, %800, %cst_435 {dimension_numbers = #tpu.dot_dimension_numbers<[1], [0], [0], [1], [0, 0, 1, 1], [], []>} : vector<8x32xbf16>, vector<32x16xbf16>, vector<8x16xf32> -> vector<8x16xf32>
    %826 = vector.extract_strided_slice %802 {offsets = [48, 0], sizes = [16, 32], strides = [1, 1]} : vector<144x32xbf16> to vector<16x32xbf16>
    %827 = arith.truncf %825 : vector<8x16xf32> to vector<8x16xbf16>
    %cst_436 = arith.constant dense<0.000000e+00> : vector<8x32xf32>
    %828 = tpu.matmul %827, %826, %cst_436 {dimension_numbers = #tpu.dot_dimension_numbers<[1], [0], [0], [1], [0, 0, 1, 1], [], []>} : vector<8x16xbf16>, vector<16x32xbf16>, vector<8x32xf32> -> vector<8x32xf32>
    %829 = arith.addf %822, %828 : vector<8x32xf32>
    %c4_437 = arith.constant 4 : index
    %c0_438 = arith.constant 0 : index
    %c0_439 = arith.constant 0 : index
    %830 = vector.load %arg5[%c4_437, %c0_438, %c0_439] : memref<9x8x32xbf16, #tpu.memory_space<vmem>>, vector<1x8x32xbf16>
    %831 = vector.shape_cast %830 : vector<1x8x32xbf16> to vector<8x32xbf16>
    %cst_440 = arith.constant dense<0.000000e+00> : vector<8x16xf32>
    %832 = tpu.matmul %831, %800, %cst_440 {dimension_numbers = #tpu.dot_dimension_numbers<[1], [0], [0], [1], [0, 0, 1, 1], [], []>} : vector<8x32xbf16>, vector<32x16xbf16>, vector<8x16xf32> -> vector<8x16xf32>
    %833 = vector.extract_strided_slice %802 {offsets = [64, 0], sizes = [16, 32], strides = [1, 1]} : vector<144x32xbf16> to vector<16x32xbf16>
    %834 = arith.truncf %832 : vector<8x16xf32> to vector<8x16xbf16>
    %cst_441 = arith.constant dense<0.000000e+00> : vector<8x32xf32>
    %835 = tpu.matmul %834, %833, %cst_441 {dimension_numbers = #tpu.dot_dimension_numbers<[1], [0], [0], [1], [0, 0, 1, 1], [], []>} : vector<8x16xbf16>, vector<16x32xbf16>, vector<8x32xf32> -> vector<8x32xf32>
    %836 = arith.addf %829, %835 : vector<8x32xf32>
    %c5_442 = arith.constant 5 : index
    %c0_443 = arith.constant 0 : index
    %c0_444 = arith.constant 0 : index
    %837 = vector.load %arg5[%c5_442, %c0_443, %c0_444] : memref<9x8x32xbf16, #tpu.memory_space<vmem>>, vector<1x8x32xbf16>
    %838 = vector.shape_cast %837 : vector<1x8x32xbf16> to vector<8x32xbf16>
    %cst_445 = arith.constant dense<0.000000e+00> : vector<8x16xf32>
    %839 = tpu.matmul %838, %800, %cst_445 {dimension_numbers = #tpu.dot_dimension_numbers<[1], [0], [0], [1], [0, 0, 1, 1], [], []>} : vector<8x32xbf16>, vector<32x16xbf16>, vector<8x16xf32> -> vector<8x16xf32>
    %840 = vector.extract_strided_slice %802 {offsets = [80, 0], sizes = [16, 32], strides = [1, 1]} : vector<144x32xbf16> to vector<16x32xbf16>
    %841 = arith.truncf %839 : vector<8x16xf32> to vector<8x16xbf16>
    %cst_446 = arith.constant dense<0.000000e+00> : vector<8x32xf32>
    %842 = tpu.matmul %841, %840, %cst_446 {dimension_numbers = #tpu.dot_dimension_numbers<[1], [0], [0], [1], [0, 0, 1, 1], [], []>} : vector<8x16xbf16>, vector<16x32xbf16>, vector<8x32xf32> -> vector<8x32xf32>
    %843 = arith.addf %836, %842 : vector<8x32xf32>
    %c6_447 = arith.constant 6 : index
    %c0_448 = arith.constant 0 : index
    %c0_449 = arith.constant 0 : index
    %844 = vector.load %arg5[%c6_447, %c0_448, %c0_449] : memref<9x8x32xbf16, #tpu.memory_space<vmem>>, vector<1x8x32xbf16>
    %845 = vector.shape_cast %844 : vector<1x8x32xbf16> to vector<8x32xbf16>
    %cst_450 = arith.constant dense<0.000000e+00> : vector<8x16xf32>
    %846 = tpu.matmul %845, %800, %cst_450 {dimension_numbers = #tpu.dot_dimension_numbers<[1], [0], [0], [1], [0, 0, 1, 1], [], []>} : vector<8x32xbf16>, vector<32x16xbf16>, vector<8x16xf32> -> vector<8x16xf32>
    %847 = vector.extract_strided_slice %802 {offsets = [96, 0], sizes = [16, 32], strides = [1, 1]} : vector<144x32xbf16> to vector<16x32xbf16>
    %848 = arith.truncf %846 : vector<8x16xf32> to vector<8x16xbf16>
    %cst_451 = arith.constant dense<0.000000e+00> : vector<8x32xf32>
    %849 = tpu.matmul %848, %847, %cst_451 {dimension_numbers = #tpu.dot_dimension_numbers<[1], [0], [0], [1], [0, 0, 1, 1], [], []>} : vector<8x16xbf16>, vector<16x32xbf16>, vector<8x32xf32> -> vector<8x32xf32>
    %850 = arith.addf %843, %849 : vector<8x32xf32>
    %c7_452 = arith.constant 7 : index
    %c0_453 = arith.constant 0 : index
    %c0_454 = arith.constant 0 : index
    %851 = vector.load %arg5[%c7_452, %c0_453, %c0_454] : memref<9x8x32xbf16, #tpu.memory_space<vmem>>, vector<1x8x32xbf16>
    %852 = vector.shape_cast %851 : vector<1x8x32xbf16> to vector<8x32xbf16>
    %cst_455 = arith.constant dense<0.000000e+00> : vector<8x16xf32>
    %853 = tpu.matmul %852, %800, %cst_455 {dimension_numbers = #tpu.dot_dimension_numbers<[1], [0], [0], [1], [0, 0, 1, 1], [], []>} : vector<8x32xbf16>, vector<32x16xbf16>, vector<8x16xf32> -> vector<8x16xf32>
    %854 = vector.extract_strided_slice %802 {offsets = [112, 0], sizes = [16, 32], strides = [1, 1]} : vector<144x32xbf16> to vector<16x32xbf16>
    %855 = arith.truncf %853 : vector<8x16xf32> to vector<8x16xbf16>
    %cst_456 = arith.constant dense<0.000000e+00> : vector<8x32xf32>
    %856 = tpu.matmul %855, %854, %cst_456 {dimension_numbers = #tpu.dot_dimension_numbers<[1], [0], [0], [1], [0, 0, 1, 1], [], []>} : vector<8x16xbf16>, vector<16x32xbf16>, vector<8x32xf32> -> vector<8x32xf32>
    %857 = arith.addf %850, %856 : vector<8x32xf32>
    %c8_457 = arith.constant 8 : index
    %c0_458 = arith.constant 0 : index
    %c0_459 = arith.constant 0 : index
    %858 = vector.load %arg5[%c8_457, %c0_458, %c0_459] : memref<9x8x32xbf16, #tpu.memory_space<vmem>>, vector<1x8x32xbf16>
    %859 = vector.shape_cast %858 : vector<1x8x32xbf16> to vector<8x32xbf16>
    %cst_460 = arith.constant dense<0.000000e+00> : vector<8x16xf32>
    %860 = tpu.matmul %859, %800, %cst_460 {dimension_numbers = #tpu.dot_dimension_numbers<[1], [0], [0], [1], [0, 0, 1, 1], [], []>} : vector<8x32xbf16>, vector<32x16xbf16>, vector<8x16xf32> -> vector<8x16xf32>
    %861 = vector.extract_strided_slice %802 {offsets = [128, 0], sizes = [16, 32], strides = [1, 1]} : vector<144x32xbf16> to vector<16x32xbf16>
    %862 = arith.truncf %860 : vector<8x16xf32> to vector<8x16xbf16>
    %cst_461 = arith.constant dense<0.000000e+00> : vector<8x32xf32>
    %863 = tpu.matmul %862, %861, %cst_461 {dimension_numbers = #tpu.dot_dimension_numbers<[1], [0], [0], [1], [0, 0, 1, 1], [], []>} : vector<8x16xbf16>, vector<16x32xbf16>, vector<8x32xf32> -> vector<8x32xf32>
    %864 = arith.addf %857, %863 : vector<8x32xf32>
    %c1_462 = arith.constant 1 : index
    %c0_463 = arith.constant 0 : index
    %c0_464 = arith.constant 0 : index
    %865 = vector.load %arg27[%c1_462, %c0_463, %c0_464] : memref<2x1x32xf32, #tpu.memory_space<vmem>>, vector<1x1x32xf32>
    %866 = vector.shape_cast %865 : vector<1x1x32xf32> to vector<1x32xf32>
    %867 = vector.broadcast %866 : vector<1x32xf32> to vector<8x32xf32>
    %868 = arith.addf %864, %867 : vector<8x32xf32>
    %c1_465 = arith.constant 1 : index
    %c0_466 = arith.constant 0 : index
    %c0_467 = arith.constant 0 : index
    %869 = vector.load %arg28[%c1_465, %c0_466, %c0_467] : memref<2x2x32xf32, #tpu.memory_space<vmem>>, vector<1x2x32xf32>
    %870 = vector.shape_cast %869 : vector<1x2x32xf32> to vector<2x32xf32>
    %cst_468 = arith.constant dense<0.000000e+00> : vector<8xf32>
    %871 = vector.multi_reduction <add>, %868, %cst_468 [1] : vector<8x32xf32> to vector<8xf32>
    %872 = vector.shape_cast %871 : vector<8xf32> to vector<8x1xf32>
    %cst_469 = arith.constant 3.200000e+01 : f32
    %873 = vector.broadcast %cst_469 : f32 to vector<8x1xf32>
    %874 = arith.divf %872, %873 : vector<8x1xf32>
    %875 = arith.mulf %868, %868 : vector<8x32xf32>
    %cst_470 = arith.constant dense<0.000000e+00> : vector<8xf32>
    %876 = vector.multi_reduction <add>, %875, %cst_470 [1] : vector<8x32xf32> to vector<8xf32>
    %877 = vector.shape_cast %876 : vector<8xf32> to vector<8x1xf32>
    %cst_471 = arith.constant 3.200000e+01 : f32
    %878 = vector.broadcast %cst_471 : f32 to vector<8x1xf32>
    %879 = arith.divf %877, %878 : vector<8x1xf32>
    %880 = arith.mulf %874, %874 : vector<8x1xf32>
    %881 = arith.subf %879, %880 : vector<8x1xf32>
    %cst_472 = arith.constant 0.000000e+00 : f32
    %882 = vector.broadcast %cst_472 : f32 to vector<8x1xf32>
    %883 = arith.maximumf %881, %882 : vector<8x1xf32>
    %884 = vector.broadcast %874 : vector<8x1xf32> to vector<8x32xf32>
    %885 = arith.subf %868, %884 : vector<8x32xf32>
    %cst_473 = arith.constant 9.99999997E-7 : f32
    %886 = vector.broadcast %cst_473 : f32 to vector<8x1xf32>
    %887 = arith.addf %883, %886 : vector<8x1xf32>
    %888 = math.rsqrt %887 : vector<8x1xf32>
    %889 = vector.broadcast %888 : vector<8x1xf32> to vector<8x32xf32>
    %890 = arith.mulf %885, %889 : vector<8x32xf32>
    %891 = vector.extract_strided_slice %870 {offsets = [0, 0], sizes = [1, 32], strides = [1, 1]} : vector<2x32xf32> to vector<1x32xf32>
    %892 = vector.broadcast %891 : vector<1x32xf32> to vector<8x32xf32>
    %893 = arith.mulf %890, %892 : vector<8x32xf32>
    %894 = vector.extract_strided_slice %870 {offsets = [1, 0], sizes = [1, 32], strides = [1, 1]} : vector<2x32xf32> to vector<1x32xf32>
    %895 = vector.broadcast %894 : vector<1x32xf32> to vector<8x32xf32>
    %896 = arith.addf %893, %895 : vector<8x32xf32>
    %c1_474 = arith.constant 1 : index
    %c0_475 = arith.constant 0 : index
    %c0_476 = arith.constant 0 : index
    %c0_477 = arith.constant 0 : index
    %897 = vector.load %arg29[%c1_474, %c0_475, %c0_476, %c0_477] : memref<2x1x2x32xf32, #tpu.memory_space<vmem>>, vector<1x1x2x32xf32>
    %898 = vector.shape_cast %897 : vector<1x1x2x32xf32> to vector<2x32xf32>
    %c1_478 = arith.constant 1 : index
    %c0_479 = arith.constant 0 : index
    %c0_480 = arith.constant 0 : index
    %c0_481 = arith.constant 0 : index
    %899 = vector.load %arg34[%c1_478, %c0_479, %c0_480, %c0_481] : memref<2x1x2x32xf32, #tpu.memory_space<vmem>>, vector<1x1x2x32xf32>
    %900 = vector.shape_cast %899 : vector<1x1x2x32xf32> to vector<2x32xf32>
    %c1_482 = arith.constant 1 : index
    %c0_483 = arith.constant 0 : index
    %c0_484 = arith.constant 0 : index
    %c0_485 = arith.constant 0 : index
    %901 = vector.load %arg30[%c1_482, %c0_483, %c0_484, %c0_485] : memref<2x1x32x96xbf16, #tpu.memory_space<vmem>>, vector<1x1x32x96xbf16>
    %902 = vector.shape_cast %901 : vector<1x1x32x96xbf16> to vector<32x96xbf16>
    %c1_486 = arith.constant 1 : index
    %c0_487 = arith.constant 0 : index
    %c0_488 = arith.constant 0 : index
    %c0_489 = arith.constant 0 : index
    %903 = vector.load %arg31[%c1_486, %c0_487, %c0_488, %c0_489] : memref<2x1x1x96xf32, #tpu.memory_space<vmem>>, vector<1x1x1x96xf32>
    %904 = vector.shape_cast %903 : vector<1x1x1x96xf32> to vector<1x96xf32>
    %c1_490 = arith.constant 1 : index
    %c0_491 = arith.constant 0 : index
    %c0_492 = arith.constant 0 : index
    %c0_493 = arith.constant 0 : index
    %905 = vector.load %arg32[%c1_490, %c0_491, %c0_492, %c0_493] : memref<2x1x32x32xbf16, #tpu.memory_space<vmem>>, vector<1x1x32x32xbf16>
    %906 = vector.shape_cast %905 : vector<1x1x32x32xbf16> to vector<32x32xbf16>
    %c1_494 = arith.constant 1 : index
    %c0_495 = arith.constant 0 : index
    %c0_496 = arith.constant 0 : index
    %c0_497 = arith.constant 0 : index
    %907 = vector.load %arg33[%c1_494, %c0_495, %c0_496, %c0_497] : memref<2x1x1x32xf32, #tpu.memory_space<vmem>>, vector<1x1x1x32xf32>
    %908 = vector.shape_cast %907 : vector<1x1x1x32xf32> to vector<1x32xf32>
    %c1_498 = arith.constant 1 : index
    %c0_499 = arith.constant 0 : index
    %c0_500 = arith.constant 0 : index
    %c0_501 = arith.constant 0 : index
    %909 = vector.load %arg35[%c1_498, %c0_499, %c0_500, %c0_501] : memref<2x1x32x64xbf16, #tpu.memory_space<vmem>>, vector<1x1x32x64xbf16>
    %910 = vector.shape_cast %909 : vector<1x1x32x64xbf16> to vector<32x64xbf16>
    %c1_502 = arith.constant 1 : index
    %c0_503 = arith.constant 0 : index
    %c0_504 = arith.constant 0 : index
    %c0_505 = arith.constant 0 : index
    %911 = vector.load %arg36[%c1_502, %c0_503, %c0_504, %c0_505] : memref<2x1x1x64xf32, #tpu.memory_space<vmem>>, vector<1x1x1x64xf32>
    %912 = vector.shape_cast %911 : vector<1x1x1x64xf32> to vector<1x64xf32>
    %c1_506 = arith.constant 1 : index
    %c0_507 = arith.constant 0 : index
    %c0_508 = arith.constant 0 : index
    %c0_509 = arith.constant 0 : index
    %913 = vector.load %arg37[%c1_506, %c0_507, %c0_508, %c0_509] : memref<2x1x64x32xbf16, #tpu.memory_space<vmem>>, vector<1x1x64x32xbf16>
    %914 = vector.shape_cast %913 : vector<1x1x64x32xbf16> to vector<64x32xbf16>
    %c1_510 = arith.constant 1 : index
    %c0_511 = arith.constant 0 : index
    %c0_512 = arith.constant 0 : index
    %c0_513 = arith.constant 0 : index
    %915 = vector.load %arg38[%c1_510, %c0_511, %c0_512, %c0_513] : memref<2x1x1x32xf32, #tpu.memory_space<vmem>>, vector<1x1x1x32xf32>
    %916 = vector.shape_cast %915 : vector<1x1x1x32xf32> to vector<1x32xf32>
    %cst_514 = arith.constant dense<0.000000e+00> : vector<8xf32>
    %917 = vector.multi_reduction <add>, %896, %cst_514 [1] : vector<8x32xf32> to vector<8xf32>
    %918 = vector.shape_cast %917 : vector<8xf32> to vector<8x1xf32>
    %cst_515 = arith.constant 3.200000e+01 : f32
    %919 = vector.broadcast %cst_515 : f32 to vector<8x1xf32>
    %920 = arith.divf %918, %919 : vector<8x1xf32>
    %921 = arith.mulf %896, %896 : vector<8x32xf32>
    %cst_516 = arith.constant dense<0.000000e+00> : vector<8xf32>
    %922 = vector.multi_reduction <add>, %921, %cst_516 [1] : vector<8x32xf32> to vector<8xf32>
    %923 = vector.shape_cast %922 : vector<8xf32> to vector<8x1xf32>
    %cst_517 = arith.constant 3.200000e+01 : f32
    %924 = vector.broadcast %cst_517 : f32 to vector<8x1xf32>
    %925 = arith.divf %923, %924 : vector<8x1xf32>
    %926 = arith.mulf %920, %920 : vector<8x1xf32>
    %927 = arith.subf %925, %926 : vector<8x1xf32>
    %cst_518 = arith.constant 0.000000e+00 : f32
    %928 = vector.broadcast %cst_518 : f32 to vector<8x1xf32>
    %929 = arith.maximumf %927, %928 : vector<8x1xf32>
    %930 = vector.broadcast %920 : vector<8x1xf32> to vector<8x32xf32>
    %931 = arith.subf %896, %930 : vector<8x32xf32>
    %cst_519 = arith.constant 9.99999997E-7 : f32
    %932 = vector.broadcast %cst_519 : f32 to vector<8x1xf32>
    %933 = arith.addf %929, %932 : vector<8x1xf32>
    %934 = math.rsqrt %933 : vector<8x1xf32>
    %935 = vector.broadcast %934 : vector<8x1xf32> to vector<8x32xf32>
    %936 = arith.mulf %931, %935 : vector<8x32xf32>
    %937 = vector.extract_strided_slice %898 {offsets = [0, 0], sizes = [1, 32], strides = [1, 1]} : vector<2x32xf32> to vector<1x32xf32>
    %938 = vector.broadcast %937 : vector<1x32xf32> to vector<8x32xf32>
    %939 = arith.mulf %936, %938 : vector<8x32xf32>
    %940 = vector.extract_strided_slice %898 {offsets = [1, 0], sizes = [1, 32], strides = [1, 1]} : vector<2x32xf32> to vector<1x32xf32>
    %941 = vector.broadcast %940 : vector<1x32xf32> to vector<8x32xf32>
    %942 = arith.addf %939, %941 : vector<8x32xf32>
    %943 = arith.truncf %942 : vector<8x32xf32> to vector<8x32xbf16>
    %cst_520 = arith.constant dense<0.000000e+00> : vector<8x96xf32>
    %944 = tpu.matmul %943, %902, %cst_520 {dimension_numbers = #tpu.dot_dimension_numbers<[1], [0], [0], [1], [0, 0, 1, 1], [], []>} : vector<8x32xbf16>, vector<32x96xbf16>, vector<8x96xf32> -> vector<8x96xf32>
    %945 = vector.broadcast %904 : vector<1x96xf32> to vector<8x96xf32>
    %946 = arith.addf %944, %945 : vector<8x96xf32>
    %947 = vector.extract_strided_slice %946 {offsets = [0, 0], sizes = [8, 32], strides = [1, 1]} : vector<8x96xf32> to vector<8x32xf32>
    %948 = vector.extract_strided_slice %946 {offsets = [0, 32], sizes = [8, 32], strides = [1, 1]} : vector<8x96xf32> to vector<8x32xf32>
    %949 = vector.extract_strided_slice %946 {offsets = [0, 64], sizes = [8, 32], strides = [1, 1]} : vector<8x96xf32> to vector<8x32xf32>
    %950 = vector.extract_strided_slice %947 {offsets = [0, 0], sizes = [8, 16], strides = [1, 1]} : vector<8x32xf32> to vector<8x16xf32>
    %951 = vector.extract_strided_slice %948 {offsets = [0, 0], sizes = [8, 16], strides = [1, 1]} : vector<8x32xf32> to vector<8x16xf32>
    %952 = arith.truncf %950 : vector<8x16xf32> to vector<8x16xbf16>
    %953 = arith.truncf %951 : vector<8x16xf32> to vector<8x16xbf16>
    %cst_521 = arith.constant dense<0.000000e+00> : vector<8x8xf32>
    %954 = tpu.matmul %952, %953, %cst_521 {dimension_numbers = #tpu.dot_dimension_numbers<[1], [1], [0], [0], [0, 0, 1, 0], [], []>} : vector<8x16xbf16>, vector<8x16xbf16>, vector<8x8xf32> -> vector<8x8xf32>
    %cst_522 = arith.constant 2.500000e-01 : f32
    %955 = vector.broadcast %cst_522 : f32 to vector<8x8xf32>
    %956 = arith.mulf %954, %955 : vector<8x8xf32>
    %957 = arith.addf %956, %1 : vector<8x8xf32>
    %cst_523 = arith.constant dense<0xFF800000> : vector<8xf32>
    %958 = vector.multi_reduction <maximumf>, %957, %cst_523 [1] : vector<8x8xf32> to vector<8xf32>
    %959 = vector.shape_cast %958 : vector<8xf32> to vector<8x1xf32>
    %960 = vector.broadcast %959 : vector<8x1xf32> to vector<8x8xf32>
    %961 = arith.subf %957, %960 : vector<8x8xf32>
    %962 = math.exp %961 : vector<8x8xf32>
    %cst_524 = arith.constant dense<0.000000e+00> : vector<8xf32>
    %963 = vector.multi_reduction <add>, %962, %cst_524 [1] : vector<8x8xf32> to vector<8xf32>
    %964 = vector.shape_cast %963 : vector<8xf32> to vector<8x1xf32>
    %965 = tpu.reciprocal %964 {approx = true} : vector<8x1xf32> -> vector<8x1xf32>
    %966 = vector.broadcast %965 : vector<8x1xf32> to vector<8x8xf32>
    %967 = arith.mulf %962, %966 : vector<8x8xf32>
    %968 = vector.extract_strided_slice %949 {offsets = [0, 0], sizes = [8, 16], strides = [1, 1]} : vector<8x32xf32> to vector<8x16xf32>
    %969 = arith.truncf %967 : vector<8x8xf32> to vector<8x8xbf16>
    %970 = arith.truncf %968 : vector<8x16xf32> to vector<8x16xbf16>
    %cst_525 = arith.constant dense<0.000000e+00> : vector<8x16xf32>
    %971 = tpu.matmul %969, %970, %cst_525 {dimension_numbers = #tpu.dot_dimension_numbers<[1], [0], [0], [1], [0, 0, 1, 1], [], []>} : vector<8x8xbf16>, vector<8x16xbf16>, vector<8x16xf32> -> vector<8x16xf32>
    %972 = vector.extract_strided_slice %906 {offsets = [0, 0], sizes = [16, 32], strides = [1, 1]} : vector<32x32xbf16> to vector<16x32xbf16>
    %973 = arith.truncf %971 : vector<8x16xf32> to vector<8x16xbf16>
    %cst_526 = arith.constant dense<0.000000e+00> : vector<8x32xf32>
    %974 = tpu.matmul %973, %972, %cst_526 {dimension_numbers = #tpu.dot_dimension_numbers<[1], [0], [0], [1], [0, 0, 1, 1], [], []>} : vector<8x16xbf16>, vector<16x32xbf16>, vector<8x32xf32> -> vector<8x32xf32>
    %975 = vector.extract_strided_slice %947 {offsets = [0, 16], sizes = [8, 16], strides = [1, 1]} : vector<8x32xf32> to vector<8x16xf32>
    %976 = vector.extract_strided_slice %948 {offsets = [0, 16], sizes = [8, 16], strides = [1, 1]} : vector<8x32xf32> to vector<8x16xf32>
    %977 = arith.truncf %975 : vector<8x16xf32> to vector<8x16xbf16>
    %978 = arith.truncf %976 : vector<8x16xf32> to vector<8x16xbf16>
    %cst_527 = arith.constant dense<0.000000e+00> : vector<8x8xf32>
    %979 = tpu.matmul %977, %978, %cst_527 {dimension_numbers = #tpu.dot_dimension_numbers<[1], [1], [0], [0], [0, 0, 1, 0], [], []>} : vector<8x16xbf16>, vector<8x16xbf16>, vector<8x8xf32> -> vector<8x8xf32>
    %cst_528 = arith.constant 2.500000e-01 : f32
    %980 = vector.broadcast %cst_528 : f32 to vector<8x8xf32>
    %981 = arith.mulf %979, %980 : vector<8x8xf32>
    %982 = arith.addf %981, %1 : vector<8x8xf32>
    %cst_529 = arith.constant dense<0xFF800000> : vector<8xf32>
    %983 = vector.multi_reduction <maximumf>, %982, %cst_529 [1] : vector<8x8xf32> to vector<8xf32>
    %984 = vector.shape_cast %983 : vector<8xf32> to vector<8x1xf32>
    %985 = vector.broadcast %984 : vector<8x1xf32> to vector<8x8xf32>
    %986 = arith.subf %982, %985 : vector<8x8xf32>
    %987 = math.exp %986 : vector<8x8xf32>
    %cst_530 = arith.constant dense<0.000000e+00> : vector<8xf32>
    %988 = vector.multi_reduction <add>, %987, %cst_530 [1] : vector<8x8xf32> to vector<8xf32>
    %989 = vector.shape_cast %988 : vector<8xf32> to vector<8x1xf32>
    %990 = tpu.reciprocal %989 {approx = true} : vector<8x1xf32> -> vector<8x1xf32>
    %991 = vector.broadcast %990 : vector<8x1xf32> to vector<8x8xf32>
    %992 = arith.mulf %987, %991 : vector<8x8xf32>
    %993 = vector.extract_strided_slice %949 {offsets = [0, 16], sizes = [8, 16], strides = [1, 1]} : vector<8x32xf32> to vector<8x16xf32>
    %994 = arith.truncf %992 : vector<8x8xf32> to vector<8x8xbf16>
    %995 = arith.truncf %993 : vector<8x16xf32> to vector<8x16xbf16>
    %cst_531 = arith.constant dense<0.000000e+00> : vector<8x16xf32>
    %996 = tpu.matmul %994, %995, %cst_531 {dimension_numbers = #tpu.dot_dimension_numbers<[1], [0], [0], [1], [0, 0, 1, 1], [], []>} : vector<8x8xbf16>, vector<8x16xbf16>, vector<8x16xf32> -> vector<8x16xf32>
    %997 = vector.extract_strided_slice %906 {offsets = [16, 0], sizes = [16, 32], strides = [1, 1]} : vector<32x32xbf16> to vector<16x32xbf16>
    %998 = arith.truncf %996 : vector<8x16xf32> to vector<8x16xbf16>
    %cst_532 = arith.constant dense<0.000000e+00> : vector<8x32xf32>
    %999 = tpu.matmul %998, %997, %cst_532 {dimension_numbers = #tpu.dot_dimension_numbers<[1], [0], [0], [1], [0, 0, 1, 1], [], []>} : vector<8x16xbf16>, vector<16x32xbf16>, vector<8x32xf32> -> vector<8x32xf32>
    %1000 = arith.addf %974, %999 : vector<8x32xf32>
    %1001 = arith.addf %896, %1000 : vector<8x32xf32>
    %1002 = vector.broadcast %908 : vector<1x32xf32> to vector<8x32xf32>
    %1003 = arith.addf %1001, %1002 : vector<8x32xf32>
    %cst_533 = arith.constant dense<0.000000e+00> : vector<8xf32>
    %1004 = vector.multi_reduction <add>, %1003, %cst_533 [1] : vector<8x32xf32> to vector<8xf32>
    %1005 = vector.shape_cast %1004 : vector<8xf32> to vector<8x1xf32>
    %cst_534 = arith.constant 3.200000e+01 : f32
    %1006 = vector.broadcast %cst_534 : f32 to vector<8x1xf32>
    %1007 = arith.divf %1005, %1006 : vector<8x1xf32>
    %1008 = arith.mulf %1003, %1003 : vector<8x32xf32>
    %cst_535 = arith.constant dense<0.000000e+00> : vector<8xf32>
    %1009 = vector.multi_reduction <add>, %1008, %cst_535 [1] : vector<8x32xf32> to vector<8xf32>
    %1010 = vector.shape_cast %1009 : vector<8xf32> to vector<8x1xf32>
    %cst_536 = arith.constant 3.200000e+01 : f32
    %1011 = vector.broadcast %cst_536 : f32 to vector<8x1xf32>
    %1012 = arith.divf %1010, %1011 : vector<8x1xf32>
    %1013 = arith.mulf %1007, %1007 : vector<8x1xf32>
    %1014 = arith.subf %1012, %1013 : vector<8x1xf32>
    %cst_537 = arith.constant 0.000000e+00 : f32
    %1015 = vector.broadcast %cst_537 : f32 to vector<8x1xf32>
    %1016 = arith.maximumf %1014, %1015 : vector<8x1xf32>
    %1017 = vector.broadcast %1007 : vector<8x1xf32> to vector<8x32xf32>
    %1018 = arith.subf %1003, %1017 : vector<8x32xf32>
    %cst_538 = arith.constant 9.99999997E-7 : f32
    %1019 = vector.broadcast %cst_538 : f32 to vector<8x1xf32>
    %1020 = arith.addf %1016, %1019 : vector<8x1xf32>
    %1021 = math.rsqrt %1020 : vector<8x1xf32>
    %1022 = vector.broadcast %1021 : vector<8x1xf32> to vector<8x32xf32>
    %1023 = arith.mulf %1018, %1022 : vector<8x32xf32>
    %1024 = vector.extract_strided_slice %900 {offsets = [0, 0], sizes = [1, 32], strides = [1, 1]} : vector<2x32xf32> to vector<1x32xf32>
    %1025 = vector.broadcast %1024 : vector<1x32xf32> to vector<8x32xf32>
    %1026 = arith.mulf %1023, %1025 : vector<8x32xf32>
    %1027 = vector.extract_strided_slice %900 {offsets = [1, 0], sizes = [1, 32], strides = [1, 1]} : vector<2x32xf32> to vector<1x32xf32>
    %1028 = vector.broadcast %1027 : vector<1x32xf32> to vector<8x32xf32>
    %1029 = arith.addf %1026, %1028 : vector<8x32xf32>
    %1030 = arith.truncf %1029 : vector<8x32xf32> to vector<8x32xbf16>
    %cst_539 = arith.constant dense<0.000000e+00> : vector<8x64xf32>
    %1031 = tpu.matmul %1030, %910, %cst_539 {dimension_numbers = #tpu.dot_dimension_numbers<[1], [0], [0], [1], [0, 0, 1, 1], [], []>} : vector<8x32xbf16>, vector<32x64xbf16>, vector<8x64xf32> -> vector<8x64xf32>
    %1032 = vector.broadcast %912 : vector<1x64xf32> to vector<8x64xf32>
    %1033 = arith.addf %1031, %1032 : vector<8x64xf32>
    %1034 = arith.mulf %1033, %1033 : vector<8x64xf32>
    %1035 = arith.mulf %1033, %1034 : vector<8x64xf32>
    %cst_540 = arith.constant 4.471500e-02 : f32
    %1036 = vector.broadcast %cst_540 : f32 to vector<8x64xf32>
    %1037 = arith.mulf %1036, %1035 : vector<8x64xf32>
    %1038 = arith.addf %1033, %1037 : vector<8x64xf32>
    %cst_541 = arith.constant 0.797884583 : f32
    %1039 = vector.broadcast %cst_541 : f32 to vector<8x64xf32>
    %1040 = arith.mulf %1039, %1038 : vector<8x64xf32>
    %1041 = math.tanh %1040 : vector<8x64xf32>
    %cst_542 = arith.constant 1.000000e+00 : f32
    %1042 = vector.broadcast %cst_542 : f32 to vector<8x64xf32>
    %1043 = arith.addf %1042, %1041 : vector<8x64xf32>
    %cst_543 = arith.constant 5.000000e-01 : f32
    %1044 = vector.broadcast %cst_543 : f32 to vector<8x64xf32>
    %1045 = arith.mulf %1044, %1043 : vector<8x64xf32>
    %1046 = arith.mulf %1033, %1045 : vector<8x64xf32>
    %1047 = arith.truncf %1046 : vector<8x64xf32> to vector<8x64xbf16>
    %cst_544 = arith.constant dense<0.000000e+00> : vector<8x32xf32>
    %1048 = tpu.matmul %1047, %914, %cst_544 {dimension_numbers = #tpu.dot_dimension_numbers<[1], [0], [0], [1], [0, 0, 1, 1], [], []>} : vector<8x64xbf16>, vector<64x32xbf16>, vector<8x32xf32> -> vector<8x32xf32>
    %1049 = vector.broadcast %916 : vector<1x32xf32> to vector<8x32xf32>
    %1050 = arith.addf %1048, %1049 : vector<8x32xf32>
    %1051 = arith.addf %1003, %1050 : vector<8x32xf32>
    %c1_545 = arith.constant 1 : index
    %c0_546 = arith.constant 0 : index
    %c0_547 = arith.constant 0 : index
    %1052 = vector.load %arg39[%c1_545, %c0_546, %c0_547] : memref<2x2x32xf32, #tpu.memory_space<vmem>>, vector<1x2x32xf32>
    %1053 = vector.shape_cast %1052 : vector<1x2x32xf32> to vector<2x32xf32>
    %cst_548 = arith.constant dense<0.000000e+00> : vector<8xf32>
    %1054 = vector.multi_reduction <add>, %1051, %cst_548 [1] : vector<8x32xf32> to vector<8xf32>
    %1055 = vector.shape_cast %1054 : vector<8xf32> to vector<8x1xf32>
    %cst_549 = arith.constant 3.200000e+01 : f32
    %1056 = vector.broadcast %cst_549 : f32 to vector<8x1xf32>
    %1057 = arith.divf %1055, %1056 : vector<8x1xf32>
    %1058 = arith.mulf %1051, %1051 : vector<8x32xf32>
    %cst_550 = arith.constant dense<0.000000e+00> : vector<8xf32>
    %1059 = vector.multi_reduction <add>, %1058, %cst_550 [1] : vector<8x32xf32> to vector<8xf32>
    %1060 = vector.shape_cast %1059 : vector<8xf32> to vector<8x1xf32>
    %cst_551 = arith.constant 3.200000e+01 : f32
    %1061 = vector.broadcast %cst_551 : f32 to vector<8x1xf32>
    %1062 = arith.divf %1060, %1061 : vector<8x1xf32>
    %1063 = arith.mulf %1057, %1057 : vector<8x1xf32>
    %1064 = arith.subf %1062, %1063 : vector<8x1xf32>
    %cst_552 = arith.constant 0.000000e+00 : f32
    %1065 = vector.broadcast %cst_552 : f32 to vector<8x1xf32>
    %1066 = arith.maximumf %1064, %1065 : vector<8x1xf32>
    %1067 = vector.broadcast %1057 : vector<8x1xf32> to vector<8x32xf32>
    %1068 = arith.subf %1051, %1067 : vector<8x32xf32>
    %cst_553 = arith.constant 9.99999997E-7 : f32
    %1069 = vector.broadcast %cst_553 : f32 to vector<8x1xf32>
    %1070 = arith.addf %1066, %1069 : vector<8x1xf32>
    %1071 = math.rsqrt %1070 : vector<8x1xf32>
    %1072 = vector.broadcast %1071 : vector<8x1xf32> to vector<8x32xf32>
    %1073 = arith.mulf %1068, %1072 : vector<8x32xf32>
    %1074 = vector.extract_strided_slice %1053 {offsets = [0, 0], sizes = [1, 32], strides = [1, 1]} : vector<2x32xf32> to vector<1x32xf32>
    %1075 = vector.broadcast %1074 : vector<1x32xf32> to vector<8x32xf32>
    %1076 = arith.mulf %1073, %1075 : vector<8x32xf32>
    %1077 = vector.extract_strided_slice %1053 {offsets = [1, 0], sizes = [1, 32], strides = [1, 1]} : vector<2x32xf32> to vector<1x32xf32>
    %1078 = vector.broadcast %1077 : vector<1x32xf32> to vector<8x32xf32>
    %1079 = arith.addf %1076, %1078 : vector<8x32xf32>
    %c0_554 = arith.constant 0 : index
    %c0_555 = arith.constant 0 : index
    %c0_556 = arith.constant 0 : index
    %1080 = vector.load %arg40[%c0_554, %c0_555, %c0_556] : memref<2x16x16xbf16, #tpu.memory_space<vmem>>, vector<1x16x16xbf16>
    %1081 = vector.shape_cast %1080 : vector<1x16x16xbf16> to vector<16x16xbf16>
    %1082 = arith.truncf %260 : vector<32x16xf32> to vector<32x16xbf16>
    %cst_557 = arith.constant dense<0.000000e+00> : vector<32x16xf32>
    %1083 = tpu.matmul %1082, %1081, %cst_557 {dimension_numbers = #tpu.dot_dimension_numbers<[1], [0], [0], [1], [0, 0, 1, 1], [], []>} : vector<32x16xbf16>, vector<16x16xbf16>, vector<32x16xf32> -> vector<32x16xf32>
    %c1_558 = arith.constant 1 : index
    %c0_559 = arith.constant 0 : index
    %c0_560 = arith.constant 0 : index
    %1084 = vector.load %arg40[%c1_558, %c0_559, %c0_560] : memref<2x16x16xbf16, #tpu.memory_space<vmem>>, vector<1x16x16xbf16>
    %1085 = vector.shape_cast %1084 : vector<1x16x16xbf16> to vector<16x16xbf16>
    %1086 = arith.truncf %799 : vector<32x16xf32> to vector<32x16xbf16>
    %cst_561 = arith.constant dense<0.000000e+00> : vector<32x16xf32>
    %1087 = tpu.matmul %1086, %1085, %cst_561 {dimension_numbers = #tpu.dot_dimension_numbers<[1], [0], [0], [1], [0, 0, 1, 1], [], []>} : vector<32x16xbf16>, vector<16x16xbf16>, vector<32x16xf32> -> vector<32x16xf32>
    %1088 = arith.addf %1083, %1087 : vector<32x16xf32>
    %c0_562 = arith.constant 0 : index
    %c0_563 = arith.constant 0 : index
    %1089 = vector.load %arg41[%c0_562, %c0_563] : memref<1x16xf32, #tpu.memory_space<vmem>>, vector<1x16xf32>
    %1090 = vector.broadcast %1089 : vector<1x16xf32> to vector<32x16xf32>
    %1091 = arith.addf %1088, %1090 : vector<32x16xf32>
    %c0_564 = arith.constant 0 : index
    %c0_565 = arith.constant 0 : index
    %c0_566 = arith.constant 0 : index
    %1092 = vector.load %arg42[%c0_564, %c0_565, %c0_566] : memref<2x32x32xbf16, #tpu.memory_space<vmem>>, vector<1x32x32xbf16>
    %1093 = vector.shape_cast %1092 : vector<1x32x32xbf16> to vector<32x32xbf16>
    %1094 = arith.truncf %540 : vector<8x32xf32> to vector<8x32xbf16>
    %cst_567 = arith.constant dense<0.000000e+00> : vector<8x32xf32>
    %1095 = tpu.matmul %1094, %1093, %cst_567 {dimension_numbers = #tpu.dot_dimension_numbers<[1], [0], [0], [1], [0, 0, 1, 1], [], []>} : vector<8x32xbf16>, vector<32x32xbf16>, vector<8x32xf32> -> vector<8x32xf32>
    %c1_568 = arith.constant 1 : index
    %c0_569 = arith.constant 0 : index
    %c0_570 = arith.constant 0 : index
    %1096 = vector.load %arg42[%c1_568, %c0_569, %c0_570] : memref<2x32x32xbf16, #tpu.memory_space<vmem>>, vector<1x32x32xbf16>
    %1097 = vector.shape_cast %1096 : vector<1x32x32xbf16> to vector<32x32xbf16>
    %1098 = arith.truncf %1079 : vector<8x32xf32> to vector<8x32xbf16>
    %cst_571 = arith.constant dense<0.000000e+00> : vector<8x32xf32>
    %1099 = tpu.matmul %1098, %1097, %cst_571 {dimension_numbers = #tpu.dot_dimension_numbers<[1], [0], [0], [1], [0, 0, 1, 1], [], []>} : vector<8x32xbf16>, vector<32x32xbf16>, vector<8x32xf32> -> vector<8x32xf32>
    %1100 = arith.addf %1095, %1099 : vector<8x32xf32>
    %c0_572 = arith.constant 0 : index
    %c0_573 = arith.constant 0 : index
    %1101 = vector.load %arg43[%c0_572, %c0_573] : memref<1x32xf32, #tpu.memory_space<vmem>>, vector<1x32xf32>
    %1102 = vector.broadcast %1101 : vector<1x32xf32> to vector<8x32xf32>
    %1103 = arith.addf %1100, %1102 : vector<8x32xf32>
    %c0_574 = arith.constant 0 : index
    %c0_575 = arith.constant 0 : index
    %1104 = vector.load %arg44[%c0_574, %c0_575] : memref<16x32xbf16, #tpu.memory_space<vmem>>, vector<16x32xbf16>
    %1105 = arith.truncf %1091 : vector<32x16xf32> to vector<32x16xbf16>
    %cst_576 = arith.constant dense<0.000000e+00> : vector<32x32xf32>
    %1106 = tpu.matmul %1105, %1104, %cst_576 {dimension_numbers = #tpu.dot_dimension_numbers<[1], [0], [0], [1], [0, 0, 1, 1], [], []>} : vector<32x16xbf16>, vector<16x32xbf16>, vector<32x32xf32> -> vector<32x32xf32>
    %c0_577 = arith.constant 0 : index
    %c0_578 = arith.constant 0 : index
    %1107 = vector.load %arg45[%c0_577, %c0_578] : memref<1x32xf32, #tpu.memory_space<vmem>>, vector<1x32xf32>
    %1108 = vector.broadcast %1107 : vector<1x32xf32> to vector<32x32xf32>
    %1109 = arith.addf %1106, %1108 : vector<32x32xf32>
    %c0_579 = arith.constant 0 : index
    %c0_580 = arith.constant 0 : index
    %1110 = vector.load %arg46[%c0_579, %c0_580] : memref<32x32xbf16, #tpu.memory_space<vmem>>, vector<32x32xbf16>
    %1111 = arith.truncf %1103 : vector<8x32xf32> to vector<8x32xbf16>
    %cst_581 = arith.constant dense<0.000000e+00> : vector<8x32xf32>
    %1112 = tpu.matmul %1111, %1110, %cst_581 {dimension_numbers = #tpu.dot_dimension_numbers<[1], [0], [0], [1], [0, 0, 1, 1], [], []>} : vector<8x32xbf16>, vector<32x32xbf16>, vector<8x32xf32> -> vector<8x32xf32>
    %c0_582 = arith.constant 0 : index
    %c0_583 = arith.constant 0 : index
    %1113 = vector.load %arg47[%c0_582, %c0_583] : memref<1x32xf32, #tpu.memory_space<vmem>>, vector<1x32xf32>
    %1114 = vector.broadcast %1113 : vector<1x32xf32> to vector<8x32xf32>
    %1115 = arith.addf %1112, %1114 : vector<8x32xf32>
    %c0_584 = arith.constant 0 : index
    %c0_585 = arith.constant 0 : index
    %1116 = vector.load %arg6[%c0_584, %c0_585] : memref<32x8xbf16, #tpu.memory_space<vmem>>, vector<32x8xbf16>
    %1117 = arith.truncf %1115 : vector<8x32xf32> to vector<8x32xbf16>
    %cst_586 = arith.constant dense<0.000000e+00> : vector<32x32xf32>
    %1118 = tpu.matmul %1116, %1117, %cst_586 {dimension_numbers = #tpu.dot_dimension_numbers<[1], [0], [0], [1], [0, 0, 1, 1], [], []>} : vector<32x8xbf16>, vector<8x32xbf16>, vector<32x32xf32> -> vector<32x32xf32>
    %c0_587 = arith.constant 0 : index
    %c0_588 = arith.constant 0 : index
    %c0_589 = arith.constant 0 : index
    %1119 = vector.load %arg48[%c0_587, %c0_588, %c0_589] : memref<2x32x32xbf16, #tpu.memory_space<vmem>>, vector<1x32x32xbf16>
    %1120 = vector.shape_cast %1119 : vector<1x32x32xbf16> to vector<32x32xbf16>
    %1121 = arith.truncf %1118 : vector<32x32xf32> to vector<32x32xbf16>
    %cst_590 = arith.constant dense<0.000000e+00> : vector<32x32xf32>
    %1122 = tpu.matmul %1121, %1120, %cst_590 {dimension_numbers = #tpu.dot_dimension_numbers<[1], [0], [0], [1], [0, 0, 1, 1], [], []>} : vector<32x32xbf16>, vector<32x32xbf16>, vector<32x32xf32> -> vector<32x32xf32>
    %c1_591 = arith.constant 1 : index
    %c0_592 = arith.constant 0 : index
    %c0_593 = arith.constant 0 : index
    %1123 = vector.load %arg48[%c1_591, %c0_592, %c0_593] : memref<2x32x32xbf16, #tpu.memory_space<vmem>>, vector<1x32x32xbf16>
    %1124 = vector.shape_cast %1123 : vector<1x32x32xbf16> to vector<32x32xbf16>
    %1125 = arith.truncf %1109 : vector<32x32xf32> to vector<32x32xbf16>
    %cst_594 = arith.constant dense<0.000000e+00> : vector<32x32xf32>
    %1126 = tpu.matmul %1125, %1124, %cst_594 {dimension_numbers = #tpu.dot_dimension_numbers<[1], [0], [0], [1], [0, 0, 1, 1], [], []>} : vector<32x32xbf16>, vector<32x32xbf16>, vector<32x32xf32> -> vector<32x32xf32>
    %1127 = arith.addf %1122, %1126 : vector<32x32xf32>
    %c0_595 = arith.constant 0 : index
    %c0_596 = arith.constant 0 : index
    %1128 = vector.load %arg49[%c0_595, %c0_596] : memref<1x32xf32, #tpu.memory_space<vmem>>, vector<1x32xf32>
    %1129 = vector.broadcast %1128 : vector<1x32xf32> to vector<32x32xf32>
    %1130 = arith.addf %1127, %1129 : vector<32x32xf32>
    %cst_597 = arith.constant 0.000000e+00 : f32
    %1131 = vector.broadcast %cst_597 : f32 to vector<32x32xf32>
    %1132 = arith.maximumf %1130, %1131 : vector<32x32xf32>
    %c0_598 = arith.constant 0 : index
    %c0_599 = arith.constant 0 : index
    %1133 = vector.load %arg50[%c0_598, %c0_599] : memref<32x128xbf16, #tpu.memory_space<vmem>>, vector<32x128xbf16>
    %1134 = arith.truncf %1132 : vector<32x32xf32> to vector<32x32xbf16>
    %cst_600 = arith.constant dense<0.000000e+00> : vector<32x128xf32>
    %1135 = tpu.matmul %1134, %1133, %cst_600 {dimension_numbers = #tpu.dot_dimension_numbers<[1], [0], [0], [1], [0, 0, 1, 1], [], []>} : vector<32x32xbf16>, vector<32x128xbf16>, vector<32x128xf32> -> vector<32x128xf32>
    %c0_601 = arith.constant 0 : index
    %c0_602 = arith.constant 0 : index
    %1136 = vector.load %arg51[%c0_601, %c0_602] : memref<1x128xf32, #tpu.memory_space<vmem>>, vector<1x128xf32>
    %1137 = vector.broadcast %1136 : vector<1x128xf32> to vector<32x128xf32>
    %1138 = arith.addf %1135, %1137 : vector<32x128xf32>
    %c0_603 = arith.constant 0 : index
    %c0_604 = arith.constant 0 : index
    %1139 = vector.load %arg52[%c0_603, %c0_604] : memref<32x128xf32, #tpu.memory_space<vmem>>, vector<32x128xf32>
    tpu.vector_store %arg52[%c0_603, %c0_604], %1138 {strides = array<i32>} : memref<32x128xf32, #tpu.memory_space<vmem>>, vector<32x128xf32>,
    return
  }
  func.func @transform_0(%arg0: i32) -> (i32, i32, i32) {
    %c0_i32 = arith.constant 0 : i32
    %c0_i32_0 = arith.constant 0 : i32
    %c0_i32_1 = arith.constant 0 : i32
    %c0_i32_2 = arith.constant 0 : i32
    return %c0_i32, %c0_i32_0, %c0_i32_1 : i32, i32, i32
  }
  func.func @transform_1(%arg0: i32) -> (i32, i32) {
    %c0_i32 = arith.constant 0 : i32
    %c0_i32_0 = arith.constant 0 : i32
    %c0_i32_1 = arith.constant 0 : i32
    return %c0_i32, %c0_i32_0 : i32, i32
  }
  func.func @transform_2(%arg0: i32) -> (i32, i32) {
    %c0_i32 = arith.constant 0 : i32
    %c0_i32_0 = arith.constant 0 : i32
    %c0_i32_1 = arith.constant 0 : i32
    return %c0_i32, %c0_i32_0 : i32, i32
  }
  func.func @transform_3(%arg0: i32) -> (i32, i32, i32) {
    %c0_i32 = arith.constant 0 : i32
    %c0_i32_0 = arith.constant 0 : i32
    %c0_i32_1 = arith.constant 0 : i32
    %c0_i32_2 = arith.constant 0 : i32
    return %c0_i32, %c0_i32_0, %c0_i32_1 : i32, i32, i32
  }
  func.func @transform_4(%arg0: i32) -> (i32, i32, i32) {
    %c0_i32 = arith.constant 0 : i32
    %c0_i32_0 = arith.constant 0 : i32
    %c0_i32_1 = arith.constant 0 : i32
    %c0_i32_2 = arith.constant 0 : i32
    return %c0_i32, %c0_i32_0, %c0_i32_1 : i32, i32, i32
  }
  func.func @transform_5(%arg0: i32) -> (i32, i32) {
    %c0_i32 = arith.constant 0 : i32
    %c0_i32_0 = arith.constant 0 : i32
    %c0_i32_1 = arith.constant 0 : i32
    return %c0_i32, %c0_i32_0 : i32, i32
  }
  func.func @transform_6(%arg0: i32) -> (i32, i32, i32) {
    %c0_i32 = arith.constant 0 : i32
    %c0_i32_0 = arith.constant 0 : i32
    %c0_i32_1 = arith.constant 0 : i32
    %c0_i32_2 = arith.constant 0 : i32
    return %c0_i32, %c0_i32_0, %c0_i32_1 : i32, i32, i32
  }
  func.func @transform_7(%arg0: i32) -> (i32, i32, i32) {
    %c0_i32 = arith.constant 0 : i32
    %c0_i32_0 = arith.constant 0 : i32
    %c0_i32_1 = arith.constant 0 : i32
    %c0_i32_2 = arith.constant 0 : i32
    return %c0_i32, %c0_i32_0, %c0_i32_1 : i32, i32, i32
  }
  func.func @transform_8(%arg0: i32) -> (i32, i32, i32) {
    %c0_i32 = arith.constant 0 : i32
    %c0_i32_0 = arith.constant 0 : i32
    %c0_i32_1 = arith.constant 0 : i32
    %c0_i32_2 = arith.constant 0 : i32
    return %c0_i32, %c0_i32_0, %c0_i32_1 : i32, i32, i32
  }
  func.func @transform_9(%arg0: i32) -> (i32, i32, i32, i32) {
    %c0_i32 = arith.constant 0 : i32
    %c0_i32_0 = arith.constant 0 : i32
    %c0_i32_1 = arith.constant 0 : i32
    %c0_i32_2 = arith.constant 0 : i32
    %c0_i32_3 = arith.constant 0 : i32
    return %c0_i32, %c0_i32_0, %c0_i32_1, %c0_i32_2 : i32, i32, i32, i32
  }
  func.func @transform_10(%arg0: i32) -> (i32, i32, i32, i32) {
    %c0_i32 = arith.constant 0 : i32
    %c0_i32_0 = arith.constant 0 : i32
    %c0_i32_1 = arith.constant 0 : i32
    %c0_i32_2 = arith.constant 0 : i32
    %c0_i32_3 = arith.constant 0 : i32
    return %c0_i32, %c0_i32_0, %c0_i32_1, %c0_i32_2 : i32, i32, i32, i32
  }
  func.func @transform_11(%arg0: i32) -> (i32, i32, i32, i32) {
    %c0_i32 = arith.constant 0 : i32
    %c0_i32_0 = arith.constant 0 : i32
    %c0_i32_1 = arith.constant 0 : i32
    %c0_i32_2 = arith.constant 0 : i32
    %c0_i32_3 = arith.constant 0 : i32
    return %c0_i32, %c0_i32_0, %c0_i32_1, %c0_i32_2 : i32, i32, i32, i32
  }
  func.func @transform_12(%arg0: i32) -> (i32, i32, i32, i32) {
    %c0_i32 = arith.constant 0 : i32
    %c0_i32_0 = arith.constant 0 : i32
    %c0_i32_1 = arith.constant 0 : i32
    %c0_i32_2 = arith.constant 0 : i32
    %c0_i32_3 = arith.constant 0 : i32
    return %c0_i32, %c0_i32_0, %c0_i32_1, %c0_i32_2 : i32, i32, i32, i32
  }
  func.func @transform_13(%arg0: i32) -> (i32, i32, i32, i32) {
    %c0_i32 = arith.constant 0 : i32
    %c0_i32_0 = arith.constant 0 : i32
    %c0_i32_1 = arith.constant 0 : i32
    %c0_i32_2 = arith.constant 0 : i32
    %c0_i32_3 = arith.constant 0 : i32
    return %c0_i32, %c0_i32_0, %c0_i32_1, %c0_i32_2 : i32, i32, i32, i32
  }
  func.func @transform_14(%arg0: i32) -> (i32, i32, i32, i32) {
    %c0_i32 = arith.constant 0 : i32
    %c0_i32_0 = arith.constant 0 : i32
    %c0_i32_1 = arith.constant 0 : i32
    %c0_i32_2 = arith.constant 0 : i32
    %c0_i32_3 = arith.constant 0 : i32
    return %c0_i32, %c0_i32_0, %c0_i32_1, %c0_i32_2 : i32, i32, i32, i32
  }
  func.func @transform_15(%arg0: i32) -> (i32, i32, i32, i32) {
    %c0_i32 = arith.constant 0 : i32
    %c0_i32_0 = arith.constant 0 : i32
    %c0_i32_1 = arith.constant 0 : i32
    %c0_i32_2 = arith.constant 0 : i32
    %c0_i32_3 = arith.constant 0 : i32
    return %c0_i32, %c0_i32_0, %c0_i32_1, %c0_i32_2 : i32, i32, i32, i32
  }
  func.func @transform_16(%arg0: i32) -> (i32, i32, i32, i32) {
    %c0_i32 = arith.constant 0 : i32
    %c0_i32_0 = arith.constant 0 : i32
    %c0_i32_1 = arith.constant 0 : i32
    %c0_i32_2 = arith.constant 0 : i32
    %c0_i32_3 = arith.constant 0 : i32
    return %c0_i32, %c0_i32_0, %c0_i32_1, %c0_i32_2 : i32, i32, i32, i32
  }
  func.func @transform_17(%arg0: i32) -> (i32, i32, i32, i32) {
    %c0_i32 = arith.constant 0 : i32
    %c0_i32_0 = arith.constant 0 : i32
    %c0_i32_1 = arith.constant 0 : i32
    %c0_i32_2 = arith.constant 0 : i32
    %c0_i32_3 = arith.constant 0 : i32
    return %c0_i32, %c0_i32_0, %c0_i32_1, %c0_i32_2 : i32, i32, i32, i32
  }
  func.func @transform_18(%arg0: i32) -> (i32, i32, i32, i32) {
    %c0_i32 = arith.constant 0 : i32
    %c0_i32_0 = arith.constant 0 : i32
    %c0_i32_1 = arith.constant 0 : i32
    %c0_i32_2 = arith.constant 0 : i32
    %c0_i32_3 = arith.constant 0 : i32
    return %c0_i32, %c0_i32_0, %c0_i32_1, %c0_i32_2 : i32, i32, i32, i32
  }
  func.func @transform_19(%arg0: i32) -> (i32, i32, i32, i32) {
    %c0_i32 = arith.constant 0 : i32
    %c0_i32_0 = arith.constant 0 : i32
    %c0_i32_1 = arith.constant 0 : i32
    %c0_i32_2 = arith.constant 0 : i32
    %c0_i32_3 = arith.constant 0 : i32
    return %c0_i32, %c0_i32_0, %c0_i32_1, %c0_i32_2 : i32, i32, i32, i32
  }
  func.func @transform_20(%arg0: i32) -> (i32, i32, i32, i32) {
    %c0_i32 = arith.constant 0 : i32
    %c0_i32_0 = arith.constant 0 : i32
    %c0_i32_1 = arith.constant 0 : i32
    %c0_i32_2 = arith.constant 0 : i32
    %c0_i32_3 = arith.constant 0 : i32
    return %c0_i32, %c0_i32_0, %c0_i32_1, %c0_i32_2 : i32, i32, i32, i32
  }
  func.func @transform_21(%arg0: i32) -> (i32, i32, i32, i32) {
    %c0_i32 = arith.constant 0 : i32
    %c0_i32_0 = arith.constant 0 : i32
    %c0_i32_1 = arith.constant 0 : i32
    %c0_i32_2 = arith.constant 0 : i32
    %c0_i32_3 = arith.constant 0 : i32
    return %c0_i32, %c0_i32_0, %c0_i32_1, %c0_i32_2 : i32, i32, i32, i32
  }
  func.func @transform_22(%arg0: i32) -> (i32, i32, i32, i32) {
    %c0_i32 = arith.constant 0 : i32
    %c0_i32_0 = arith.constant 0 : i32
    %c0_i32_1 = arith.constant 0 : i32
    %c0_i32_2 = arith.constant 0 : i32
    %c0_i32_3 = arith.constant 0 : i32
    return %c0_i32, %c0_i32_0, %c0_i32_1, %c0_i32_2 : i32, i32, i32, i32
  }
  func.func @transform_23(%arg0: i32) -> (i32, i32, i32, i32) {
    %c0_i32 = arith.constant 0 : i32
    %c0_i32_0 = arith.constant 0 : i32
    %c0_i32_1 = arith.constant 0 : i32
    %c0_i32_2 = arith.constant 0 : i32
    %c0_i32_3 = arith.constant 0 : i32
    return %c0_i32, %c0_i32_0, %c0_i32_1, %c0_i32_2 : i32, i32, i32, i32
  }
  func.func @transform_24(%arg0: i32) -> (i32, i32, i32) {
    %c0_i32 = arith.constant 0 : i32
    %c0_i32_0 = arith.constant 0 : i32
    %c0_i32_1 = arith.constant 0 : i32
    %c0_i32_2 = arith.constant 0 : i32
    return %c0_i32, %c0_i32_0, %c0_i32_1 : i32, i32, i32
  }
  func.func @transform_25(%arg0: i32) -> (i32, i32, i32) {
    %c0_i32 = arith.constant 0 : i32
    %c0_i32_0 = arith.constant 0 : i32
    %c0_i32_1 = arith.constant 0 : i32
    %c0_i32_2 = arith.constant 0 : i32
    return %c0_i32, %c0_i32_0, %c0_i32_1 : i32, i32, i32
  }
  func.func @transform_26(%arg0: i32) -> (i32, i32, i32) {
    %c0_i32 = arith.constant 0 : i32
    %c0_i32_0 = arith.constant 0 : i32
    %c0_i32_1 = arith.constant 0 : i32
    %c0_i32_2 = arith.constant 0 : i32
    return %c0_i32, %c0_i32_0, %c0_i32_1 : i32, i32, i32
  }
  func.func @transform_27(%arg0: i32) -> (i32, i32, i32) {
    %c0_i32 = arith.constant 0 : i32
    %c0_i32_0 = arith.constant 0 : i32
    %c0_i32_1 = arith.constant 0 : i32
    %c0_i32_2 = arith.constant 0 : i32
    return %c0_i32, %c0_i32_0, %c0_i32_1 : i32, i32, i32
  }
  func.func @transform_28(%arg0: i32) -> (i32, i32, i32, i32) {
    %c0_i32 = arith.constant 0 : i32
    %c0_i32_0 = arith.constant 0 : i32
    %c0_i32_1 = arith.constant 0 : i32
    %c0_i32_2 = arith.constant 0 : i32
    %c0_i32_3 = arith.constant 0 : i32
    return %c0_i32, %c0_i32_0, %c0_i32_1, %c0_i32_2 : i32, i32, i32, i32
  }
  func.func @transform_29(%arg0: i32) -> (i32, i32, i32, i32) {
    %c0_i32 = arith.constant 0 : i32
    %c0_i32_0 = arith.constant 0 : i32
    %c0_i32_1 = arith.constant 0 : i32
    %c0_i32_2 = arith.constant 0 : i32
    %c0_i32_3 = arith.constant 0 : i32
    return %c0_i32, %c0_i32_0, %c0_i32_1, %c0_i32_2 : i32, i32, i32, i32
  }
  func.func @transform_30(%arg0: i32) -> (i32, i32, i32, i32) {
    %c0_i32 = arith.constant 0 : i32
    %c0_i32_0 = arith.constant 0 : i32
    %c0_i32_1 = arith.constant 0 : i32
    %c0_i32_2 = arith.constant 0 : i32
    %c0_i32_3 = arith.constant 0 : i32
    return %c0_i32, %c0_i32_0, %c0_i32_1, %c0_i32_2 : i32, i32, i32, i32
  }
  func.func @transform_31(%arg0: i32) -> (i32, i32, i32, i32) {
    %c0_i32 = arith.constant 0 : i32
    %c0_i32_0 = arith.constant 0 : i32
    %c0_i32_1 = arith.constant 0 : i32
    %c0_i32_2 = arith.constant 0 : i32
    %c0_i32_3 = arith.constant 0 : i32
    return %c0_i32, %c0_i32_0, %c0_i32_1, %c0_i32_2 : i32, i32, i32, i32
  }
  func.func @transform_32(%arg0: i32) -> (i32, i32, i32, i32) {
    %c0_i32 = arith.constant 0 : i32
    %c0_i32_0 = arith.constant 0 : i32
    %c0_i32_1 = arith.constant 0 : i32
    %c0_i32_2 = arith.constant 0 : i32
    %c0_i32_3 = arith.constant 0 : i32
    return %c0_i32, %c0_i32_0, %c0_i32_1, %c0_i32_2 : i32, i32, i32, i32
  }
  func.func @transform_33(%arg0: i32) -> (i32, i32, i32, i32) {
    %c0_i32 = arith.constant 0 : i32
    %c0_i32_0 = arith.constant 0 : i32
    %c0_i32_1 = arith.constant 0 : i32
    %c0_i32_2 = arith.constant 0 : i32
    %c0_i32_3 = arith.constant 0 : i32
    return %c0_i32, %c0_i32_0, %c0_i32_1, %c0_i32_2 : i32, i32, i32, i32
  }
  func.func @transform_34(%arg0: i32) -> (i32, i32, i32, i32) {
    %c0_i32 = arith.constant 0 : i32
    %c0_i32_0 = arith.constant 0 : i32
    %c0_i32_1 = arith.constant 0 : i32
    %c0_i32_2 = arith.constant 0 : i32
    %c0_i32_3 = arith.constant 0 : i32
    return %c0_i32, %c0_i32_0, %c0_i32_1, %c0_i32_2 : i32, i32, i32, i32
  }
  func.func @transform_35(%arg0: i32) -> (i32, i32, i32, i32) {
    %c0_i32 = arith.constant 0 : i32
    %c0_i32_0 = arith.constant 0 : i32
    %c0_i32_1 = arith.constant 0 : i32
    %c0_i32_2 = arith.constant 0 : i32
    %c0_i32_3 = arith.constant 0 : i32
    return %c0_i32, %c0_i32_0, %c0_i32_1, %c0_i32_2 : i32, i32, i32, i32
  }
  func.func @transform_36(%arg0: i32) -> (i32, i32, i32, i32) {
    %c0_i32 = arith.constant 0 : i32
    %c0_i32_0 = arith.constant 0 : i32
    %c0_i32_1 = arith.constant 0 : i32
    %c0_i32_2 = arith.constant 0 : i32
    %c0_i32_3 = arith.constant 0 : i32
    return %c0_i32, %c0_i32_0, %c0_i32_1, %c0_i32_2 : i32, i32, i32, i32
  }
  func.func @transform_37(%arg0: i32) -> (i32, i32, i32, i32) {
    %c0_i32 = arith.constant 0 : i32
    %c0_i32_0 = arith.constant 0 : i32
    %c0_i32_1 = arith.constant 0 : i32
    %c0_i32_2 = arith.constant 0 : i32
    %c0_i32_3 = arith.constant 0 : i32
    return %c0_i32, %c0_i32_0, %c0_i32_1, %c0_i32_2 : i32, i32, i32, i32
  }
  func.func @transform_38(%arg0: i32) -> (i32, i32, i32) {
    %c0_i32 = arith.constant 0 : i32
    %c0_i32_0 = arith.constant 0 : i32
    %c0_i32_1 = arith.constant 0 : i32
    %c0_i32_2 = arith.constant 0 : i32
    return %c0_i32, %c0_i32_0, %c0_i32_1 : i32, i32, i32
  }
  func.func @transform_39(%arg0: i32) -> (i32, i32, i32) {
    %c0_i32 = arith.constant 0 : i32
    %c0_i32_0 = arith.constant 0 : i32
    %c0_i32_1 = arith.constant 0 : i32
    %c0_i32_2 = arith.constant 0 : i32
    return %c0_i32, %c0_i32_0, %c0_i32_1 : i32, i32, i32
  }
  func.func @transform_40(%arg0: i32) -> (i32, i32) {
    %c0_i32 = arith.constant 0 : i32
    %c0_i32_0 = arith.constant 0 : i32
    %c0_i32_1 = arith.constant 0 : i32
    return %c0_i32, %c0_i32_0 : i32, i32
  }
  func.func @transform_41(%arg0: i32) -> (i32, i32, i32) {
    %c0_i32 = arith.constant 0 : i32
    %c0_i32_0 = arith.constant 0 : i32
    %c0_i32_1 = arith.constant 0 : i32
    %c0_i32_2 = arith.constant 0 : i32
    return %c0_i32, %c0_i32_0, %c0_i32_1 : i32, i32, i32
  }
  func.func @transform_42(%arg0: i32) -> (i32, i32) {
    %c0_i32 = arith.constant 0 : i32
    %c0_i32_0 = arith.constant 0 : i32
    %c0_i32_1 = arith.constant 0 : i32
    return %c0_i32, %c0_i32_0 : i32, i32
  }
  func.func @transform_43(%arg0: i32) -> (i32, i32) {
    %c0_i32 = arith.constant 0 : i32
    %c0_i32_0 = arith.constant 0 : i32
    %c0_i32_1 = arith.constant 0 : i32
    return %c0_i32, %c0_i32_0 : i32, i32
  }
  func.func @transform_44(%arg0: i32) -> (i32, i32) {
    %c0_i32 = arith.constant 0 : i32
    %c0_i32_0 = arith.constant 0 : i32
    %c0_i32_1 = arith.constant 0 : i32
    return %c0_i32, %c0_i32_0 : i32, i32
  }
  func.func @transform_45(%arg0: i32) -> (i32, i32) {
    %c0_i32 = arith.constant 0 : i32
    %c0_i32_0 = arith.constant 0 : i32
    %c0_i32_1 = arith.constant 0 : i32
    return %c0_i32, %c0_i32_0 : i32, i32
  }
  func.func @transform_46(%arg0: i32) -> (i32, i32) {
    %c0_i32 = arith.constant 0 : i32
    %c0_i32_0 = arith.constant 0 : i32
    %c0_i32_1 = arith.constant 0 : i32
    return %c0_i32, %c0_i32_0 : i32, i32
  }
  func.func @transform_47(%arg0: i32) -> (i32, i32, i32) {
    %c0_i32 = arith.constant 0 : i32
    %c0_i32_0 = arith.constant 0 : i32
    %c0_i32_1 = arith.constant 0 : i32
    %c0_i32_2 = arith.constant 0 : i32
    return %c0_i32, %c0_i32_0, %c0_i32_1 : i32, i32, i32
  }
  func.func @transform_48(%arg0: i32) -> (i32, i32) {
    %c0_i32 = arith.constant 0 : i32
    %c0_i32_0 = arith.constant 0 : i32
    %c0_i32_1 = arith.constant 0 : i32
    return %c0_i32, %c0_i32_0 : i32, i32
  }
  func.func @transform_49(%arg0: i32) -> (i32, i32) {
    %c0_i32 = arith.constant 0 : i32
    %c0_i32_0 = arith.constant 0 : i32
    %c0_i32_1 = arith.constant 0 : i32
    return %c0_i32, %c0_i32_0 : i32, i32
  }
  func.func @transform_50(%arg0: i32) -> (i32, i32) {
    %c0_i32 = arith.constant 0 : i32
    %c0_i32_0 = arith.constant 0 : i32
    %c0_i32_1 = arith.constant 0 : i32
    return %c0_i32, %c0_i32_0 : i32, i32
  }
  func.func @transform_51(%arg0: i32) -> (i32, i32) {
    %c0_i32 = arith.constant 0 : i32
    %c0_i32_0 = arith.constant 0 : i32
    %c0_i32_1 = arith.constant 0 : i32
    return %c0_i32, %c0_i32_0 : i32, i32
  }
}

</mosaic_0001>

<llo_original>
// kernel: segtasknet_forward.1
$region0: #{segtasknet_forward.1}
  #allocation0 [shape = 'u32[]', space=smem, size = 0x4, offset = 0x4, fixed_abs, tag = 'smem constant byte address 0x4 - core index']
  #allocation1 [shape = 'u32[72,128]{1,0:T(1,128)}', space=vmem, size = 0x9000, scoped, tag = 'internal scratch']
  %s0 = inlined_call_operand.smem [shape: u32[52], index: -1, kind: input, shape index: {}]
  %s1 = sld [smem:[%s0]]
  %s2 = scalar_lea.smem %s0, 1
  %s3 = sld [smem:[%s2]]
  %s4 = scalar_lea.smem %s0, 2
  %s5 = sld [smem:[%s4]]
  %s6 = scalar_lea.smem %s0, 3
  %s7 = sld [smem:[%s6]]
  %s8 = scalar_lea.smem %s0, 4
  %s9 = sld [smem:[%s8]]
  %s10 = scalar_lea.smem %s0, 5
  %s11 = sld [smem:[%s10]]
  %s12 = scalar_lea.smem %s0, 6
  %s13 = sld [smem:[%s12]]
  %s14 = scalar_lea.smem %s0, 7
  %s15 = sld [smem:[%s14]]
  %s16 = scalar_lea.smem %s0, 8
  %s17 = sld [smem:[%s16]]
  %s18 = scalar_lea.smem %s0, 9
  %s19 = sld [smem:[%s18]]
  %s20 = scalar_lea.smem %s0, 10
  %s21 = sld [smem:[%s20]]
  %s22 = scalar_lea.smem %s0, 11
  %s23 = sld [smem:[%s22]]
  %s24 = scalar_lea.smem %s0, 12
  %s25 = sld [smem:[%s24]]
  %s26 = scalar_lea.smem %s0, 13
  %s27 = sld [smem:[%s26]]
  %s28 = scalar_lea.smem %s0, 14
  %s29 = sld [smem:[%s28]]
  %s30 = scalar_lea.smem %s0, 15
  %s31 = sld [smem:[%s30]]
  %s32 = scalar_lea.smem %s0, 16
  %s33 = sld [smem:[%s32]]
  %s34 = scalar_lea.smem %s0, 17
  %s35 = sld [smem:[%s34]]
  %s36 = scalar_lea.smem %s0, 18
  %s37 = sld [smem:[%s36]]
  %s38 = scalar_lea.smem %s0, 19
  %s39 = sld [smem:[%s38]]
  %s40 = scalar_lea.smem %s0, 20
  %s41 = sld [smem:[%s40]]
  %s42 = scalar_lea.smem %s0, 21
  %s43 = sld [smem:[%s42]]
  %s44 = scalar_lea.smem %s0, 22
  %s45 = sld [smem:[%s44]]
  %s46 = scalar_lea.smem %s0, 23
  %s47 = sld [smem:[%s46]]
  %s48 = scalar_lea.smem %s0, 24
  %s49 = sld [smem:[%s48]]
  %s50 = scalar_lea.smem %s0, 25
  %s51 = sld [smem:[%s50]]
  %s52 = scalar_lea.smem %s0, 26
  %s53 = sld [smem:[%s52]]
  %s54 = scalar_lea.smem %s0, 27
  %s55 = sld [smem:[%s54]]
  %s56 = scalar_lea.smem %s0, 28
  %s57 = sld [smem:[%s56]]
  %s58 = scalar_lea.smem %s0, 29
  %s59 = sld [smem:[%s58]]
  %s60 = scalar_lea.smem %s0, 30
  %s61 = sld [smem:[%s60]]
  %s62 = scalar_lea.smem %s0, 31
  %s63 = sld [smem:[%s62]]
  %s64 = scalar_lea.smem %s0, 32
  %s65 = sld [smem:[%s64]]
  %s66 = scalar_lea.smem %s0, 33
  %s67 = sld [smem:[%s66]]
  %s68 = scalar_lea.smem %s0, 34
  %s69 = sld [smem:[%s68]]
  %s70 = scalar_lea.smem %s0, 35
  %s71 = sld [smem:[%s70]]
  %s72 = scalar_lea.smem %s0, 36
  %s73 = sld [smem:[%s72]]
  %s74 = scalar_lea.smem %s0, 37
  %s75 = sld [smem:[%s74]]
  %s76 = scalar_lea.smem %s0, 38
  %s77 = sld [smem:[%s76]]
  %s78 = scalar_lea.smem %s0, 39
  %s79 = sld [smem:[%s78]]
  %s80 = scalar_lea.smem %s0, 40
  %s81 = sld [smem:[%s80]]
  %s82 = scalar_lea.smem %s0, 41
  %s83 = sld [smem:[%s82]]
  %s84 = scalar_lea.smem %s0, 42
  %s85 = sld [smem:[%s84]]
  %s86 = scalar_lea.smem %s0, 43
  %s87 = sld [smem:[%s86]]
  %s88 = scalar_lea.smem %s0, 44
  %s89 = sld [smem:[%s88]]
  %s90 = scalar_lea.smem %s0, 45
  %s91 = sld [smem:[%s90]]
  %s92 = scalar_lea.smem %s0, 46
  %s93 = sld [smem:[%s92]]
  %s94 = scalar_lea.smem %s0, 47
  %s95 = sld [smem:[%s94]]
  %s96 = scalar_lea.smem %s0, 48
  %s97 = sld [smem:[%s96]]
  %s98 = scalar_lea.smem %s0, 49
  %s99 = sld [smem:[%s98]]
  %s100 = scalar_lea.smem %s0, 50
  %s101 = sld [smem:[%s100]]
  %s102 = scalar_lea.smem %s0, 51
  %s103 = sld [smem:[%s102]]
  %s104 = sld [smem:[#allocation0]]
  $region254: #{segtasknet_forward.1} parent=0
    _
  %s106 = ssub.s32 1, %s104
  %s107 = scalar_select 0, %s106, %s104
  $region1: #{segtasknet_forward.1} parent=0
    #allocation2 [shape = 'u8[1024]{0}', space=vmem, size = 0x400, scoped, tag = 'input window, operand 30, single buffered']
    #allocation3 [shape = 's32[1]{0}', space=sflag, size = 0x4, scoped, tag = 'scoped memory for segtasknet_forward.1']
    #allocation4 [shape = 's32[1]{0}', space=sflag, size = 0x4, scoped, tag = 'scoped memory for segtasknet_forward.1']
    #allocation5 [shape = 'u8[1024]{0}', space=vmem, size = 0x400, scoped, tag = 'input window, operand 32, single buffered']
    #allocation6 [shape = 's32[1]{0}', space=sflag, size = 0x4, scoped, tag = 'scoped memory for segtasknet_forward.1']
    #allocation7 [shape = 'u8[1024]{0}', space=vmem, size = 0x400, scoped, tag = 'input window, operand 35, single buffered']
    #allocation8 [shape = 'u8[1024]{0}', space=vmem, size = 0x400, scoped, tag = 'input window, operand 37, single buffered']
    #allocation9 [shape = 's32[1]{0}', space=sflag, size = 0x4, scoped, tag = 'scoped memory for segtasknet_forward.1']
    #allocation10 [shape = 'u8[512]{0}', space=vmem, size = 0x400, scoped, tag = 'input window, operand 40, single buffered']
    #allocation11 [shape = 'u8[512]{0}', space=vmem, size = 0x400, scoped, tag = 'input window, operand 42, single buffered']
    #allocation12 [shape = 's32[1]{0}', space=sflag, size = 0x4, scoped, tag = 'scoped memory for segtasknet_forward.1']
    #allocation13 [shape = 'u8[512]{0}', space=vmem, size = 0x400, scoped, tag = 'input window, operand 44, single buffered']
    #allocation14 [shape = 'u8[512]{0}', space=vmem, size = 0x400, scoped, tag = 'input window, operand 46, single buffered']
    #allocation15 [shape = 's32[1]{0}', space=sflag, size = 0x4, scoped, tag = 'scoped memory for segtasknet_forward.1']
    #allocation16 [shape = 'u8[512]{0}', space=vmem, size = 0x400, scoped, tag = 'input window, operand 48, single buffered']
    #allocation17 [shape = 'u8[512]{0}', space=vmem, size = 0x400, scoped, tag = 'input window, operand 50, single buffered']
    #allocation18 [shape = 's32[1]{0}', space=sflag, size = 0x4, scoped, tag = 'scoped memory for segtasknet_forward.1']
    #allocation19 [shape = 'u8[16384]{0}', space=vmem, size = 0x4000, scoped, tag = 'output window, operand 0, single buffered']
    %108 = vsyncpa [#allocation3], 0
    %109 = vsyncpa [#allocation6], 0
    %110 = vsyncpa [#allocation9], 0
    %111 = vsyncpa [#allocation12], 0
    %112 = vsyncpa [#allocation15], 0
    %113 = vsyncpa [#allocation18], 0
    %114 = vsyncpa [#allocation4], 0
    // Predicated region
    $region2: #{segtasknet_forward.1} parent=1 // pred_check
      _
    $region3: #{segtasknet_forward.1} parent=1 // pred_check_branch
      %116 = sbr.rel (0) target = $region5
    $region4: #{segtasknet_forward.1} parent=1 // pred_region
      _
    $region5: #{segtasknet_forward.1} parent=1 // pred_fallthru
      _
    // Predicated region
    $region6: #{segtasknet_forward.1} parent=1 // pred_check
      _
    $region7: #{segtasknet_forward.1} parent=1 // pred_check_branch
      %118 = sbr.rel (0) target = $region9
    $region8: #{segtasknet_forward.1} parent=1 // pred_region
      _
    $region9: #{segtasknet_forward.1} parent=1 // pred_fallthru
      _
    // Predicated region
    $region10: #{segtasknet_forward.1} parent=1 // pred_check
      _
    $region11: #{segtasknet_forward.1} parent=1 // pred_check_branch
      %120 = sbr.rel (0) target = $region13
    $region12: #{segtasknet_forward.1} parent=1 // pred_region
      _
    $region13: #{segtasknet_forward.1} parent=1 // pred_fallthru
      _
    // Predicated region
    $region14: #{segtasknet_forward.1} parent=1 // pred_check
      _
    $region15: #{segtasknet_forward.1} parent=1 // pred_check_branch
      %122 = sbr.rel (0) target = $region17
    $region16: #{segtasknet_forward.1} parent=1 // pred_region
      _
    $region17: #{segtasknet_forward.1} parent=1 // pred_fallthru
      _
    // Predicated region
    $region18: #{segtasknet_forward.1} parent=1 // pred_check
      _
    $region19: #{segtasknet_forward.1} parent=1 // pred_check_branch
      %124 = sbr.rel (0) target = $region21
    $region20: #{segtasknet_forward.1} parent=1 // pred_region
      _
    $region21: #{segtasknet_forward.1} parent=1 // pred_fallthru
      _
    // Predicated region
    $region22: #{segtasknet_forward.1} parent=1 // pred_check
      _
    $region23: #{segtasknet_forward.1} parent=1 // pred_check_branch
      %126 = sbr.rel (0) target = $region25
    $region24: #{segtasknet_forward.1} parent=1 // pred_region
      _
    $region25: #{segtasknet_forward.1} parent=1 // pred_fallthru
      _
    // Predicated region
    $region26: #{segtasknet_forward.1} parent=1 // pred_check
      _
    $region27: #{segtasknet_forward.1} parent=1 // pred_check_branch
      %128 = sbr.rel (0) target = $region29
    $region28: #{segtasknet_forward.1} parent=1 // pred_region
      _
    $region29: #{segtasknet_forward.1} parent=1 // pred_fallthru
      _
    // Predicated region
    $region30: #{segtasknet_forward.1} parent=1 // pred_check
      _
    $region31: #{segtasknet_forward.1} parent=1 // pred_check_branch
      %130 = sbr.rel (0) target = $region33
    $region32: #{segtasknet_forward.1} parent=1 // pred_region
      _
    $region33: #{segtasknet_forward.1} parent=1 // pred_fallthru
      _
    // Predicated region
    $region34: #{segtasknet_forward.1} parent=1 // pred_check
      _
    $region35: #{segtasknet_forward.1} parent=1 // pred_check_branch
      %132 = sbr.rel (0) target = $region37
    $region36: #{segtasknet_forward.1} parent=1 // pred_region
      _
    $region37: #{segtasknet_forward.1} parent=1 // pred_fallthru
      _
    // Predicated region
    $region38: #{segtasknet_forward.1} parent=1 // pred_check
      _
    $region39: #{segtasknet_forward.1} parent=1 // pred_check_branch
      %134 = sbr.rel (0) target = $region41
    $region40: #{segtasknet_forward.1} parent=1 // pred_region
      _
    $region41: #{segtasknet_forward.1} parent=1 // pred_fallthru
      _
    // Predicated region
    $region42: #{segtasknet_forward.1} parent=1 // pred_check
      _
    $region43: #{segtasknet_forward.1} parent=1 // pred_check_branch
      %136 = sbr.rel (0) target = $region45
    $region44: #{segtasknet_forward.1} parent=1 // pred_region
      _
    $region45: #{segtasknet_forward.1} parent=1 // pred_fallthru
      _
    // Predicated region
    $region46: #{segtasknet_forward.1} parent=1 // pred_check
      _
    $region47: #{segtasknet_forward.1} parent=1 // pred_check_branch
      %138 = sbr.rel (0) target = $region49
    $region48: #{segtasknet_forward.1} parent=1 // pred_region
      _
    $region49: #{segtasknet_forward.1} parent=1 // pred_fallthru
      _
    // Predicated region
    $region50: #{segtasknet_forward.1} parent=1 // pred_check
      _
    $region51: #{segtasknet_forward.1} parent=1 // pred_check_branch
      %140 = sbr.rel (0) target = $region53
    $region52: #{segtasknet_forward.1} parent=1 // pred_region
      _
    $region53: #{segtasknet_forward.1} parent=1 // pred_fallthru
      _
    // Predicated region
    $region54: #{segtasknet_forward.1} parent=1 // pred_check
      _
    $region55: #{segtasknet_forward.1} parent=1 // pred_check_branch
      %142 = sbr.rel (0) target = $region57
    $region56: #{segtasknet_forward.1} parent=1 // pred_region
      _
    $region57: #{segtasknet_forward.1} parent=1 // pred_fallthru
      _
    // Predicated region
    $region58: #{segtasknet_forward.1} parent=1 // pred_check
      _
    $region59: #{segtasknet_forward.1} parent=1 // pred_check_branch
      %144 = sbr.rel (0) target = $region61
    $region60: #{segtasknet_forward.1} parent=1 // pred_region
      _
    $region61: #{segtasknet_forward.1} parent=1 // pred_fallthru
      _
    // Predicated region
    $region62: #{segtasknet_forward.1} parent=1 // pred_check
      _
    $region63: #{segtasknet_forward.1} parent=1 // pred_check_branch
      %146 = sbr.rel (0) target = $region65
    $region64: #{segtasknet_forward.1} parent=1 // pred_region
      _
    $region65: #{segtasknet_forward.1} parent=1 // pred_fallthru
      _
    // Predicated region
    $region66: #{segtasknet_forward.1} parent=1 // pred_check
      _
    $region67: #{segtasknet_forward.1} parent=1 // pred_check_branch
      %148 = sbr.rel (0) target = $region69
    $region68: #{segtasknet_forward.1} parent=1 // pred_region
      _
    $region69: #{segtasknet_forward.1} parent=1 // pred_fallthru
      _
    // Predicated region
    $region70: #{segtasknet_forward.1} parent=1 // pred_check
      _
    $region71: #{segtasknet_forward.1} parent=1 // pred_check_branch
      %150 = sbr.rel (0) target = $region73
    $region72: #{segtasknet_forward.1} parent=1 // pred_region
      _
    $region73: #{segtasknet_forward.1} parent=1 // pred_fallthru
      _
    // Predicated region
    $region74: #{segtasknet_forward.1} parent=1 // pred_check
      _
    $region75: #{segtasknet_forward.1} parent=1 // pred_check_branch
      %152 = sbr.rel (0) target = $region77
    $region76: #{segtasknet_forward.1} parent=1 // pred_region
      _
    $region77: #{segtasknet_forward.1} parent=1 // pred_fallthru
      _
    // Predicated region
    $region78: #{segtasknet_forward.1} parent=1 // pred_check
      _
    $region79: #{segtasknet_forward.1} parent=1 // pred_check_branch
      %154 = sbr.rel (0) target = $region81
    $region80: #{segtasknet_forward.1} parent=1 // pred_region
      _
    $region81: #{segtasknet_forward.1} parent=1 // pred_fallthru
      _
    // Predicated region
    $region82: #{segtasknet_forward.1} parent=1 // pred_check
      _
    $region83: #{segtasknet_forward.1} parent=1 // pred_check_branch
      %156 = sbr.rel (0) target = $region85
    $region84: #{segtasknet_forward.1} parent=1 // pred_region
      _
    $region85: #{segtasknet_forward.1} parent=1 // pred_fallthru
      _
    // Predicated region
    $region86: #{segtasknet_forward.1} parent=1 // pred_check
      _
    $region87: #{segtasknet_forward.1} parent=1 // pred_check_branch
      %158 = sbr.rel (0) target = $region89
    $region88: #{segtasknet_forward.1} parent=1 // pred_region
      _
    $region89: #{segtasknet_forward.1} parent=1 // pred_fallthru
      _
    // Predicated region
    $region90: #{segtasknet_forward.1} parent=1 // pred_check
      _
    $region91: #{segtasknet_forward.1} parent=1 // pred_check_branch
      %160 = sbr.rel (0) target = $region93
    $region92: #{segtasknet_forward.1} parent=1 // pred_region
      _
    $region93: #{segtasknet_forward.1} parent=1 // pred_fallthru
      _
    // Predicated region
    $region94: #{segtasknet_forward.1} parent=1 // pred_check
      _
    $region95: #{segtasknet_forward.1} parent=1 // pred_check_branch
      %162 = sbr.rel (0) target = $region97
    $region96: #{segtasknet_forward.1} parent=1 // pred_region
      _
    $region97: #{segtasknet_forward.1} parent=1 // pred_fallthru
      _
    // Predicated region
    $region98: #{segtasknet_forward.1} parent=1 // pred_check
      _
    $region99: #{segtasknet_forward.1} parent=1 // pred_check_branch
      %164 = sbr.rel (0) target = $region101
    $region100: #{segtasknet_forward.1} parent=1 // pred_region
      _
    $region101: #{segtasknet_forward.1} parent=1 // pred_fallthru
      _
    // Predicated region
    $region102: #{segtasknet_forward.1} parent=1 // pred_check
      _
    $region103: #{segtasknet_forward.1} parent=1 // pred_check_branch
      %166 = sbr.rel (0) target = $region105
    $region104: #{segtasknet_forward.1} parent=1 // pred_region
      _
    $region105: #{segtasknet_forward.1} parent=1 // pred_fallthru
      _
    // Predicated region
    $region106: #{segtasknet_forward.1} parent=1 // pred_check
      _
    $region107: #{segtasknet_forward.1} parent=1 // pred_check_branch
      %168 = sbr.rel (0) target = $region109
    $region108: #{segtasknet_forward.1} parent=1 // pred_region
      _
    $region109: #{segtasknet_forward.1} parent=1 // pred_fallthru
      _
    // Predicated region
    $region110: #{segtasknet_forward.1} parent=1 // pred_check
      _
    $region111: #{segtasknet_forward.1} parent=1 // pred_check_branch
      %170 = sbr.rel (0) target = $region113
    $region112: #{segtasknet_forward.1} parent=1 // pred_region
      _
    $region113: #{segtasknet_forward.1} parent=1 // pred_fallthru
      _
    // Predicated region
    $region114: #{segtasknet_forward.1} parent=1 // pred_check
      _
    $region115: #{segtasknet_forward.1} parent=1 // pred_check_branch
      %172 = sbr.rel (0) target = $region117
    $region116: #{segtasknet_forward.1} parent=1 // pred_region
      _
    $region117: #{segtasknet_forward.1} parent=1 // pred_fallthru
      _
    // Predicated region
    $region118: #{segtasknet_forward.1} parent=1 // pred_check
      _
    $region119: #{segtasknet_forward.1} parent=1 // pred_check_branch
      %174 = sbr.rel (0) target = $region121
    $region120: #{segtasknet_forward.1} parent=1 // pred_region
      _
    $region121: #{segtasknet_forward.1} parent=1 // pred_fallthru
      _
    // Predicated region
    $region122: #{segtasknet_forward.1} parent=1 // pred_check
      _
    $region123: #{segtasknet_forward.1} parent=1 // pred_check_branch
      %176 = sbr.rel (0) target = $region125
    $region124: #{segtasknet_forward.1} parent=1 // pred_region
      %178 = vsyncadd [#allocation3], 0
      %s179 = sshll.u32 %s61, 4
      %s180 = int_to_ptr.hbm [resolvable:$true] %s179
      %s181 = sshll.u32 [#allocation2], 4
      %s182 = int_to_ptr.vmem [resolvable:$true] %s181
      %187 = dma.hbm_to_vmem [thread:$0]  %s180, 32, %s182, [#allocation3], 16, 16, 1
    $region125: #{segtasknet_forward.1} parent=1 // pred_fallthru
      _
    // Predicated region
    $region126: #{segtasknet_forward.1} parent=1 // pred_check
      _
    $region127: #{segtasknet_forward.1} parent=1 // pred_check_branch
      %189 = sbr.rel (0) target = $region129
    $region128: #{segtasknet_forward.1} parent=1 // pred_region
      _
    $region129: #{segtasknet_forward.1} parent=1 // pred_fallthru
      _
    // Predicated region
    $region130: #{segtasknet_forward.1} parent=1 // pred_check
      _
    $region131: #{segtasknet_forward.1} parent=1 // pred_check_branch
      %191 = sbr.rel (0) target = $region133
    $region132: #{segtasknet_forward.1} parent=1 // pred_region
      %193 = vsyncadd [#allocation6], 0
      %s194 = sshll.u32 %s65, 4
      %s195 = int_to_ptr.hbm [resolvable:$true] %s194
      %s196 = sshll.u32 [#allocation5], 4
      %s197 = int_to_ptr.vmem [resolvable:$true] %s196
      %202 = dma.hbm_to_vmem [thread:$0]  %s195, 32, %s197, [#allocation6], 16, 16, 1
    $region133: #{segtasknet_forward.1} parent=1 // pred_fallthru
      _
    // Predicated region
    $region134: #{segtasknet_forward.1} parent=1 // pred_check
      _
    $region135: #{segtasknet_forward.1} parent=1 // pred_check_branch
      %204 = sbr.rel (0) target = $region137
    $region136: #{segtasknet_forward.1} parent=1 // pred_region
      _
    $region137: #{segtasknet_forward.1} parent=1 // pred_fallthru
      _
    // Predicated region
    $region138: #{segtasknet_forward.1} parent=1 // pred_check
      _
    $region139: #{segtasknet_forward.1} parent=1 // pred_check_branch
      %206 = sbr.rel (0) target = $region141
    $region140: #{segtasknet_forward.1} parent=1 // pred_region
      _
    $region141: #{segtasknet_forward.1} parent=1 // pred_fallthru
      _
    // Predicated region
    $region142: #{segtasknet_forward.1} parent=1 // pred_check
      _
    $region143: #{segtasknet_forward.1} parent=1 // pred_check_branch
      %208 = sbr.rel (0) target = $region145
    $region144: #{segtasknet_forward.1} parent=1 // pred_region
      %210 = vsyncadd [#allocation6], 0
      %s211 = sshll.u32 %s71, 4
      %s212 = int_to_ptr.hbm [resolvable:$true] %s211
      %s213 = sshll.u32 [#allocation7], 4
      %s214 = int_to_ptr.vmem [resolvable:$true] %s213
      %219 = dma.hbm_to_vmem [thread:$0]  %s212, 32, %s214, [#allocation6], 16, 16, 1
    $region145: #{segtasknet_forward.1} parent=1 // pred_fallthru
      _
    // Predicated region
    $region146: #{segtasknet_forward.1} parent=1 // pred_check
      _
    $region147: #{segtasknet_forward.1} parent=1 // pred_check_branch
      %221 = sbr.rel (0) target = $region149
    $region148: #{segtasknet_forward.1} parent=1 // pred_region
      _
    $region149: #{segtasknet_forward.1} parent=1 // pred_fallthru
      _
    // Predicated region
    $region150: #{segtasknet_forward.1} parent=1 // pred_check
      _
    $region151: #{segtasknet_forward.1} parent=1 // pred_check_branch
      %223 = sbr.rel (0) target = $region153
    $region152: #{segtasknet_forward.1} parent=1 // pred_region
      %225 = vsyncadd [#allocation9], 0
      %s226 = sshll.u32 %s75, 4
      %s227 = int_to_ptr.hbm [resolvable:$true] %s226
      %s228 = sshll.u32 [#allocation8], 4
      %s229 = int_to_ptr.vmem [resolvable:$true] %s228
      %234 = dma.hbm_to_vmem [thread:$0]  %s227, 32, %s229, [#allocation9], 16, 16, 1
    $region153: #{segtasknet_forward.1} parent=1 // pred_fallthru
      _
    // Predicated region
    $region154: #{segtasknet_forward.1} parent=1 // pred_check
      _
    $region155: #{segtasknet_forward.1} parent=1 // pred_check_branch
      %236 = sbr.rel (0) target = $region157
    $region156: #{segtasknet_forward.1} parent=1 // pred_region
      _
    $region157: #{segtasknet_forward.1} parent=1 // pred_fallthru
      _
    // Predicated region
    $region158: #{segtasknet_forward.1} parent=1 // pred_check
      _
    $region159: #{segtasknet_forward.1} parent=1 // pred_check_branch
      %238 = sbr.rel (0) target = $region161
    $region160: #{segtasknet_forward.1} parent=1 // pred_region
      _
    $region161: #{segtasknet_forward.1} parent=1 // pred_fallthru
      _
    // Predicated region
    $region162: #{segtasknet_forward.1} parent=1 // pred_check
      _
    $region163: #{segtasknet_forward.1} parent=1 // pred_check_branch
      %240 = sbr.rel (0) target = $region165
    $region164: #{segtasknet_forward.1} parent=1 // pred_region
      %242 = vsyncadd [#allocation9], 0
      %s244 = sshll.u32 %s81, 4
      %s245 = int_to_ptr.hbm [resolvable:$true] %s244
      %s246 = sshll.u32 [#allocation10], 4
      %s247 = int_to_ptr.vmem [resolvable:$true] %s246
      %249 = dma.hbm_to_vmem [thread:$0]  %s245, 16, %s247, [#allocation9]
    $region165: #{segtasknet_forward.1} parent=1 // pred_fallthru
      _
    // Predicated region
    $region166: #{segtasknet_forward.1} parent=1 // pred_check
      _
    $region167: #{segtasknet_forward.1} parent=1 // pred_check_branch
      %251 = sbr.rel (0) target = $region169
    $region168: #{segtasknet_forward.1} parent=1 // pred_region
      _
    $region169: #{segtasknet_forward.1} parent=1 // pred_fallthru
      _
    // Predicated region
    $region170: #{segtasknet_forward.1} parent=1 // pred_check
      _
    $region171: #{segtasknet_forward.1} parent=1 // pred_check_branch
      %253 = sbr.rel (0) target = $region173
    $region172: #{segtasknet_forward.1} parent=1 // pred_region
      %255 = vsyncadd [#allocation12], 0
      %s257 = sshll.u32 %s85, 4
      %s258 = int_to_ptr.hbm [resolvable:$true] %s257
      %s259 = sshll.u32 [#allocation11], 4
      %s260 = int_to_ptr.vmem [resolvable:$true] %s259
      %262 = dma.hbm_to_vmem [thread:$0]  %s258, 16, %s260, [#allocation12]
    $region173: #{segtasknet_forward.1} parent=1 // pred_fallthru
      _
    // Predicated region
    $region174: #{segtasknet_forward.1} parent=1 // pred_check
      _
    $region175: #{segtasknet_forward.1} parent=1 // pred_check_branch
      %264 = sbr.rel (0) target = $region177
    $region176: #{segtasknet_forward.1} parent=1 // pred_region
      _
    $region177: #{segtasknet_forward.1} parent=1 // pred_fallthru
      _
    // Predicated region
    $region178: #{segtasknet_forward.1} parent=1 // pred_check
      _
    $region179: #{segtasknet_forward.1} parent=1 // pred_check_branch
      %266 = sbr.rel (0) target = $region181
    $region180: #{segtasknet_forward.1} parent=1 // pred_region
      %268 = vsyncadd [#allocation12], 0
      %s270 = sshll.u32 %s89, 4
      %s271 = int_to_ptr.hbm [resolvable:$true] %s270
      %s272 = sshll.u32 [#allocation13], 4
      %s273 = int_to_ptr.vmem [resolvable:$true] %s272
      %275 = dma.hbm_to_vmem [thread:$0]  %s271, 16, %s273, [#allocation12]
    $region181: #{segtasknet_forward.1} parent=1 // pred_fallthru
      _
    // Predicated region
    $region182: #{segtasknet_forward.1} parent=1 // pred_check
      _
    $region183: #{segtasknet_forward.1} parent=1 // pred_check_branch
      %277 = sbr.rel (0) target = $region185
    $region184: #{segtasknet_forward.1} parent=1 // pred_region
      _
    $region185: #{segtasknet_forward.1} parent=1 // pred_fallthru
      _
    // Predicated region
    $region186: #{segtasknet_forward.1} parent=1 // pred_check
      _
    $region187: #{segtasknet_forward.1} parent=1 // pred_check_branch
      %279 = sbr.rel (0) target = $region189
    $region188: #{segtasknet_forward.1} parent=1 // pred_region
      %281 = vsyncadd [#allocation15], 0
      %s283 = sshll.u32 %s93, 4
      %s284 = int_to_ptr.hbm [resolvable:$true] %s283
      %s285 = sshll.u32 [#allocation14], 4
      %s286 = int_to_ptr.vmem [resolvable:$true] %s285
      %288 = dma.hbm_to_vmem [thread:$0]  %s284, 16, %s286, [#allocation15]
    $region189: #{segtasknet_forward.1} parent=1 // pred_fallthru
      _
    // Predicated region
    $region190: #{segtasknet_forward.1} parent=1 // pred_check
      _
    $region191: #{segtasknet_forward.1} parent=1 // pred_check_branch
      %290 = sbr.rel (0) target = $region193
    $region192: #{segtasknet_forward.1} parent=1 // pred_region
      _
    $region193: #{segtasknet_forward.1} parent=1 // pred_fallthru
      _
    // Predicated region
    $region194: #{segtasknet_forward.1} parent=1 // pred_check
      _
    $region195: #{segtasknet_forward.1} parent=1 // pred_check_branch
      %292 = sbr.rel (0) target = $region197
    $region196: #{segtasknet_forward.1} parent=1 // pred_region
      %294 = vsyncadd [#allocation15], 0
      %s296 = sshll.u32 %s97, 4
      %s297 = int_to_ptr.hbm [resolvable:$true] %s296
      %s298 = sshll.u32 [#allocation16], 4
      %s299 = int_to_ptr.vmem [resolvable:$true] %s298
      %301 = dma.hbm_to_vmem [thread:$0]  %s297, 16, %s299, [#allocation15]
    $region197: #{segtasknet_forward.1} parent=1 // pred_fallthru
      _
    // Predicated region
    $region198: #{segtasknet_forward.1} parent=1 // pred_check
      _
    $region199: #{segtasknet_forward.1} parent=1 // pred_check_branch
      %303 = sbr.rel (0) target = $region201
    $region200: #{segtasknet_forward.1} parent=1 // pred_region
      _
    $region201: #{segtasknet_forward.1} parent=1 // pred_fallthru
      _
    // Predicated region
    $region202: #{segtasknet_forward.1} parent=1 // pred_check
      _
    $region203: #{segtasknet_forward.1} parent=1 // pred_check_branch
      %305 = sbr.rel (0) target = $region205
    $region204: #{segtasknet_forward.1} parent=1 // pred_region
      %307 = vsyncadd [#allocation18], 0
      %s309 = sshll.u32 %s101, 4
      %s310 = int_to_ptr.hbm [resolvable:$true] %s309
      %s311 = sshll.u32 [#allocation17], 4
      %s312 = int_to_ptr.vmem [resolvable:$true] %s311
      %314 = dma.hbm_to_vmem [thread:$0]  %s310, 16, %s312, [#allocation18]
    $region205: #{segtasknet_forward.1} parent=1 // pred_fallthru
      _
    // Predicated region
    $region206: #{segtasknet_forward.1} parent=1 // pred_check
      _
    $region207: #{segtasknet_forward.1} parent=1 // pred_check_branch
      %316 = sbr.rel (0) target = $region209
    $region208: #{segtasknet_forward.1} parent=1 // pred_region
      %318 = dma.done [#allocation3], 32
    $region209: #{segtasknet_forward.1} parent=1 // pred_fallthru
      _
    // Predicated region
    $region210: #{segtasknet_forward.1} parent=1 // pred_check
      _
    $region211: #{segtasknet_forward.1} parent=1 // pred_check_branch
      %320 = sbr.rel (0) target = $region213
    $region212: #{segtasknet_forward.1} parent=1 // pred_region
      %322 = dma.done [#allocation6], 32
    $region213: #{segtasknet_forward.1} parent=1 // pred_fallthru
      _
    // Predicated region
    $region214: #{segtasknet_forward.1} parent=1 // pred_check
      _
    $region215: #{segtasknet_forward.1} parent=1 // pred_check_branch
      %324 = sbr.rel (0) target = $region217
    $region216: #{segtasknet_forward.1} parent=1 // pred_region
      %326 = dma.done [#allocation6], 32
    $region217: #{segtasknet_forward.1} parent=1 // pred_fallthru
      _
    // Predicated region
    $region218: #{segtasknet_forward.1} parent=1 // pred_check
      _
    $region219: #{segtasknet_forward.1} parent=1 // pred_check_branch
      %328 = sbr.rel (0) target = $region221
    $region220: #{segtasknet_forward.1} parent=1 // pred_region
      %330 = dma.done [#allocation9], 32
    $region221: #{segtasknet_forward.1} parent=1 // pred_fallthru
      _
    // Predicated region
    $region222: #{segtasknet_forward.1} parent=1 // pred_check
      _
    $region223: #{segtasknet_forward.1} parent=1 // pred_check_branch
      %332 = sbr.rel (0) target = $region225
    $region224: #{segtasknet_forward.1} parent=1 // pred_region
      %334 = dma.done [#allocation9], 16
    $region225: #{segtasknet_forward.1} parent=1 // pred_fallthru
      _
    // Predicated region
    $region226: #{segtasknet_forward.1} parent=1 // pred_check
      _
    $region227: #{segtasknet_forward.1} parent=1 // pred_check_branch
      %336 = sbr.rel (0) target = $region229
    $region228: #{segtasknet_forward.1} parent=1 // pred_region
      %338 = dma.done [#allocation12], 16
    $region229: #{segtasknet_forward.1} parent=1 // pred_fallthru
      _
    // Predicated region
    $region230: #{segtasknet_forward.1} parent=1 // pred_check
      _
    $region231: #{segtasknet_forward.1} parent=1 // pred_check_branch
      %340 = sbr.rel (0) target = $region233
    $region232: #{segtasknet_forward.1} parent=1 // pred_region
      %342 = dma.done [#allocation12], 16
    $region233: #{segtasknet_forward.1} parent=1 // pred_fallthru
      _
    // Predicated region
    $region234: #{segtasknet_forward.1} parent=1 // pred_check
      _
    $region235: #{segtasknet_forward.1} parent=1 // pred_check_branch
      %344 = sbr.rel (0) target = $region237
    $region236: #{segtasknet_forward.1} parent=1 // pred_region
      %346 = dma.done [#allocation15], 16
    $region237: #{segtasknet_forward.1} parent=1 // pred_fallthru
      _
    // Predicated region
    $region238: #{segtasknet_forward.1} parent=1 // pred_check
      _
    $region239: #{segtasknet_forward.1} parent=1 // pred_check_branch
      %348 = sbr.rel (0) target = $region241
    $region240: #{segtasknet_forward.1} parent=1 // pred_region
      %350 = dma.done [#allocation15], 16
    $region241: #{segtasknet_forward.1} parent=1 // pred_fallthru
      _
    // Predicated region
    $region242: #{segtasknet_forward.1} parent=1 // pred_check
      _
    $region243: #{segtasknet_forward.1} parent=1 // pred_check_branch
      %352 = sbr.rel (0) target = $region245
    $region244: #{segtasknet_forward.1} parent=1 // pred_region
      %354 = dma.done [#allocation18], 16
    $region245: #{segtasknet_forward.1} parent=1 // pred_fallthru
      _
    %v356 = vld [vmem:[%s3] sm:$0xff]
    %v357 = vld [vmem:[%s3 + $0x8] sm:$0xff]
    %v358 = vld [vmem:[%s3 + $0x10] sm:$0xff]
    %v359 = vld [vmem:[%s3 + $0x18] sm:$0xff]
    %v360 = vld [vmem:[%s5] sm:$0xff]
    %v361 = vld [vmem:[%s1] sm:$0xff]
    %v362 = vld [vmem:[%s1 + $0x8] sm:$0xff]
    %v363 = vld [vmem:[%s1 + $0x10] sm:$0xff]
    %v364 = vld [vmem:[%s1 + $0x18] sm:$0xff]
    %v365 = vld [vmem:[%s1 + $0x20] sm:$0xff]
    %v366 = vld [vmem:[%s1 + $0x28] sm:$0xff]
    %v367 = vld [vmem:[%s1 + $0x30] sm:$0xff]
    %v368 = vld [vmem:[%s1 + $0x38] sm:$0xff]
    %v369 = vld [vmem:[%s13] sm:$0xf]
    %v370 = vld [vmem:[%s13 + $0x4] sm:$0xf]
    %v371 = vld [vmem:[%s13 + $0x8] sm:$0xf]
    %v372 = vld [vmem:[%s13 + $0xc] sm:$0xf]
    %v373 = vld [vmem:[%s13 + $0x10] sm:$0xf]
    %v374 = vld [vmem:[%s13 + $0x14] sm:$0xf]
    %v375 = vld [vmem:[%s13 + $0x18] sm:$0xf]
    %v376 = vld [vmem:[%s13 + $0x1c] sm:$0xf]
    %v377 = vld [vmem:[%s13 + $0x20] sm:$0xf]
    %v378 = vld [vmem:[%s13 + $0x24] sm:$0xf]
    %v379 = vld [vmem:[%s13 + $0x28] sm:$0xf]
    %v380 = vld [vmem:[%s13 + $0x2c] sm:$0xf]
    %v381 = vld [vmem:[%s13 + $0x30] sm:$0xf]
    %v382 = vld [vmem:[%s13 + $0x34] sm:$0xf]
    %v383 = vld [vmem:[%s13 + $0x38] sm:$0xf]
    %v384 = vld [vmem:[%s13 + $0x3c] sm:$0xf]
    %v385 = vld [vmem:[%s13 + $0x40] sm:$0xf]
    %v386 = vld [vmem:[%s13 + $0x44] sm:$0xf]
    %v387 = vld [vmem:[%s13 + $0x48] sm:$0xf]
    %v388 = vld [vmem:[%s13 + $0x4c] sm:$0xf]
    %v389 = vld [vmem:[%s13 + $0x50] sm:$0xf]
    %v390 = vld [vmem:[%s13 + $0x54] sm:$0xf]
    %v391 = vld [vmem:[%s13 + $0x58] sm:$0xf]
    %v392 = vld [vmem:[%s13 + $0x5c] sm:$0xf]
    %v393 = vld [vmem:[%s13 + $0x60] sm:$0x3]
    %v394 = vpack.c.bf16 %v363, %v361
    %v395 = vpack.c.bf16 %v364, %v362
    %v396 = vpack.c.bf16 %v367, %v365
    %v397 = vpack.c.bf16 %v368, %v366
    %v398 = vld [vmem:[%s15] sm:$0x1]
    %v400 = vperm.slane %v398, 0
    %v427 = vunpack.c.l.b16 %v369
    %v428 = vunpack.c.l.b16 %v370
    %v429 = vunpack.c.l.b16 %v371
    %v430 = vunpack.c.l.b16 %v372
    %v431 = vunpack.c.l.b16 %v373
    %v432 = vunpack.c.l.b16 %v374
    %v433 = vunpack.c.l.b16 %v375
    %v434 = vunpack.c.l.b16 %v376
    %v435 = vunpack.c.l.b16 %v377
    %v436 = vunpack.c.l.b16 %v378
    %v437 = vunpack.c.l.b16 %v379
    %v438 = vunpack.c.l.b16 %v380
    %v439 = vunpack.c.l.b16 %v381
    %v440 = vunpack.c.l.b16 %v382
    %v441 = vunpack.c.l.b16 %v383
    %v442 = vunpack.c.l.b16 %v384
    %v443 = vunpack.c.l.b16 %v385
    %v444 = vunpack.c.l.b16 %v386
    %v445 = vunpack.c.l.b16 %v387
    %v446 = vunpack.c.l.b16 %v388
    %v447 = vunpack.c.l.b16 %v389
    %v448 = vunpack.c.l.b16 %v390
    %v449 = vunpack.c.l.b16 %v391
    %v450 = vunpack.c.l.b16 %v392
    %v451 = vunpack.c.l.b16 %v393
    %v452 = vpack.c.b16 %v428, %v427
    %v453 = vpack.c.b16 %v430, %v429
    %v454 = vpack.c.b16 %v432, %v431
    %v455 = vpack.c.b16 %v434, %v433
    %v456 = vpack.c.b16 %v436, %v435
    %v457 = vpack.c.b16 %v438, %v437
    %v458 = vpack.c.b16 %v440, %v439
    %v459 = vpack.c.b16 %v442, %v441
    %v460 = vpack.c.b16 %v444, %v443
    %v461 = vpack.c.b16 %v446, %v445
    %v462 = vpack.c.b16 %v448, %v447
    %v463 = vpack.c.b16 %v450, %v449
    %v464 = vpack.c.b16 %v451, %v451
    %vm477 = vcmask 556032
    %v479 = vsel %vm477, %v395, 0
    %v482 = vsel %vm477, %v397, 0
    %vm484 = vcmask 1041408
    %v486 = vsel %vm484, %v464, 0
    %488 = vmatpush.bf16.msra.mxu0 %v459
    %489 = vmatpush.bf16.msra.mxu0 %v458
    %490 = vmatpush.bf16.msra.mxu0 %v457
    %491 = vmatpush.bf16.msra.mxu0 %v456
    %492 = vmatpush.bf16.msra.mxu0 %v455
    %493 = vmatpush.bf16.msra.mxu0 %v454
    %494 = vmatpush.bf16.msra.mxu0 %v453
    %495 = vmatpush.bf16.msra.mxu0 %v452
    %496 = vmatmul.bf16.gmra.mxu0 %v394
    %v497 = vpop.f32.mrf.mxu0
    %v498 = vadd.f32 %v400, %v497
    %v499 = vpop.f32.mrf.mxu0
    %v500 = vadd.f32 %v400, %v499
    %501 = vmatmul.bf16.gmra.mxu0 %v396
    %v502 = vpop.f32.mrf.mxu0
    %v503 = vadd.f32 %v400, %v502
    %v504 = vpop.f32.mrf.mxu0
    %v505 = vadd.f32 %v400, %v504
    %506 = vdwg.mxu0
    %507 = vmatpush.bf16.msra.mxu0 0
    %508 = vmatpush.bf16.msra.mxu0 0
    %509 = vmatpush.bf16.msra.mxu0 0
    %510 = vmatpush.bf16.msra.mxu0 %v486
    %511 = vmatpush.bf16.msra.mxu0 %v463
    %512 = vmatpush.bf16.msra.mxu0 %v462
    %513 = vmatpush.bf16.msra.mxu0 %v461
    %514 = vmatpush.bf16.msra.mxu0 %v460
    %515 = vmatmul.bf16.gmra.mxu0 %v479
    %v516 = vpop.f32.mrf.mxu0
    %v517 = vadd.f32 %v498, %v516
    %v518 = vpop.f32.mrf.mxu0
    %v519 = vadd.f32 %v500, %v518
    %520 = vmatmul.bf16.gmra.mxu0 %v482
    %v521 = vpop.f32.mrf.mxu0
    %v522 = vadd.f32 %v503, %v521
    %v523 = vpop.f32.mrf.mxu0
    %v524 = vadd.f32 %v505, %v523
    %525 = vdwg.mxu0
    %v526 = vld [vmem:[%s17] sm:$0x3]
    %vm527 = vcmask 130048
    %v528 = vsel %vm527, %v517, 0.0
    %529 = vadd.xlane.f32.xlu0 %v528
    %v530 = vpop.xlane.xlu0 %529
    %v531 = vsel %vm527, %v519, 0.0
    %532 = vadd.xlane.f32.xlu0 %v531
    %v533 = vpop.xlane.xlu0 %532
    %v534 = vsel %vm527, %v522, 0.0
    %535 = vadd.xlane.f32.xlu0 %v534
    %v536 = vpop.xlane.xlu0 %535
    %v537 = vsel %vm527, %v524, 0.0
    %538 = vadd.xlane.f32.xlu0 %v537
    %v539 = vpop.xlane.xlu0 %538
    %v540 = vrcp.pop 16.0
    %v541 = vmul.f32 16.0, %v540
    %v542 = vsub.f32 1.0, %v541
    %v543 = vmul.f32 %v540, %v542
    %v544 = vadd.f32 %v540, %v543
    %vm545 = vweird.f32 %v540
    %v546 = vsel %vm545, %v540, %v544
    %v547 = vmul.f32 %v530, %v546
    %v548 = vmul.f32 %v533, %v546
    %v549 = vmul.f32 %v536, %v546
    %v550 = vmul.f32 %v539, %v546
    %v551 = vmul.f32 %v517, %v517
    %v552 = vmul.f32 %v519, %v519
    %v553 = vmul.f32 %v522, %v522
    %v554 = vmul.f32 %v524, %v524
    %v555 = vsel %vm527, %v551, 0.0
    %556 = vadd.xlane.f32.xlu0 %v555
    %v557 = vpop.xlane.xlu0 %556
    %v558 = vsel %vm527, %v552, 0.0
    %559 = vadd.xlane.f32.xlu0 %v558
    %v560 = vpop.xlane.xlu0 %559
    %v561 = vsel %vm527, %v553, 0.0
    %562 = vadd.xlane.f32.xlu0 %v561
    %v563 = vpop.xlane.xlu0 %562
    %v564 = vsel %vm527, %v554, 0.0
    %565 = vadd.xlane.f32.xlu0 %v564
    %v566 = vpop.xlane.xlu0 %565
    %v567 = vmul.f32 %v557, %v546
    %v568 = vmul.f32 %v560, %v546
    %v569 = vmul.f32 %v563, %v546
    %v570 = vmul.f32 %v566, %v546
    %v571 = vmul.f32 %v547, %v547
    %v572 = vmul.f32 %v548, %v548
    %v573 = vmul.f32 %v549, %v549
    %v574 = vmul.f32 %v550, %v550
    %v575 = vsub.f32 %v567, %v571
    %v576 = vsub.f32 %v568, %v572
    %v577 = vsub.f32 %v569, %v573
    %v578 = vsub.f32 %v570, %v574
    %v579 = vmax.f32 %v575, 0.0
    %v580 = vmax.f32 %v576, 0.0
    %v581 = vmax.f32 %v577, 0.0
    %v582 = vmax.f32 %v578, 0.0
    %v583 = vsub.f32 %v517, %v547
    %v584 = vsub.f32 %v519, %v548
    %v585 = vsub.f32 %v522, %v549
    %v586 = vsub.f32 %v524, %v550
    %v587 = vadd.f32 %v579, 1e-06
    %v588 = vadd.f32 %v580, 1e-06
    %v589 = vadd.f32 %v581, 1e-06
    %v590 = vadd.f32 %v582, 1e-06
    %v591 = vrsqrt.pop %v587
    %v592 = vmul.f32 %v591, %v587
    %v593 = vmul.f32 %v592, %v591
    %v594 = vmul.f32 0.5, %v593
    %v595 = vsub.f32 1.5, %v594
    %v596 = vmul.f32 %v591, %v595
    %vm597 = vweird.f32 %v587
    %vm598 = vweird.f32 %v591
    %vm599 = vmor %vm597, %vm598
    %v600 = vsel %vm599, %v591, %v596
    %v601 = vrsqrt.pop %v588
    %v602 = vmul.f32 %v601, %v588
    %v603 = vmul.f32 %v602, %v601
    %v604 = vmul.f32 0.5, %v603
    %v605 = vsub.f32 1.5, %v604
    %v606 = vmul.f32 %v601, %v605
    %vm607 = vweird.f32 %v588
    %vm608 = vweird.f32 %v601
    %vm609 = vmor %vm607, %vm608
    %v610 = vsel %vm609, %v601, %v606
    %v611 = vrsqrt.pop %v589
    %v612 = vmul.f32 %v611, %v589
    %v613 = vmul.f32 %v612, %v611
    %v614 = vmul.f32 0.5, %v613
    %v615 = vsub.f32 1.5, %v614
    %v616 = vmul.f32 %v611, %v615
    %vm617 = vweird.f32 %v589
    %vm618 = vweird.f32 %v611
    %vm619 = vmor %vm617, %vm618
    %v620 = vsel %vm619, %v611, %v616
    %v621 = vrsqrt.pop %v590
    %v622 = vmul.f32 %v621, %v590
    %v623 = vmul.f32 %v622, %v621
    %v624 = vmul.f32 0.5, %v623
    %v625 = vsub.f32 1.5, %v624
    %v626 = vmul.f32 %v621, %v625
    %vm627 = vweird.f32 %v590
    %vm628 = vweird.f32 %v621
    %vm629 = vmor %vm627, %vm628
    %v630 = vsel %vm629, %v621, %v626
    %v631 = vmul.f32 %v583, %v600
    %v632 = vmul.f32 %v584, %v610
    %v633 = vmul.f32 %v585, %v620
    %v634 = vmul.f32 %v586, %v630
    %v635 = vperm.slane %v526, 0
    %v636 = vmul.f32 %v631, %v635
    %v637 = vmul.f32 %v632, %v635
    %v638 = vmul.f32 %v633, %v635
    %v639 = vmul.f32 %v634, %v635
    %v640 = vperm.slane %v526, 1
    %v641 = vadd.f32 %v636, %v640
    %v642 = vadd.f32 %v637, %v640
    %v643 = vadd.f32 %v638, %v640
    %v644 = vadd.f32 %v639, %v640
    %v645 = vld [vmem:[%s19] sm:$0x3]
    %v646 = vld [vmem:[%s39] sm:$0x3]
    %v647 = vld [vmem:[%s21] sm:$0xf]
    %v648 = vld [vmem:[%s21 + $0x4] sm:$0xf]
    %v649 = vld [vmem:[%s23] sm:$0x1]
    %v650 = vld [vmem:[%s25] sm:$0xf]
    %v651 = vld [vmem:[%s25 + $0x4] sm:$0xf]
    %v652 = vld [vmem:[%s27] sm:$0x1]
    %v653 = vld [vmem:[%s35] sm:$0xf]
    %v654 = vld [vmem:[%s35 + $0x4] sm:$0xf]
    %v655 = vld [vmem:[%s37] sm:$0x1]
    %v656 = vld [vmem:[%s41] sm:$0xf]
    %v657 = vld [vmem:[%s41 + $0x4] sm:$0xf]
    %v658 = vld [vmem:[%s43] sm:$0x1]
    %v659 = vld [vmem:[%s45] sm:$0xf]
    %v660 = vld [vmem:[%s45 + $0x4] sm:$0xf]
    %v661 = vld [vmem:[%s45 + $0x8] sm:$0xf]
    %v662 = vld [vmem:[%s45 + $0xc] sm:$0xf]
    %v663 = vld [vmem:[%s47] sm:$0x1]
    %v664 = vld [vmem:[%s29] sm:$0xf]
    %v665 = vld [vmem:[%s29 + $0x4] sm:$0xf]
    %v666 = vld [vmem:[%s29 + $0x8] sm:$0xf]
    %v667 = vld [vmem:[%s29 + $0xc] sm:$0xf]
    %v668 = vld [vmem:[%s29 + $0x10] sm:$0xf]
    %v669 = vld [vmem:[%s29 + $0x14] sm:$0xf]
    %v670 = vld [vmem:[%s29 + $0x18] sm:$0xf]
    %v671 = vld [vmem:[%s29 + $0x1c] sm:$0xf]
    %v672 = vld [vmem:[%s31] sm:$0x1]
    %v673 = vld [vmem:[%s33] sm:$0x3]
    %v674 = vsel %vm527, %v641, 0.0
    %675 = vadd.xlane.f32.xlu0 %v674
    %v676 = vpop.xlane.xlu0 %675
    %v677 = vsel %vm527, %v642, 0.0
    %678 = vadd.xlane.f32.xlu0 %v677
    %v679 = vpop.xlane.xlu0 %678
    %v680 = vsel %vm527, %v643, 0.0
    %681 = vadd.xlane.f32.xlu0 %v680
    %v682 = vpop.xlane.xlu0 %681
    %v683 = vsel %vm527, %v644, 0.0
    %684 = vadd.xlane.f32.xlu0 %v683
    %v685 = vpop.xlane.xlu0 %684
    %v686 = vmul.f32 %v676, %v546
    %v687 = vmul.f32 %v679, %v546
    %v688 = vmul.f32 %v682, %v546
    %v689 = vmul.f32 %v685, %v546
    %v690 = vmul.f32 %v641, %v641
    %v691 = vmul.f32 %v642, %v642
    %v692 = vmul.f32 %v643, %v643
    %v693 = vmul.f32 %v644, %v644
    %v694 = vsel %vm527, %v690, 0.0
    %695 = vadd.xlane.f32.xlu0 %v694
    %v696 = vpop.xlane.xlu0 %695
    %v697 = vsel %vm527, %v691, 0.0
    %698 = vadd.xlane.f32.xlu0 %v697
    %v699 = vpop.xlane.xlu0 %698
    %v700 = vsel %vm527, %v692, 0.0
    %701 = vadd.xlane.f32.xlu0 %v700
    %v702 = vpop.xlane.xlu0 %701
    %v703 = vsel %vm527, %v693, 0.0
    %704 = vadd.xlane.f32.xlu0 %v703
    %v705 = vpop.xlane.xlu0 %704
    %v706 = vmul.f32 %v696, %v546
    %v707 = vmul.f32 %v699, %v546
    %v708 = vmul.f32 %v702, %v546
    %v709 = vmul.f32 %v705, %v546
    %v710 = vmul.f32 %v686, %v686
    %v711 = vmul.f32 %v687, %v687
    %v712 = vmul.f32 %v688, %v688
    %v713 = vmul.f32 %v689, %v689
    %v714 = vsub.f32 %v706, %v710
    %v715 = vsub.f32 %v707, %v711
    %v716 = vsub.f32 %v708, %v712
    %v717 = vsub.f32 %v709, %v713
    %v718 = vmax.f32 %v714, 0.0
    %v719 = vmax.f32 %v715, 0.0
    %v720 = vmax.f32 %v716, 0.0
    %v721 = vmax.f32 %v717, 0.0
    %v722 = vsub.f32 %v641, %v686
    %v723 = vsub.f32 %v642, %v687
    %v724 = vsub.f32 %v643, %v688
    %v725 = vsub.f32 %v644, %v689
    %v726 = vadd.f32 %v718, 1e-06
    %v727 = vadd.f32 %v719, 1e-06
    %v728 = vadd.f32 %v720, 1e-06
    %v729 = vadd.f32 %v721, 1e-06
    %v730 = vrsqrt.pop %v726
    %v731 = vmul.f32 %v730, %v726
    %v732 = vmul.f32 %v731, %v730
    %v733 = vmul.f32 0.5, %v732
    %v734 = vsub.f32 1.5, %v733
    %v735 = vmul.f32 %v730, %v734
    %vm736 = vweird.f32 %v726
    %vm737 = vweird.f32 %v730
    %vm738 = vmor %vm736, %vm737
    %v739 = vsel %vm738, %v730, %v735
    %v740 = vrsqrt.pop %v727
    %v741 = vmul.f32 %v740, %v727
    %v742 = vmul.f32 %v741, %v740
    %v743 = vmul.f32 0.5, %v742
    %v744 = vsub.f32 1.5, %v743
    %v745 = vmul.f32 %v740, %v744
    %vm746 = vweird.f32 %v727
    %vm747 = vweird.f32 %v740
    %vm748 = vmor %vm746, %vm747
    %v749 = vsel %vm748, %v740, %v745
    %v750 = vrsqrt.pop %v728
    %v751 = vmul.f32 %v750, %v728
    %v752 = vmul.f32 %v751, %v750
    %v753 = vmul.f32 0.5, %v752
    %v754 = vsub.f32 1.5, %v753
    %v755 = vmul.f32 %v750, %v754
    %vm756 = vweird.f32 %v728
    %vm757 = vweird.f32 %v750
    %vm758 = vmor %vm756, %vm757
    %v759 = vsel %vm758, %v750, %v755
    %v760 = vrsqrt.pop %v729
    %v761 = vmul.f32 %v760, %v729
    %v762 = vmul.f32 %v761, %v760
    %v763 = vmul.f32 0.5, %v762
    %v764 = vsub.f32 1.5, %v763
    %v765 = vmul.f32 %v760, %v764
    %vm766 = vweird.f32 %v729
    %vm767 = vweird.f32 %v760
    %vm768 = vmor %vm766, %vm767
    %v769 = vsel %vm768, %v760, %v765
    %v770 = vmul.f32 %v722, %v739
    %v771 = vmul.f32 %v723, %v749
    %v772 = vmul.f32 %v724, %v759
    %v773 = vmul.f32 %v725, %v769
    %v774 = vperm.slane %v645, 0
    %v775 = vmul.f32 %v770, %v774
    %v776 = vmul.f32 %v771, %v774
    %v777 = vmul.f32 %v772, %v774
    %v778 = vmul.f32 %v773, %v774
    %v779 = vperm.slane %v645, 1
    %v780 = vadd.f32 %v775, %v779
    %v781 = vadd.f32 %v776, %v779
    %v782 = vadd.f32 %v777, %v779
    %v783 = vadd.f32 %v778, %v779
    %v784 = vpack.c.bf16 %v781, %v780
    %v785 = vpack.c.bf16 %v783, %v782
    %v787 = vperm.slane %v649, 0
    %v791 = vunpack.c.l.b16 %v647
    %v792 = vunpack.c.l.b16 %v648
    %v793 = vpack.c.b16 %v792, %v791
    %v796 = vsel %vm527, %v784, 0
    %v799 = vsel %vm527, %v785, 0
    %801 = vmatpush.bf16.msra.mxu0 0
    %802 = vmatpush.bf16.msra.mxu0 0
    %803 = vmatpush.bf16.msra.mxu0 0
    %804 = vmatpush.bf16.msra.mxu0 0
    %805 = vmatpush.bf16.msra.mxu0 0
    %806 = vmatpush.bf16.msra.mxu0 0
    %807 = vmatpush.bf16.msra.mxu0 0
    %808 = vmatpush.bf16.msra.mxu0 %v793
    %809 = vmatmul.bf16.gmra.mxu0 %v796
    %v810 = vpop.f32.mrf.mxu0
    %v811 = vadd.f32 %v787, %v810
    %v812 = vpop.f32.mrf.mxu0
    %v813 = vadd.f32 %v787, %v812
    %814 = vmatmul.bf16.gmra.mxu0 %v799
    %v815 = vpop.f32.mrf.mxu0
    %v816 = vadd.f32 %v787, %v815
    %v817 = vpop.f32.mrf.mxu0
    %v818 = vadd.f32 %v787, %v817
    %819 = vdwg.mxu0
    %v820 = vld [vmem:[%s7] sm:$0xf]
    %vm821 = vcmask 261120
    %v823 = vsel %vm821, %v820, 0
    %825 = vmatpush.bf16.msra.mxu0 0
    %826 = vmatpush.bf16.msra.mxu0 0
    %827 = vmatpush.bf16.msra.mxu0 0
    %828 = vmatpush.bf16.msra.mxu0 0
    %829 = vmatpush.bf16.msra.mxu0 0
    %830 = vmatpush.bf16.msra.mxu0 0
    %831 = vmatpush.bf16.msra.mxu0 %v785
    %832 = vmatpush.bf16.msra.mxu0 %v784
    %833 = vmatmul.bf16.gmra.mxu0 %v823
    %v834 = vpop.f32.mrf.mxu0
    %v835 = vadd.f32 0.0, %v834
    %v836 = vpop.f32.mrf.mxu0
    %837 = vdwg.mxu0
    %v838 = vpack.c.bf16 %v835, %v835
    %s839 = scalar_lea.vmem %s7, 4
    %v840 = vld [vmem:[%s839] sm:$0xf]
    %v842 = vsel %vm821, %v840, 0
    %844 = vmatpush.bf16.msra.mxu0 0
    %845 = vmatpush.bf16.msra.mxu0 0
    %846 = vmatpush.bf16.msra.mxu0 0
    %847 = vmatpush.bf16.msra.mxu0 0
    %848 = vmatpush.bf16.msra.mxu0 0
    %849 = vmatpush.bf16.msra.mxu0 0
    %850 = vmatpush.bf16.msra.mxu0 %v785
    %851 = vmatpush.bf16.msra.mxu0 %v784
    %852 = vmatmul.bf16.gmra.mxu0 %v842
    %v853 = vpop.f32.mrf.mxu0
    %v854 = vadd.f32 0.0, %v853
    %v855 = vpop.f32.mrf.mxu0
    %856 = vdwg.mxu0
    %v857 = vpack.c.bf16 %v854, %v854
    %v860 = vunpack.c.l.b16 %v666
    %v861 = vunpack.c.l.b16 %v667
    %v862 = vpack.c.b16 %v861, %v860
    %v865 = vsel %vm527, %v857, 0
    %867 = vmatpush.bf16.msra.mxu0 0
    %868 = vmatpush.bf16.msra.mxu0 0
    %869 = vmatpush.bf16.msra.mxu0 0
    %870 = vmatpush.bf16.msra.mxu0 0
    %871 = vmatpush.bf16.msra.mxu0 0
    %872 = vmatpush.bf16.msra.mxu0 0
    %873 = vmatpush.bf16.msra.mxu0 0
    %874 = vmatpush.bf16.msra.mxu0 %v862
    %875 = vmatmul.bf16.gmra.mxu0 %v865
    %v876 = vpop.f32.mrf.mxu0
    %v877 = vadd.f32 0.0, %v876
    %v878 = vpop.f32.mrf.mxu0
    %879 = vdwg.mxu0
    %v882 = vunpack.c.l.b16 %v664
    %v883 = vunpack.c.l.b16 %v665
    %v884 = vpack.c.b16 %v883, %v882
    %v887 = vsel %vm527, %v838, 0
    %889 = vmatpush.bf16.msra.mxu0 0
    %890 = vmatpush.bf16.msra.mxu0 0
    %891 = vmatpush.bf16.msra.mxu0 0
    %892 = vmatpush.bf16.msra.mxu0 0
    %893 = vmatpush.bf16.msra.mxu0 0
    %894 = vmatpush.bf16.msra.mxu0 0
    %895 = vmatpush.bf16.msra.mxu0 0
    %896 = vmatpush.bf16.msra.mxu0 %v884
    %897 = vmatmul.bf16.gmra.mxu0 %v887
    %v898 = vpop.f32.mrf.mxu0
    %v899 = vadd.f32 %v877, %v898
    %v900 = vpop.f32.mrf.mxu0
    %901 = vdwg.mxu0
    %s902 = scalar_lea.vmem %s7, 8
    %v903 = vld [vmem:[%s902] sm:$0xf]
    %v905 = vsel %vm821, %v903, 0
    %907 = vmatpush.bf16.msra.mxu0 0
    %908 = vmatpush.bf16.msra.mxu0 0
    %909 = vmatpush.bf16.msra.mxu0 0
    %910 = vmatpush.bf16.msra.mxu0 0
    %911 = vmatpush.bf16.msra.mxu0 0
    %912 = vmatpush.bf16.msra.mxu0 0
    %913 = vmatpush.bf16.msra.mxu0 %v785
    %914 = vmatpush.bf16.msra.mxu0 %v784
    %915 = vmatmul.bf16.gmra.mxu0 %v905
    %v916 = vpop.f32.mrf.mxu0
    %v917 = vadd.f32 0.0, %v916
    %v918 = vpop.f32.mrf.mxu0
    %919 = vdwg.mxu0
    %v920 = vpack.c.bf16 %v917, %v917
    %v923 = vunpack.c.l.b16 %v668
    %v924 = vunpack.c.l.b16 %v669
    %v925 = vpack.c.b16 %v924, %v923
    %v928 = vsel %vm527, %v920, 0
    %930 = vmatpush.bf16.msra.mxu0 0
    %931 = vmatpush.bf16.msra.mxu0 0
    %932 = vmatpush.bf16.msra.mxu0 0
    %933 = vmatpush.bf16.msra.mxu0 0
    %934 = vmatpush.bf16.msra.mxu0 0
    %935 = vmatpush.bf16.msra.mxu0 0
    %936 = vmatpush.bf16.msra.mxu0 0
    %937 = vmatpush.bf16.msra.mxu0 %v925
    %938 = vmatmul.bf16.gmra.mxu0 %v928
    %v939 = vpop.f32.mrf.mxu0
    %v940 = vadd.f32 0.0, %v939
    %v941 = vpop.f32.mrf.mxu0
    %942 = vdwg.mxu0
    %v943 = vadd.f32 %v899, %v940
    %s944 = scalar_lea.vmem %s7, 12
    %v945 = vld [vmem:[%s944] sm:$0xf]
    %v947 = vsel %vm821, %v945, 0
    %949 = vmatpush.bf16.msra.mxu0 0
    %950 = vmatpush.bf16.msra.mxu0 0
    %951 = vmatpush.bf16.msra.mxu0 0
    %952 = vmatpush.bf16.msra.mxu0 0
    %953 = vmatpush.bf16.msra.mxu0 0
    %954 = vmatpush.bf16.msra.mxu0 0
    %955 = vmatpush.bf16.msra.mxu0 %v785
    %956 = vmatpush.bf16.msra.mxu0 %v784
    %957 = vmatmul.bf16.gmra.mxu0 %v947
    %v958 = vpop.f32.mrf.mxu0
    %v959 = vadd.f32 0.0, %v958
    %v960 = vpop.f32.mrf.mxu0
    %961 = vdwg.mxu0
    %v962 = vpack.c.bf16 %v959, %v959
    %v965 = vunpack.c.l.b16 %v670
    %v966 = vunpack.c.l.b16 %v671
    %v967 = vpack.c.b16 %v966, %v965
    %v970 = vsel %vm527, %v962, 0
    %972 = vmatpush.bf16.msra.mxu0 0
    %973 = vmatpush.bf16.msra.mxu0 0
    %974 = vmatpush.bf16.msra.mxu0 0
    %975 = vmatpush.bf16.msra.mxu0 0
    %976 = vmatpush.bf16.msra.mxu0 0
    %977 = vmatpush.bf16.msra.mxu0 0
    %978 = vmatpush.bf16.msra.mxu0 0
    %979 = vmatpush.bf16.msra.mxu0 %v967
    %980 = vmatmul.bf16.gmra.mxu0 %v970
    %v981 = vpop.f32.mrf.mxu0
    %v982 = vadd.f32 0.0, %v981
    %v983 = vpop.f32.mrf.mxu0
    %984 = vdwg.mxu0
    %v985 = vadd.f32 %v943, %v982
    %v987 = vperm.slane %v672, 0
    %v989 = vadd.f32 %v985, %v987
    %v990 = vsel %vm527, %v989, 0.0
    %991 = vadd.xlane.f32.xlu0 %v990
    %v992 = vpop.xlane.xlu0 %991
    %v993 = vmul.f32 %v992, %v546
    %v994 = vmul.f32 %v989, %v989
    %v995 = vsel %vm527, %v994, 0.0
    %996 = vadd.xlane.f32.xlu0 %v995
    %v997 = vpop.xlane.xlu0 %996
    %v998 = vmul.f32 %v997, %v546
    %v999 = vmul.f32 %v993, %v993
    %v1000 = vsub.f32 %v998, %v999
    %v1001 = vmax.f32 %v1000, 0.0
    %v1002 = vsub.f32 %v989, %v993
    %v1003 = vadd.f32 %v1001, 1e-06
    %v1004 = vrsqrt.pop %v1003
    %v1005 = vmul.f32 %v1004, %v1003
    %v1006 = vmul.f32 %v1005, %v1004
    %v1007 = vmul.f32 0.5, %v1006
    %v1008 = vsub.f32 1.5, %v1007
    %v1009 = vmul.f32 %v1004, %v1008
    %vm1010 = vweird.f32 %v1003
    %vm1011 = vweird.f32 %v1004
    %vm1012 = vmor %vm1010, %vm1011
    %v1013 = vsel %vm1012, %v1004, %v1009
    %v1014 = vmul.f32 %v1002, %v1013
    %v1015 = vperm.slane %v673, 0
    %v1016 = vmul.f32 %v1014, %v1015
    %v1017 = vperm.slane %v673, 1
    %v1018 = vadd.f32 %v1016, %v1017
    %v1019 = vpack.c.bf16 %v1018, %v1018
    %v1021 = vperm.slane %v652, 0
    %v1025 = vunpack.c.l.b16 %v650
    %v1026 = vunpack.c.l.b16 %v651
    %v1027 = vpack.c.b16 %v1026, %v1025
    %v1030 = vsel %vm527, %v1019, 0
    %1032 = vmatpush.bf16.msra.mxu0 0
    %1033 = vmatpush.bf16.msra.mxu0 0
    %1034 = vmatpush.bf16.msra.mxu0 0
    %1035 = vmatpush.bf16.msra.mxu0 0
    %1036 = vmatpush.bf16.msra.mxu0 0
    %1037 = vmatpush.bf16.msra.mxu0 0
    %1038 = vmatpush.bf16.msra.mxu0 0
    %1039 = vmatpush.bf16.msra.mxu0 %v1027
    %1040 = vmatmul.bf16.gmra.mxu0 %v1030
    %v1041 = vpop.f32.mrf.mxu0
    %v1042 = vadd.f32 %v1021, %v1041
    %v1043 = vpop.f32.mrf.mxu0
    %1044 = vdwg.mxu0
    %v1045 = vpack.c.bf16 %v813, %v811
    %v1046 = vpack.c.bf16 %v818, %v816
    %v1047 = vpack.c.bf16 %v1042, %v1042
    %v1049 = vsel %vm527, %v1045, 0
    %v1052 = vsel %vm527, %v1046, 0
    %v1055 = vsel %vm527, %v1047, 0
    %1057 = vmatpush.bf16.xpose.msra.mxu0 0
    %1058 = vmatpush.bf16.xpose.msra.mxu0 0
    %1059 = vmatpush.bf16.xpose.msra.mxu0 0
    %1060 = vmatpush.bf16.xpose.msra.mxu0 0
    %1061 = vmatpush.bf16.xpose.msra.mxu0 0
    %1062 = vmatpush.bf16.xpose.msra.mxu0 0
    %1063 = vmatpush.bf16.xpose.msra.mxu0 0
    %1064 = vmatpush.bf16.xpose.msra.mxu0 %v1055
    %1065 = vmatmul.bf16.gmra.mxu0 %v1049
    %v1066 = vpop.f32.mrf.mxu0
    %v1067 = vadd.f32 0.0, %v1066
    %v1068 = vpop.f32.mrf.mxu0
    %v1069 = vadd.f32 0.0, %v1068
    %1070 = vmatmul.bf16.gmra.mxu0 %v1052
    %v1071 = vpop.f32.mrf.mxu0
    %v1072 = vadd.f32 0.0, %v1071
    %v1073 = vpop.f32.mrf.mxu0
    %v1074 = vadd.f32 0.0, %v1073
    %1075 = vdwg.mxu0
    %v1076 = vmul.f32 %v1067, 0.25
    %v1077 = vmul.f32 %v1069, 0.25
    %v1078 = vmul.f32 %v1072, 0.25
    %v1079 = vmul.f32 %v1074, 0.25
    %v1080 = vadd.f32 %v1076, %v356
    %v1081 = vadd.f32 %v1077, %v357
    %v1082 = vadd.f32 %v1078, %v358
    %v1083 = vadd.f32 %v1079, %v359
    %vm1084 = vcmask 64512
    %v1085 = vsel %vm1084, %v1080, -inf
    %1086 = vmax.xlane.f32.xlu0 %v1085
    %v1087 = vpop.xlane.xlu0 %1086
    %v1088 = vsel %vm1084, %v1081, -inf
    %1089 = vmax.xlane.f32.xlu0 %v1088
    %v1090 = vpop.xlane.xlu0 %1089
    %v1091 = vsel %vm1084, %v1082, -inf
    %1092 = vmax.xlane.f32.xlu0 %v1091
    %v1093 = vpop.xlane.xlu0 %1092
    %v1094 = vsel %vm1084, %v1083, -inf
    %1095 = vmax.xlane.f32.xlu0 %v1094
    %v1096 = vpop.xlane.xlu0 %1095
    %v1097 = vsub.f32 %v1080, %v1087
    %v1098 = vsub.f32 %v1081, %v1090
    %v1099 = vsub.f32 %v1082, %v1093
    %v1100 = vsub.f32 %v1083, %v1096
    %v1101 = vmul.f32 %v1097, 1.442695
    %v1102 = vpow.pop %v1101
    %v1103 = vmul.f32 %v1098, 1.442695
    %v1104 = vpow.pop %v1103
    %v1105 = vmul.f32 %v1099, 1.442695
    %v1106 = vpow.pop %v1105
    %v1107 = vmul.f32 %v1100, 1.442695
    %v1108 = vpow.pop %v1107
    %v1109 = vsel %vm1084, %v1102, 0.0
    %1110 = vadd.xlane.f32.xlu0 %v1109
    %v1111 = vpop.xlane.xlu0 %1110
    %v1112 = vsel %vm1084, %v1104, 0.0
    %1113 = vadd.xlane.f32.xlu0 %v1112
    %v1114 = vpop.xlane.xlu0 %1113
    %v1115 = vsel %vm1084, %v1106, 0.0
    %1116 = vadd.xlane.f32.xlu0 %v1115
    %v1117 = vpop.xlane.xlu0 %1116
    %v1118 = vsel %vm1084, %v1108, 0.0
    %1119 = vadd.xlane.f32.xlu0 %v1118
    %v1120 = vpop.xlane.xlu0 %1119
    %v1121 = vrcp.pop %v1111
    %v1122 = vrcp.pop %v1114
    %v1123 = vrcp.pop %v1117
    %v1124 = vrcp.pop %v1120
    %v1125 = vmul.f32 %v1102, %v1121
    %v1126 = vmul.f32 %v1104, %v1122
    %v1127 = vmul.f32 %v1106, %v1123
    %v1128 = vmul.f32 %v1108, %v1124
    %v1129 = vpack.c.bf16 %v1126, %v1125
    %v1130 = vpack.c.bf16 %v1128, %v1127
    %1132 = vrot.lane.b32.xlu0 %v1047, 112
    %v1133 = vpop.permute.xlu0 %1132
    %v1135 = vsel %vm1084, %v1129, 0
    %v1138 = vsel %vm1084, %v1130, 0
    %vm1140 = vcmask 1043456
    %v1142 = vsel %vm1140, %v1133, 0
    %1144 = vmatpush.bf16.msra.mxu0 0
    %1145 = vmatpush.bf16.msra.mxu0 0
    %1146 = vmatpush.bf16.msra.mxu0 0
    %1147 = vmatpush.bf16.msra.mxu0 0
    %1148 = vmatpush.bf16.msra.mxu0 0
    %1149 = vmatpush.bf16.msra.mxu0 0
    %1150 = vmatpush.bf16.msra.mxu0 0
    %1151 = vmatpush.bf16.msra.mxu0 %v1142
    %1152 = vmatmul.bf16.gmra.mxu0 %v1135
    %v1153 = vpop.f32.mrf.mxu0
    %v1154 = vadd.f32 0.0, %v1153
    %v1155 = vpop.f32.mrf.mxu0
    %v1156 = vadd.f32 0.0, %v1155
    %1157 = vmatmul.bf16.gmra.mxu0 %v1138
    %v1158 = vpop.f32.mrf.mxu0
    %v1159 = vadd.f32 0.0, %v1158
    %v1160 = vpop.f32.mrf.mxu0
    %v1161 = vadd.f32 0.0, %v1160
    %1162 = vdwg.mxu0
    %v1163 = vpack.c.bf16 %v1156, %v1154
    %v1164 = vpack.c.bf16 %v1161, %v1159
    %v1167 = vunpack.c.l.b16 %v653
    %v1168 = vunpack.c.l.b16 %v654
    %v1169 = vpack.c.b16 %v1168, %v1167
    %v1172 = vsel %vm527, %v1163, 0
    %v1175 = vsel %vm527, %v1164, 0
    %1177 = vmatpush.bf16.msra.mxu0 0
    %1178 = vmatpush.bf16.msra.mxu0 0
    %1179 = vmatpush.bf16.msra.mxu0 0
    %1180 = vmatpush.bf16.msra.mxu0 0
    %1181 = vmatpush.bf16.msra.mxu0 0
    %1182 = vmatpush.bf16.msra.mxu0 0
    %1183 = vmatpush.bf16.msra.mxu0 0
    %1184 = vmatpush.bf16.msra.mxu0 %v1169
    %1185 = vmatmul.bf16.gmra.mxu0 %v1172
    %v1186 = vpop.f32.mrf.mxu0
    %v1187 = vadd.f32 0.0, %v1186
    %v1188 = vpop.f32.mrf.mxu0
    %v1189 = vadd.f32 0.0, %v1188
    %1190 = vmatmul.bf16.gmra.mxu0 %v1175
    %v1191 = vpop.f32.mrf.mxu0
    %v1192 = vadd.f32 0.0, %v1191
    %v1193 = vpop.f32.mrf.mxu0
    %v1194 = vadd.f32 0.0, %v1193
    %1195 = vdwg.mxu0
    %v1196 = vadd.f32 %v641, %v1187
    %v1197 = vadd.f32 %v642, %v1189
    %v1198 = vadd.f32 %v643, %v1192
    %v1199 = vadd.f32 %v644, %v1194
    %v1201 = vperm.slane %v655, 0
    %v1203 = vadd.f32 %v1196, %v1201
    %v1204 = vadd.f32 %v1197, %v1201
    %v1205 = vadd.f32 %v1198, %v1201
    %v1206 = vadd.f32 %v1199, %v1201
    %v1207 = vsel %vm527, %v1203, 0.0
    %1208 = vadd.xlane.f32.xlu0 %v1207
    %v1209 = vpop.xlane.xlu0 %1208
    %v1210 = vsel %vm527, %v1204, 0.0
    %1211 = vadd.xlane.f32.xlu0 %v1210
    %v1212 = vpop.xlane.xlu0 %1211
    %v1213 = vsel %vm527, %v1205, 0.0
    %1214 = vadd.xlane.f32.xlu0 %v1213
    %v1215 = vpop.xlane.xlu0 %1214
    %v1216 = vsel %vm527, %v1206, 0.0
    %1217 = vadd.xlane.f32.xlu0 %v1216
    %v1218 = vpop.xlane.xlu0 %1217
    %v1219 = vmul.f32 %v1209, %v546
    %v1220 = vmul.f32 %v1212, %v546
    %v1221 = vmul.f32 %v1215, %v546
    %v1222 = vmul.f32 %v1218, %v546
    %v1223 = vmul.f32 %v1203, %v1203
    %v1224 = vmul.f32 %v1204, %v1204
    %v1225 = vmul.f32 %v1205, %v1205
    %v1226 = vmul.f32 %v1206, %v1206
    %v1227 = vsel %vm527, %v1223, 0.0
    %1228 = vadd.xlane.f32.xlu0 %v1227
    %v1229 = vpop.xlane.xlu0 %1228
    %v1230 = vsel %vm527, %v1224, 0.0
    %1231 = vadd.xlane.f32.xlu0 %v1230
    %v1232 = vpop.xlane.xlu0 %1231
    %v1233 = vsel %vm527, %v1225, 0.0
    %1234 = vadd.xlane.f32.xlu0 %v1233
    %v1235 = vpop.xlane.xlu0 %1234
    %v1236 = vsel %vm527, %v1226, 0.0
    %1237 = vadd.xlane.f32.xlu0 %v1236
    %v1238 = vpop.xlane.xlu0 %1237
    %v1239 = vmul.f32 %v1229, %v546
    %v1240 = vmul.f32 %v1232, %v546
    %v1241 = vmul.f32 %v1235, %v546
    %v1242 = vmul.f32 %v1238, %v546
    %v1243 = vmul.f32 %v1219, %v1219
    %v1244 = vmul.f32 %v1220, %v1220
    %v1245 = vmul.f32 %v1221, %v1221
    %v1246 = vmul.f32 %v1222, %v1222
    %v1247 = vsub.f32 %v1239, %v1243
    %v1248 = vsub.f32 %v1240, %v1244
    %v1249 = vsub.f32 %v1241, %v1245
    %v1250 = vsub.f32 %v1242, %v1246
    %v1251 = vmax.f32 %v1247, 0.0
    %v1252 = vmax.f32 %v1248, 0.0
    %v1253 = vmax.f32 %v1249, 0.0
    %v1254 = vmax.f32 %v1250, 0.0
    %v1255 = vsub.f32 %v1203, %v1219
    %v1256 = vsub.f32 %v1204, %v1220
    %v1257 = vsub.f32 %v1205, %v1221
    %v1258 = vsub.f32 %v1206, %v1222
    %v1259 = vadd.f32 %v1251, 1e-06
    %v1260 = vadd.f32 %v1252, 1e-06
    %v1261 = vadd.f32 %v1253, 1e-06
    %v1262 = vadd.f32 %v1254, 1e-06
    %v1263 = vrsqrt.pop %v1259
    %v1264 = vmul.f32 %v1263, %v1259
    %v1265 = vmul.f32 %v1264, %v1263
    %v1266 = vmul.f32 0.5, %v1265
    %v1267 = vsub.f32 1.5, %v1266
    %v1268 = vmul.f32 %v1263, %v1267
    %vm1269 = vweird.f32 %v1259
    %vm1270 = vweird.f32 %v1263
    %vm1271 = vmor %vm1269, %vm1270
    %v1272 = vsel %vm1271, %v1263, %v1268
    %v1273 = vrsqrt.pop %v1260
    %v1274 = vmul.f32 %v1273, %v1260
    %v1275 = vmul.f32 %v1274, %v1273
    %v1276 = vmul.f32 0.5, %v1275
    %v1277 = vsub.f32 1.5, %v1276
    %v1278 = vmul.f32 %v1273, %v1277
    %vm1279 = vweird.f32 %v1260
    %vm1280 = vweird.f32 %v1273
    %vm1281 = vmor %vm1279, %vm1280
    %v1282 = vsel %vm1281, %v1273, %v1278
    %v1283 = vrsqrt.pop %v1261
    %v1284 = vmul.f32 %v1283, %v1261
    %v1285 = vmul.f32 %v1284, %v1283
    %v1286 = vmul.f32 0.5, %v1285
    %v1287 = vsub.f32 1.5, %v1286
    %v1288 = vmul.f32 %v1283, %v1287
    %vm1289 = vweird.f32 %v1261
    %vm1290 = vweird.f32 %v1283
    %vm1291 = vmor %vm1289, %vm1290
    %v1292 = vsel %vm1291, %v1283, %v1288
    %v1293 = vrsqrt.pop %v1262
    %v1294 = vmul.f32 %v1293, %v1262
    %v1295 = vmul.f32 %v1294, %v1293
    %v1296 = vmul.f32 0.5, %v1295
    %v1297 = vsub.f32 1.5, %v1296
    %v1298 = vmul.f32 %v1293, %v1297
    %vm1299 = vweird.f32 %v1262
    %vm1300 = vweird.f32 %v1293
    %vm1301 = vmor %vm1299, %vm1300
    %v1302 = vsel %vm1301, %v1293, %v1298
    %v1303 = vmul.f32 %v1255, %v1272
    %v1304 = vmul.f32 %v1256, %v1282
    %v1305 = vmul.f32 %v1257, %v1292
    %v1306 = vmul.f32 %v1258, %v1302
    %v1307 = vperm.slane %v646, 0
    %v1308 = vmul.f32 %v1303, %v1307
    %v1309 = vmul.f32 %v1304, %v1307
    %v1310 = vmul.f32 %v1305, %v1307
    %v1311 = vmul.f32 %v1306, %v1307
    %v1312 = vperm.slane %v646, 1
    %v1313 = vadd.f32 %v1308, %v1312
    %v1314 = vadd.f32 %v1309, %v1312
    %v1315 = vadd.f32 %v1310, %v1312
    %v1316 = vadd.f32 %v1311, %v1312
    %v1317 = vpack.c.bf16 %v1314, %v1313
    %v1318 = vpack.c.bf16 %v1316, %v1315
    %v1320 = vperm.slane %v658, 0
    %v1324 = vunpack.c.l.b16 %v656
    %v1325 = vunpack.c.l.b16 %v657
    %v1326 = vpack.c.b16 %v1325, %v1324
    %v1329 = vsel %vm527, %v1317, 0
    %v1332 = vsel %vm527, %v1318, 0
    %1334 = vmatpush.bf16.msra.mxu0 0
    %1335 = vmatpush.bf16.msra.mxu0 0
    %1336 = vmatpush.bf16.msra.mxu0 0
    %1337 = vmatpush.bf16.msra.mxu0 0
    %1338 = vmatpush.bf16.msra.mxu0 0
    %1339 = vmatpush.bf16.msra.mxu0 0
    %1340 = vmatpush.bf16.msra.mxu0 0
    %1341 = vmatpush.bf16.msra.mxu0 %v1326
    %1342 = vmatmul.bf16.gmra.mxu0 %v1329
    %v1343 = vpop.f32.mrf.mxu0
    %v1344 = vadd.f32 %v1320, %v1343
    %v1345 = vpop.f32.mrf.mxu0
    %v1346 = vadd.f32 %v1320, %v1345
    %1347 = vmatmul.bf16.gmra.mxu0 %v1332
    %v1348 = vpop.f32.mrf.mxu0
    %v1349 = vadd.f32 %v1320, %v1348
    %v1350 = vpop.f32.mrf.mxu0
    %v1351 = vadd.f32 %v1320, %v1350
    %1352 = vdwg.mxu0
    %v1353 = vmul.f32 %v1344, %v1344
    %v1354 = vmul.f32 %v1346, %v1346
    %v1355 = vmul.f32 %v1349, %v1349
    %v1356 = vmul.f32 %v1351, %v1351
    %v1357 = vmul.f32 %v1344, %v1353
    %v1358 = vmul.f32 %v1346, %v1354
    %v1359 = vmul.f32 %v1349, %v1355
    %v1360 = vmul.f32 %v1351, %v1356
    %v1361 = vmul.f32 %v1357, 0.044715
    %v1362 = vmul.f32 %v1358, 0.044715
    %v1363 = vmul.f32 %v1359, 0.044715
    %v1364 = vmul.f32 %v1360, 0.044715
    %v1365 = vadd.f32 %v1344, %v1361
    %v1366 = vadd.f32 %v1346, %v1362
    %v1367 = vadd.f32 %v1349, %v1363
    %v1368 = vadd.f32 %v1351, %v1364
    %v1369 = vmul.f32 %v1365, 0.7978846
    %v1370 = vmul.f32 %v1366, 0.7978846
    %v1371 = vmul.f32 %v1367, 0.7978846
    %v1372 = vmul.f32 %v1368, 0.7978846
    %v1373 = vtanh.pop %v1369
    %v1374 = vtanh.pop %v1370
    %v1375 = vtanh.pop %v1371
    %v1376 = vtanh.pop %v1372
    %v1377 = vadd.f32 %v1373, 1.0
    %v1378 = vadd.f32 %v1374, 1.0
    %v1379 = vadd.f32 %v1375, 1.0
    %v1380 = vadd.f32 %v1376, 1.0
    %v1381 = vmul.f32 %v1377, 0.5
    %v1382 = vmul.f32 %v1378, 0.5
    %v1383 = vmul.f32 %v1379, 0.5
    %v1384 = vmul.f32 %v1380, 0.5
    %v1385 = vmul.f32 %v1344, %v1381
    %v1386 = vmul.f32 %v1346, %v1382
    %v1387 = vmul.f32 %v1349, %v1383
    %v1388 = vmul.f32 %v1351, %v1384
    %v1389 = vpack.c.bf16 %v1386, %v1385
    %v1390 = vpack.c.bf16 %v1388, %v1387
    %v1392 = vperm.slane %v663, 0
    %v1398 = vunpack.c.l.b16 %v659
    %v1399 = vunpack.c.l.b16 %v660
    %v1400 = vunpack.c.l.b16 %v661
    %v1401 = vunpack.c.l.b16 %v662
    %v1402 = vpack.c.b16 %v1399, %v1398
    %v1403 = vpack.c.b16 %v1401, %v1400
    %v1407 = vsel %vm821, %v1389, 0
    %v1410 = vsel %vm821, %v1390, 0
    %1412 = vmatpush.bf16.msra.mxu0 0
    %1413 = vmatpush.bf16.msra.mxu0 0
    %1414 = vmatpush.bf16.msra.mxu0 0
    %1415 = vmatpush.bf16.msra.mxu0 0
    %1416 = vmatpush.bf16.msra.mxu0 0
    %1417 = vmatpush.bf16.msra.mxu0 0
    %1418 = vmatpush.bf16.msra.mxu0 %v1403
    %1419 = vmatpush.bf16.msra.mxu0 %v1402
    %1420 = vmatmul.bf16.gmra.mxu0 %v1407
    %v1421 = vpop.f32.mrf.mxu0
    %v1422 = vadd.f32 %v1392, %v1421
    %v1423 = vpop.f32.mrf.mxu0
    %v1424 = vadd.f32 %v1392, %v1423
    %1425 = vmatmul.bf16.gmra.mxu0 %v1410
    %v1426 = vpop.f32.mrf.mxu0
    %v1427 = vadd.f32 %v1392, %v1426
    %v1428 = vpop.f32.mrf.mxu0
    %v1429 = vadd.f32 %v1392, %v1428
    %1430 = vdwg.mxu0
    %v1431 = vadd.f32 %v1203, %v1422
    %v1432 = vadd.f32 %v1204, %v1424
    %v1433 = vadd.f32 %v1205, %v1427
    %v1434 = vadd.f32 %v1206, %v1429
    %v1435 = vld [vmem:[%s49] sm:$0x3]
    %v1436 = vsel %vm527, %v1431, 0.0
    %1437 = vadd.xlane.f32.xlu0 %v1436
    %v1438 = vpop.xlane.xlu0 %1437
    %v1439 = vsel %vm527, %v1432, 0.0
    %1440 = vadd.xlane.f32.xlu0 %v1439
    %v1441 = vpop.xlane.xlu0 %1440
    %v1442 = vsel %vm527, %v1433, 0.0
    %1443 = vadd.xlane.f32.xlu0 %v1442
    %v1444 = vpop.xlane.xlu0 %1443
    %v1445 = vsel %vm527, %v1434, 0.0
    %1446 = vadd.xlane.f32.xlu0 %v1445
    %v1447 = vpop.xlane.xlu0 %1446
    %v1448 = vmul.f32 %v1438, %v546
    %v1449 = vmul.f32 %v1441, %v546
    %v1450 = vmul.f32 %v1444, %v546
    %v1451 = vmul.f32 %v1447, %v546
    %v1452 = vmul.f32 %v1431, %v1431
    %v1453 = vmul.f32 %v1432, %v1432
    %v1454 = vmul.f32 %v1433, %v1433
    %v1455 = vmul.f32 %v1434, %v1434
    %v1456 = vsel %vm527, %v1452, 0.0
    %1457 = vadd.xlane.f32.xlu0 %v1456
    %v1458 = vpop.xlane.xlu0 %1457
    %v1459 = vsel %vm527, %v1453, 0.0
    %1460 = vadd.xlane.f32.xlu0 %v1459
    %v1461 = vpop.xlane.xlu0 %1460
    %v1462 = vsel %vm527, %v1454, 0.0
    %1463 = vadd.xlane.f32.xlu0 %v1462
    %v1464 = vpop.xlane.xlu0 %1463
    %v1465 = vsel %vm527, %v1455, 0.0
    %1466 = vadd.xlane.f32.xlu0 %v1465
    %v1467 = vpop.xlane.xlu0 %1466
    %v1468 = vmul.f32 %v1458, %v546
    %v1469 = vmul.f32 %v1461, %v546
    %v1470 = vmul.f32 %v1464, %v546
    %v1471 = vmul.f32 %v1467, %v546
    %v1472 = vmul.f32 %v1448, %v1448
    %v1473 = vmul.f32 %v1449, %v1449
    %v1474 = vmul.f32 %v1450, %v1450
    %v1475 = vmul.f32 %v1451, %v1451
    %v1476 = vsub.f32 %v1468, %v1472
    %v1477 = vsub.f32 %v1469, %v1473
    %v1478 = vsub.f32 %v1470, %v1474
    %v1479 = vsub.f32 %v1471, %v1475
    %v1480 = vmax.f32 %v1476, 0.0
    %v1481 = vmax.f32 %v1477, 0.0
    %v1482 = vmax.f32 %v1478, 0.0
    %v1483 = vmax.f32 %v1479, 0.0
    %v1484 = vsub.f32 %v1431, %v1448
    %v1485 = vsub.f32 %v1432, %v1449
    %v1486 = vsub.f32 %v1433, %v1450
    %v1487 = vsub.f32 %v1434, %v1451
    %v1488 = vadd.f32 %v1480, 1e-06
    %v1489 = vadd.f32 %v1481, 1e-06
    %v1490 = vadd.f32 %v1482, 1e-06
    %v1491 = vadd.f32 %v1483, 1e-06
    %v1492 = vrsqrt.pop %v1488
    %v1493 = vmul.f32 %v1492, %v1488
    %v1494 = vmul.f32 %v1493, %v1492
    %v1495 = vmul.f32 0.5, %v1494
    %v1496 = vsub.f32 1.5, %v1495
    %v1497 = vmul.f32 %v1492, %v1496
    %vm1498 = vweird.f32 %v1488
    %vm1499 = vweird.f32 %v1492
    %vm1500 = vmor %vm1498, %vm1499
    %v1501 = vsel %vm1500, %v1492, %v1497
    %v1502 = vrsqrt.pop %v1489
    %v1503 = vmul.f32 %v1502, %v1489
    %v1504 = vmul.f32 %v1503, %v1502
    %v1505 = vmul.f32 0.5, %v1504
    %v1506 = vsub.f32 1.5, %v1505
    %v1507 = vmul.f32 %v1502, %v1506
    %vm1508 = vweird.f32 %v1489
    %vm1509 = vweird.f32 %v1502
    %vm1510 = vmor %vm1508, %vm1509
    %v1511 = vsel %vm1510, %v1502, %v1507
    %v1512 = vrsqrt.pop %v1490
    %v1513 = vmul.f32 %v1512, %v1490
    %v1514 = vmul.f32 %v1513, %v1512
    %v1515 = vmul.f32 0.5, %v1514
    %v1516 = vsub.f32 1.5, %v1515
    %v1517 = vmul.f32 %v1512, %v1516
    %vm1518 = vweird.f32 %v1490
    %vm1519 = vweird.f32 %v1512
    %vm1520 = vmor %vm1518, %vm1519
    %v1521 = vsel %vm1520, %v1512, %v1517
    %v1522 = vrsqrt.pop %v1491
    %v1523 = vmul.f32 %v1522, %v1491
    %v1524 = vmul.f32 %v1523, %v1522
    %v1525 = vmul.f32 0.5, %v1524
    %v1526 = vsub.f32 1.5, %v1525
    %v1527 = vmul.f32 %v1522, %v1526
    %vm1528 = vweird.f32 %v1491
    %vm1529 = vweird.f32 %v1522
    %vm1530 = vmor %vm1528, %vm1529
    %v1531 = vsel %vm1530, %v1522, %v1527
    %v1532 = vmul.f32 %v1484, %v1501
    %v1533 = vmul.f32 %v1485, %v1511
    %v1534 = vmul.f32 %v1486, %v1521
    %v1535 = vmul.f32 %v1487, %v1531
    %v1536 = vperm.slane %v1435, 0
    %v1537 = vmul.f32 %v1532, %v1536
    %v1538 = vmul.f32 %v1533, %v1536
    %v1539 = vmul.f32 %v1534, %v1536
    %v1540 = vmul.f32 %v1535, %v1536
    %v1541 = vperm.slane %v1435, 1
    %v1542 = vadd.f32 %v1537, %v1541
    %v1543 = vadd.f32 %v1538, %v1541
    %v1544 = vadd.f32 %v1539, %v1541
    %v1545 = vadd.f32 %v1540, %v1541
    %v1546 = vpack.c.bf16 %v1543, %v1542
    %v1547 = vpack.c.bf16 %v1545, %v1544
    %v1548 = vld [vmem:[%s51] sm:$0xf]
    %v1549 = vld [vmem:[%s51 + $0x4] sm:$0xf]
    %v1550 = vld [vmem:[%s51 + $0x8] sm:$0xf]
    %v1551 = vld [vmem:[%s51 + $0xc] sm:$0xf]
    %v1552 = vld [vmem:[%s51 + $0x10] sm:$0xf]
    %v1553 = vld [vmem:[%s51 + $0x14] sm:$0xf]
    %v1554 = vld [vmem:[%s51 + $0x18] sm:$0xf]
    %v1555 = vld [vmem:[%s51 + $0x1c] sm:$0xf]
    %v1556 = vld [vmem:[%s51 + $0x20] sm:$0xf]
    %v1557 = vld [vmem:[%s51 + $0x24] sm:$0xf]
    %v1558 = vld [vmem:[%s51 + $0x28] sm:$0xf]
    %v1559 = vld [vmem:[%s51 + $0x2c] sm:$0xf]
    %v1560 = vld [vmem:[%s51 + $0x30] sm:$0xf]
    %v1561 = vld [vmem:[%s51 + $0x34] sm:$0xf]
    %v1562 = vld [vmem:[%s51 + $0x38] sm:$0xf]
    %v1563 = vld [vmem:[%s51 + $0x3c] sm:$0xf]
    %v1564 = vld [vmem:[%s51 + $0x40] sm:$0xf]
    %v1565 = vld [vmem:[%s51 + $0x44] sm:$0xf]
    %v1566 = vld [vmem:[%s9] sm:$0xf]
    %v1568 = vsel %vm821, %v1566, 0
    %1570 = vmatpush.bf16.msra.mxu0 0
    %1571 = vmatpush.bf16.msra.mxu0 0
    %1572 = vmatpush.bf16.msra.mxu0 0
    %1573 = vmatpush.bf16.msra.mxu0 0
    %1574 = vmatpush.bf16.msra.mxu0 0
    %1575 = vmatpush.bf16.msra.mxu0 0
    %1576 = vmatpush.bf16.msra.mxu0 %v1547
    %1577 = vmatpush.bf16.msra.mxu0 %v1546
    %1578 = vmatmul.bf16.gmra.mxu0 %v1568
    %v1579 = vpop.f32.mrf.mxu0
    %v1580 = vadd.f32 0.0, %v1579
    %v1581 = vpop.f32.mrf.mxu0
    %1582 = vdwg.mxu0
    %v1583 = vpack.c.bf16 %v1580, %v1580
    %s1584 = scalar_lea.vmem %s9, 4
    %v1585 = vld [vmem:[%s1584] sm:$0xf]
    %v1587 = vsel %vm821, %v1585, 0
    %1589 = vmatpush.bf16.msra.mxu0 0
    %1590 = vmatpush.bf16.msra.mxu0 0
    %1591 = vmatpush.bf16.msra.mxu0 0
    %1592 = vmatpush.bf16.msra.mxu0 0
    %1593 = vmatpush.bf16.msra.mxu0 0
    %1594 = vmatpush.bf16.msra.mxu0 0
    %1595 = vmatpush.bf16.msra.mxu0 %v1547
    %1596 = vmatpush.bf16.msra.mxu0 %v1546
    %1597 = vmatmul.bf16.gmra.mxu0 %v1587
    %v1598 = vpop.f32.mrf.mxu0
    %v1599 = vadd.f32 0.0, %v1598
    %v1600 = vpop.f32.mrf.mxu0
    %1601 = vdwg.mxu0
    %v1602 = vpack.c.bf16 %v1599, %v1599
    %v1605 = vunpack.c.l.b16 %v1550
    %v1606 = vunpack.c.l.b16 %v1551
    %v1607 = vpack.c.b16 %v1606, %v1605
    %v1610 = vsel %vm527, %v1602, 0
    %1612 = vmatpush.bf16.msra.mxu0 0
    %1613 = vmatpush.bf16.msra.mxu0 0
    %1614 = vmatpush.bf16.msra.mxu0 0
    %1615 = vmatpush.bf16.msra.mxu0 0
    %1616 = vmatpush.bf16.msra.mxu0 0
    %1617 = vmatpush.bf16.msra.mxu0 0
    %1618 = vmatpush.bf16.msra.mxu0 0
    %1619 = vmatpush.bf16.msra.mxu0 %v1607
    %1620 = vmatmul.bf16.gmra.mxu0 %v1610
    %v1621 = vpop.f32.mrf.mxu0
    %v1622 = vadd.f32 0.0, %v1621
    %v1623 = vpop.f32.mrf.mxu0
    %1624 = vdwg.mxu0
    %v1627 = vunpack.c.l.b16 %v1548
    %v1628 = vunpack.c.l.b16 %v1549
    %v1629 = vpack.c.b16 %v1628, %v1627
    %v1632 = vsel %vm527, %v1583, 0
    %1634 = vmatpush.bf16.msra.mxu0 0
    %1635 = vmatpush.bf16.msra.mxu0 0
    %1636 = vmatpush.bf16.msra.mxu0 0
    %1637 = vmatpush.bf16.msra.mxu0 0
    %1638 = vmatpush.bf16.msra.mxu0 0
    %1639 = vmatpush.bf16.msra.mxu0 0
    %1640 = vmatpush.bf16.msra.mxu0 0
    %1641 = vmatpush.bf16.msra.mxu0 %v1629
    %1642 = vmatmul.bf16.gmra.mxu0 %v1632
    %v1643 = vpop.f32.mrf.mxu0
    %v1644 = vadd.f32 %v1622, %v1643
    %v1645 = vpop.f32.mrf.mxu0
    %1646 = vdwg.mxu0
    %s1647 = scalar_lea.vmem %s9, 8
    %v1648 = vld [vmem:[%s1647] sm:$0xf]
    %v1650 = vsel %vm821, %v1648, 0
    %1652 = vmatpush.bf16.msra.mxu0 0
    %1653 = vmatpush.bf16.msra.mxu0 0
    %1654 = vmatpush.bf16.msra.mxu0 0
    %1655 = vmatpush.bf16.msra.mxu0 0
    %1656 = vmatpush.bf16.msra.mxu0 0
    %1657 = vmatpush.bf16.msra.mxu0 0
    %1658 = vmatpush.bf16.msra.mxu0 %v1547
    %1659 = vmatpush.bf16.msra.mxu0 %v1546
    %1660 = vmatmul.bf16.gmra.mxu0 %v1650
    %v1661 = vpop.f32.mrf.mxu0
    %v1662 = vadd.f32 0.0, %v1661
    %v1663 = vpop.f32.mrf.mxu0
    %1664 = vdwg.mxu0
    %v1665 = vpack.c.bf16 %v1662, %v1662
    %v1668 = vunpack.c.l.b16 %v1552
    %v1669 = vunpack.c.l.b16 %v1553
    %v1670 = vpack.c.b16 %v1669, %v1668
    %v1673 = vsel %vm527, %v1665, 0
    %1675 = vmatpush.bf16.msra.mxu0 0
    %1676 = vmatpush.bf16.msra.mxu0 0
    %1677 = vmatpush.bf16.msra.mxu0 0
    %1678 = vmatpush.bf16.msra.mxu0 0
    %1679 = vmatpush.bf16.msra.mxu0 0
    %1680 = vmatpush.bf16.msra.mxu0 0
    %1681 = vmatpush.bf16.msra.mxu0 0
    %1682 = vmatpush.bf16.msra.mxu0 %v1670
    %1683 = vmatmul.bf16.gmra.mxu0 %v1673
    %v1684 = vpop.f32.mrf.mxu0
    %v1685 = vadd.f32 0.0, %v1684
    %v1686 = vpop.f32.mrf.mxu0
    %1687 = vdwg.mxu0
    %v1688 = vadd.f32 %v1644, %v1685
    %s1689 = scalar_lea.vmem %s9, 12
    %v1690 = vld [vmem:[%s1689] sm:$0xf]
    %v1692 = vsel %vm821, %v1690, 0
    %1694 = vmatpush.bf16.msra.mxu0 0
    %1695 = vmatpush.bf16.msra.mxu0 0
    %1696 = vmatpush.bf16.msra.mxu0 0
    %1697 = vmatpush.bf16.msra.mxu0 0
    %1698 = vmatpush.bf16.msra.mxu0 0
    %1699 = vmatpush.bf16.msra.mxu0 0
    %1700 = vmatpush.bf16.msra.mxu0 %v1547
    %1701 = vmatpush.bf16.msra.mxu0 %v1546
    %1702 = vmatmul.bf16.gmra.mxu0 %v1692
    %v1703 = vpop.f32.mrf.mxu0
    %v1704 = vadd.f32 0.0, %v1703
    %v1705 = vpop.f32.mrf.mxu0
    %1706 = vdwg.mxu0
    %v1707 = vpack.c.bf16 %v1704, %v1704
    %v1710 = vunpack.c.l.b16 %v1554
    %v1711 = vunpack.c.l.b16 %v1555
    %v1712 = vpack.c.b16 %v1711, %v1710
    %v1715 = vsel %vm527, %v1707, 0
    %1717 = vmatpush.bf16.msra.mxu0 0
    %1718 = vmatpush.bf16.msra.mxu0 0
    %1719 = vmatpush.bf16.msra.mxu0 0
    %1720 = vmatpush.bf16.msra.mxu0 0
    %1721 = vmatpush.bf16.msra.mxu0 0
    %1722 = vmatpush.bf16.msra.mxu0 0
    %1723 = vmatpush.bf16.msra.mxu0 0
    %1724 = vmatpush.bf16.msra.mxu0 %v1712
    %1725 = vmatmul.bf16.gmra.mxu0 %v1715
    %v1726 = vpop.f32.mrf.mxu0
    %v1727 = vadd.f32 0.0, %v1726
    %v1728 = vpop.f32.mrf.mxu0
    %1729 = vdwg.mxu0
    %v1730 = vadd.f32 %v1688, %v1727
    %s1731 = scalar_lea.vmem %s9, 16
    %v1732 = vld [vmem:[%s1731] sm:$0xf]
    %v1734 = vsel %vm821, %v1732, 0
    %1736 = vmatpush.bf16.msra.mxu0 0
    %1737 = vmatpush.bf16.msra.mxu0 0
    %1738 = vmatpush.bf16.msra.mxu0 0
    %1739 = vmatpush.bf16.msra.mxu0 0
    %1740 = vmatpush.bf16.msra.mxu0 0
    %1741 = vmatpush.bf16.msra.mxu0 0
    %1742 = vmatpush.bf16.msra.mxu0 %v1547
    %1743 = vmatpush.bf16.msra.mxu0 %v1546
    %1744 = vmatmul.bf16.gmra.mxu0 %v1734
    %v1745 = vpop.f32.mrf.mxu0
    %v1746 = vadd.f32 0.0, %v1745
    %v1747 = vpop.f32.mrf.mxu0
    %1748 = vdwg.mxu0
    %v1749 = vpack.c.bf16 %v1746, %v1746
    %v1752 = vunpack.c.l.b16 %v1556
    %v1753 = vunpack.c.l.b16 %v1557
    %v1754 = vpack.c.b16 %v1753, %v1752
    %v1757 = vsel %vm527, %v1749, 0
    %1759 = vmatpush.bf16.msra.mxu0 0
    %1760 = vmatpush.bf16.msra.mxu0 0
    %1761 = vmatpush.bf16.msra.mxu0 0
    %1762 = vmatpush.bf16.msra.mxu0 0
    %1763 = vmatpush.bf16.msra.mxu0 0
    %1764 = vmatpush.bf16.msra.mxu0 0
    %1765 = vmatpush.bf16.msra.mxu0 0
    %1766 = vmatpush.bf16.msra.mxu0 %v1754
    %1767 = vmatmul.bf16.gmra.mxu0 %v1757
    %v1768 = vpop.f32.mrf.mxu0
    %v1769 = vadd.f32 0.0, %v1768
    %v1770 = vpop.f32.mrf.mxu0
    %1771 = vdwg.mxu0
    %v1772 = vadd.f32 %v1730, %v1769
    %s1773 = scalar_lea.vmem %s9, 20
    %v1774 = vld [vmem:[%s1773] sm:$0xf]
    %v1776 = vsel %vm821, %v1774, 0
    %1778 = vmatpush.bf16.msra.mxu0 0
    %1779 = vmatpush.bf16.msra.mxu0 0
    %1780 = vmatpush.bf16.msra.mxu0 0
    %1781 = vmatpush.bf16.msra.mxu0 0
    %1782 = vmatpush.bf16.msra.mxu0 0
    %1783 = vmatpush.bf16.msra.mxu0 0
    %1784 = vmatpush.bf16.msra.mxu0 %v1547
    %1785 = vmatpush.bf16.msra.mxu0 %v1546
    %1786 = vmatmul.bf16.gmra.mxu0 %v1776
    %v1787 = vpop.f32.mrf.mxu0
    %v1788 = vadd.f32 0.0, %v1787
    %v1789 = vpop.f32.mrf.mxu0
    %1790 = vdwg.mxu0
    %v1791 = vpack.c.bf16 %v1788, %v1788
    %v1794 = vunpack.c.l.b16 %v1558
    %v1795 = vunpack.c.l.b16 %v1559
    %v1796 = vpack.c.b16 %v1795, %v1794
    %v1799 = vsel %vm527, %v1791, 0
    %1801 = vmatpush.bf16.msra.mxu0 0
    %1802 = vmatpush.bf16.msra.mxu0 0
    %1803 = vmatpush.bf16.msra.mxu0 0
    %1804 = vmatpush.bf16.msra.mxu0 0
    %1805 = vmatpush.bf16.msra.mxu0 0
    %1806 = vmatpush.bf16.msra.mxu0 0
    %1807 = vmatpush.bf16.msra.mxu0 0
    %1808 = vmatpush.bf16.msra.mxu0 %v1796
    %1809 = vmatmul.bf16.gmra.mxu0 %v1799
    %v1810 = vpop.f32.mrf.mxu0
    %v1811 = vadd.f32 0.0, %v1810
    %v1812 = vpop.f32.mrf.mxu0
    %1813 = vdwg.mxu0
    %v1814 = vadd.f32 %v1772, %v1811
    %s1815 = scalar_lea.vmem %s9, 24
    %v1816 = vld [vmem:[%s1815] sm:$0xf]
    %v1818 = vsel %vm821, %v1816, 0
    %1820 = vmatpush.bf16.msra.mxu0 0
    %1821 = vmatpush.bf16.msra.mxu0 0
    %1822 = vmatpush.bf16.msra.mxu0 0
    %1823 = vmatpush.bf16.msra.mxu0 0
    %1824 = vmatpush.bf16.msra.mxu0 0
    %1825 = vmatpush.bf16.msra.mxu0 0
    %1826 = vmatpush.bf16.msra.mxu0 %v1547
    %1827 = vmatpush.bf16.msra.mxu0 %v1546
    %1828 = vmatmul.bf16.gmra.mxu0 %v1818
    %v1829 = vpop.f32.mrf.mxu0
    %v1830 = vadd.f32 0.0, %v1829
    %v1831 = vpop.f32.mrf.mxu0
    %1832 = vdwg.mxu0
    %v1833 = vpack.c.bf16 %v1830, %v1830
    %v1836 = vunpack.c.l.b16 %v1560
    %v1837 = vunpack.c.l.b16 %v1561
    %v1838 = vpack.c.b16 %v1837, %v1836
    %v1841 = vsel %vm527, %v1833, 0
    %1843 = vmatpush.bf16.msra.mxu0 0
    %1844 = vmatpush.bf16.msra.mxu0 0
    %1845 = vmatpush.bf16.msra.mxu0 0
    %1846 = vmatpush.bf16.msra.mxu0 0
    %1847 = vmatpush.bf16.msra.mxu0 0
    %1848 = vmatpush.bf16.msra.mxu0 0
    %1849 = vmatpush.bf16.msra.mxu0 0
    %1850 = vmatpush.bf16.msra.mxu0 %v1838
    %1851 = vmatmul.bf16.gmra.mxu0 %v1841
    %v1852 = vpop.f32.mrf.mxu0
    %v1853 = vadd.f32 0.0, %v1852
    %v1854 = vpop.f32.mrf.mxu0
    %1855 = vdwg.mxu0
    %v1856 = vadd.f32 %v1814, %v1853
    %s1857 = scalar_lea.vmem %s9, 28
    %v1858 = vld [vmem:[%s1857] sm:$0xf]
    %v1860 = vsel %vm821, %v1858, 0
    %1862 = vmatpush.bf16.msra.mxu0 0
    %1863 = vmatpush.bf16.msra.mxu0 0
    %1864 = vmatpush.bf16.msra.mxu0 0
    %1865 = vmatpush.bf16.msra.mxu0 0
    %1866 = vmatpush.bf16.msra.mxu0 0
    %1867 = vmatpush.bf16.msra.mxu0 0
    %1868 = vmatpush.bf16.msra.mxu0 %v1547
    %1869 = vmatpush.bf16.msra.mxu0 %v1546
    %1870 = vmatmul.bf16.gmra.mxu0 %v1860
    %v1871 = vpop.f32.mrf.mxu0
    %v1872 = vadd.f32 0.0, %v1871
    %v1873 = vpop.f32.mrf.mxu0
    %1874 = vdwg.mxu0
    %v1875 = vpack.c.bf16 %v1872, %v1872
    %v1878 = vunpack.c.l.b16 %v1562
    %v1879 = vunpack.c.l.b16 %v1563
    %v1880 = vpack.c.b16 %v1879, %v1878
    %v1883 = vsel %vm527, %v1875, 0
    %1885 = vmatpush.bf16.msra.mxu0 0
    %1886 = vmatpush.bf16.msra.mxu0 0
    %1887 = vmatpush.bf16.msra.mxu0 0
    %1888 = vmatpush.bf16.msra.mxu0 0
    %1889 = vmatpush.bf16.msra.mxu0 0
    %1890 = vmatpush.bf16.msra.mxu0 0
    %1891 = vmatpush.bf16.msra.mxu0 0
    %1892 = vmatpush.bf16.msra.mxu0 %v1880
    %1893 = vmatmul.bf16.gmra.mxu0 %v1883
    %v1894 = vpop.f32.mrf.mxu0
    %v1895 = vadd.f32 0.0, %v1894
    %v1896 = vpop.f32.mrf.mxu0
    %1897 = vdwg.mxu0
    %v1898 = vadd.f32 %v1856, %v1895
    %s1899 = scalar_lea.vmem %s9, 32
    %v1900 = vld [vmem:[%s1899] sm:$0xf]
    %v1902 = vsel %vm821, %v1900, 0
    %1904 = vmatpush.bf16.msra.mxu0 0
    %1905 = vmatpush.bf16.msra.mxu0 0
    %1906 = vmatpush.bf16.msra.mxu0 0
    %1907 = vmatpush.bf16.msra.mxu0 0
    %1908 = vmatpush.bf16.msra.mxu0 0
    %1909 = vmatpush.bf16.msra.mxu0 0
    %1910 = vmatpush.bf16.msra.mxu0 %v1547
    %1911 = vmatpush.bf16.msra.mxu0 %v1546
    %1912 = vmatmul.bf16.gmra.mxu0 %v1902
    %v1913 = vpop.f32.mrf.mxu0
    %v1914 = vadd.f32 0.0, %v1913
    %v1915 = vpop.f32.mrf.mxu0
    %1916 = vdwg.mxu0
    %v1917 = vpack.c.bf16 %v1914, %v1914
    %v1920 = vunpack.c.l.b16 %v1564
    %v1921 = vunpack.c.l.b16 %v1565
    %v1922 = vpack.c.b16 %v1921, %v1920
    %v1925 = vsel %vm527, %v1917, 0
    %1927 = vmatpush.bf16.msra.mxu0 0
    %1928 = vmatpush.bf16.msra.mxu0 0
    %1929 = vmatpush.bf16.msra.mxu0 0
    %1930 = vmatpush.bf16.msra.mxu0 0
    %1931 = vmatpush.bf16.msra.mxu0 0
    %1932 = vmatpush.bf16.msra.mxu0 0
    %1933 = vmatpush.bf16.msra.mxu0 0
    %1934 = vmatpush.bf16.msra.mxu0 %v1922
    %1935 = vmatmul.bf16.gmra.mxu0 %v1925
    %v1936 = vpop.f32.mrf.mxu0
    %v1937 = vadd.f32 0.0, %v1936
    %v1938 = vpop.f32.mrf.mxu0
    %1939 = vdwg.mxu0
    %v1940 = vadd.f32 %v1898, %v1937
    %v1941 = vld [vmem:[%s53] sm:$0x1]
    %v1943 = vperm.slane %v1941, 0
    %v1945 = vadd.f32 %v1940, %v1943
    %v1946 = vld [vmem:[%s55] sm:$0x3]
    %v1947 = vsel %vm821, %v1945, 0.0
    %1948 = vadd.xlane.f32.xlu0 %v1947
    %v1949 = vpop.xlane.xlu0 %1948
    %v1950 = vrcp.pop 32.0
    %v1951 = vmul.f32 32.0, %v1950
    %v1952 = vsub.f32 1.0, %v1951
    %v1953 = vmul.f32 %v1950, %v1952
    %v1954 = vadd.f32 %v1950, %v1953
    %vm1955 = vweird.f32 %v1950
    %v1956 = vsel %vm1955, %v1950, %v1954
    %v1957 = vmul.f32 %v1949, %v1956
    %v1958 = vmul.f32 %v1945, %v1945
    %v1959 = vsel %vm821, %v1958, 0.0
    %1960 = vadd.xlane.f32.xlu0 %v1959
    %v1961 = vpop.xlane.xlu0 %1960
    %v1962 = vmul.f32 %v1961, %v1956
    %v1963 = vmul.f32 %v1957, %v1957
    %v1964 = vsub.f32 %v1962, %v1963
    %v1965 = vmax.f32 %v1964, 0.0
    %v1966 = vsub.f32 %v1945, %v1957
    %v1967 = vadd.f32 %v1965, 1e-06
    %v1968 = vrsqrt.pop %v1967
    %v1969 = vmul.f32 %v1968, %v1967
    %v1970 = vmul.f32 %v1969, %v1968
    %v1971 = vmul.f32 0.5, %v1970
    %v1972 = vsub.f32 1.5, %v1971
    %v1973 = vmul.f32 %v1968, %v1972
    %vm1974 = vweird.f32 %v1967
    %vm1975 = vweird.f32 %v1968
    %vm1976 = vmor %vm1974, %vm1975
    %v1977 = vsel %vm1976, %v1968, %v1973
    %v1978 = vmul.f32 %v1966, %v1977
    %v1979 = vperm.slane %v1946, 0
    %v1980 = vmul.f32 %v1978, %v1979
    %v1981 = vperm.slane %v1946, 1
    %v1982 = vadd.f32 %v1980, %v1981
    %v1983 = vld [vmem:[%s57] sm:$0x3]
    %v1984 = vld [vmem:[%s67] sm:$0x3]
    %v1985 = vld [vmem:[%s59] sm:$0xf]
    %v1986 = vld [vmem:[%s59 + $0x4] sm:$0xf]
    %v1987 = vld [vmem:[%s59 + $0x8] sm:$0xf]
    %v1988 = vld [vmem:[%s59 + $0xc] sm:$0xf]
    %v1989 = vld [vmem:[#allocation2] sm:$0x1]
    %v1990 = vld [vmem:[%s63] sm:$0xf]
    %v1991 = vld [vmem:[%s63 + $0x4] sm:$0xf]
    %v1992 = vld [vmem:[%s63 + $0x8] sm:$0xf]
    %v1993 = vld [vmem:[%s63 + $0xc] sm:$0xf]
    %v1994 = vld [vmem:[#allocation5] sm:$0x1]
    %v1995 = vld [vmem:[%s69] sm:$0xf]
    %v1996 = vld [vmem:[%s69 + $0x4] sm:$0xf]
    %v1997 = vld [vmem:[%s69 + $0x8] sm:$0xf]
    %v1998 = vld [vmem:[%s69 + $0xc] sm:$0xf]
    %v1999 = vld [vmem:[#allocation7] sm:$0x1]
    %v2000 = vld [vmem:[%s73] sm:$0xf]
    %v2001 = vld [vmem:[%s73 + $0x4] sm:$0xf]
    %v2002 = vld [vmem:[%s73 + $0x8] sm:$0xf]
    %v2003 = vld [vmem:[%s73 + $0xc] sm:$0xf]
    %v2004 = vld [vmem:[%s73 + $0x10] sm:$0xf]
    %v2005 = vld [vmem:[%s73 + $0x14] sm:$0xf]
    %v2006 = vld [vmem:[%s73 + $0x18] sm:$0xf]
    %v2007 = vld [vmem:[%s73 + $0x1c] sm:$0xf]
    %v2008 = vld [vmem:[#allocation8] sm:$0x1]
    %v2009 = vsel %vm821, %v1982, 0.0
    %2010 = vadd.xlane.f32.xlu0 %v2009
    %v2011 = vpop.xlane.xlu0 %2010
    %v2012 = vmul.f32 %v2011, %v1956
    %v2013 = vmul.f32 %v1982, %v1982
    %v2014 = vsel %vm821, %v2013, 0.0
    %2015 = vadd.xlane.f32.xlu0 %v2014
    %v2016 = vpop.xlane.xlu0 %2015
    %v2017 = vmul.f32 %v2016, %v1956
    %v2018 = vmul.f32 %v2012, %v2012
    %v2019 = vsub.f32 %v2017, %v2018
    %v2020 = vmax.f32 %v2019, 0.0
    %v2021 = vsub.f32 %v1982, %v2012
    %v2022 = vadd.f32 %v2020, 1e-06
    %v2023 = vrsqrt.pop %v2022
    %v2024 = vmul.f32 %v2023, %v2022
    %v2025 = vmul.f32 %v2024, %v2023
    %v2026 = vmul.f32 0.5, %v2025
    %v2027 = vsub.f32 1.5, %v2026
    %v2028 = vmul.f32 %v2023, %v2027
    %vm2029 = vweird.f32 %v2022
    %vm2030 = vweird.f32 %v2023
    %vm2031 = vmor %vm2029, %vm2030
    %v2032 = vsel %vm2031, %v2023, %v2028
    %v2033 = vmul.f32 %v2021, %v2032
    %v2034 = vperm.slane %v1983, 0
    %v2035 = vmul.f32 %v2033, %v2034
    %v2036 = vperm.slane %v1983, 1
    %v2037 = vadd.f32 %v2035, %v2036
    %v2038 = vpack.c.bf16 %v2037, %v2037
    %v2040 = vperm.slane %v1989, 0
    %v2046 = vunpack.c.l.b16 %v1985
    %v2047 = vunpack.c.l.b16 %v1986
    %v2048 = vunpack.c.l.b16 %v1987
    %v2049 = vunpack.c.l.b16 %v1988
    %v2050 = vpack.c.b16 %v2047, %v2046
    %v2051 = vpack.c.b16 %v2049, %v2048
    %v2055 = vsel %vm821, %v2038, 0
    %2057 = vmatpush.bf16.msra.mxu0 0
    %2058 = vmatpush.bf16.msra.mxu0 0
    %2059 = vmatpush.bf16.msra.mxu0 0
    %2060 = vmatpush.bf16.msra.mxu0 0
    %2061 = vmatpush.bf16.msra.mxu0 0
    %2062 = vmatpush.bf16.msra.mxu0 0
    %2063 = vmatpush.bf16.msra.mxu0 %v2051
    %2064 = vmatpush.bf16.msra.mxu0 %v2050
    %2065 = vmatmul.bf16.gmra.mxu0 %v2055
    %v2066 = vpop.f32.mrf.mxu0
    %v2067 = vadd.f32 %v2040, %v2066
    %v2068 = vpop.f32.mrf.mxu0
    %2069 = vdwg.mxu0
    %v2070 = vpack.c.bf16 %v2067, %v2067
    %2072 = vrot.lane.b32.xlu0 %v2070, 96
    %v2073 = vpop.permute.xlu0 %2072
    %v2075 = vsel %vm527, %v2070, 0
    %v2078 = vsel %vm527, %v2073, 0
    %2080 = vmatpush.bf16.xpose.msra.mxu0 0
    %2081 = vmatpush.bf16.xpose.msra.mxu0 0
    %2082 = vmatpush.bf16.xpose.msra.mxu0 0
    %2083 = vmatpush.bf16.xpose.msra.mxu0 0
    %2084 = vmatpush.bf16.xpose.msra.mxu0 0
    %2085 = vmatpush.bf16.xpose.msra.mxu0 0
    %2086 = vmatpush.bf16.xpose.msra.mxu0 0
    %2087 = vmatpush.bf16.xpose.msra.mxu0 %v2078
    %2088 = vmatmul.bf16.gmra.mxu0 %v2075
    %v2089 = vpop.f32.mrf.mxu0
    %v2090 = vadd.f32 0.0, %v2089
    %v2091 = vpop.f32.mrf.mxu0
    %2092 = vdwg.mxu0
    %v2093 = vmul.f32 %v2090, 0.25
    %v2094 = vadd.f32 %v2093, %v360
    %v2095 = vsel %vm1084, %v2094, -inf
    %2096 = vmax.xlane.f32.xlu0 %v2095
    %v2097 = vpop.xlane.xlu0 %2096
    %v2098 = vsub.f32 %v2094, %v2097
    %v2099 = vmul.f32 %v2098, 1.442695
    %v2100 = vpow.pop %v2099
    %v2101 = vsel %vm1084, %v2100, 0.0
    %2102 = vadd.xlane.f32.xlu0 %v2101
    %v2103 = vpop.xlane.xlu0 %2102
    %v2104 = vrcp.pop %v2103
    %v2105 = vmul.f32 %v2100, %v2104
    %v2106 = vpack.c.bf16 %v2105, %v2105
    %2107 = vrot.lane.b32.xlu0 %v2070, 64
    %v2108 = vpop.permute.xlu0 %2107
    %v2110 = vsel %vm1084, %v2106, 0
    %v2113 = vsel %vm1140, %v2108, 0
    %2115 = vmatpush.bf16.msra.mxu0 0
    %2116 = vmatpush.bf16.msra.mxu0 0
    %2117 = vmatpush.bf16.msra.mxu0 0
    %2118 = vmatpush.bf16.msra.mxu0 0
    %2119 = vmatpush.bf16.msra.mxu0 0
    %2120 = vmatpush.bf16.msra.mxu0 0
    %2121 = vmatpush.bf16.msra.mxu0 0
    %2122 = vmatpush.bf16.msra.mxu0 %v2113
    %2123 = vmatmul.bf16.gmra.mxu0 %v2110
    %v2124 = vpop.f32.mrf.mxu0
    %v2125 = vadd.f32 0.0, %v2124
    %v2126 = vpop.f32.mrf.mxu0
    %2127 = vdwg.mxu0
    %v2128 = vpack.c.bf16 %v2125, %v2125
    %2129 = vrot.lane.b32.xlu0 %v2070, 112
    %v2130 = vpop.permute.xlu0 %2129
    %2131 = vrot.lane.b32.xlu0 %v2070, 80
    %v2132 = vpop.permute.xlu0 %2131
    %v2134 = vsel %vm527, %v2130, 0
    %v2137 = vsel %vm527, %v2132, 0
    %2139 = vmatpush.bf16.xpose.msra.mxu0 0
    %2140 = vmatpush.bf16.xpose.msra.mxu0 0
    %2141 = vmatpush.bf16.xpose.msra.mxu0 0
    %2142 = vmatpush.bf16.xpose.msra.mxu0 0
    %2143 = vmatpush.bf16.xpose.msra.mxu0 0
    %2144 = vmatpush.bf16.xpose.msra.mxu0 0
    %2145 = vmatpush.bf16.xpose.msra.mxu0 0
    %2146 = vmatpush.bf16.xpose.msra.mxu0 %v2137
    %2147 = vmatmul.bf16.gmra.mxu0 %v2134
    %v2148 = vpop.f32.mrf.mxu0
    %v2149 = vadd.f32 0.0, %v2148
    %v2150 = vpop.f32.mrf.mxu0
    %2151 = vdwg.mxu0
    %v2152 = vmul.f32 %v2149, 0.25
    %v2153 = vadd.f32 %v2152, %v360
    %v2154 = vsel %vm1084, %v2153, -inf
    %2155 = vmax.xlane.f32.xlu0 %v2154
    %v2156 = vpop.xlane.xlu0 %2155
    %v2157 = vsub.f32 %v2153, %v2156
    %v2158 = vmul.f32 %v2157, 1.442695
    %v2159 = vpow.pop %v2158
    %v2160 = vsel %vm1084, %v2159, 0.0
    %2161 = vadd.xlane.f32.xlu0 %v2160
    %v2162 = vpop.xlane.xlu0 %2161
    %v2163 = vrcp.pop %v2162
    %v2164 = vmul.f32 %v2159, %v2163
    %v2165 = vpack.c.bf16 %v2164, %v2164
    %2166 = vrot.lane.b32.xlu0 %v2070, 48
    %v2167 = vpop.permute.xlu0 %2166
    %v2169 = vsel %vm1084, %v2165, 0
    %v2172 = vsel %vm1140, %v2167, 0
    %2174 = vmatpush.bf16.msra.mxu0 0
    %2175 = vmatpush.bf16.msra.mxu0 0
    %2176 = vmatpush.bf16.msra.mxu0 0
    %2177 = vmatpush.bf16.msra.mxu0 0
    %2178 = vmatpush.bf16.msra.mxu0 0
    %2179 = vmatpush.bf16.msra.mxu0 0
    %2180 = vmatpush.bf16.msra.mxu0 0
    %2181 = vmatpush.bf16.msra.mxu0 %v2172
    %2182 = vmatmul.bf16.gmra.mxu0 %v2169
    %v2183 = vpop.f32.mrf.mxu0
    %v2184 = vadd.f32 0.0, %v2183
    %v2185 = vpop.f32.mrf.mxu0
    %2186 = vdwg.mxu0
    %v2187 = vpack.c.bf16 %v2184, %v2184
    %v2190 = vunpack.c.l.b16 %v1992
    %v2191 = vunpack.c.l.b16 %v1993
    %v2192 = vpack.c.b16 %v2191, %v2190
    %v2195 = vsel %vm527, %v2187, 0
    %2197 = vmatpush.bf16.msra.mxu0 0
    %2198 = vmatpush.bf16.msra.mxu0 0
    %2199 = vmatpush.bf16.msra.mxu0 0
    %2200 = vmatpush.bf16.msra.mxu0 0
    %2201 = vmatpush.bf16.msra.mxu0 0
    %2202 = vmatpush.bf16.msra.mxu0 0
    %2203 = vmatpush.bf16.msra.mxu0 0
    %2204 = vmatpush.bf16.msra.mxu0 %v2192
    %2205 = vmatmul.bf16.gmra.mxu0 %v2195
    %v2206 = vpop.f32.mrf.mxu0
    %v2207 = vadd.f32 0.0, %v2206
    %v2208 = vpop.f32.mrf.mxu0
    %2209 = vdwg.mxu0
    %v2212 = vunpack.c.l.b16 %v1990
    %v2213 = vunpack.c.l.b16 %v1991
    %v2214 = vpack.c.b16 %v2213, %v2212
    %v2217 = vsel %vm527, %v2128, 0
    %2219 = vmatpush.bf16.msra.mxu0 0
    %2220 = vmatpush.bf16.msra.mxu0 0
    %2221 = vmatpush.bf16.msra.mxu0 0
    %2222 = vmatpush.bf16.msra.mxu0 0
    %2223 = vmatpush.bf16.msra.mxu0 0
    %2224 = vmatpush.bf16.msra.mxu0 0
    %2225 = vmatpush.bf16.msra.mxu0 0
    %2226 = vmatpush.bf16.msra.mxu0 %v2214
    %2227 = vmatmul.bf16.gmra.mxu0 %v2217
    %v2228 = vpop.f32.mrf.mxu0
    %v2229 = vadd.f32 %v2207, %v2228
    %v2230 = vpop.f32.mrf.mxu0
    %2231 = vdwg.mxu0
    %v2232 = vadd.f32 %v1982, %v2229
    %v2234 = vperm.slane %v1994, 0
    %v2236 = vadd.f32 %v2232, %v2234
    %v2237 = vsel %vm821, %v2236, 0.0
    %2238 = vadd.xlane.f32.xlu0 %v2237
    %v2239 = vpop.xlane.xlu0 %2238
    %v2240 = vmul.f32 %v2239, %v1956
    %v2241 = vmul.f32 %v2236, %v2236
    %v2242 = vsel %vm821, %v2241, 0.0
    %2243 = vadd.xlane.f32.xlu0 %v2242
    %v2244 = vpop.xlane.xlu0 %2243
    %v2245 = vmul.f32 %v2244, %v1956
    %v2246 = vmul.f32 %v2240, %v2240
    %v2247 = vsub.f32 %v2245, %v2246
    %v2248 = vmax.f32 %v2247, 0.0
    %v2249 = vsub.f32 %v2236, %v2240
    %v2250 = vadd.f32 %v2248, 1e-06
    %v2251 = vrsqrt.pop %v2250
    %v2252 = vmul.f32 %v2251, %v2250
    %v2253 = vmul.f32 %v2252, %v2251
    %v2254 = vmul.f32 0.5, %v2253
    %v2255 = vsub.f32 1.5, %v2254
    %v2256 = vmul.f32 %v2251, %v2255
    %vm2257 = vweird.f32 %v2250
    %vm2258 = vweird.f32 %v2251
    %vm2259 = vmor %vm2257, %vm2258
    %v2260 = vsel %vm2259, %v2251, %v2256
    %v2261 = vmul.f32 %v2249, %v2260
    %v2262 = vperm.slane %v1984, 0
    %v2263 = vmul.f32 %v2261, %v2262
    %v2264 = vperm.slane %v1984, 1
    %v2265 = vadd.f32 %v2263, %v2264
    %v2266 = vpack.c.bf16 %v2265, %v2265
    %v2268 = vperm.slane %v1999, 0
    %v2274 = vunpack.c.l.b16 %v1995
    %v2275 = vunpack.c.l.b16 %v1996
    %v2276 = vunpack.c.l.b16 %v1997
    %v2277 = vunpack.c.l.b16 %v1998
    %v2278 = vpack.c.b16 %v2275, %v2274
    %v2279 = vpack.c.b16 %v2277, %v2276
    %v2283 = vsel %vm821, %v2266, 0
    %2285 = vmatpush.bf16.msra.mxu0 0
    %2286 = vmatpush.bf16.msra.mxu0 0
    %2287 = vmatpush.bf16.msra.mxu0 0
    %2288 = vmatpush.bf16.msra.mxu0 0
    %2289 = vmatpush.bf16.msra.mxu0 0
    %2290 = vmatpush.bf16.msra.mxu0 0
    %2291 = vmatpush.bf16.msra.mxu0 %v2279
    %2292 = vmatpush.bf16.msra.mxu0 %v2278
    %2293 = vmatmul.bf16.gmra.mxu0 %v2283
    %v2294 = vpop.f32.mrf.mxu0
    %v2295 = vadd.f32 %v2268, %v2294
    %v2296 = vpop.f32.mrf.mxu0
    %2297 = vdwg.mxu0
    %v2298 = vmul.f32 %v2295, %v2295
    %v2299 = vmul.f32 %v2295, %v2298
    %v2300 = vmul.f32 %v2299, 0.044715
    %v2301 = vadd.f32 %v2295, %v2300
    %v2302 = vmul.f32 %v2301, 0.7978846
    %v2303 = vtanh.pop %v2302
    %v2304 = vadd.f32 %v2303, 1.0
    %v2305 = vmul.f32 %v2304, 0.5
    %v2306 = vmul.f32 %v2295, %v2305
    %v2307 = vpack.c.bf16 %v2306, %v2306
    %v2309 = vperm.slane %v2008, 0
    %v2319 = vunpack.c.l.b16 %v2000
    %v2320 = vunpack.c.l.b16 %v2001
    %v2321 = vunpack.c.l.b16 %v2002
    %v2322 = vunpack.c.l.b16 %v2003
    %v2323 = vunpack.c.l.b16 %v2004
    %v2324 = vunpack.c.l.b16 %v2005
    %v2325 = vunpack.c.l.b16 %v2006
    %v2326 = vunpack.c.l.b16 %v2007
    %v2327 = vpack.c.b16 %v2320, %v2319
    %v2328 = vpack.c.b16 %v2322, %v2321
    %v2329 = vpack.c.b16 %v2324, %v2323
    %v2330 = vpack.c.b16 %v2326, %v2325
    %vm2335 = vcmask 523264
    %v2337 = vsel %vm2335, %v2307, 0
    %2339 = vmatpush.bf16.msra.mxu0 0
    %2340 = vmatpush.bf16.msra.mxu0 0
    %2341 = vmatpush.bf16.msra.mxu0 0
    %2342 = vmatpush.bf16.msra.mxu0 0
    %2343 = vmatpush.bf16.msra.mxu0 %v2330
    %2344 = vmatpush.bf16.msra.mxu0 %v2329
    %2345 = vmatpush.bf16.msra.mxu0 %v2328
    %2346 = vmatpush.bf16.msra.mxu0 %v2327
    %2347 = vmatmul.bf16.gmra.mxu0 %v2337
    %v2348 = vpop.f32.mrf.mxu0
    %v2349 = vadd.f32 %v2309, %v2348
    %v2350 = vpop.f32.mrf.mxu0
    %2351 = vdwg.mxu0
    %v2352 = vadd.f32 %v2236, %v2349
    %v2353 = vld [vmem:[%s77] sm:$0x3]
    %v2354 = vsel %vm821, %v2352, 0.0
    %2355 = vadd.xlane.f32.xlu0 %v2354
    %v2356 = vpop.xlane.xlu0 %2355
    %v2357 = vmul.f32 %v2356, %v1956
    %v2358 = vmul.f32 %v2352, %v2352
    %v2359 = vsel %vm821, %v2358, 0.0
    %2360 = vadd.xlane.f32.xlu0 %v2359
    %v2361 = vpop.xlane.xlu0 %2360
    %v2362 = vmul.f32 %v2361, %v1956
    %v2363 = vmul.f32 %v2357, %v2357
    %v2364 = vsub.f32 %v2362, %v2363
    %v2365 = vmax.f32 %v2364, 0.0
    %v2366 = vsub.f32 %v2352, %v2357
    %v2367 = vadd.f32 %v2365, 1e-06
    %v2368 = vrsqrt.pop %v2367
    %v2369 = vmul.f32 %v2368, %v2367
    %v2370 = vmul.f32 %v2369, %v2368
    %v2371 = vmul.f32 0.5, %v2370
    %v2372 = vsub.f32 1.5, %v2371
    %v2373 = vmul.f32 %v2368, %v2372
    %vm2374 = vweird.f32 %v2367
    %vm2375 = vweird.f32 %v2368
    %vm2376 = vmor %vm2374, %vm2375
    %v2377 = vsel %vm2376, %v2368, %v2373
    %v2378 = vmul.f32 %v2366, %v2377
    %v2379 = vperm.slane %v2353, 0
    %v2380 = vmul.f32 %v2378, %v2379
    %v2381 = vperm.slane %v2353, 1
    %v2382 = vadd.f32 %v2380, %v2381
    %s2383 = scalar_lea.vmem %s1, 64
    %v2384 = vld [vmem:[%s2383] sm:$0xff]
    %v2385 = vld [vmem:[%s2383 + $0x8] sm:$0xff]
    %v2386 = vld [vmem:[%s2383 + $0x10] sm:$0xff]
    %v2387 = vld [vmem:[%s2383 + $0x18] sm:$0xff]
    %v2388 = vld [vmem:[%s2383 + $0x20] sm:$0xff]
    %v2389 = vld [vmem:[%s2383 + $0x28] sm:$0xff]
    %v2390 = vld [vmem:[%s2383 + $0x30] sm:$0xff]
    %v2391 = vld [vmem:[%s2383 + $0x38] sm:$0xff]
    %s2392 = scalar_lea.vmem %s13, 100
    %v2393 = vld [vmem:[%s2392] sm:$0xf]
    %v2394 = vld [vmem:[%s2392 + $0x4] sm:$0xf]
    %v2395 = vld [vmem:[%s2392 + $0x8] sm:$0xf]
    %v2396 = vld [vmem:[%s2392 + $0xc] sm:$0xf]
    %v2397 = vld [vmem:[%s2392 + $0x10] sm:$0xf]
    %v2398 = vld [vmem:[%s2392 + $0x14] sm:$0xf]
    %v2399 = vld [vmem:[%s2392 + $0x18] sm:$0xf]
    %v2400 = vld [vmem:[%s2392 + $0x1c] sm:$0xf]
    %v2401 = vld [vmem:[%s2392 + $0x20] sm:$0xf]
    %v2402 = vld [vmem:[%s2392 + $0x24] sm:$0xf]
    %v2403 = vld [vmem:[%s2392 + $0x28] sm:$0xf]
    %v2404 = vld [vmem:[%s2392 + $0x2c] sm:$0xf]
    %v2405 = vld [vmem:[%s2392 + $0x30] sm:$0xf]
    %v2406 = vld [vmem:[%s2392 + $0x34] sm:$0xf]
    %v2407 = vld [vmem:[%s2392 + $0x38] sm:$0xf]
    %v2408 = vld [vmem:[%s2392 + $0x3c] sm:$0xf]
    %v2409 = vld [vmem:[%s2392 + $0x40] sm:$0xf]
    %v2410 = vld [vmem:[%s2392 + $0x44] sm:$0xf]
    %v2411 = vld [vmem:[%s2392 + $0x48] sm:$0xf]
    %v2412 = vld [vmem:[%s2392 + $0x4c] sm:$0xf]
    %v2413 = vld [vmem:[%s2392 + $0x50] sm:$0xf]
    %v2414 = vld [vmem:[%s2392 + $0x54] sm:$0xf]
    %v2415 = vld [vmem:[%s2392 + $0x58] sm:$0xf]
    %v2416 = vld [vmem:[%s2392 + $0x5c] sm:$0xf]
    %v2417 = vld [vmem:[%s2392 + $0x60] sm:$0x3]
    %v2418 = vpack.c.bf16 %v2386, %v2384
    %v2419 = vpack.c.bf16 %v2387, %v2385
    %v2420 = vpack.c.bf16 %v2390, %v2388
    %v2421 = vpack.c.bf16 %v2391, %v2389
    %s2422 = scalar_lea.vmem %s15, 1
    %v2423 = vld [vmem:[%s2422] sm:$0x1]
    %v2425 = vperm.slane %v2423, 0
    %v2452 = vunpack.c.l.b16 %v2393
    %v2453 = vunpack.c.l.b16 %v2394
    %v2454 = vunpack.c.l.b16 %v2395
    %v2455 = vunpack.c.l.b16 %v2396
    %v2456 = vunpack.c.l.b16 %v2397
    %v2457 = vunpack.c.l.b16 %v2398
    %v2458 = vunpack.c.l.b16 %v2399
    %v2459 = vunpack.c.l.b16 %v2400
    %v2460 = vunpack.c.l.b16 %v2401
    %v2461 = vunpack.c.l.b16 %v2402
    %v2462 = vunpack.c.l.b16 %v2403
    %v2463 = vunpack.c.l.b16 %v2404
    %v2464 = vunpack.c.l.b16 %v2405
    %v2465 = vunpack.c.l.b16 %v2406
    %v2466 = vunpack.c.l.b16 %v2407
    %v2467 = vunpack.c.l.b16 %v2408
    %v2468 = vunpack.c.l.b16 %v2409
    %v2469 = vunpack.c.l.b16 %v2410
    %v2470 = vunpack.c.l.b16 %v2411
    %v2471 = vunpack.c.l.b16 %v2412
    %v2472 = vunpack.c.l.b16 %v2413
    %v2473 = vunpack.c.l.b16 %v2414
    %v2474 = vunpack.c.l.b16 %v2415
    %v2475 = vunpack.c.l.b16 %v2416
    %v2476 = vunpack.c.l.b16 %v2417
    %v2477 = vpack.c.b16 %v2453, %v2452
    %v2478 = vpack.c.b16 %v2455, %v2454
    %v2479 = vpack.c.b16 %v2457, %v2456
    %v2480 = vpack.c.b16 %v2459, %v2458
    %v2481 = vpack.c.b16 %v2461, %v2460
    %v2482 = vpack.c.b16 %v2463, %v2462
    %v2483 = vpack.c.b16 %v2465, %v2464
    %v2484 = vpack.c.b16 %v2467, %v2466
    %v2485 = vpack.c.b16 %v2469, %v2468
    %v2486 = vpack.c.b16 %v2471, %v2470
    %v2487 = vpack.c.b16 %v2473, %v2472
    %v2488 = vpack.c.b16 %v2475, %v2474
    %v2489 = vpack.c.b16 %v2476, %v2476
    %v2503 = vsel %vm477, %v2419, 0
    %v2506 = vsel %vm477, %v2421, 0
    %v2509 = vsel %vm484, %v2489, 0
    %2511 = vmatpush.bf16.msra.mxu0 %v2484
    %2512 = vmatpush.bf16.msra.mxu0 %v2483
    %2513 = vmatpush.bf16.msra.mxu0 %v2482
    %2514 = vmatpush.bf16.msra.mxu0 %v2481
    %2515 = vmatpush.bf16.msra.mxu0 %v2480
    %2516 = vmatpush.bf16.msra.mxu0 %v2479
    %2517 = vmatpush.bf16.msra.mxu0 %v2478
    %2518 = vmatpush.bf16.msra.mxu0 %v2477
    %2519 = vmatmul.bf16.gmra.mxu0 %v2418
    %v2520 = vpop.f32.mrf.mxu0
    %v2521 = vadd.f32 %v2425, %v2520
    %v2522 = vpop.f32.mrf.mxu0
    %v2523 = vadd.f32 %v2425, %v2522
    %2524 = vmatmul.bf16.gmra.mxu0 %v2420
    %v2525 = vpop.f32.mrf.mxu0
    %v2526 = vadd.f32 %v2425, %v2525
    %v2527 = vpop.f32.mrf.mxu0
    %v2528 = vadd.f32 %v2425, %v2527
    %2529 = vdwg.mxu0
    %2530 = vmatpush.bf16.msra.mxu0 0
    %2531 = vmatpush.bf16.msra.mxu0 0
    %2532 = vmatpush.bf16.msra.mxu0 0
    %2533 = vmatpush.bf16.msra.mxu0 %v2509
    %2534 = vmatpush.bf16.msra.mxu0 %v2488
    %2535 = vmatpush.bf16.msra.mxu0 %v2487
    %2536 = vmatpush.bf16.msra.mxu0 %v2486
    %2537 = vmatpush.bf16.msra.mxu0 %v2485
    %2538 = vmatmul.bf16.gmra.mxu0 %v2503
    %v2539 = vpop.f32.mrf.mxu0
    %v2540 = vadd.f32 %v2521, %v2539
    %v2541 = vpop.f32.mrf.mxu0
    %v2542 = vadd.f32 %v2523, %v2541
    %2543 = vmatmul.bf16.gmra.mxu0 %v2506
    %v2544 = vpop.f32.mrf.mxu0
    %v2545 = vadd.f32 %v2526, %v2544
    %v2546 = vpop.f32.mrf.mxu0
    %v2547 = vadd.f32 %v2528, %v2546
    %2548 = vdwg.mxu0
    %s2549 = scalar_lea.vmem %s17, 2
    %v2550 = vld [vmem:[%s2549] sm:$0x3]
    %v2551 = vsel %vm527, %v2540, 0.0
    %2552 = vadd.xlane.f32.xlu0 %v2551
    %v2553 = vpop.xlane.xlu0 %2552
    %v2554 = vsel %vm527, %v2542, 0.0
    %2555 = vadd.xlane.f32.xlu0 %v2554
    %v2556 = vpop.xlane.xlu0 %2555
    %v2557 = vsel %vm527, %v2545, 0.0
    %2558 = vadd.xlane.f32.xlu0 %v2557
    %v2559 = vpop.xlane.xlu0 %2558
    %v2560 = vsel %vm527, %v2547, 0.0
    %2561 = vadd.xlane.f32.xlu0 %v2560
    %v2562 = vpop.xlane.xlu0 %2561
    %v2563 = vmul.f32 %v2553, %v546
    %v2564 = vmul.f32 %v2556, %v546
    %v2565 = vmul.f32 %v2559, %v546
    %v2566 = vmul.f32 %v2562, %v546
    %v2567 = vmul.f32 %v2540, %v2540
    %v2568 = vmul.f32 %v2542, %v2542
    %v2569 = vmul.f32 %v2545, %v2545
    %v2570 = vmul.f32 %v2547, %v2547
    %v2571 = vsel %vm527, %v2567, 0.0
    %2572 = vadd.xlane.f32.xlu0 %v2571
    %v2573 = vpop.xlane.xlu0 %2572
    %v2574 = vsel %vm527, %v2568, 0.0
    %2575 = vadd.xlane.f32.xlu0 %v2574
    %v2576 = vpop.xlane.xlu0 %2575
    %v2577 = vsel %vm527, %v2569, 0.0
    %2578 = vadd.xlane.f32.xlu0 %v2577
    %v2579 = vpop.xlane.xlu0 %2578
    %v2580 = vsel %vm527, %v2570, 0.0
    %2581 = vadd.xlane.f32.xlu0 %v2580
    %v2582 = vpop.xlane.xlu0 %2581
    %v2583 = vmul.f32 %v2573, %v546
    %v2584 = vmul.f32 %v2576, %v546
    %v2585 = vmul.f32 %v2579, %v546
    %v2586 = vmul.f32 %v2582, %v546
    %v2587 = vmul.f32 %v2563, %v2563
    %v2588 = vmul.f32 %v2564, %v2564
    %v2589 = vmul.f32 %v2565, %v2565
    %v2590 = vmul.f32 %v2566, %v2566
    %v2591 = vsub.f32 %v2583, %v2587
    %v2592 = vsub.f32 %v2584, %v2588
    %v2593 = vsub.f32 %v2585, %v2589
    %v2594 = vsub.f32 %v2586, %v2590
    %v2595 = vmax.f32 %v2591, 0.0
    %v2596 = vmax.f32 %v2592, 0.0
    %v2597 = vmax.f32 %v2593, 0.0
    %v2598 = vmax.f32 %v2594, 0.0
    %v2599 = vsub.f32 %v2540, %v2563
    %v2600 = vsub.f32 %v2542, %v2564
    %v2601 = vsub.f32 %v2545, %v2565
    %v2602 = vsub.f32 %v2547, %v2566
    %v2603 = vadd.f32 %v2595, 1e-06
    %v2604 = vadd.f32 %v2596, 1e-06
    %v2605 = vadd.f32 %v2597, 1e-06
    %v2606 = vadd.f32 %v2598, 1e-06
    %v2607 = vrsqrt.pop %v2603
    %v2608 = vmul.f32 %v2607, %v2603
    %v2609 = vmul.f32 %v2608, %v2607
    %v2610 = vmul.f32 0.5, %v2609
    %v2611 = vsub.f32 1.5, %v2610
    %v2612 = vmul.f32 %v2607, %v2611
    %vm2613 = vweird.f32 %v2603
    %vm2614 = vweird.f32 %v2607
    %vm2615 = vmor %vm2613, %vm2614
    %v2616 = vsel %vm2615, %v2607, %v2612
    %v2617 = vrsqrt.pop %v2604
    %v2618 = vmul.f32 %v2617, %v2604
    %v2619 = vmul.f32 %v2618, %v2617
    %v2620 = vmul.f32 0.5, %v2619
    %v2621 = vsub.f32 1.5, %v2620
    %v2622 = vmul.f32 %v2617, %v2621
    %vm2623 = vweird.f32 %v2604
    %vm2624 = vweird.f32 %v2617
    %vm2625 = vmor %vm2623, %vm2624
    %v2626 = vsel %vm2625, %v2617, %v2622
    %v2627 = vrsqrt.pop %v2605
    %v2628 = vmul.f32 %v2627, %v2605
    %v2629 = vmul.f32 %v2628, %v2627
    %v2630 = vmul.f32 0.5, %v2629
    %v2631 = vsub.f32 1.5, %v2630
    %v2632 = vmul.f32 %v2627, %v2631
    %vm2633 = vweird.f32 %v2605
    %vm2634 = vweird.f32 %v2627
    %vm2635 = vmor %vm2633, %vm2634
    %v2636 = vsel %vm2635, %v2627, %v2632
    %v2637 = vrsqrt.pop %v2606
    %v2638 = vmul.f32 %v2637, %v2606
    %v2639 = vmul.f32 %v2638, %v2637
    %v2640 = vmul.f32 0.5, %v2639
    %v2641 = vsub.f32 1.5, %v2640
    %v2642 = vmul.f32 %v2637, %v2641
    %vm2643 = vweird.f32 %v2606
    %vm2644 = vweird.f32 %v2637
    %vm2645 = vmor %vm2643, %vm2644
    %v2646 = vsel %vm2645, %v2637, %v2642
    %v2647 = vmul.f32 %v2599, %v2616
    %v2648 = vmul.f32 %v2600, %v2626
    %v2649 = vmul.f32 %v2601, %v2636
    %v2650 = vmul.f32 %v2602, %v2646
    %v2651 = vperm.slane %v2550, 0
    %v2652 = vmul.f32 %v2647, %v2651
    %v2653 = vmul.f32 %v2648, %v2651
    %v2654 = vmul.f32 %v2649, %v2651
    %v2655 = vmul.f32 %v2650, %v2651
    %v2656 = vperm.slane %v2550, 1
    %v2657 = vadd.f32 %v2652, %v2656
    %v2658 = vadd.f32 %v2653, %v2656
    %v2659 = vadd.f32 %v2654, %v2656
    %v2660 = vadd.f32 %v2655, %v2656
    %s2661 = scalar_lea.vmem %s19, 2
    %v2662 = vld [vmem:[%s2661] sm:$0x3]
    %s2663 = scalar_lea.vmem %s39, 2
    %v2664 = vld [vmem:[%s2663] sm:$0x3]
    %s2665 = scalar_lea.vmem %s21, 8
    %v2666 = vld [vmem:[%s2665] sm:$0xf]
    %v2667 = vld [vmem:[%s2665 + $0x4] sm:$0xf]
    %s2668 = scalar_lea.vmem %s23, 1
    %v2669 = vld [vmem:[%s2668] sm:$0x1]
    %s2670 = scalar_lea.vmem %s25, 8
    %v2671 = vld [vmem:[%s2670] sm:$0xf]
    %v2672 = vld [vmem:[%s2670 + $0x4] sm:$0xf]
    %s2673 = scalar_lea.vmem %s27, 1
    %v2674 = vld [vmem:[%s2673] sm:$0x1]
    %s2675 = scalar_lea.vmem %s35, 8
    %v2676 = vld [vmem:[%s2675] sm:$0xf]
    %v2677 = vld [vmem:[%s2675 + $0x4] sm:$0xf]
    %s2678 = scalar_lea.vmem %s37, 1
    %v2679 = vld [vmem:[%s2678] sm:$0x1]
    %s2680 = scalar_lea.vmem %s41, 8
    %v2681 = vld [vmem:[%s2680] sm:$0xf]
    %v2682 = vld [vmem:[%s2680 + $0x4] sm:$0xf]
    %s2683 = scalar_lea.vmem %s43, 1
    %v2684 = vld [vmem:[%s2683] sm:$0x1]
    %s2685 = scalar_lea.vmem %s45, 16
    %v2686 = vld [vmem:[%s2685] sm:$0xf]
    %v2687 = vld [vmem:[%s2685 + $0x4] sm:$0xf]
    %v2688 = vld [vmem:[%s2685 + $0x8] sm:$0xf]
    %v2689 = vld [vmem:[%s2685 + $0xc] sm:$0xf]
    %s2690 = scalar_lea.vmem %s47, 1
    %v2691 = vld [vmem:[%s2690] sm:$0x1]
    %s2692 = scalar_lea.vmem %s29, 32
    %v2693 = vld [vmem:[%s2692] sm:$0xf]
    %v2694 = vld [vmem:[%s2692 + $0x4] sm:$0xf]
    %v2695 = vld [vmem:[%s2692 + $0x8] sm:$0xf]
    %v2696 = vld [vmem:[%s2692 + $0xc] sm:$0xf]
    %v2697 = vld [vmem:[%s2692 + $0x10] sm:$0xf]
    %v2698 = vld [vmem:[%s2692 + $0x14] sm:$0xf]
    %v2699 = vld [vmem:[%s2692 + $0x18] sm:$0xf]
    %v2700 = vld [vmem:[%s2692 + $0x1c] sm:$0xf]
    %s2701 = scalar_lea.vmem %s31, 1
    %v2702 = vld [vmem:[%s2701] sm:$0x1]
    %s2703 = scalar_lea.vmem %s33, 2
    %v2704 = vld [vmem:[%s2703] sm:$0x3]
    %v2705 = vsel %vm527, %v2657, 0.0
    %2706 = vadd.xlane.f32.xlu0 %v2705
    %v2707 = vpop.xlane.xlu0 %2706
    %v2708 = vsel %vm527, %v2658, 0.0
    %2709 = vadd.xlane.f32.xlu0 %v2708
    %v2710 = vpop.xlane.xlu0 %2709
    %v2711 = vsel %vm527, %v2659, 0.0
    %2712 = vadd.xlane.f32.xlu0 %v2711
    %v2713 = vpop.xlane.xlu0 %2712
    %v2714 = vsel %vm527, %v2660, 0.0
    %2715 = vadd.xlane.f32.xlu0 %v2714
    %v2716 = vpop.xlane.xlu0 %2715
    %v2717 = vmul.f32 %v2707, %v546
    %v2718 = vmul.f32 %v2710, %v546
    %v2719 = vmul.f32 %v2713, %v546
    %v2720 = vmul.f32 %v2716, %v546
    %v2721 = vmul.f32 %v2657, %v2657
    %v2722 = vmul.f32 %v2658, %v2658
    %v2723 = vmul.f32 %v2659, %v2659
    %v2724 = vmul.f32 %v2660, %v2660
    %v2725 = vsel %vm527, %v2721, 0.0
    %2726 = vadd.xlane.f32.xlu0 %v2725
    %v2727 = vpop.xlane.xlu0 %2726
    %v2728 = vsel %vm527, %v2722, 0.0
    %2729 = vadd.xlane.f32.xlu0 %v2728
    %v2730 = vpop.xlane.xlu0 %2729
    %v2731 = vsel %vm527, %v2723, 0.0
    %2732 = vadd.xlane.f32.xlu0 %v2731
    %v2733 = vpop.xlane.xlu0 %2732
    %v2734 = vsel %vm527, %v2724, 0.0
    %2735 = vadd.xlane.f32.xlu0 %v2734
    %v2736 = vpop.xlane.xlu0 %2735
    %v2737 = vmul.f32 %v2727, %v546
    %v2738 = vmul.f32 %v2730, %v546
    %v2739 = vmul.f32 %v2733, %v546
    %v2740 = vmul.f32 %v2736, %v546
    %v2741 = vmul.f32 %v2717, %v2717
    %v2742 = vmul.f32 %v2718, %v2718
    %v2743 = vmul.f32 %v2719, %v2719
    %v2744 = vmul.f32 %v2720, %v2720
    %v2745 = vsub.f32 %v2737, %v2741
    %v2746 = vsub.f32 %v2738, %v2742
    %v2747 = vsub.f32 %v2739, %v2743
    %v2748 = vsub.f32 %v2740, %v2744
    %v2749 = vmax.f32 %v2745, 0.0
    %v2750 = vmax.f32 %v2746, 0.0
    %v2751 = vmax.f32 %v2747, 0.0
    %v2752 = vmax.f32 %v2748, 0.0
    %v2753 = vsub.f32 %v2657, %v2717
    %v2754 = vsub.f32 %v2658, %v2718
    %v2755 = vsub.f32 %v2659, %v2719
    %v2756 = vsub.f32 %v2660, %v2720
    %v2757 = vadd.f32 %v2749, 1e-06
    %v2758 = vadd.f32 %v2750, 1e-06
    %v2759 = vadd.f32 %v2751, 1e-06
    %v2760 = vadd.f32 %v2752, 1e-06
    %v2761 = vrsqrt.pop %v2757
    %v2762 = vmul.f32 %v2761, %v2757
    %v2763 = vmul.f32 %v2762, %v2761
    %v2764 = vmul.f32 0.5, %v2763
    %v2765 = vsub.f32 1.5, %v2764
    %v2766 = vmul.f32 %v2761, %v2765
    %vm2767 = vweird.f32 %v2757
    %vm2768 = vweird.f32 %v2761
    %vm2769 = vmor %vm2767, %vm2768
    %v2770 = vsel %vm2769, %v2761, %v2766
    %v2771 = vrsqrt.pop %v2758
    %v2772 = vmul.f32 %v2771, %v2758
    %v2773 = vmul.f32 %v2772, %v2771
    %v2774 = vmul.f32 0.5, %v2773
    %v2775 = vsub.f32 1.5, %v2774
    %v2776 = vmul.f32 %v2771, %v2775
    %vm2777 = vweird.f32 %v2758
    %vm2778 = vweird.f32 %v2771
    %vm2779 = vmor %vm2777, %vm2778
    %v2780 = vsel %vm2779, %v2771, %v2776
    %v2781 = vrsqrt.pop %v2759
    %v2782 = vmul.f32 %v2781, %v2759
    %v2783 = vmul.f32 %v2782, %v2781
    %v2784 = vmul.f32 0.5, %v2783
    %v2785 = vsub.f32 1.5, %v2784
    %v2786 = vmul.f32 %v2781, %v2785
    %vm2787 = vweird.f32 %v2759
    %vm2788 = vweird.f32 %v2781
    %vm2789 = vmor %vm2787, %vm2788
    %v2790 = vsel %vm2789, %v2781, %v2786
    %v2791 = vrsqrt.pop %v2760
    %v2792 = vmul.f32 %v2791, %v2760
    %v2793 = vmul.f32 %v2792, %v2791
    %v2794 = vmul.f32 0.5, %v2793
    %v2795 = vsub.f32 1.5, %v2794
    %v2796 = vmul.f32 %v2791, %v2795
    %vm2797 = vweird.f32 %v2760
    %vm2798 = vweird.f32 %v2791
    %vm2799 = vmor %vm2797, %vm2798
    %v2800 = vsel %vm2799, %v2791, %v2796
    %v2801 = vmul.f32 %v2753, %v2770
    %v2802 = vmul.f32 %v2754, %v2780
    %v2803 = vmul.f32 %v2755, %v2790
    %v2804 = vmul.f32 %v2756, %v2800
    %v2805 = vperm.slane %v2662, 0
    %v2806 = vmul.f32 %v2801, %v2805
    %v2807 = vmul.f32 %v2802, %v2805
    %v2808 = vmul.f32 %v2803, %v2805
    %v2809 = vmul.f32 %v2804, %v2805
    %v2810 = vperm.slane %v2662, 1
    %v2811 = vadd.f32 %v2806, %v2810
    %v2812 = vadd.f32 %v2807, %v2810
    %v2813 = vadd.f32 %v2808, %v2810
    %v2814 = vadd.f32 %v2809, %v2810
    %v2815 = vpack.c.bf16 %v2812, %v2811
    %v2816 = vpack.c.bf16 %v2814, %v2813
    %v2818 = vperm.slane %v2669, 0
    %v2822 = vunpack.c.l.b16 %v2666
    %v2823 = vunpack.c.l.b16 %v2667
    %v2824 = vpack.c.b16 %v2823, %v2822
    %v2827 = vsel %vm527, %v2815, 0
    %v2830 = vsel %vm527, %v2816, 0
    %2832 = vmatpush.bf16.msra.mxu0 0
    %2833 = vmatpush.bf16.msra.mxu0 0
    %2834 = vmatpush.bf16.msra.mxu0 0
    %2835 = vmatpush.bf16.msra.mxu0 0
    %2836 = vmatpush.bf16.msra.mxu0 0
    %2837 = vmatpush.bf16.msra.mxu0 0
    %2838 = vmatpush.bf16.msra.mxu0 0
    %2839 = vmatpush.bf16.msra.mxu0 %v2824
    %2840 = vmatmul.bf16.gmra.mxu0 %v2827
    %v2841 = vpop.f32.mrf.mxu0
    %v2842 = vadd.f32 %v2818, %v2841
    %v2843 = vpop.f32.mrf.mxu0
    %v2844 = vadd.f32 %v2818, %v2843
    %2845 = vmatmul.bf16.gmra.mxu0 %v2830
    %v2846 = vpop.f32.mrf.mxu0
    %v2847 = vadd.f32 %v2818, %v2846
    %v2848 = vpop.f32.mrf.mxu0
    %v2849 = vadd.f32 %v2818, %v2848
    %2850 = vdwg.mxu0
    %2851 = vmatpush.bf16.msra.mxu0 0
    %2852 = vmatpush.bf16.msra.mxu0 0
    %2853 = vmatpush.bf16.msra.mxu0 0
    %2854 = vmatpush.bf16.msra.mxu0 0
    %2855 = vmatpush.bf16.msra.mxu0 0
    %2856 = vmatpush.bf16.msra.mxu0 0
    %2857 = vmatpush.bf16.msra.mxu0 %v2816
    %2858 = vmatpush.bf16.msra.mxu0 %v2815
    %2859 = vmatmul.bf16.gmra.mxu0 %v823
    %v2860 = vpop.f32.mrf.mxu0
    %v2861 = vadd.f32 0.0, %v2860
    %v2862 = vpop.f32.mrf.mxu0
    %2863 = vdwg.mxu0
    %v2864 = vpack.c.bf16 %v2861, %v2861
    %2865 = vmatpush.bf16.msra.mxu0 0
    %2866 = vmatpush.bf16.msra.mxu0 0
    %2867 = vmatpush.bf16.msra.mxu0 0
    %2868 = vmatpush.bf16.msra.mxu0 0
    %2869 = vmatpush.bf16.msra.mxu0 0
    %2870 = vmatpush.bf16.msra.mxu0 0
    %2871 = vmatpush.bf16.msra.mxu0 %v2816
    %2872 = vmatpush.bf16.msra.mxu0 %v2815
    %2873 = vmatmul.bf16.gmra.mxu0 %v842
    %v2874 = vpop.f32.mrf.mxu0
    %v2875 = vadd.f32 0.0, %v2874
    %v2876 = vpop.f32.mrf.mxu0
    %2877 = vdwg.mxu0
    %v2878 = vpack.c.bf16 %v2875, %v2875
    %v2881 = vunpack.c.l.b16 %v2695
    %v2882 = vunpack.c.l.b16 %v2696
    %v2883 = vpack.c.b16 %v2882, %v2881
    %v2886 = vsel %vm527, %v2878, 0
    %2888 = vmatpush.bf16.msra.mxu0 0
    %2889 = vmatpush.bf16.msra.mxu0 0
    %2890 = vmatpush.bf16.msra.mxu0 0
    %2891 = vmatpush.bf16.msra.mxu0 0
    %2892 = vmatpush.bf16.msra.mxu0 0
    %2893 = vmatpush.bf16.msra.mxu0 0
    %2894 = vmatpush.bf16.msra.mxu0 0
    %2895 = vmatpush.bf16.msra.mxu0 %v2883
    %2896 = vmatmul.bf16.gmra.mxu0 %v2886
    %v2897 = vpop.f32.mrf.mxu0
    %v2898 = vadd.f32 0.0, %v2897
    %v2899 = vpop.f32.mrf.mxu0
    %2900 = vdwg.mxu0
    %v2903 = vunpack.c.l.b16 %v2693
    %v2904 = vunpack.c.l.b16 %v2694
    %v2905 = vpack.c.b16 %v2904, %v2903
    %v2908 = vsel %vm527, %v2864, 0
    %2910 = vmatpush.bf16.msra.mxu0 0
    %2911 = vmatpush.bf16.msra.mxu0 0
    %2912 = vmatpush.bf16.msra.mxu0 0
    %2913 = vmatpush.bf16.msra.mxu0 0
    %2914 = vmatpush.bf16.msra.mxu0 0
    %2915 = vmatpush.bf16.msra.mxu0 0
    %2916 = vmatpush.bf16.msra.mxu0 0
    %2917 = vmatpush.bf16.msra.mxu0 %v2905
    %2918 = vmatmul.bf16.gmra.mxu0 %v2908
    %v2919 = vpop.f32.mrf.mxu0
    %v2920 = vadd.f32 %v2898, %v2919
    %v2921 = vpop.f32.mrf.mxu0
    %2922 = vdwg.mxu0
    %2923 = vmatpush.bf16.msra.mxu0 0
    %2924 = vmatpush.bf16.msra.mxu0 0
    %2925 = vmatpush.bf16.msra.mxu0 0
    %2926 = vmatpush.bf16.msra.mxu0 0
    %2927 = vmatpush.bf16.msra.mxu0 0
    %2928 = vmatpush.bf16.msra.mxu0 0
    %2929 = vmatpush.bf16.msra.mxu0 %v2816
    %2930 = vmatpush.bf16.msra.mxu0 %v2815
    %2931 = vmatmul.bf16.gmra.mxu0 %v905
    %v2932 = vpop.f32.mrf.mxu0
    %v2933 = vadd.f32 0.0, %v2932
    %v2934 = vpop.f32.mrf.mxu0
    %2935 = vdwg.mxu0
    %v2936 = vpack.c.bf16 %v2933, %v2933
    %v2939 = vunpack.c.l.b16 %v2697
    %v2940 = vunpack.c.l.b16 %v2698
    %v2941 = vpack.c.b16 %v2940, %v2939
    %v2944 = vsel %vm527, %v2936, 0
    %2946 = vmatpush.bf16.msra.mxu0 0
    %2947 = vmatpush.bf16.msra.mxu0 0
    %2948 = vmatpush.bf16.msra.mxu0 0
    %2949 = vmatpush.bf16.msra.mxu0 0
    %2950 = vmatpush.bf16.msra.mxu0 0
    %2951 = vmatpush.bf16.msra.mxu0 0
    %2952 = vmatpush.bf16.msra.mxu0 0
    %2953 = vmatpush.bf16.msra.mxu0 %v2941
    %2954 = vmatmul.bf16.gmra.mxu0 %v2944
    %v2955 = vpop.f32.mrf.mxu0
    %v2956 = vadd.f32 0.0, %v2955
    %v2957 = vpop.f32.mrf.mxu0
    %2958 = vdwg.mxu0
    %v2959 = vadd.f32 %v2920, %v2956
    %2960 = vmatpush.bf16.msra.mxu0 0
    %2961 = vmatpush.bf16.msra.mxu0 0
    %2962 = vmatpush.bf16.msra.mxu0 0
    %2963 = vmatpush.bf16.msra.mxu0 0
    %2964 = vmatpush.bf16.msra.mxu0 0
    %2965 = vmatpush.bf16.msra.mxu0 0
    %2966 = vmatpush.bf16.msra.mxu0 %v2816
    %2967 = vmatpush.bf16.msra.mxu0 %v2815
    %2968 = vmatmul.bf16.gmra.mxu0 %v947
    %v2969 = vpop.f32.mrf.mxu0
    %v2970 = vadd.f32 0.0, %v2969
    %v2971 = vpop.f32.mrf.mxu0
    %2972 = vdwg.mxu0
    %v2973 = vpack.c.bf16 %v2970, %v2970
    %v2976 = vunpack.c.l.b16 %v2699
    %v2977 = vunpack.c.l.b16 %v2700
    %v2978 = vpack.c.b16 %v2977, %v2976
    %v2981 = vsel %vm527, %v2973, 0
    %2983 = vmatpush.bf16.msra.mxu0 0
    %2984 = vmatpush.bf16.msra.mxu0 0
    %2985 = vmatpush.bf16.msra.mxu0 0
    %2986 = vmatpush.bf16.msra.mxu0 0
    %2987 = vmatpush.bf16.msra.mxu0 0
    %2988 = vmatpush.bf16.msra.mxu0 0
    %2989 = vmatpush.bf16.msra.mxu0 0
    %2990 = vmatpush.bf16.msra.mxu0 %v2978
    %2991 = vmatmul.bf16.gmra.mxu0 %v2981
    %v2992 = vpop.f32.mrf.mxu0
    %v2993 = vadd.f32 0.0, %v2992
    %v2994 = vpop.f32.mrf.mxu0
    %2995 = vdwg.mxu0
    %v2996 = vadd.f32 %v2959, %v2993
    %v2998 = vperm.slane %v2702, 0
    %v3000 = vadd.f32 %v2996, %v2998
    %v3001 = vsel %vm527, %v3000, 0.0
    %3002 = vadd.xlane.f32.xlu0 %v3001
    %v3003 = vpop.xlane.xlu0 %3002
    %v3004 = vmul.f32 %v3003, %v546
    %v3005 = vmul.f32 %v3000, %v3000
    %v3006 = vsel %vm527, %v3005, 0.0
    %3007 = vadd.xlane.f32.xlu0 %v3006
    %v3008 = vpop.xlane.xlu0 %3007
    %v3009 = vmul.f32 %v3008, %v546
    %v3010 = vmul.f32 %v3004, %v3004
    %v3011 = vsub.f32 %v3009, %v3010
    %v3012 = vmax.f32 %v3011, 0.0
    %v3013 = vsub.f32 %v3000, %v3004
    %v3014 = vadd.f32 %v3012, 1e-06
    %v3015 = vrsqrt.pop %v3014
    %v3016 = vmul.f32 %v3015, %v3014
    %v3017 = vmul.f32 %v3016, %v3015
    %v3018 = vmul.f32 0.5, %v3017
    %v3019 = vsub.f32 1.5, %v3018
    %v3020 = vmul.f32 %v3015, %v3019
    %vm3021 = vweird.f32 %v3014
    %vm3022 = vweird.f32 %v3015
    %vm3023 = vmor %vm3021, %vm3022
    %v3024 = vsel %vm3023, %v3015, %v3020
    %v3025 = vmul.f32 %v3013, %v3024
    %v3026 = vperm.slane %v2704, 0
    %v3027 = vmul.f32 %v3025, %v3026
    %v3028 = vperm.slane %v2704, 1
    %v3029 = vadd.f32 %v3027, %v3028
    %v3030 = vpack.c.bf16 %v3029, %v3029
    %v3032 = vperm.slane %v2674, 0
    %v3036 = vunpack.c.l.b16 %v2671
    %v3037 = vunpack.c.l.b16 %v2672
    %v3038 = vpack.c.b16 %v3037, %v3036
    %v3041 = vsel %vm527, %v3030, 0
    %3043 = vmatpush.bf16.msra.mxu0 0
    %3044 = vmatpush.bf16.msra.mxu0 0
    %3045 = vmatpush.bf16.msra.mxu0 0
    %3046 = vmatpush.bf16.msra.mxu0 0
    %3047 = vmatpush.bf16.msra.mxu0 0
    %3048 = vmatpush.bf16.msra.mxu0 0
    %3049 = vmatpush.bf16.msra.mxu0 0
    %3050 = vmatpush.bf16.msra.mxu0 %v3038
    %3051 = vmatmul.bf16.gmra.mxu0 %v3041
    %v3052 = vpop.f32.mrf.mxu0
    %v3053 = vadd.f32 %v3032, %v3052
    %v3054 = vpop.f32.mrf.mxu0
    %3055 = vdwg.mxu0
    %v3056 = vpack.c.bf16 %v2844, %v2842
    %v3057 = vpack.c.bf16 %v2849, %v2847
    %v3058 = vpack.c.bf16 %v3053, %v3053
    %v3060 = vsel %vm527, %v3056, 0
    %v3063 = vsel %vm527, %v3057, 0
    %v3066 = vsel %vm527, %v3058, 0
    %3068 = vmatpush.bf16.xpose.msra.mxu0 0
    %3069 = vmatpush.bf16.xpose.msra.mxu0 0
    %3070 = vmatpush.bf16.xpose.msra.mxu0 0
    %3071 = vmatpush.bf16.xpose.msra.mxu0 0
    %3072 = vmatpush.bf16.xpose.msra.mxu0 0
    %3073 = vmatpush.bf16.xpose.msra.mxu0 0
    %3074 = vmatpush.bf16.xpose.msra.mxu0 0
    %3075 = vmatpush.bf16.xpose.msra.mxu0 %v3066
    %3076 = vmatmul.bf16.gmra.mxu0 %v3060
    %v3077 = vpop.f32.mrf.mxu0
    %v3078 = vadd.f32 0.0, %v3077
    %v3079 = vpop.f32.mrf.mxu0
    %v3080 = vadd.f32 0.0, %v3079
    %3081 = vmatmul.bf16.gmra.mxu0 %v3063
    %v3082 = vpop.f32.mrf.mxu0
    %v3083 = vadd.f32 0.0, %v3082
    %v3084 = vpop.f32.mrf.mxu0
    %v3085 = vadd.f32 0.0, %v3084
    %3086 = vdwg.mxu0
    %v3087 = vmul.f32 %v3078, 0.25
    %v3088 = vmul.f32 %v3080, 0.25
    %v3089 = vmul.f32 %v3083, 0.25
    %v3090 = vmul.f32 %v3085, 0.25
    %v3091 = vadd.f32 %v3087, %v356
    %v3092 = vadd.f32 %v3088, %v357
    %v3093 = vadd.f32 %v3089, %v358
    %v3094 = vadd.f32 %v3090, %v359
    %v3095 = vsel %vm1084, %v3091, -inf
    %3096 = vmax.xlane.f32.xlu0 %v3095
    %v3097 = vpop.xlane.xlu0 %3096
    %v3098 = vsel %vm1084, %v3092, -inf
    %3099 = vmax.xlane.f32.xlu0 %v3098
    %v3100 = vpop.xlane.xlu0 %3099
    %v3101 = vsel %vm1084, %v3093, -inf
    %3102 = vmax.xlane.f32.xlu0 %v3101
    %v3103 = vpop.xlane.xlu0 %3102
    %v3104 = vsel %vm1084, %v3094, -inf
    %3105 = vmax.xlane.f32.xlu0 %v3104
    %v3106 = vpop.xlane.xlu0 %3105
    %v3107 = vsub.f32 %v3091, %v3097
    %v3108 = vsub.f32 %v3092, %v3100
    %v3109 = vsub.f32 %v3093, %v3103
    %v3110 = vsub.f32 %v3094, %v3106
    %v3111 = vmul.f32 %v3107, 1.442695
    %v3112 = vpow.pop %v3111
    %v3113 = vmul.f32 %v3108, 1.442695
    %v3114 = vpow.pop %v3113
    %v3115 = vmul.f32 %v3109, 1.442695
    %v3116 = vpow.pop %v3115
    %v3117 = vmul.f32 %v3110, 1.442695
    %v3118 = vpow.pop %v3117
    %v3119 = vsel %vm1084, %v3112, 0.0
    %3120 = vadd.xlane.f32.xlu0 %v3119
    %v3121 = vpop.xlane.xlu0 %3120
    %v3122 = vsel %vm1084, %v3114, 0.0
    %3123 = vadd.xlane.f32.xlu0 %v3122
    %v3124 = vpop.xlane.xlu0 %3123
    %v3125 = vsel %vm1084, %v3116, 0.0
    %3126 = vadd.xlane.f32.xlu0 %v3125
    %v3127 = vpop.xlane.xlu0 %3126
    %v3128 = vsel %vm1084, %v3118, 0.0
    %3129 = vadd.xlane.f32.xlu0 %v3128
    %v3130 = vpop.xlane.xlu0 %3129
    %v3131 = vrcp.pop %v3121
    %v3132 = vrcp.pop %v3124
    %v3133 = vrcp.pop %v3127
    %v3134 = vrcp.pop %v3130
    %v3135 = vmul.f32 %v3112, %v3131
    %v3136 = vmul.f32 %v3114, %v3132
    %v3137 = vmul.f32 %v3116, %v3133
    %v3138 = vmul.f32 %v3118, %v3134
    %v3139 = vpack.c.bf16 %v3136, %v3135
    %v3140 = vpack.c.bf16 %v3138, %v3137
    %3142 = vrot.lane.b32.xlu0 %v3058, 112
    %v3143 = vpop.permute.xlu0 %3142
    %v3145 = vsel %vm1084, %v3139, 0
    %v3148 = vsel %vm1084, %v3140, 0
    %v3151 = vsel %vm1140, %v3143, 0
    %3153 = vmatpush.bf16.msra.mxu0 0
    %3154 = vmatpush.bf16.msra.mxu0 0
    %3155 = vmatpush.bf16.msra.mxu0 0
    %3156 = vmatpush.bf16.msra.mxu0 0
    %3157 = vmatpush.bf16.msra.mxu0 0
    %3158 = vmatpush.bf16.msra.mxu0 0
    %3159 = vmatpush.bf16.msra.mxu0 0
    %3160 = vmatpush.bf16.msra.mxu0 %v3151
    %3161 = vmatmul.bf16.gmra.mxu0 %v3145
    %v3162 = vpop.f32.mrf.mxu0
    %v3163 = vadd.f32 0.0, %v3162
    %v3164 = vpop.f32.mrf.mxu0
    %v3165 = vadd.f32 0.0, %v3164
    %3166 = vmatmul.bf16.gmra.mxu0 %v3148
    %v3167 = vpop.f32.mrf.mxu0
    %v3168 = vadd.f32 0.0, %v3167
    %v3169 = vpop.f32.mrf.mxu0
    %v3170 = vadd.f32 0.0, %v3169
    %3171 = vdwg.mxu0
    %v3172 = vpack.c.bf16 %v3165, %v3163
    %v3173 = vpack.c.bf16 %v3170, %v3168
    %v3176 = vunpack.c.l.b16 %v2676
    %v3177 = vunpack.c.l.b16 %v2677
    %v3178 = vpack.c.b16 %v3177, %v3176
    %v3181 = vsel %vm527, %v3172, 0
    %v3184 = vsel %vm527, %v3173, 0
    %3186 = vmatpush.bf16.msra.mxu0 0
    %3187 = vmatpush.bf16.msra.mxu0 0
    %3188 = vmatpush.bf16.msra.mxu0 0
    %3189 = vmatpush.bf16.msra.mxu0 0
    %3190 = vmatpush.bf16.msra.mxu0 0
    %3191 = vmatpush.bf16.msra.mxu0 0
    %3192 = vmatpush.bf16.msra.mxu0 0
    %3193 = vmatpush.bf16.msra.mxu0 %v3178
    %3194 = vmatmul.bf16.gmra.mxu0 %v3181
    %v3195 = vpop.f32.mrf.mxu0
    %v3196 = vadd.f32 0.0, %v3195
    %v3197 = vpop.f32.mrf.mxu0
    %v3198 = vadd.f32 0.0, %v3197
    %3199 = vmatmul.bf16.gmra.mxu0 %v3184
    %v3200 = vpop.f32.mrf.mxu0
    %v3201 = vadd.f32 0.0, %v3200
    %v3202 = vpop.f32.mrf.mxu0
    %v3203 = vadd.f32 0.0, %v3202
    %3204 = vdwg.mxu0
    %v3205 = vadd.f32 %v2657, %v3196
    %v3206 = vadd.f32 %v2658, %v3198
    %v3207 = vadd.f32 %v2659, %v3201
    %v3208 = vadd.f32 %v2660, %v3203
    %v3210 = vperm.slane %v2679, 0
    %v3212 = vadd.f32 %v3205, %v3210
    %v3213 = vadd.f32 %v3206, %v3210
    %v3214 = vadd.f32 %v3207, %v3210
    %v3215 = vadd.f32 %v3208, %v3210
    %v3216 = vsel %vm527, %v3212, 0.0
    %3217 = vadd.xlane.f32.xlu0 %v3216
    %v3218 = vpop.xlane.xlu0 %3217
    %v3219 = vsel %vm527, %v3213, 0.0
    %3220 = vadd.xlane.f32.xlu0 %v3219
    %v3221 = vpop.xlane.xlu0 %3220
    %v3222 = vsel %vm527, %v3214, 0.0
    %3223 = vadd.xlane.f32.xlu0 %v3222
    %v3224 = vpop.xlane.xlu0 %3223
    %v3225 = vsel %vm527, %v3215, 0.0
    %3226 = vadd.xlane.f32.xlu0 %v3225
    %v3227 = vpop.xlane.xlu0 %3226
    %v3228 = vmul.f32 %v3218, %v546
    %v3229 = vmul.f32 %v3221, %v546
    %v3230 = vmul.f32 %v3224, %v546
    %v3231 = vmul.f32 %v3227, %v546
    %v3232 = vmul.f32 %v3212, %v3212
    %v3233 = vmul.f32 %v3213, %v3213
    %v3234 = vmul.f32 %v3214, %v3214
    %v3235 = vmul.f32 %v3215, %v3215
    %v3236 = vsel %vm527, %v3232, 0.0
    %3237 = vadd.xlane.f32.xlu0 %v3236
    %v3238 = vpop.xlane.xlu0 %3237
    %v3239 = vsel %vm527, %v3233, 0.0
    %3240 = vadd.xlane.f32.xlu0 %v3239
    %v3241 = vpop.xlane.xlu0 %3240
    %v3242 = vsel %vm527, %v3234, 0.0
    %3243 = vadd.xlane.f32.xlu0 %v3242
    %v3244 = vpop.xlane.xlu0 %3243
    %v3245 = vsel %vm527, %v3235, 0.0
    %3246 = vadd.xlane.f32.xlu0 %v3245
    %v3247 = vpop.xlane.xlu0 %3246
    %v3248 = vmul.f32 %v3238, %v546
    %v3249 = vmul.f32 %v3241, %v546
    %v3250 = vmul.f32 %v3244, %v546
    %v3251 = vmul.f32 %v3247, %v546
    %v3252 = vmul.f32 %v3228, %v3228
    %v3253 = vmul.f32 %v3229, %v3229
    %v3254 = vmul.f32 %v3230, %v3230
    %v3255 = vmul.f32 %v3231, %v3231
    %v3256 = vsub.f32 %v3248, %v3252
    %v3257 = vsub.f32 %v3249, %v3253
    %v3258 = vsub.f32 %v3250, %v3254
    %v3259 = vsub.f32 %v3251, %v3255
    %v3260 = vmax.f32 %v3256, 0.0
    %v3261 = vmax.f32 %v3257, 0.0
    %v3262 = vmax.f32 %v3258, 0.0
    %v3263 = vmax.f32 %v3259, 0.0
    %v3264 = vsub.f32 %v3212, %v3228
    %v3265 = vsub.f32 %v3213, %v3229
    %v3266 = vsub.f32 %v3214, %v3230
    %v3267 = vsub.f32 %v3215, %v3231
    %v3268 = vadd.f32 %v3260, 1e-06
    %v3269 = vadd.f32 %v3261, 1e-06
    %v3270 = vadd.f32 %v3262, 1e-06
    %v3271 = vadd.f32 %v3263, 1e-06
    %v3272 = vrsqrt.pop %v3268
    %v3273 = vmul.f32 %v3272, %v3268
    %v3274 = vmul.f32 %v3273, %v3272
    %v3275 = vmul.f32 0.5, %v3274
    %v3276 = vsub.f32 1.5, %v3275
    %v3277 = vmul.f32 %v3272, %v3276
    %vm3278 = vweird.f32 %v3268
    %vm3279 = vweird.f32 %v3272
    %vm3280 = vmor %vm3278, %vm3279
    %v3281 = vsel %vm3280, %v3272, %v3277
    %v3282 = vrsqrt.pop %v3269
    %v3283 = vmul.f32 %v3282, %v3269
    %v3284 = vmul.f32 %v3283, %v3282
    %v3285 = vmul.f32 0.5, %v3284
    %v3286 = vsub.f32 1.5, %v3285
    %v3287 = vmul.f32 %v3282, %v3286
    %vm3288 = vweird.f32 %v3269
    %vm3289 = vweird.f32 %v3282
    %vm3290 = vmor %vm3288, %vm3289
    %v3291 = vsel %vm3290, %v3282, %v3287
    %v3292 = vrsqrt.pop %v3270
    %v3293 = vmul.f32 %v3292, %v3270
    %v3294 = vmul.f32 %v3293, %v3292
    %v3295 = vmul.f32 0.5, %v3294
    %v3296 = vsub.f32 1.5, %v3295
    %v3297 = vmul.f32 %v3292, %v3296
    %vm3298 = vweird.f32 %v3270
    %vm3299 = vweird.f32 %v3292
    %vm3300 = vmor %vm3298, %vm3299
    %v3301 = vsel %vm3300, %v3292, %v3297
    %v3302 = vrsqrt.pop %v3271
    %v3303 = vmul.f32 %v3302, %v3271
    %v3304 = vmul.f32 %v3303, %v3302
    %v3305 = vmul.f32 0.5, %v3304
    %v3306 = vsub.f32 1.5, %v3305
    %v3307 = vmul.f32 %v3302, %v3306
    %vm3308 = vweird.f32 %v3271
    %vm3309 = vweird.f32 %v3302
    %vm3310 = vmor %vm3308, %vm3309
    %v3311 = vsel %vm3310, %v3302, %v3307
    %v3312 = vmul.f32 %v3264, %v3281
    %v3313 = vmul.f32 %v3265, %v3291
    %v3314 = vmul.f32 %v3266, %v3301
    %v3315 = vmul.f32 %v3267, %v3311
    %v3316 = vperm.slane %v2664, 0
    %v3317 = vmul.f32 %v3312, %v3316
    %v3318 = vmul.f32 %v3313, %v3316
    %v3319 = vmul.f32 %v3314, %v3316
    %v3320 = vmul.f32 %v3315, %v3316
    %v3321 = vperm.slane %v2664, 1
    %v3322 = vadd.f32 %v3317, %v3321
    %v3323 = vadd.f32 %v3318, %v3321
    %v3324 = vadd.f32 %v3319, %v3321
    %v3325 = vadd.f32 %v3320, %v3321
    %v3326 = vpack.c.bf16 %v3323, %v3322
    %v3327 = vpack.c.bf16 %v3325, %v3324
    %v3329 = vperm.slane %v2684, 0
    %v3333 = vunpack.c.l.b16 %v2681
    %v3334 = vunpack.c.l.b16 %v2682
    %v3335 = vpack.c.b16 %v3334, %v3333
    %v3338 = vsel %vm527, %v3326, 0
    %v3341 = vsel %vm527, %v3327, 0
    %3343 = vmatpush.bf16.msra.mxu0 0
    %3344 = vmatpush.bf16.msra.mxu0 0
    %3345 = vmatpush.bf16.msra.mxu0 0
    %3346 = vmatpush.bf16.msra.mxu0 0
    %3347 = vmatpush.bf16.msra.mxu0 0
    %3348 = vmatpush.bf16.msra.mxu0 0
    %3349 = vmatpush.bf16.msra.mxu0 0
    %3350 = vmatpush.bf16.msra.mxu0 %v3335
    %3351 = vmatmul.bf16.gmra.mxu0 %v3338
    %v3352 = vpop.f32.mrf.mxu0
    %v3353 = vadd.f32 %v3329, %v3352
    %v3354 = vpop.f32.mrf.mxu0
    %v3355 = vadd.f32 %v3329, %v3354
    %3356 = vmatmul.bf16.gmra.mxu0 %v3341
    %v3357 = vpop.f32.mrf.mxu0
    %v3358 = vadd.f32 %v3329, %v3357
    %v3359 = vpop.f32.mrf.mxu0
    %v3360 = vadd.f32 %v3329, %v3359
    %3361 = vdwg.mxu0
    %v3362 = vmul.f32 %v3353, %v3353
    %v3363 = vmul.f32 %v3355, %v3355
    %v3364 = vmul.f32 %v3358, %v3358
    %v3365 = vmul.f32 %v3360, %v3360
    %v3366 = vmul.f32 %v3353, %v3362
    %v3367 = vmul.f32 %v3355, %v3363
    %v3368 = vmul.f32 %v3358, %v3364
    %v3369 = vmul.f32 %v3360, %v3365
    %v3370 = vmul.f32 %v3366, 0.044715
    %v3371 = vmul.f32 %v3367, 0.044715
    %v3372 = vmul.f32 %v3368, 0.044715
    %v3373 = vmul.f32 %v3369, 0.044715
    %v3374 = vadd.f32 %v3353, %v3370
    %v3375 = vadd.f32 %v3355, %v3371
    %v3376 = vadd.f32 %v3358, %v3372
    %v3377 = vadd.f32 %v3360, %v3373
    %v3378 = vmul.f32 %v3374, 0.7978846
    %v3379 = vmul.f32 %v3375, 0.7978846
    %v3380 = vmul.f32 %v3376, 0.7978846
    %v3381 = vmul.f32 %v3377, 0.7978846
    %v3382 = vtanh.pop %v3378
    %v3383 = vtanh.pop %v3379
    %v3384 = vtanh.pop %v3380
    %v3385 = vtanh.pop %v3381
    %v3386 = vadd.f32 %v3382, 1.0
    %v3387 = vadd.f32 %v3383, 1.0
    %v3388 = vadd.f32 %v3384, 1.0
    %v3389 = vadd.f32 %v3385, 1.0
    %v3390 = vmul.f32 %v3386, 0.5
    %v3391 = vmul.f32 %v3387, 0.5
    %v3392 = vmul.f32 %v3388, 0.5
    %v3393 = vmul.f32 %v3389, 0.5
    %v3394 = vmul.f32 %v3353, %v3390
    %v3395 = vmul.f32 %v3355, %v3391
    %v3396 = vmul.f32 %v3358, %v3392
    %v3397 = vmul.f32 %v3360, %v3393
    %v3398 = vpack.c.bf16 %v3395, %v3394
    %v3399 = vpack.c.bf16 %v3397, %v3396
    %v3401 = vperm.slane %v2691, 0
    %v3407 = vunpack.c.l.b16 %v2686
    %v3408 = vunpack.c.l.b16 %v2687
    %v3409 = vunpack.c.l.b16 %v2688
    %v3410 = vunpack.c.l.b16 %v2689
    %v3411 = vpack.c.b16 %v3408, %v3407
    %v3412 = vpack.c.b16 %v3410, %v3409
    %v3416 = vsel %vm821, %v3398, 0
    %v3419 = vsel %vm821, %v3399, 0
    %3421 = vmatpush.bf16.msra.mxu0 0
    %3422 = vmatpush.bf16.msra.mxu0 0
    %3423 = vmatpush.bf16.msra.mxu0 0
    %3424 = vmatpush.bf16.msra.mxu0 0
    %3425 = vmatpush.bf16.msra.mxu0 0
    %3426 = vmatpush.bf16.msra.mxu0 0
    %3427 = vmatpush.bf16.msra.mxu0 %v3412
    %3428 = vmatpush.bf16.msra.mxu0 %v3411
    %3429 = vmatmul.bf16.gmra.mxu0 %v3416
    %v3430 = vpop.f32.mrf.mxu0
    %v3431 = vadd.f32 %v3401, %v3430
    %v3432 = vpop.f32.mrf.mxu0
    %v3433 = vadd.f32 %v3401, %v3432
    %3434 = vmatmul.bf16.gmra.mxu0 %v3419
    %v3435 = vpop.f32.mrf.mxu0
    %v3436 = vadd.f32 %v3401, %v3435
    %v3437 = vpop.f32.mrf.mxu0
    %v3438 = vadd.f32 %v3401, %v3437
    %3439 = vdwg.mxu0
    %v3440 = vadd.f32 %v3212, %v3431
    %v3441 = vadd.f32 %v3213, %v3433
    %v3442 = vadd.f32 %v3214, %v3436
    %v3443 = vadd.f32 %v3215, %v3438
    %s3444 = scalar_lea.vmem %s49, 2
    %v3445 = vld [vmem:[%s3444] sm:$0x3]
    %v3446 = vsel %vm527, %v3440, 0.0
    %3447 = vadd.xlane.f32.xlu0 %v3446
    %v3448 = vpop.xlane.xlu0 %3447
    %v3449 = vsel %vm527, %v3441, 0.0
    %3450 = vadd.xlane.f32.xlu0 %v3449
    %v3451 = vpop.xlane.xlu0 %3450
    %v3452 = vsel %vm527, %v3442, 0.0
    %3453 = vadd.xlane.f32.xlu0 %v3452
    %v3454 = vpop.xlane.xlu0 %3453
    %v3455 = vsel %vm527, %v3443, 0.0
    %3456 = vadd.xlane.f32.xlu0 %v3455
    %v3457 = vpop.xlane.xlu0 %3456
    %v3458 = vmul.f32 %v3448, %v546
    %v3459 = vmul.f32 %v3451, %v546
    %v3460 = vmul.f32 %v3454, %v546
    %v3461 = vmul.f32 %v3457, %v546
    %v3462 = vmul.f32 %v3440, %v3440
    %v3463 = vmul.f32 %v3441, %v3441
    %v3464 = vmul.f32 %v3442, %v3442
    %v3465 = vmul.f32 %v3443, %v3443
    %v3466 = vsel %vm527, %v3462, 0.0
    %3467 = vadd.xlane.f32.xlu0 %v3466
    %v3468 = vpop.xlane.xlu0 %3467
    %v3469 = vsel %vm527, %v3463, 0.0
    %3470 = vadd.xlane.f32.xlu0 %v3469
    %v3471 = vpop.xlane.xlu0 %3470
    %v3472 = vsel %vm527, %v3464, 0.0
    %3473 = vadd.xlane.f32.xlu0 %v3472
    %v3474 = vpop.xlane.xlu0 %3473
    %v3475 = vsel %vm527, %v3465, 0.0
    %3476 = vadd.xlane.f32.xlu0 %v3475
    %v3477 = vpop.xlane.xlu0 %3476
    %v3478 = vmul.f32 %v3468, %v546
    %v3479 = vmul.f32 %v3471, %v546
    %v3480 = vmul.f32 %v3474, %v546
    %v3481 = vmul.f32 %v3477, %v546
    %v3482 = vmul.f32 %v3458, %v3458
    %v3483 = vmul.f32 %v3459, %v3459
    %v3484 = vmul.f32 %v3460, %v3460
    %v3485 = vmul.f32 %v3461, %v3461
    %v3486 = vsub.f32 %v3478, %v3482
    %v3487 = vsub.f32 %v3479, %v3483
    %v3488 = vsub.f32 %v3480, %v3484
    %v3489 = vsub.f32 %v3481, %v3485
    %v3490 = vmax.f32 %v3486, 0.0
    %v3491 = vmax.f32 %v3487, 0.0
    %v3492 = vmax.f32 %v3488, 0.0
    %v3493 = vmax.f32 %v3489, 0.0
    %v3494 = vsub.f32 %v3440, %v3458
    %v3495 = vsub.f32 %v3441, %v3459
    %v3496 = vsub.f32 %v3442, %v3460
    %v3497 = vsub.f32 %v3443, %v3461
    %v3498 = vadd.f32 %v3490, 1e-06
    %v3499 = vadd.f32 %v3491, 1e-06
    %v3500 = vadd.f32 %v3492, 1e-06
    %v3501 = vadd.f32 %v3493, 1e-06
    %v3502 = vrsqrt.pop %v3498
    %v3503 = vmul.f32 %v3502, %v3498
    %v3504 = vmul.f32 %v3503, %v3502
    %v3505 = vmul.f32 0.5, %v3504
    %v3506 = vsub.f32 1.5, %v3505
    %v3507 = vmul.f32 %v3502, %v3506
    %vm3508 = vweird.f32 %v3498
    %vm3509 = vweird.f32 %v3502
    %vm3510 = vmor %vm3508, %vm3509
    %v3511 = vsel %vm3510, %v3502, %v3507
    %v3512 = vrsqrt.pop %v3499
    %v3513 = vmul.f32 %v3512, %v3499
    %v3514 = vmul.f32 %v3513, %v3512
    %v3515 = vmul.f32 0.5, %v3514
    %v3516 = vsub.f32 1.5, %v3515
    %v3517 = vmul.f32 %v3512, %v3516
    %vm3518 = vweird.f32 %v3499
    %vm3519 = vweird.f32 %v3512
    %vm3520 = vmor %vm3518, %vm3519
    %v3521 = vsel %vm3520, %v3512, %v3517
    %v3522 = vrsqrt.pop %v3500
    %v3523 = vmul.f32 %v3522, %v3500
    %v3524 = vmul.f32 %v3523, %v3522
    %v3525 = vmul.f32 0.5, %v3524
    %v3526 = vsub.f32 1.5, %v3525
    %v3527 = vmul.f32 %v3522, %v3526
    %vm3528 = vweird.f32 %v3500
    %vm3529 = vweird.f32 %v3522
    %vm3530 = vmor %vm3528, %vm3529
    %v3531 = vsel %vm3530, %v3522, %v3527
    %v3532 = vrsqrt.pop %v3501
    %v3533 = vmul.f32 %v3532, %v3501
    %v3534 = vmul.f32 %v3533, %v3532
    %v3535 = vmul.f32 0.5, %v3534
    %v3536 = vsub.f32 1.5, %v3535
    %v3537 = vmul.f32 %v3532, %v3536
    %vm3538 = vweird.f32 %v3501
    %vm3539 = vweird.f32 %v3532
    %vm3540 = vmor %vm3538, %vm3539
    %v3541 = vsel %vm3540, %v3532, %v3537
    %v3542 = vmul.f32 %v3494, %v3511
    %v3543 = vmul.f32 %v3495, %v3521
    %v3544 = vmul.f32 %v3496, %v3531
    %v3545 = vmul.f32 %v3497, %v3541
    %v3546 = vperm.slane %v3445, 0
    %v3547 = vmul.f32 %v3542, %v3546
    %v3548 = vmul.f32 %v3543, %v3546
    %v3549 = vmul.f32 %v3544, %v3546
    %v3550 = vmul.f32 %v3545, %v3546
    %v3551 = vperm.slane %v3445, 1
    %v3552 = vadd.f32 %v3547, %v3551
    %v3553 = vadd.f32 %v3548, %v3551
    %v3554 = vadd.f32 %v3549, %v3551
    %v3555 = vadd.f32 %v3550, %v3551
    %v3556 = vpack.c.bf16 %v3553, %v3552
    %v3557 = vpack.c.bf16 %v3555, %v3554
    %s3558 = scalar_lea.vmem %s51, 72
    %v3559 = vld [vmem:[%s3558] sm:$0xf]
    %v3560 = vld [vmem:[%s3558 + $0x4] sm:$0xf]
    %v3561 = vld [vmem:[%s3558 + $0x8] sm:$0xf]
    %v3562 = vld [vmem:[%s3558 + $0xc] sm:$0xf]
    %v3563 = vld [vmem:[%s3558 + $0x10] sm:$0xf]
    %v3564 = vld [vmem:[%s3558 + $0x14] sm:$0xf]
    %v3565 = vld [vmem:[%s3558 + $0x18] sm:$0xf]
    %v3566 = vld [vmem:[%s3558 + $0x1c] sm:$0xf]
    %v3567 = vld [vmem:[%s3558 + $0x20] sm:$0xf]
    %v3568 = vld [vmem:[%s3558 + $0x24] sm:$0xf]
    %v3569 = vld [vmem:[%s3558 + $0x28] sm:$0xf]
    %v3570 = vld [vmem:[%s3558 + $0x2c] sm:$0xf]
    %v3571 = vld [vmem:[%s3558 + $0x30] sm:$0xf]
    %v3572 = vld [vmem:[%s3558 + $0x34] sm:$0xf]
    %v3573 = vld [vmem:[%s3558 + $0x38] sm:$0xf]
    %v3574 = vld [vmem:[%s3558 + $0x3c] sm:$0xf]
    %v3575 = vld [vmem:[%s3558 + $0x40] sm:$0xf]
    %v3576 = vld [vmem:[%s3558 + $0x44] sm:$0xf]
    %3577 = vmatpush.bf16.msra.mxu0 0
    %3578 = vmatpush.bf16.msra.mxu0 0
    %3579 = vmatpush.bf16.msra.mxu0 0
    %3580 = vmatpush.bf16.msra.mxu0 0
    %3581 = vmatpush.bf16.msra.mxu0 0
    %3582 = vmatpush.bf16.msra.mxu0 0
    %3583 = vmatpush.bf16.msra.mxu0 %v3557
    %3584 = vmatpush.bf16.msra.mxu0 %v3556
    %3585 = vmatmul.bf16.gmra.mxu0 %v1568
    %v3586 = vpop.f32.mrf.mxu0
    %v3587 = vadd.f32 0.0, %v3586
    %v3588 = vpop.f32.mrf.mxu0
    %3589 = vdwg.mxu0
    %v3590 = vpack.c.bf16 %v3587, %v3587
    %3591 = vmatpush.bf16.msra.mxu0 0
    %3592 = vmatpush.bf16.msra.mxu0 0
    %3593 = vmatpush.bf16.msra.mxu0 0
    %3594 = vmatpush.bf16.msra.mxu0 0
    %3595 = vmatpush.bf16.msra.mxu0 0
    %3596 = vmatpush.bf16.msra.mxu0 0
    %3597 = vmatpush.bf16.msra.mxu0 %v3557
    %3598 = vmatpush.bf16.msra.mxu0 %v3556
    %3599 = vmatmul.bf16.gmra.mxu0 %v1587
    %v3600 = vpop.f32.mrf.mxu0
    %v3601 = vadd.f32 0.0, %v3600
    %v3602 = vpop.f32.mrf.mxu0
    %3603 = vdwg.mxu0
    %v3604 = vpack.c.bf16 %v3601, %v3601
    %v3607 = vunpack.c.l.b16 %v3561
    %v3608 = vunpack.c.l.b16 %v3562
    %v3609 = vpack.c.b16 %v3608, %v3607
    %v3612 = vsel %vm527, %v3604, 0
    %3614 = vmatpush.bf16.msra.mxu0 0
    %3615 = vmatpush.bf16.msra.mxu0 0
    %3616 = vmatpush.bf16.msra.mxu0 0
    %3617 = vmatpush.bf16.msra.mxu0 0
    %3618 = vmatpush.bf16.msra.mxu0 0
    %3619 = vmatpush.bf16.msra.mxu0 0
    %3620 = vmatpush.bf16.msra.mxu0 0
    %3621 = vmatpush.bf16.msra.mxu0 %v3609
    %3622 = vmatmul.bf16.gmra.mxu0 %v3612
    %v3623 = vpop.f32.mrf.mxu0
    %v3624 = vadd.f32 0.0, %v3623
    %v3625 = vpop.f32.mrf.mxu0
    %3626 = vdwg.mxu0
    %v3629 = vunpack.c.l.b16 %v3559
    %v3630 = vunpack.c.l.b16 %v3560
    %v3631 = vpack.c.b16 %v3630, %v3629
    %v3634 = vsel %vm527, %v3590, 0
    %3636 = vmatpush.bf16.msra.mxu0 0
    %3637 = vmatpush.bf16.msra.mxu0 0
    %3638 = vmatpush.bf16.msra.mxu0 0
    %3639 = vmatpush.bf16.msra.mxu0 0
    %3640 = vmatpush.bf16.msra.mxu0 0
    %3641 = vmatpush.bf16.msra.mxu0 0
    %3642 = vmatpush.bf16.msra.mxu0 0
    %3643 = vmatpush.bf16.msra.mxu0 %v3631
    %3644 = vmatmul.bf16.gmra.mxu0 %v3634
    %v3645 = vpop.f32.mrf.mxu0
    %v3646 = vadd.f32 %v3624, %v3645
    %v3647 = vpop.f32.mrf.mxu0
    %3648 = vdwg.mxu0
    %3649 = vmatpush.bf16.msra.mxu0 0
    %3650 = vmatpush.bf16.msra.mxu0 0
    %3651 = vmatpush.bf16.msra.mxu0 0
    %3652 = vmatpush.bf16.msra.mxu0 0
    %3653 = vmatpush.bf16.msra.mxu0 0
    %3654 = vmatpush.bf16.msra.mxu0 0
    %3655 = vmatpush.bf16.msra.mxu0 %v3557
    %3656 = vmatpush.bf16.msra.mxu0 %v3556
    %3657 = vmatmul.bf16.gmra.mxu0 %v1650
    %v3658 = vpop.f32.mrf.mxu0
    %v3659 = vadd.f32 0.0, %v3658
    %v3660 = vpop.f32.mrf.mxu0
    %3661 = vdwg.mxu0
    %v3662 = vpack.c.bf16 %v3659, %v3659
    %v3665 = vunpack.c.l.b16 %v3563
    %v3666 = vunpack.c.l.b16 %v3564
    %v3667 = vpack.c.b16 %v3666, %v3665
    %v3670 = vsel %vm527, %v3662, 0
    %3672 = vmatpush.bf16.msra.mxu0 0
    %3673 = vmatpush.bf16.msra.mxu0 0
    %3674 = vmatpush.bf16.msra.mxu0 0
    %3675 = vmatpush.bf16.msra.mxu0 0
    %3676 = vmatpush.bf16.msra.mxu0 0
    %3677 = vmatpush.bf16.msra.mxu0 0
    %3678 = vmatpush.bf16.msra.mxu0 0
    %3679 = vmatpush.bf16.msra.mxu0 %v3667
    %3680 = vmatmul.bf16.gmra.mxu0 %v3670
    %v3681 = vpop.f32.mrf.mxu0
    %v3682 = vadd.f32 0.0, %v3681
    %v3683 = vpop.f32.mrf.mxu0
    %3684 = vdwg.mxu0
    %v3685 = vadd.f32 %v3646, %v3682
    %3686 = vmatpush.bf16.msra.mxu0 0
    %3687 = vmatpush.bf16.msra.mxu0 0
    %3688 = vmatpush.bf16.msra.mxu0 0
    %3689 = vmatpush.bf16.msra.mxu0 0
    %3690 = vmatpush.bf16.msra.mxu0 0
    %3691 = vmatpush.bf16.msra.mxu0 0
    %3692 = vmatpush.bf16.msra.mxu0 %v3557
    %3693 = vmatpush.bf16.msra.mxu0 %v3556
    %3694 = vmatmul.bf16.gmra.mxu0 %v1692
    %v3695 = vpop.f32.mrf.mxu0
    %v3696 = vadd.f32 0.0, %v3695
    %v3697 = vpop.f32.mrf.mxu0
    %3698 = vdwg.mxu0
    %v3699 = vpack.c.bf16 %v3696, %v3696
    %v3702 = vunpack.c.l.b16 %v3565
    %v3703 = vunpack.c.l.b16 %v3566
    %v3704 = vpack.c.b16 %v3703, %v3702
    %v3707 = vsel %vm527, %v3699, 0
    %3709 = vmatpush.bf16.msra.mxu0 0
    %3710 = vmatpush.bf16.msra.mxu0 0
    %3711 = vmatpush.bf16.msra.mxu0 0
    %3712 = vmatpush.bf16.msra.mxu0 0
    %3713 = vmatpush.bf16.msra.mxu0 0
    %3714 = vmatpush.bf16.msra.mxu0 0
    %3715 = vmatpush.bf16.msra.mxu0 0
    %3716 = vmatpush.bf16.msra.mxu0 %v3704
    %3717 = vmatmul.bf16.gmra.mxu0 %v3707
    %v3718 = vpop.f32.mrf.mxu0
    %v3719 = vadd.f32 0.0, %v3718
    %v3720 = vpop.f32.mrf.mxu0
    %3721 = vdwg.mxu0
    %v3722 = vadd.f32 %v3685, %v3719
    %3723 = vmatpush.bf16.msra.mxu0 0
    %3724 = vmatpush.bf16.msra.mxu0 0
    %3725 = vmatpush.bf16.msra.mxu0 0
    %3726 = vmatpush.bf16.msra.mxu0 0
    %3727 = vmatpush.bf16.msra.mxu0 0
    %3728 = vmatpush.bf16.msra.mxu0 0
    %3729 = vmatpush.bf16.msra.mxu0 %v3557
    %3730 = vmatpush.bf16.msra.mxu0 %v3556
    %3731 = vmatmul.bf16.gmra.mxu0 %v1734
    %v3732 = vpop.f32.mrf.mxu0
    %v3733 = vadd.f32 0.0, %v3732
    %v3734 = vpop.f32.mrf.mxu0
    %3735 = vdwg.mxu0
    %v3736 = vpack.c.bf16 %v3733, %v3733
    %v3739 = vunpack.c.l.b16 %v3567
    %v3740 = vunpack.c.l.b16 %v3568
    %v3741 = vpack.c.b16 %v3740, %v3739
    %v3744 = vsel %vm527, %v3736, 0
    %3746 = vmatpush.bf16.msra.mxu0 0
    %3747 = vmatpush.bf16.msra.mxu0 0
    %3748 = vmatpush.bf16.msra.mxu0 0
    %3749 = vmatpush.bf16.msra.mxu0 0
    %3750 = vmatpush.bf16.msra.mxu0 0
    %3751 = vmatpush.bf16.msra.mxu0 0
    %3752 = vmatpush.bf16.msra.mxu0 0
    %3753 = vmatpush.bf16.msra.mxu0 %v3741
    %3754 = vmatmul.bf16.gmra.mxu0 %v3744
    %v3755 = vpop.f32.mrf.mxu0
    %v3756 = vadd.f32 0.0, %v3755
    %v3757 = vpop.f32.mrf.mxu0
    %3758 = vdwg.mxu0
    %v3759 = vadd.f32 %v3722, %v3756
    %3760 = vmatpush.bf16.msra.mxu0 0
    %3761 = vmatpush.bf16.msra.mxu0 0
    %3762 = vmatpush.bf16.msra.mxu0 0
    %3763 = vmatpush.bf16.msra.mxu0 0
    %3764 = vmatpush.bf16.msra.mxu0 0
    %3765 = vmatpush.bf16.msra.mxu0 0
    %3766 = vmatpush.bf16.msra.mxu0 %v3557
    %3767 = vmatpush.bf16.msra.mxu0 %v3556
    %3768 = vmatmul.bf16.gmra.mxu0 %v1776
    %v3769 = vpop.f32.mrf.mxu0
    %v3770 = vadd.f32 0.0, %v3769
    %v3771 = vpop.f32.mrf.mxu0
    %3772 = vdwg.mxu0
    %v3773 = vpack.c.bf16 %v3770, %v3770
    %v3776 = vunpack.c.l.b16 %v3569
    %v3777 = vunpack.c.l.b16 %v3570
    %v3778 = vpack.c.b16 %v3777, %v3776
    %v3781 = vsel %vm527, %v3773, 0
    %3783 = vmatpush.bf16.msra.mxu0 0
    %3784 = vmatpush.bf16.msra.mxu0 0
    %3785 = vmatpush.bf16.msra.mxu0 0
    %3786 = vmatpush.bf16.msra.mxu0 0
    %3787 = vmatpush.bf16.msra.mxu0 0
    %3788 = vmatpush.bf16.msra.mxu0 0
    %3789 = vmatpush.bf16.msra.mxu0 0
    %3790 = vmatpush.bf16.msra.mxu0 %v3778
    %3791 = vmatmul.bf16.gmra.mxu0 %v3781
    %v3792 = vpop.f32.mrf.mxu0
    %v3793 = vadd.f32 0.0, %v3792
    %v3794 = vpop.f32.mrf.mxu0
    %3795 = vdwg.mxu0
    %v3796 = vadd.f32 %v3759, %v3793
    %3797 = vmatpush.bf16.msra.mxu0 0
    %3798 = vmatpush.bf16.msra.mxu0 0
    %3799 = vmatpush.bf16.msra.mxu0 0
    %3800 = vmatpush.bf16.msra.mxu0 0
    %3801 = vmatpush.bf16.msra.mxu0 0
    %3802 = vmatpush.bf16.msra.mxu0 0
    %3803 = vmatpush.bf16.msra.mxu0 %v3557
    %3804 = vmatpush.bf16.msra.mxu0 %v3556
    %3805 = vmatmul.bf16.gmra.mxu0 %v1818
    %v3806 = vpop.f32.mrf.mxu0
    %v3807 = vadd.f32 0.0, %v3806
    %v3808 = vpop.f32.mrf.mxu0
    %3809 = vdwg.mxu0
    %v3810 = vpack.c.bf16 %v3807, %v3807
    %v3813 = vunpack.c.l.b16 %v3571
    %v3814 = vunpack.c.l.b16 %v3572
    %v3815 = vpack.c.b16 %v3814, %v3813
    %v3818 = vsel %vm527, %v3810, 0
    %3820 = vmatpush.bf16.msra.mxu0 0
    %3821 = vmatpush.bf16.msra.mxu0 0
    %3822 = vmatpush.bf16.msra.mxu0 0
    %3823 = vmatpush.bf16.msra.mxu0 0
    %3824 = vmatpush.bf16.msra.mxu0 0
    %3825 = vmatpush.bf16.msra.mxu0 0
    %3826 = vmatpush.bf16.msra.mxu0 0
    %3827 = vmatpush.bf16.msra.mxu0 %v3815
    %3828 = vmatmul.bf16.gmra.mxu0 %v3818
    %v3829 = vpop.f32.mrf.mxu0
    %v3830 = vadd.f32 0.0, %v3829
    %v3831 = vpop.f32.mrf.mxu0
    %3832 = vdwg.mxu0
    %v3833 = vadd.f32 %v3796, %v3830
    %3834 = vmatpush.bf16.msra.mxu0 0
    %3835 = vmatpush.bf16.msra.mxu0 0
    %3836 = vmatpush.bf16.msra.mxu0 0
    %3837 = vmatpush.bf16.msra.mxu0 0
    %3838 = vmatpush.bf16.msra.mxu0 0
    %3839 = vmatpush.bf16.msra.mxu0 0
    %3840 = vmatpush.bf16.msra.mxu0 %v3557
    %3841 = vmatpush.bf16.msra.mxu0 %v3556
    %3842 = vmatmul.bf16.gmra.mxu0 %v1860
    %v3843 = vpop.f32.mrf.mxu0
    %v3844 = vadd.f32 0.0, %v3843
    %v3845 = vpop.f32.mrf.mxu0
    %3846 = vdwg.mxu0
    %v3847 = vpack.c.bf16 %v3844, %v3844
    %v3850 = vunpack.c.l.b16 %v3573
    %v3851 = vunpack.c.l.b16 %v3574
    %v3852 = vpack.c.b16 %v3851, %v3850
    %v3855 = vsel %vm527, %v3847, 0
    %3857 = vmatpush.bf16.msra.mxu0 0
    %3858 = vmatpush.bf16.msra.mxu0 0
    %3859 = vmatpush.bf16.msra.mxu0 0
    %3860 = vmatpush.bf16.msra.mxu0 0
    %3861 = vmatpush.bf16.msra.mxu0 0
    %3862 = vmatpush.bf16.msra.mxu0 0
    %3863 = vmatpush.bf16.msra.mxu0 0
    %3864 = vmatpush.bf16.msra.mxu0 %v3852
    %3865 = vmatmul.bf16.gmra.mxu0 %v3855
    %v3866 = vpop.f32.mrf.mxu0
    %v3867 = vadd.f32 0.0, %v3866
    %v3868 = vpop.f32.mrf.mxu0
    %3869 = vdwg.mxu0
    %v3870 = vadd.f32 %v3833, %v3867
    %3871 = vmatpush.bf16.msra.mxu0 0
    %3872 = vmatpush.bf16.msra.mxu0 0
    %3873 = vmatpush.bf16.msra.mxu0 0
    %3874 = vmatpush.bf16.msra.mxu0 0
    %3875 = vmatpush.bf16.msra.mxu0 0
    %3876 = vmatpush.bf16.msra.mxu0 0
    %3877 = vmatpush.bf16.msra.mxu0 %v3557
    %3878 = vmatpush.bf16.msra.mxu0 %v3556
    %3879 = vmatmul.bf16.gmra.mxu0 %v1902
    %v3880 = vpop.f32.mrf.mxu0
    %v3881 = vadd.f32 0.0, %v3880
    %v3882 = vpop.f32.mrf.mxu0
    %3883 = vdwg.mxu0
    %v3884 = vpack.c.bf16 %v3881, %v3881
    %v3887 = vunpack.c.l.b16 %v3575
    %v3888 = vunpack.c.l.b16 %v3576
    %v3889 = vpack.c.b16 %v3888, %v3887
    %v3892 = vsel %vm527, %v3884, 0
    %3894 = vmatpush.bf16.msra.mxu0 0
    %3895 = vmatpush.bf16.msra.mxu0 0
    %3896 = vmatpush.bf16.msra.mxu0 0
    %3897 = vmatpush.bf16.msra.mxu0 0
    %3898 = vmatpush.bf16.msra.mxu0 0
    %3899 = vmatpush.bf16.msra.mxu0 0
    %3900 = vmatpush.bf16.msra.mxu0 0
    %3901 = vmatpush.bf16.msra.mxu0 %v3889
    %3902 = vmatmul.bf16.gmra.mxu0 %v3892
    %v3903 = vpop.f32.mrf.mxu0
    %v3904 = vadd.f32 0.0, %v3903
    %v3905 = vpop.f32.mrf.mxu0
    %3906 = vdwg.mxu0
    %v3907 = vadd.f32 %v3870, %v3904
    %s3908 = scalar_lea.vmem %s53, 1
    %v3909 = vld [vmem:[%s3908] sm:$0x1]
    %v3911 = vperm.slane %v3909, 0
    %v3913 = vadd.f32 %v3907, %v3911
    %s3914 = scalar_lea.vmem %s55, 2
    %v3915 = vld [vmem:[%s3914] sm:$0x3]
    %v3916 = vsel %vm821, %v3913, 0.0
    %3917 = vadd.xlane.f32.xlu0 %v3916
    %v3918 = vpop.xlane.xlu0 %3917
    %v3919 = vmul.f32 %v3918, %v1956
    %v3920 = vmul.f32 %v3913, %v3913
    %v3921 = vsel %vm821, %v3920, 0.0
    %3922 = vadd.xlane.f32.xlu0 %v3921
    %v3923 = vpop.xlane.xlu0 %3922
    %v3924 = vmul.f32 %v3923, %v1956
    %v3925 = vmul.f32 %v3919, %v3919
    %v3926 = vsub.f32 %v3924, %v3925
    %v3927 = vmax.f32 %v3926, 0.0
    %v3928 = vsub.f32 %v3913, %v3919
    %v3929 = vadd.f32 %v3927, 1e-06
    %v3930 = vrsqrt.pop %v3929
    %v3931 = vmul.f32 %v3930, %v3929
    %v3932 = vmul.f32 %v3931, %v3930
    %v3933 = vmul.f32 0.5, %v3932
    %v3934 = vsub.f32 1.5, %v3933
    %v3935 = vmul.f32 %v3930, %v3934
    %vm3936 = vweird.f32 %v3929
    %vm3937 = vweird.f32 %v3930
    %vm3938 = vmor %vm3936, %vm3937
    %v3939 = vsel %vm3938, %v3930, %v3935
    %v3940 = vmul.f32 %v3928, %v3939
    %v3941 = vperm.slane %v3915, 0
    %v3942 = vmul.f32 %v3940, %v3941
    %v3943 = vperm.slane %v3915, 1
    %v3944 = vadd.f32 %v3942, %v3943
    %s3945 = scalar_lea.vmem %s57, 2
    %v3946 = vld [vmem:[%s3945] sm:$0x3]
    %s3947 = scalar_lea.vmem %s67, 2
    %v3948 = vld [vmem:[%s3947] sm:$0x3]
    %s3949 = scalar_lea.vmem %s59, 16
    %v3950 = vld [vmem:[%s3949] sm:$0xf]
    %v3951 = vld [vmem:[%s3949 + $0x4] sm:$0xf]
    %v3952 = vld [vmem:[%s3949 + $0x8] sm:$0xf]
    %v3953 = vld [vmem:[%s3949 + $0xc] sm:$0xf]
    %s3954 = scalar_lea.vmem [#allocation2], 1
    %v3955 = vld [vmem:[%s3954] sm:$0x1]
    %s3956 = scalar_lea.vmem %s63, 16
    %v3957 = vld [vmem:[%s3956] sm:$0xf]
    %v3958 = vld [vmem:[%s3956 + $0x4] sm:$0xf]
    %v3959 = vld [vmem:[%s3956 + $0x8] sm:$0xf]
    %v3960 = vld [vmem:[%s3956 + $0xc] sm:$0xf]
    %s3961 = scalar_lea.vmem [#allocation5], 1
    %v3962 = vld [vmem:[%s3961] sm:$0x1]
    %s3963 = scalar_lea.vmem %s69, 16
    %v3964 = vld [vmem:[%s3963] sm:$0xf]
    %v3965 = vld [vmem:[%s3963 + $0x4] sm:$0xf]
    %v3966 = vld [vmem:[%s3963 + $0x8] sm:$0xf]
    %v3967 = vld [vmem:[%s3963 + $0xc] sm:$0xf]
    %s3968 = scalar_lea.vmem [#allocation7], 1
    %v3969 = vld [vmem:[%s3968] sm:$0x1]
    %s3970 = scalar_lea.vmem %s73, 32
    %v3971 = vld [vmem:[%s3970] sm:$0xf]
    %v3972 = vld [vmem:[%s3970 + $0x4] sm:$0xf]
    %v3973 = vld [vmem:[%s3970 + $0x8] sm:$0xf]
    %v3974 = vld [vmem:[%s3970 + $0xc] sm:$0xf]
    %v3975 = vld [vmem:[%s3970 + $0x10] sm:$0xf]
    %v3976 = vld [vmem:[%s3970 + $0x14] sm:$0xf]
    %v3977 = vld [vmem:[%s3970 + $0x18] sm:$0xf]
    %v3978 = vld [vmem:[%s3970 + $0x1c] sm:$0xf]
    %s3979 = scalar_lea.vmem [#allocation8], 1
    %v3980 = vld [vmem:[%s3979] sm:$0x1]
    %v3981 = vsel %vm821, %v3944, 0.0
    %3982 = vadd.xlane.f32.xlu0 %v3981
    %v3983 = vpop.xlane.xlu0 %3982
    %v3984 = vmul.f32 %v3983, %v1956
    %v3985 = vmul.f32 %v3944, %v3944
    %v3986 = vsel %vm821, %v3985, 0.0
    %3987 = vadd.xlane.f32.xlu0 %v3986
    %v3988 = vpop.xlane.xlu0 %3987
    %v3989 = vmul.f32 %v3988, %v1956
    %v3990 = vmul.f32 %v3984, %v3984
    %v3991 = vsub.f32 %v3989, %v3990
    %v3992 = vmax.f32 %v3991, 0.0
    %v3993 = vsub.f32 %v3944, %v3984
    %v3994 = vadd.f32 %v3992, 1e-06
    %v3995 = vrsqrt.pop %v3994
    %v3996 = vmul.f32 %v3995, %v3994
    %v3997 = vmul.f32 %v3996, %v3995
    %v3998 = vmul.f32 0.5, %v3997
    %v3999 = vsub.f32 1.5, %v3998
    %v4000 = vmul.f32 %v3995, %v3999
    %vm4001 = vweird.f32 %v3994
    %vm4002 = vweird.f32 %v3995
    %vm4003 = vmor %vm4001, %vm4002
    %v4004 = vsel %vm4003, %v3995, %v4000
    %v4005 = vmul.f32 %v3993, %v4004
    %v4006 = vperm.slane %v3946, 0
    %v4007 = vmul.f32 %v4005, %v4006
    %v4008 = vperm.slane %v3946, 1
    %v4009 = vadd.f32 %v4007, %v4008
    %v4010 = vpack.c.bf16 %v4009, %v4009
    %v4012 = vperm.slane %v3955, 0
    %v4018 = vunpack.c.l.b16 %v3950
    %v4019 = vunpack.c.l.b16 %v3951
    %v4020 = vunpack.c.l.b16 %v3952
    %v4021 = vunpack.c.l.b16 %v3953
    %v4022 = vpack.c.b16 %v4019, %v4018
    %v4023 = vpack.c.b16 %v4021, %v4020
    %v4027 = vsel %vm821, %v4010, 0
    %4029 = vmatpush.bf16.msra.mxu0 0
    %4030 = vmatpush.bf16.msra.mxu0 0
    %4031 = vmatpush.bf16.msra.mxu0 0
    %4032 = vmatpush.bf16.msra.mxu0 0
    %4033 = vmatpush.bf16.msra.mxu0 0
    %4034 = vmatpush.bf16.msra.mxu0 0
    %4035 = vmatpush.bf16.msra.mxu0 %v4023
    %4036 = vmatpush.bf16.msra.mxu0 %v4022
    %4037 = vmatmul.bf16.gmra.mxu0 %v4027
    %v4038 = vpop.f32.mrf.mxu0
    %v4039 = vadd.f32 %v4012, %v4038
    %v4040 = vpop.f32.mrf.mxu0
    %4041 = vdwg.mxu0
    %v4042 = vpack.c.bf16 %v4039, %v4039
    %4044 = vrot.lane.b32.xlu0 %v4042, 96
    %v4045 = vpop.permute.xlu0 %4044
    %v4047 = vsel %vm527, %v4042, 0
    %v4050 = vsel %vm527, %v4045, 0
    %4052 = vmatpush.bf16.xpose.msra.mxu0 0
    %4053 = vmatpush.bf16.xpose.msra.mxu0 0
    %4054 = vmatpush.bf16.xpose.msra.mxu0 0
    %4055 = vmatpush.bf16.xpose.msra.mxu0 0
    %4056 = vmatpush.bf16.xpose.msra.mxu0 0
    %4057 = vmatpush.bf16.xpose.msra.mxu0 0
    %4058 = vmatpush.bf16.xpose.msra.mxu0 0
    %4059 = vmatpush.bf16.xpose.msra.mxu0 %v4050
    %4060 = vmatmul.bf16.gmra.mxu0 %v4047
    %v4061 = vpop.f32.mrf.mxu0
    %v4062 = vadd.f32 0.0, %v4061
    %v4063 = vpop.f32.mrf.mxu0
    %4064 = vdwg.mxu0
    %v4065 = vmul.f32 %v4062, 0.25
    %v4066 = vadd.f32 %v4065, %v360
    %v4067 = vsel %vm1084, %v4066, -inf
    %4068 = vmax.xlane.f32.xlu0 %v4067
    %v4069 = vpop.xlane.xlu0 %4068
    %v4070 = vsub.f32 %v4066, %v4069
    %v4071 = vmul.f32 %v4070, 1.442695
    %v4072 = vpow.pop %v4071
    %v4073 = vsel %vm1084, %v4072, 0.0
    %4074 = vadd.xlane.f32.xlu0 %v4073
    %v4075 = vpop.xlane.xlu0 %4074
    %v4076 = vrcp.pop %v4075
    %v4077 = vmul.f32 %v4072, %v4076
    %v4078 = vpack.c.bf16 %v4077, %v4077
    %4079 = vrot.lane.b32.xlu0 %v4042, 64
    %v4080 = vpop.permute.xlu0 %4079
    %v4082 = vsel %vm1084, %v4078, 0
    %v4085 = vsel %vm1140, %v4080, 0
    %4087 = vmatpush.bf16.msra.mxu0 0
    %4088 = vmatpush.bf16.msra.mxu0 0
    %4089 = vmatpush.bf16.msra.mxu0 0
    %4090 = vmatpush.bf16.msra.mxu0 0
    %4091 = vmatpush.bf16.msra.mxu0 0
    %4092 = vmatpush.bf16.msra.mxu0 0
    %4093 = vmatpush.bf16.msra.mxu0 0
    %4094 = vmatpush.bf16.msra.mxu0 %v4085
    %4095 = vmatmul.bf16.gmra.mxu0 %v4082
    %v4096 = vpop.f32.mrf.mxu0
    %v4097 = vadd.f32 0.0, %v4096
    %v4098 = vpop.f32.mrf.mxu0
    %4099 = vdwg.mxu0
    %v4100 = vpack.c.bf16 %v4097, %v4097
    %4101 = vrot.lane.b32.xlu0 %v4042, 112
    %v4102 = vpop.permute.xlu0 %4101
    %4103 = vrot.lane.b32.xlu0 %v4042, 80
    %v4104 = vpop.permute.xlu0 %4103
    %v4106 = vsel %vm527, %v4102, 0
    %v4109 = vsel %vm527, %v4104, 0
    %4111 = vmatpush.bf16.xpose.msra.mxu0 0
    %4112 = vmatpush.bf16.xpose.msra.mxu0 0
    %4113 = vmatpush.bf16.xpose.msra.mxu0 0
    %4114 = vmatpush.bf16.xpose.msra.mxu0 0
    %4115 = vmatpush.bf16.xpose.msra.mxu0 0
    %4116 = vmatpush.bf16.xpose.msra.mxu0 0
    %4117 = vmatpush.bf16.xpose.msra.mxu0 0
    %4118 = vmatpush.bf16.xpose.msra.mxu0 %v4109
    %4119 = vmatmul.bf16.gmra.mxu0 %v4106
    %v4120 = vpop.f32.mrf.mxu0
    %v4121 = vadd.f32 0.0, %v4120
    %v4122 = vpop.f32.mrf.mxu0
    %4123 = vdwg.mxu0
    %v4124 = vmul.f32 %v4121, 0.25
    %v4125 = vadd.f32 %v4124, %v360
    %v4126 = vsel %vm1084, %v4125, -inf
    %4127 = vmax.xlane.f32.xlu0 %v4126
    %v4128 = vpop.xlane.xlu0 %4127
    %v4129 = vsub.f32 %v4125, %v4128
    %v4130 = vmul.f32 %v4129, 1.442695
    %v4131 = vpow.pop %v4130
    %v4132 = vsel %vm1084, %v4131, 0.0
    %4133 = vadd.xlane.f32.xlu0 %v4132
    %v4134 = vpop.xlane.xlu0 %4133
    %v4135 = vrcp.pop %v4134
    %v4136 = vmul.f32 %v4131, %v4135
    %v4137 = vpack.c.bf16 %v4136, %v4136
    %4138 = vrot.lane.b32.xlu0 %v4042, 48
    %v4139 = vpop.permute.xlu0 %4138
    %v4141 = vsel %vm1084, %v4137, 0
    %v4144 = vsel %vm1140, %v4139, 0
    %4146 = vmatpush.bf16.msra.mxu0 0
    %4147 = vmatpush.bf16.msra.mxu0 0
    %4148 = vmatpush.bf16.msra.mxu0 0
    %4149 = vmatpush.bf16.msra.mxu0 0
    %4150 = vmatpush.bf16.msra.mxu0 0
    %4151 = vmatpush.bf16.msra.mxu0 0
    %4152 = vmatpush.bf16.msra.mxu0 0
    %4153 = vmatpush.bf16.msra.mxu0 %v4144
    %4154 = vmatmul.bf16.gmra.mxu0 %v4141
    %v4155 = vpop.f32.mrf.mxu0
    %v4156 = vadd.f32 0.0, %v4155
    %v4157 = vpop.f32.mrf.mxu0
    %4158 = vdwg.mxu0
    %v4159 = vpack.c.bf16 %v4156, %v4156
    %v4162 = vunpack.c.l.b16 %v3959
    %v4163 = vunpack.c.l.b16 %v3960
    %v4164 = vpack.c.b16 %v4163, %v4162
    %v4167 = vsel %vm527, %v4159, 0
    %4169 = vmatpush.bf16.msra.mxu0 0
    %4170 = vmatpush.bf16.msra.mxu0 0
    %4171 = vmatpush.bf16.msra.mxu0 0
    %4172 = vmatpush.bf16.msra.mxu0 0
    %4173 = vmatpush.bf16.msra.mxu0 0
    %4174 = vmatpush.bf16.msra.mxu0 0
    %4175 = vmatpush.bf16.msra.mxu0 0
    %4176 = vmatpush.bf16.msra.mxu0 %v4164
    %4177 = vmatmul.bf16.gmra.mxu0 %v4167
    %v4178 = vpop.f32.mrf.mxu0
    %v4179 = vadd.f32 0.0, %v4178
    %v4180 = vpop.f32.mrf.mxu0
    %4181 = vdwg.mxu0
    %v4184 = vunpack.c.l.b16 %v3957
    %v4185 = vunpack.c.l.b16 %v3958
    %v4186 = vpack.c.b16 %v4185, %v4184
    %v4189 = vsel %vm527, %v4100, 0
    %4191 = vmatpush.bf16.msra.mxu0 0
    %4192 = vmatpush.bf16.msra.mxu0 0
    %4193 = vmatpush.bf16.msra.mxu0 0
    %4194 = vmatpush.bf16.msra.mxu0 0
    %4195 = vmatpush.bf16.msra.mxu0 0
    %4196 = vmatpush.bf16.msra.mxu0 0
    %4197 = vmatpush.bf16.msra.mxu0 0
    %4198 = vmatpush.bf16.msra.mxu0 %v4186
    %4199 = vmatmul.bf16.gmra.mxu0 %v4189
    %v4200 = vpop.f32.mrf.mxu0
    %v4201 = vadd.f32 %v4179, %v4200
    %v4202 = vpop.f32.mrf.mxu0
    %4203 = vdwg.mxu0
    %v4204 = vadd.f32 %v3944, %v4201
    %v4206 = vperm.slane %v3962, 0
    %v4208 = vadd.f32 %v4204, %v4206
    %v4209 = vsel %vm821, %v4208, 0.0
    %4210 = vadd.xlane.f32.xlu0 %v4209
    %v4211 = vpop.xlane.xlu0 %4210
    %v4212 = vmul.f32 %v4211, %v1956
    %v4213 = vmul.f32 %v4208, %v4208
    %v4214 = vsel %vm821, %v4213, 0.0
    %4215 = vadd.xlane.f32.xlu0 %v4214
    %v4216 = vpop.xlane.xlu0 %4215
    %v4217 = vmul.f32 %v4216, %v1956
    %v4218 = vmul.f32 %v4212, %v4212
    %v4219 = vsub.f32 %v4217, %v4218
    %v4220 = vmax.f32 %v4219, 0.0
    %v4221 = vsub.f32 %v4208, %v4212
    %v4222 = vadd.f32 %v4220, 1e-06
    %v4223 = vrsqrt.pop %v4222
    %v4224 = vmul.f32 %v4223, %v4222
    %v4225 = vmul.f32 %v4224, %v4223
    %v4226 = vmul.f32 0.5, %v4225
    %v4227 = vsub.f32 1.5, %v4226
    %v4228 = vmul.f32 %v4223, %v4227
    %vm4229 = vweird.f32 %v4222
    %vm4230 = vweird.f32 %v4223
    %vm4231 = vmor %vm4229, %vm4230
    %v4232 = vsel %vm4231, %v4223, %v4228
    %v4233 = vmul.f32 %v4221, %v4232
    %v4234 = vperm.slane %v3948, 0
    %v4235 = vmul.f32 %v4233, %v4234
    %v4236 = vperm.slane %v3948, 1
    %v4237 = vadd.f32 %v4235, %v4236
    %v4238 = vpack.c.bf16 %v4237, %v4237
    %v4240 = vperm.slane %v3969, 0
    %v4246 = vunpack.c.l.b16 %v3964
    %v4247 = vunpack.c.l.b16 %v3965
    %v4248 = vunpack.c.l.b16 %v3966
    %v4249 = vunpack.c.l.b16 %v3967
    %v4250 = vpack.c.b16 %v4247, %v4246
    %v4251 = vpack.c.b16 %v4249, %v4248
    %v4255 = vsel %vm821, %v4238, 0
    %4257 = vmatpush.bf16.msra.mxu0 0
    %4258 = vmatpush.bf16.msra.mxu0 0
    %4259 = vmatpush.bf16.msra.mxu0 0
    %4260 = vmatpush.bf16.msra.mxu0 0
    %4261 = vmatpush.bf16.msra.mxu0 0
    %4262 = vmatpush.bf16.msra.mxu0 0
    %4263 = vmatpush.bf16.msra.mxu0 %v4251
    %4264 = vmatpush.bf16.msra.mxu0 %v4250
    %4265 = vmatmul.bf16.gmra.mxu0 %v4255
    %v4266 = vpop.f32.mrf.mxu0
    %v4267 = vadd.f32 %v4240, %v4266
    %v4268 = vpop.f32.mrf.mxu0
    %4269 = vdwg.mxu0
    %v4270 = vmul.f32 %v4267, %v4267
    %v4271 = vmul.f32 %v4267, %v4270
    %v4272 = vmul.f32 %v4271, 0.044715
    %v4273 = vadd.f32 %v4267, %v4272
    %v4274 = vmul.f32 %v4273, 0.7978846
    %v4275 = vtanh.pop %v4274
    %v4276 = vadd.f32 %v4275, 1.0
    %v4277 = vmul.f32 %v4276, 0.5
    %v4278 = vmul.f32 %v4267, %v4277
    %v4279 = vpack.c.bf16 %v4278, %v4278
    %v4281 = vperm.slane %v3980, 0
    %v4291 = vunpack.c.l.b16 %v3971
    %v4292 = vunpack.c.l.b16 %v3972
    %v4293 = vunpack.c.l.b16 %v3973
    %v4294 = vunpack.c.l.b16 %v3974
    %v4295 = vunpack.c.l.b16 %v3975
    %v4296 = vunpack.c.l.b16 %v3976
    %v4297 = vunpack.c.l.b16 %v3977
    %v4298 = vunpack.c.l.b16 %v3978
    %v4299 = vpack.c.b16 %v4292, %v4291
    %v4300 = vpack.c.b16 %v4294, %v4293
    %v4301 = vpack.c.b16 %v4296, %v4295
    %v4302 = vpack.c.b16 %v4298, %v4297
    %v4308 = vsel %vm2335, %v4279, 0
    %4310 = vmatpush.bf16.msra.mxu0 0
    %4311 = vmatpush.bf16.msra.mxu0 0
    %4312 = vmatpush.bf16.msra.mxu0 0
    %4313 = vmatpush.bf16.msra.mxu0 0
    %4314 = vmatpush.bf16.msra.mxu0 %v4302
    %4315 = vmatpush.bf16.msra.mxu0 %v4301
    %4316 = vmatpush.bf16.msra.mxu0 %v4300
    %4317 = vmatpush.bf16.msra.mxu0 %v4299
    %4318 = vmatmul.bf16.gmra.mxu0 %v4308
    %v4319 = vpop.f32.mrf.mxu0
    %v4320 = vadd.f32 %v4281, %v4319
    %v4321 = vpop.f32.mrf.mxu0
    %4322 = vdwg.mxu0
    %v4323 = vadd.f32 %v4208, %v4320
    %s4324 = scalar_lea.vmem %s77, 2
    %v4325 = vld [vmem:[%s4324] sm:$0x3]
    %v4326 = vsel %vm821, %v4323, 0.0
    %4327 = vadd.xlane.f32.xlu0 %v4326
    %v4328 = vpop.xlane.xlu0 %4327
    %v4329 = vmul.f32 %v4328, %v1956
    %v4330 = vmul.f32 %v4323, %v4323
    %v4331 = vsel %vm821, %v4330, 0.0
    %4332 = vadd.xlane.f32.xlu0 %v4331
    %v4333 = vpop.xlane.xlu0 %4332
    %v4334 = vmul.f32 %v4333, %v1956
    %v4335 = vmul.f32 %v4329, %v4329
    %v4336 = vsub.f32 %v4334, %v4335
    %v4337 = vmax.f32 %v4336, 0.0
    %v4338 = vsub.f32 %v4323, %v4329
    %v4339 = vadd.f32 %v4337, 1e-06
    %v4340 = vrsqrt.pop %v4339
    %v4341 = vmul.f32 %v4340, %v4339
    %v4342 = vmul.f32 %v4341, %v4340
    %v4343 = vmul.f32 0.5, %v4342
    %v4344 = vsub.f32 1.5, %v4343
    %v4345 = vmul.f32 %v4340, %v4344
    %vm4346 = vweird.f32 %v4339
    %vm4347 = vweird.f32 %v4340
    %vm4348 = vmor %vm4346, %vm4347
    %v4349 = vsel %vm4348, %v4340, %v4345
    %v4350 = vmul.f32 %v4338, %v4349
    %v4351 = vperm.slane %v4325, 0
    %v4352 = vmul.f32 %v4350, %v4351
    %v4353 = vperm.slane %v4325, 1
    %v4354 = vadd.f32 %v4352, %v4353
    %v4355 = vld [vmem:[%s79] sm:$0xf]
    %v4356 = vld [vmem:[%s79 + $0x4] sm:$0xf]
    %s4357 = scalar_lea.vmem %s79, 8
    %v4358 = vld [vmem:[%s4357] sm:$0xf]
    %v4359 = vld [vmem:[%s4357 + $0x4] sm:$0xf]
    %v4362 = vunpack.c.l.b16 %v4358
    %v4363 = vunpack.c.l.b16 %v4359
    %v4364 = vpack.c.b16 %v4363, %v4362
    %v4367 = vsel %vm527, %v3556, 0
    %v4370 = vsel %vm527, %v3557, 0
    %4372 = vmatpush.bf16.msra.mxu0 0
    %4373 = vmatpush.bf16.msra.mxu0 0
    %4374 = vmatpush.bf16.msra.mxu0 0
    %4375 = vmatpush.bf16.msra.mxu0 0
    %4376 = vmatpush.bf16.msra.mxu0 0
    %4377 = vmatpush.bf16.msra.mxu0 0
    %4378 = vmatpush.bf16.msra.mxu0 0
    %4379 = vmatpush.bf16.msra.mxu0 %v4364
    %4380 = vmatmul.bf16.gmra.mxu0 %v4367
    %v4381 = vpop.f32.mrf.mxu0
    %v4382 = vadd.f32 0.0, %v4381
    %v4383 = vpop.f32.mrf.mxu0
    %v4384 = vadd.f32 0.0, %v4383
    %4385 = vmatmul.bf16.gmra.mxu0 %v4370
    %v4386 = vpop.f32.mrf.mxu0
    %v4387 = vadd.f32 0.0, %v4386
    %v4388 = vpop.f32.mrf.mxu0
    %v4389 = vadd.f32 0.0, %v4388
    %4390 = vdwg.mxu0
    %v4393 = vunpack.c.l.b16 %v4355
    %v4394 = vunpack.c.l.b16 %v4356
    %v4395 = vpack.c.b16 %v4394, %v4393
    %v4398 = vsel %vm527, %v1546, 0
    %v4401 = vsel %vm527, %v1547, 0
    %4403 = vmatpush.bf16.msra.mxu0 0
    %4404 = vmatpush.bf16.msra.mxu0 0
    %4405 = vmatpush.bf16.msra.mxu0 0
    %4406 = vmatpush.bf16.msra.mxu0 0
    %4407 = vmatpush.bf16.msra.mxu0 0
    %4408 = vmatpush.bf16.msra.mxu0 0
    %4409 = vmatpush.bf16.msra.mxu0 0
    %4410 = vmatpush.bf16.msra.mxu0 %v4395
    %4411 = vmatmul.bf16.gmra.mxu0 %v4398
    %v4412 = vpop.f32.mrf.mxu0
    %v4413 = vadd.f32 %v4382, %v4412
    %v4414 = vpop.f32.mrf.mxu0
    %v4415 = vadd.f32 %v4384, %v4414
    %4416 = vmatmul.bf16.gmra.mxu0 %v4401
    %v4417 = vpop.f32.mrf.mxu0
    %v4418 = vadd.f32 %v4387, %v4417
    %v4419 = vpop.f32.mrf.mxu0
    %v4420 = vadd.f32 %v4389, %v4419
    %4421 = vdwg.mxu0
    %v4422 = vld [vmem:[#allocation10] sm:$0x1]
    %v4424 = vperm.slane %v4422, 0
    %v4426 = vadd.f32 %v4413, %v4424
    %v4427 = vadd.f32 %v4415, %v4424
    %v4428 = vadd.f32 %v4418, %v4424
    %v4429 = vadd.f32 %v4420, %v4424
    %v4430 = vld [vmem:[%s83] sm:$0xf]
    %v4431 = vld [vmem:[%s83 + $0x4] sm:$0xf]
    %v4432 = vld [vmem:[%s83 + $0x8] sm:$0xf]
    %v4433 = vld [vmem:[%s83 + $0xc] sm:$0xf]
    %v4434 = vpack.c.bf16 %v2382, %v2382
    %s4435 = scalar_lea.vmem %s83, 16
    %v4436 = vld [vmem:[%s4435] sm:$0xf]
    %v4437 = vld [vmem:[%s4435 + $0x4] sm:$0xf]
    %v4438 = vld [vmem:[%s4435 + $0x8] sm:$0xf]
    %v4439 = vld [vmem:[%s4435 + $0xc] sm:$0xf]
    %v4440 = vpack.c.bf16 %v4354, %v4354
    %v4445 = vunpack.c.l.b16 %v4436
    %v4446 = vunpack.c.l.b16 %v4437
    %v4447 = vunpack.c.l.b16 %v4438
    %v4448 = vunpack.c.l.b16 %v4439
    %v4449 = vpack.c.b16 %v4446, %v4445
    %v4450 = vpack.c.b16 %v4448, %v4447
    %v4454 = vsel %vm821, %v4440, 0
    %4456 = vmatpush.bf16.msra.mxu0 0
    %4457 = vmatpush.bf16.msra.mxu0 0
    %4458 = vmatpush.bf16.msra.mxu0 0
    %4459 = vmatpush.bf16.msra.mxu0 0
    %4460 = vmatpush.bf16.msra.mxu0 0
    %4461 = vmatpush.bf16.msra.mxu0 0
    %4462 = vmatpush.bf16.msra.mxu0 %v4450
    %4463 = vmatpush.bf16.msra.mxu0 %v4449
    %4464 = vmatmul.bf16.gmra.mxu0 %v4454
    %v4465 = vpop.f32.mrf.mxu0
    %v4466 = vadd.f32 0.0, %v4465
    %v4467 = vpop.f32.mrf.mxu0
    %4468 = vdwg.mxu0
    %v4473 = vunpack.c.l.b16 %v4430
    %v4474 = vunpack.c.l.b16 %v4431
    %v4475 = vunpack.c.l.b16 %v4432
    %v4476 = vunpack.c.l.b16 %v4433
    %v4477 = vpack.c.b16 %v4474, %v4473
    %v4478 = vpack.c.b16 %v4476, %v4475
    %v4482 = vsel %vm821, %v4434, 0
    %4484 = vmatpush.bf16.msra.mxu0 0
    %4485 = vmatpush.bf16.msra.mxu0 0
    %4486 = vmatpush.bf16.msra.mxu0 0
    %4487 = vmatpush.bf16.msra.mxu0 0
    %4488 = vmatpush.bf16.msra.mxu0 0
    %4489 = vmatpush.bf16.msra.mxu0 0
    %4490 = vmatpush.bf16.msra.mxu0 %v4478
    %4491 = vmatpush.bf16.msra.mxu0 %v4477
    %4492 = vmatmul.bf16.gmra.mxu0 %v4482
    %v4493 = vpop.f32.mrf.mxu0
    %v4494 = vadd.f32 %v4466, %v4493
    %v4495 = vpop.f32.mrf.mxu0
    %4496 = vdwg.mxu0
    %v4497 = vld [vmem:[#allocation11] sm:$0x1]
    %v4499 = vperm.slane %v4497, 0
    %v4501 = vadd.f32 %v4494, %v4499
    %v4502 = vld [vmem:[%s87] sm:$0xf]
    %v4503 = vld [vmem:[%s87 + $0x4] sm:$0xf]
    %v4504 = vpack.c.bf16 %v4427, %v4426
    %v4505 = vpack.c.bf16 %v4429, %v4428
    %v4506 = vld [vmem:[#allocation13] sm:$0x1]
    %v4508 = vperm.slane %v4506, 0
    %v4512 = vunpack.c.l.b16 %v4502
    %v4513 = vunpack.c.l.b16 %v4503
    %v4514 = vpack.c.b16 %v4513, %v4512
    %v4517 = vsel %vm527, %v4504, 0
    %v4520 = vsel %vm527, %v4505, 0
    %4522 = vmatpush.bf16.msra.mxu0 0
    %4523 = vmatpush.bf16.msra.mxu0 0
    %4524 = vmatpush.bf16.msra.mxu0 0
    %4525 = vmatpush.bf16.msra.mxu0 0
    %4526 = vmatpush.bf16.msra.mxu0 0
    %4527 = vmatpush.bf16.msra.mxu0 0
    %4528 = vmatpush.bf16.msra.mxu0 0
    %4529 = vmatpush.bf16.msra.mxu0 %v4514
    %4530 = vmatmul.bf16.gmra.mxu0 %v4517
    %v4531 = vpop.f32.mrf.mxu0
    %v4532 = vadd.f32 %v4508, %v4531
    %v4533 = vpop.f32.mrf.mxu0
    %v4534 = vadd.f32 %v4508, %v4533
    %4535 = vmatmul.bf16.gmra.mxu0 %v4520
    %v4536 = vpop.f32.mrf.mxu0
    %v4537 = vadd.f32 %v4508, %v4536
    %v4538 = vpop.f32.mrf.mxu0
    %v4539 = vadd.f32 %v4508, %v4538
    %4540 = vdwg.mxu0
    %v4541 = vld [vmem:[%s91] sm:$0xf]
    %v4542 = vld [vmem:[%s91 + $0x4] sm:$0xf]
    %v4543 = vld [vmem:[%s91 + $0x8] sm:$0xf]
    %v4544 = vld [vmem:[%s91 + $0xc] sm:$0xf]
    %v4545 = vpack.c.bf16 %v4501, %v4501
    %v4546 = vld [vmem:[#allocation14] sm:$0x1]
    %v4548 = vperm.slane %v4546, 0
    %v4554 = vunpack.c.l.b16 %v4541
    %v4555 = vunpack.c.l.b16 %v4542
    %v4556 = vunpack.c.l.b16 %v4543
    %v4557 = vunpack.c.l.b16 %v4544
    %v4558 = vpack.c.b16 %v4555, %v4554
    %v4559 = vpack.c.b16 %v4557, %v4556
    %v4563 = vsel %vm821, %v4545, 0
    %4565 = vmatpush.bf16.msra.mxu0 0
    %4566 = vmatpush.bf16.msra.mxu0 0
    %4567 = vmatpush.bf16.msra.mxu0 0
    %4568 = vmatpush.bf16.msra.mxu0 0
    %4569 = vmatpush.bf16.msra.mxu0 0
    %4570 = vmatpush.bf16.msra.mxu0 0
    %4571 = vmatpush.bf16.msra.mxu0 %v4559
    %4572 = vmatpush.bf16.msra.mxu0 %v4558
    %4573 = vmatmul.bf16.gmra.mxu0 %v4563
    %v4574 = vpop.f32.mrf.mxu0
    %v4575 = vadd.f32 %v4548, %v4574
    %v4576 = vpop.f32.mrf.mxu0
    %4577 = vdwg.mxu0
    %v4578 = vld [vmem:[%s11] sm:$0xf]
    %v4579 = vld [vmem:[%s11 + $0x4] sm:$0xf]
    %v4580 = vld [vmem:[%s11 + $0x8] sm:$0xf]
    %v4581 = vld [vmem:[%s11 + $0xc] sm:$0xf]
    %v4582 = vpack.c.bf16 %v4575, %v4575
    %v4587 = vunpack.c.l.b16 %v4578
    %v4588 = vunpack.c.l.b16 %v4579
    %v4589 = vunpack.c.l.b16 %v4580
    %v4590 = vunpack.c.l.b16 %v4581
    %v4591 = vpack.c.b16 %v4588, %v4587
    %v4592 = vpack.c.b16 %v4590, %v4589
    %v4594 = vsel %vm1084, %v4591, 0
    %v4597 = vsel %vm1084, %v4592, 0
    %v4600 = vsel %vm1140, %v4582, 0
    %4602 = vmatpush.bf16.msra.mxu0 0
    %4603 = vmatpush.bf16.msra.mxu0 0
    %4604 = vmatpush.bf16.msra.mxu0 0
    %4605 = vmatpush.bf16.msra.mxu0 0
    %4606 = vmatpush.bf16.msra.mxu0 0
    %4607 = vmatpush.bf16.msra.mxu0 0
    %4608 = vmatpush.bf16.msra.mxu0 0
    %4609 = vmatpush.bf16.msra.mxu0 %v4600
    %4610 = vmatmul.bf16.gmra.mxu0 %v4594
    %v4611 = vpop.f32.mrf.mxu0
    %v4612 = vadd.f32 0.0, %v4611
    %v4613 = vpop.f32.mrf.mxu0
    %v4614 = vadd.f32 0.0, %v4613
    %4615 = vmatmul.bf16.gmra.mxu0 %v4597
    %v4616 = vpop.f32.mrf.mxu0
    %v4617 = vadd.f32 0.0, %v4616
    %v4618 = vpop.f32.mrf.mxu0
    %v4619 = vadd.f32 0.0, %v4618
    %4620 = vdwg.mxu0
    %v4621 = vld [vmem:[%s95] sm:$0xf]
    %v4622 = vld [vmem:[%s95 + $0x4] sm:$0xf]
    %v4623 = vld [vmem:[%s95 + $0x8] sm:$0xf]
    %v4624 = vld [vmem:[%s95 + $0xc] sm:$0xf]
    %v4625 = vpack.c.bf16 %v4614, %v4612
    %v4626 = vpack.c.bf16 %v4619, %v4617
    %s4627 = scalar_lea.vmem %s95, 16
    %v4628 = vld [vmem:[%s4627] sm:$0xf]
    %v4629 = vld [vmem:[%s4627 + $0x4] sm:$0xf]
    %v4630 = vld [vmem:[%s4627 + $0x8] sm:$0xf]
    %v4631 = vld [vmem:[%s4627 + $0xc] sm:$0xf]
    %v4632 = vpack.c.bf16 %v4534, %v4532
    %v4633 = vpack.c.bf16 %v4539, %v4537
    %v4638 = vunpack.c.l.b16 %v4628
    %v4639 = vunpack.c.l.b16 %v4629
    %v4640 = vunpack.c.l.b16 %v4630
    %v4641 = vunpack.c.l.b16 %v4631
    %v4642 = vpack.c.b16 %v4639, %v4638
    %v4643 = vpack.c.b16 %v4641, %v4640
    %v4647 = vsel %vm821, %v4632, 0
    %v4650 = vsel %vm821, %v4633, 0
    %4652 = vmatpush.bf16.msra.mxu0 0
    %4653 = vmatpush.bf16.msra.mxu0 0
    %4654 = vmatpush.bf16.msra.mxu0 0
    %4655 = vmatpush.bf16.msra.mxu0 0
    %4656 = vmatpush.bf16.msra.mxu0 0
    %4657 = vmatpush.bf16.msra.mxu0 0
    %4658 = vmatpush.bf16.msra.mxu0 %v4643
    %4659 = vmatpush.bf16.msra.mxu0 %v4642
    %4660 = vmatmul.bf16.gmra.mxu0 %v4647
    %v4661 = vpop.f32.mrf.mxu0
    %v4662 = vadd.f32 0.0, %v4661
    %v4663 = vpop.f32.mrf.mxu0
    %v4664 = vadd.f32 0.0, %v4663
    %4665 = vmatmul.bf16.gmra.mxu0 %v4650
    %v4666 = vpop.f32.mrf.mxu0
    %v4667 = vadd.f32 0.0, %v4666
    %v4668 = vpop.f32.mrf.mxu0
    %v4669 = vadd.f32 0.0, %v4668
    %4670 = vdwg.mxu0
    %v4675 = vunpack.c.l.b16 %v4621
    %v4676 = vunpack.c.l.b16 %v4622
    %v4677 = vunpack.c.l.b16 %v4623
    %v4678 = vunpack.c.l.b16 %v4624
    %v4679 = vpack.c.b16 %v4676, %v4675
    %v4680 = vpack.c.b16 %v4678, %v4677
    %v4684 = vsel %vm821, %v4625, 0
    %v4687 = vsel %vm821, %v4626, 0
    %4689 = vmatpush.bf16.msra.mxu0 0
    %4690 = vmatpush.bf16.msra.mxu0 0
    %4691 = vmatpush.bf16.msra.mxu0 0
    %4692 = vmatpush.bf16.msra.mxu0 0
    %4693 = vmatpush.bf16.msra.mxu0 0
    %4694 = vmatpush.bf16.msra.mxu0 0
    %4695 = vmatpush.bf16.msra.mxu0 %v4680
    %4696 = vmatpush.bf16.msra.mxu0 %v4679
    %4697 = vmatmul.bf16.gmra.mxu0 %v4684
    %v4698 = vpop.f32.mrf.mxu0
    %v4699 = vadd.f32 %v4662, %v4698
    %v4700 = vpop.f32.mrf.mxu0
    %v4701 = vadd.f32 %v4664, %v4700
    %4702 = vmatmul.bf16.gmra.mxu0 %v4687
    %v4703 = vpop.f32.mrf.mxu0
    %v4704 = vadd.f32 %v4667, %v4703
    %v4705 = vpop.f32.mrf.mxu0
    %v4706 = vadd.f32 %v4669, %v4705
    %4707 = vdwg.mxu0
    %v4708 = vld [vmem:[#allocation16] sm:$0x1]
    %v4710 = vperm.slane %v4708, 0
    %v4712 = vadd.f32 %v4699, %v4710
    %v4713 = vadd.f32 %v4701, %v4710
    %v4714 = vadd.f32 %v4704, %v4710
    %v4715 = vadd.f32 %v4706, %v4710
    %v4716 = vmax.f32 %v4712, 0.0
    %v4717 = vmax.f32 %v4713, 0.0
    %v4718 = vmax.f32 %v4714, 0.0
    %v4719 = vmax.f32 %v4715, 0.0
    %v4720 = vld [vmem:[%s99] sm:$0xf]
    %v4721 = vld [vmem:[%s99 + $0x4] sm:$0xf]
    %v4722 = vld [vmem:[%s99 + $0x8] sm:$0xf]
    %v4723 = vld [vmem:[%s99 + $0xc] sm:$0xf]
    %v4724 = vpack.c.bf16 %v4717, %v4716
    %v4725 = vpack.c.bf16 %v4719, %v4718
    %v4726 = vld [vmem:[#allocation17] sm:$0x1]
    %v4728 = vperm.slane %v4726, 0
    %v4734 = vunpack.c.l.b16 %v4720
    %v4735 = vunpack.c.l.b16 %v4721
    %v4736 = vunpack.c.l.b16 %v4722
    %v4737 = vunpack.c.l.b16 %v4723
    %v4738 = vpack.c.b16 %v4735, %v4734
    %v4739 = vpack.c.b16 %v4737, %v4736
    %v4743 = vsel %vm821, %v4724, 0
    %v4746 = vsel %vm821, %v4725, 0
    %4748 = vmatpush.bf16.msra.mxu0 0
    %4749 = vmatpush.bf16.msra.mxu0 0
    %4750 = vmatpush.bf16.msra.mxu0 0
    %4751 = vmatpush.bf16.msra.mxu0 0
    %4752 = vmatpush.bf16.msra.mxu0 0
    %4753 = vmatpush.bf16.msra.mxu0 0
    %4754 = vmatpush.bf16.msra.mxu0 %v4739
    %4755 = vmatpush.bf16.msra.mxu0 %v4738
    %4756 = vmatmul.bf16.gmra.mxu0 %v4743
    %v4757 = vpop.f32.mrf.mxu0
    %v4758 = vadd.f32 %v4728, %v4757
    %v4759 = vpop.f32.mrf.mxu0
    %v4760 = vadd.f32 %v4728, %v4759
    %4761 = vmatmul.bf16.gmra.mxu0 %v4746
    %v4762 = vpop.f32.mrf.mxu0
    %v4763 = vadd.f32 %v4728, %v4762
    %v4764 = vpop.f32.mrf.mxu0
    %v4765 = vadd.f32 %v4728, %v4764
    %4766 = vdwg.mxu0
    %4767 = vst [vmem:[#allocation19] sm:$0xff] %v4758
    %4768 = vst [vmem:[#allocation19 + $0x8] sm:$0xff] %v4760
    %4769 = vst [vmem:[#allocation19 + $0x10] sm:$0xff] %v4763
    %4770 = vst [vmem:[#allocation19 + $0x18] sm:$0xff] %v4765
    // Predicated region
    $region246: #{segtasknet_forward.1} parent=1 // pred_check
      _
    $region247: #{segtasknet_forward.1} parent=1 // pred_check_branch
      %4772 = sbr.rel (0) target = $region249
    $region248: #{segtasknet_forward.1} parent=1 // pred_region
      %4774 = vsyncadd [#allocation4], 0
      %s4775 = sshll.u32 [#allocation19], 4
      %s4776 = int_to_ptr.vmem [resolvable:$true] %s4775
      %s4777 = sshll.u32 %s103, 4
      %s4778 = int_to_ptr.hbm [resolvable:$true] %s4777
      %4783 = dma.vmem_to_hbm [thread:$0]  %s4776, 512, %s4778, [#allocation4], 128, 128, 8
    $region249: #{segtasknet_forward.1} parent=1 // pred_fallthru
      _
    // Predicated region
    $region250: #{segtasknet_forward.1} parent=1 // pred_check
      _
    $region251: #{segtasknet_forward.1} parent=1 // pred_check_branch
      %4785 = sbr.rel (0) target = $region253
    $region252: #{segtasknet_forward.1} parent=1 // pred_region
      %4787 = dma.done [#allocation4], 512
    $region253: #{segtasknet_forward.1} parent=1 // pred_fallthru
      _
    %4788 = vsyncpa [#allocation3], 1
    %4789 = vsyncpa [#allocation6], 1
    %4790 = vsyncpa [#allocation9], 1
    %4791 = vsyncpa [#allocation12], 1
    %4792 = vsyncpa [#allocation15], 1
    %4793 = vsyncpa [#allocation18], 1
    %4794 = vsyncpa [#allocation4], 1

</llo_original>
